<compile_context>
chip_gen: v7x
topology: tpu7x:2x2x1
jax: 0.10.0
libtpu: 0.0.40
codegen_flags: <defaults>
</compile_context>

<pallas_src>
import jax
import jax.numpy as jnp
from jax.experimental import pallas as pl
from jax.experimental.pallas import tpu as pltpu

_MXU_DTYPE = jnp.bfloat16   # MXU operand dtype (f32 accumulation everywhere)
_CPAD = 128                 # all channel dims padded to one lane tile

# Per-stage geometry.  Activations are stored flat as (rows, 128) with
# row = h * Ws + w (Ws = storage width, power of two; columns >= valid width
# are garbage that is never read for valid outputs).
#   stage 1: input 32x32x3   -> conv 31x31 -> pool 15x15, storage (15*16, 128)
#   stage 2: input 15x15x32  -> conv 14x14 -> pool  7x7 , storage ( 7* 8, 128)
#   stage 3: input  7x7x64   -> conv  6x6  -> pool  3x3 , storage ( 3* 4, 128)
_WS = (32, 16, 8)   # input storage widths
_HP = (15, 7, 3)    # pooled output heights (= pooled widths)


def _conv_relu_pool(in_ref, w_ref, b_ref, ws, hp):
    """Fused 2x2 conv + bias + ReLU + 2x2 maxpool on one feature map.

    in_ref : (rows_in, Cin_storage) VMEM ref, row = h * ws + w
    w_ref  : (4, Cin_storage, 128) bf16, index dh*2+dw
    b_ref  : (1, 128) f32
    returns: (hp * ws//2, 128) f32 value, row = ph * (ws//2) + pw
    """
    half = ws // 2
    n = hp * half

    # 9 shifted, stride-2 views: offset (oh, ow) in {0,1,2}^2 covers every
    # combination of pool offset (a,b) + kernel tap (dh,dw).
    shifted = {}
    for oh in range(3):
        for ow in range(3):
            start = oh * ws + ow
            shifted[(oh, ow)] = in_ref[pl.ds(start, n, stride=2), :].astype(
                w_ref.dtype)

    wmats = [w_ref[i] for i in range(4)]     # hoisted weight loads
    bias = b_ref[...]                        # (1, 128) f32

    quads = []
    for a in range(2):                       # pool row offset
        for b in range(2):                   # pool col offset
            acc = None
            for dh in range(2):
                for dw in range(2):
                    d = jnp.dot(shifted[(a + dh, b + dw)], wmats[2 * dh + dw],
                                preferred_element_type=jnp.float32)
                    acc = d if acc is None else acc + d
            quads.append(jnp.maximum(acc + bias, 0.0))   # bias + ReLU

    # 2x2 max pool = elementwise max of the four quadrants.
    return jnp.maximum(jnp.maximum(quads[0], quads[1]),
                       jnp.maximum(quads[2], quads[3]))


def _cnn_fused_kernel(x_ref, w1_ref, b1_ref, w2_ref, b2_ref, w3_ref, b3_ref,
                      wl_ref, bl_ref, out_ref, p1_ref, p2_ref):
    # x_ref: (1024, 3) one image, row = h*32 + w.  out_ref: (1, 10).
    p1_ref[...] = _conv_relu_pool(x_ref, w1_ref, b1_ref, _WS[0], _HP[0])  # (240,128)
    p2_ref[...] = _conv_relu_pool(p1_ref, w2_ref, b2_ref, _WS[1], _HP[1])  # (56,128)
    p3 = _conv_relu_pool(p2_ref, w3_ref, b3_ref, _WS[2], _HP[2])           # (12,128)

    # Linear(900 -> 10): PyTorch NCHW flatten is folded into the pre-permuted
    # weight wl_ref[h*3+w, c, n].  Valid pooled positions are rows h*4+w, h,w<3.
    acc = None
    for h in range(3):
        for w in range(3):
            r = h * 4 + w
            lhs = p3[r:r + 1, :].astype(wl_ref.dtype)                 # (1, 128)
            d = jnp.dot(lhs, wl_ref[h * 3 + w],
                        preferred_element_type=jnp.float32)           # (1, 10)
            acc = d if acc is None else acc + d
    logits = acc + bl_ref[...]                                        # (1, 10)

    # softmax(dim=1)
    m = jnp.max(logits, axis=-1, keepdims=True)
    e = jnp.exp(logits - m)
    out_ref[...] = e / jnp.sum(e, axis=-1, keepdims=True)


# ----------------------------- parameter prep ------------------------------

def init_params(key):
    """PyTorch-layout parameters (Conv2d: (Cout,Cin,kh,kw); Linear: (out,in))."""
    ks = jax.random.split(key, 8)

    def u(k, shape, fan_in):
        bound = 1.0 / (fan_in ** 0.5)
        return jax.random.uniform(k, shape, jnp.float32, -bound, bound)

    return {
        "w1": u(ks[0], (32, 3, 2, 2), 3 * 4),   "b1": u(ks[1], (32,), 3 * 4),
        "w2": u(ks[2], (64, 32, 2, 2), 32 * 4), "b2": u(ks[3], (64,), 32 * 4),
        "w4": u(ks[4], (100, 64, 2, 2), 64 * 4), "b4": u(ks[5], (100,), 64 * 4),
        "wl": u(ks[6], (10, 900), 900),         "bl": u(ks[7], (10,), 900),
    }


def prepare_params(p):
    """Permute / zero-pad / cast PyTorch params into the kernel layout."""
    def conv_w(w_pt, cin_pad):
        cout, cin = w_pt.shape[0], w_pt.shape[1]
        wk = jnp.transpose(w_pt, (2, 3, 1, 0)).reshape(4, cin, cout)  # (dh*2+dw,ci,co)
        wk = jnp.pad(wk, ((0, 0), (0, cin_pad - cin), (0, _CPAD - cout)))
        return wk.astype(_MXU_DTYPE)

    def conv_b(b_pt):
        return jnp.pad(b_pt, (0, _CPAD - b_pt.shape[0])).reshape(1, _CPAD) \
                  .astype(jnp.float32)

    wl = p["wl"].reshape(10, 100, 3, 3)                    # (n, c, h, w)
    wlk = jnp.transpose(wl, (2, 3, 1, 0)).reshape(9, 100, 10)  # (h*3+w, c, n)
    wlk = jnp.pad(wlk, ((0, 0), (0, _CPAD - 100), (0, 0))).astype(_MXU_DTYPE)

    return {
        "w1": conv_w(p["w1"], 3),     "b1": conv_b(p["b1"]),
        "w2": conv_w(p["w2"], _CPAD), "b2": conv_b(p["b2"]),
        "w3": conv_w(p["w4"], _CPAD), "b3": conv_b(p["b4"]),
        "wl": wlk,                    "bl": p["bl"].reshape(1, 10).astype(jnp.float32),
    }


# --------------------------------- forward ---------------------------------

def cnn_forward(kparams, x_nchw):
    B = x_nchw.shape[0]
    assert x_nchw.shape[1:] == (3, 32, 32), x_nchw.shape
    # Only XLA glue: NCHW -> flat (B, H*W, C) rows for the kernel.
    x_rows = jnp.transpose(x_nchw, (0, 2, 3, 1)).reshape(B, 32 * 32, 3)

    out = pl.pallas_call(
        _cnn_fused_kernel,
        out_shape=jax.ShapeDtypeStruct((B, 1, 10), jnp.float32),
        grid_spec=pltpu.PrefetchScalarGridSpec(
            num_scalar_prefetch=0,
            grid=(B,),
            in_specs=[
                pl.BlockSpec((None, 32 * 32, 3), lambda b: (b, 0, 0)),   # x
                pl.BlockSpec((4, 3, _CPAD),      lambda b: (0, 0, 0)),   # w1
                pl.BlockSpec((1, _CPAD),         lambda b: (0, 0)),      # b1
                pl.BlockSpec((4, _CPAD, _CPAD),  lambda b: (0, 0, 0)),   # w2
                pl.BlockSpec((1, _CPAD),         lambda b: (0, 0)),      # b2
                pl.BlockSpec((4, _CPAD, _CPAD),  lambda b: (0, 0, 0)),   # w3
                pl.BlockSpec((1, _CPAD),         lambda b: (0, 0)),      # b3
                pl.BlockSpec((9, _CPAD, 10),     lambda b: (0, 0, 0)),   # wl
                pl.BlockSpec((1, 10),            lambda b: (0, 0)),      # bl
            ],
            out_specs=pl.BlockSpec((None, 1, 10), lambda b: (b, 0, 0)),
            scratch_shapes=[
                pltpu.VMEM((_HP[0] * _WS[0] // 2, _CPAD), jnp.float32),  # pooled1
                pltpu.VMEM((_HP[1] * _WS[1] // 2, _CPAD), jnp.float32),  # pooled2
            ],
        ),
        compiler_params=pltpu.CompilerParams(
            dimension_semantics=("parallel",)),
    )(x_rows, kparams["w1"], kparams["b1"], kparams["w2"], kparams["b2"],
      kparams["w3"], kparams["b3"], kparams["wl"], kparams["bl"])

    return out.reshape(B, 10)


# --------------------------- pure-JAX reference -----------------------------

def reference_forward(params, x_nchw):
    x = jnp.transpose(x_nchw, (0, 2, 3, 1)).astype(jnp.float32)   # NHWC

    def conv_relu(x, w_pt, b_pt):
        _, H, W, _ = x.shape
        acc = None
        for dh in range(2):
            for dw in range(2):
                xs = x[:, dh:dh + H - 1, dw:dw + W - 1, :]
                t = jnp.einsum("bhwc,oc->bhwo", xs, w_pt[:, :, dh, dw])
                acc = t if acc is None else acc + t
        return jax.nn.relu(acc + b_pt)

    def pool(x):
        B, H, W, C = x.shape
        Ho, Wo = H // 2, W // 2
        xr = x[:, :2 * Ho, :2 * Wo, :].reshape(B, Ho, 2, Wo, 2, C)
        return jnp.max(xr, axis=(2, 4))

    x = pool(conv_relu(x, params["w1"], params["b1"]))
    x = pool(conv_relu(x, params["w2"], params["b2"]))
    x = pool(conv_relu(x, params["w4"], params["b4"]))
    B = x.shape[0]
    xf = jnp.transpose(x, (0, 3, 1, 2)).reshape(B, -1)      # PyTorch NCHW flatten
    logits = xf @ params["wl"].T + params["bl"]
    return jax.nn.softmax(logits, axis=-1)


# ----------------------------------- main -----------------------------------

if __name__ == "__main__":
    key = jax.random.PRNGKey(0)
    k_x, k_p = jax.random.split(key)
    x = jax.random.normal(k_x, (2, 3, 32, 32), jnp.float32)   # NCHW input
    params = init_params(k_p)
    kparams = prepare_params(params)

    out = jax.block_until_ready(jax.jit(cnn_forward)(kparams, x))
    ref = jax.block_until_ready(jax.jit(reference_forward)(params, x))

    assert out.shape == (2, 10), out.shape
    assert bool(jnp.all(jnp.isfinite(out)))
    assert bool(jnp.allclose(jnp.sum(out, axis=-1), 1.0, atol=1e-5))
    err = float(jnp.max(jnp.abs(out - ref)))
    assert err < 3e-2, f"mismatch vs reference: {err}"
    print("KERNEL_OK")
</pallas_src>

<mosaic_0001>
module attributes {stable_mosaic.version = 11 : i64} {
  func.func @_cnn_fused_kernel(%arg0: i32, %arg1: memref<1x1024x3xf32, #tpu.memory_space<vmem>>, %arg2: memref<4x3x128xbf16, #tpu.memory_space<vmem>>, %arg3: memref<1x128xf32, #tpu.memory_space<vmem>>, %arg4: memref<4x128x128xbf16, #tpu.memory_space<vmem>>, %arg5: memref<1x128xf32, #tpu.memory_space<vmem>>, %arg6: memref<4x128x128xbf16, #tpu.memory_space<vmem>>, %arg7: memref<1x128xf32, #tpu.memory_space<vmem>>, %arg8: memref<9x128x10xbf16, #tpu.memory_space<vmem>>, %arg9: memref<1x10xf32, #tpu.memory_space<vmem>>, %arg10: memref<1x1x10xf32, #tpu.memory_space<vmem>>, %arg11: memref<240x128xf32, #tpu.memory_space<vmem>>, %arg12: memref<56x128xf32, #tpu.memory_space<vmem>>) attributes {dimension_semantics = [#tpu.dimension_semantics<parallel>], iteration_bounds = array<i64: 2>, scalar_prefetch = 0 : i64, scratch_operands = 2 : i64, tpu.core_type = #tpu.core_type<tc>, window_params = [{transform_indices = @transform_0, window_bounds = array<i64: 1, 1024, 3>}, {pipeline_mode = #tpu.pipeline_mode<synchronous>, transform_indices = @transform_1, window_bounds = array<i64: 4, 3, 128>}, {pipeline_mode = #tpu.pipeline_mode<synchronous>, transform_indices = @transform_2, window_bounds = array<i64: 1, 128>}, {pipeline_mode = #tpu.pipeline_mode<synchronous>, transform_indices = @transform_3, window_bounds = array<i64: 4, 128, 128>}, {pipeline_mode = #tpu.pipeline_mode<synchronous>, transform_indices = @transform_4, window_bounds = array<i64: 1, 128>}, {pipeline_mode = #tpu.pipeline_mode<synchronous>, transform_indices = @transform_5, window_bounds = array<i64: 4, 128, 128>}, {pipeline_mode = #tpu.pipeline_mode<synchronous>, transform_indices = @transform_6, window_bounds = array<i64: 1, 128>}, {pipeline_mode = #tpu.pipeline_mode<synchronous>, transform_indices = @transform_7, window_bounds = array<i64: 9, 128, 10>}, {pipeline_mode = #tpu.pipeline_mode<synchronous>, transform_indices = @transform_8, window_bounds = array<i64: 1, 10>}, {transform_indices = @transform_9, window_bounds = array<i64: 1, 1, 10>}]} {
    %c0 = arith.constant 0 : index
    %c0_0 = arith.constant 0 : index
    %c0_1 = arith.constant 0 : index
    %0 = tpu.strided_load %arg1[%c0, %c0_0, %c0_1] {strides = array<i32: 1, 2, 1>} : memref<1x1024x3xf32, #tpu.memory_space<vmem>>, vector<1x240x3xf32>
    %1 = vector.shape_cast %0 : vector<1x240x3xf32> to vector<240x3xf32>
    %2 = arith.truncf %1 : vector<240x3xf32> to vector<240x3xbf16>
    %c0_2 = arith.constant 0 : index
    %c1 = arith.constant 1 : index
    %c0_3 = arith.constant 0 : index
    %3 = tpu.strided_load %arg1[%c0_2, %c1, %c0_3] {strides = array<i32: 1, 2, 1>} : memref<1x1024x3xf32, #tpu.memory_space<vmem>>, vector<1x240x3xf32>
    %4 = vector.shape_cast %3 : vector<1x240x3xf32> to vector<240x3xf32>
    %5 = arith.truncf %4 : vector<240x3xf32> to vector<240x3xbf16>
    %c0_4 = arith.constant 0 : index
    %c2 = arith.constant 2 : index
    %c0_5 = arith.constant 0 : index
    %6 = tpu.strided_load %arg1[%c0_4, %c2, %c0_5] {strides = array<i32: 1, 2, 1>} : memref<1x1024x3xf32, #tpu.memory_space<vmem>>, vector<1x240x3xf32>
    %7 = vector.shape_cast %6 : vector<1x240x3xf32> to vector<240x3xf32>
    %8 = arith.truncf %7 : vector<240x3xf32> to vector<240x3xbf16>
    %c0_6 = arith.constant 0 : index
    %c32 = arith.constant 32 : index
    %c0_7 = arith.constant 0 : index
    %9 = tpu.strided_load %arg1[%c0_6, %c32, %c0_7] {strides = array<i32: 1, 2, 1>} : memref<1x1024x3xf32, #tpu.memory_space<vmem>>, vector<1x240x3xf32>
    %10 = vector.shape_cast %9 : vector<1x240x3xf32> to vector<240x3xf32>
    %11 = arith.truncf %10 : vector<240x3xf32> to vector<240x3xbf16>
    %c0_8 = arith.constant 0 : index
    %c33 = arith.constant 33 : index
    %c0_9 = arith.constant 0 : index
    %12 = tpu.strided_load %arg1[%c0_8, %c33, %c0_9] {strides = array<i32: 1, 2, 1>} : memref<1x1024x3xf32, #tpu.memory_space<vmem>>, vector<1x240x3xf32>
    %13 = vector.shape_cast %12 : vector<1x240x3xf32> to vector<240x3xf32>
    %14 = arith.truncf %13 : vector<240x3xf32> to vector<240x3xbf16>
    %c0_10 = arith.constant 0 : index
    %c34 = arith.constant 34 : index
    %c0_11 = arith.constant 0 : index
    %15 = tpu.strided_load %arg1[%c0_10, %c34, %c0_11] {strides = array<i32: 1, 2, 1>} : memref<1x1024x3xf32, #tpu.memory_space<vmem>>, vector<1x240x3xf32>
    %16 = vector.shape_cast %15 : vector<1x240x3xf32> to vector<240x3xf32>
    %17 = arith.truncf %16 : vector<240x3xf32> to vector<240x3xbf16>
    %c0_12 = arith.constant 0 : index
    %c64 = arith.constant 64 : index
    %c0_13 = arith.constant 0 : index
    %18 = tpu.strided_load %arg1[%c0_12, %c64, %c0_13] {strides = array<i32: 1, 2, 1>} : memref<1x1024x3xf32, #tpu.memory_space<vmem>>, vector<1x240x3xf32>
    %19 = vector.shape_cast %18 : vector<1x240x3xf32> to vector<240x3xf32>
    %20 = arith.truncf %19 : vector<240x3xf32> to vector<240x3xbf16>
    %c0_14 = arith.constant 0 : index
    %c65 = arith.constant 65 : index
    %c0_15 = arith.constant 0 : index
    %21 = tpu.strided_load %arg1[%c0_14, %c65, %c0_15] {strides = array<i32: 1, 2, 1>} : memref<1x1024x3xf32, #tpu.memory_space<vmem>>, vector<1x240x3xf32>
    %22 = vector.shape_cast %21 : vector<1x240x3xf32> to vector<240x3xf32>
    %23 = arith.truncf %22 : vector<240x3xf32> to vector<240x3xbf16>
    %c0_16 = arith.constant 0 : index
    %c66 = arith.constant 66 : index
    %c0_17 = arith.constant 0 : index
    %24 = tpu.strided_load %arg1[%c0_16, %c66, %c0_17] {strides = array<i32: 1, 2, 1>} : memref<1x1024x3xf32, #tpu.memory_space<vmem>>, vector<1x240x3xf32>
    %25 = vector.shape_cast %24 : vector<1x240x3xf32> to vector<240x3xf32>
    %26 = arith.truncf %25 : vector<240x3xf32> to vector<240x3xbf16>
    %c0_18 = arith.constant 0 : index
    %c0_19 = arith.constant 0 : index
    %c0_20 = arith.constant 0 : index
    %27 = vector.load %arg2[%c0_18, %c0_19, %c0_20] : memref<4x3x128xbf16, #tpu.memory_space<vmem>>, vector<1x3x128xbf16>
    %28 = vector.shape_cast %27 : vector<1x3x128xbf16> to vector<3x128xbf16>
    %c1_21 = arith.constant 1 : index
    %c0_22 = arith.constant 0 : index
    %c0_23 = arith.constant 0 : index
    %29 = vector.load %arg2[%c1_21, %c0_22, %c0_23] : memref<4x3x128xbf16, #tpu.memory_space<vmem>>, vector<1x3x128xbf16>
    %30 = vector.shape_cast %29 : vector<1x3x128xbf16> to vector<3x128xbf16>
    %c2_24 = arith.constant 2 : index
    %c0_25 = arith.constant 0 : index
    %c0_26 = arith.constant 0 : index
    %31 = vector.load %arg2[%c2_24, %c0_25, %c0_26] : memref<4x3x128xbf16, #tpu.memory_space<vmem>>, vector<1x3x128xbf16>
    %32 = vector.shape_cast %31 : vector<1x3x128xbf16> to vector<3x128xbf16>
    %c3 = arith.constant 3 : index
    %c0_27 = arith.constant 0 : index
    %c0_28 = arith.constant 0 : index
    %33 = vector.load %arg2[%c3, %c0_27, %c0_28] : memref<4x3x128xbf16, #tpu.memory_space<vmem>>, vector<1x3x128xbf16>
    %34 = vector.shape_cast %33 : vector<1x3x128xbf16> to vector<3x128xbf16>
    %c0_29 = arith.constant 0 : index
    %c0_30 = arith.constant 0 : index
    %35 = vector.load %arg3[%c0_29, %c0_30] : memref<1x128xf32, #tpu.memory_space<vmem>>, vector<1x128xf32>
    %cst = arith.constant dense<0.000000e+00> : vector<240x128xf32>
    %36 = tpu.matmul %2, %28, %cst {dimension_numbers = #tpu.dot_dimension_numbers<[1], [0], [0], [1], [0, 0, 1, 1], [], []>} : vector<240x3xbf16>, vector<3x128xbf16>, vector<240x128xf32> -> vector<240x128xf32>
    %cst_31 = arith.constant dense<0.000000e+00> : vector<240x128xf32>
    %37 = tpu.matmul %5, %30, %cst_31 {dimension_numbers = #tpu.dot_dimension_numbers<[1], [0], [0], [1], [0, 0, 1, 1], [], []>} : vector<240x3xbf16>, vector<3x128xbf16>, vector<240x128xf32> -> vector<240x128xf32>
    %38 = arith.addf %36, %37 : vector<240x128xf32>
    %cst_32 = arith.constant dense<0.000000e+00> : vector<240x128xf32>
    %39 = tpu.matmul %11, %32, %cst_32 {dimension_numbers = #tpu.dot_dimension_numbers<[1], [0], [0], [1], [0, 0, 1, 1], [], []>} : vector<240x3xbf16>, vector<3x128xbf16>, vector<240x128xf32> -> vector<240x128xf32>
    %40 = arith.addf %38, %39 : vector<240x128xf32>
    %cst_33 = arith.constant dense<0.000000e+00> : vector<240x128xf32>
    %41 = tpu.matmul %14, %34, %cst_33 {dimension_numbers = #tpu.dot_dimension_numbers<[1], [0], [0], [1], [0, 0, 1, 1], [], []>} : vector<240x3xbf16>, vector<3x128xbf16>, vector<240x128xf32> -> vector<240x128xf32>
    %42 = arith.addf %40, %41 : vector<240x128xf32>
    %43 = vector.broadcast %35 : vector<1x128xf32> to vector<240x128xf32>
    %44 = arith.addf %42, %43 : vector<240x128xf32>
    %cst_34 = arith.constant 0.000000e+00 : f32
    %45 = vector.broadcast %cst_34 : f32 to vector<240x128xf32>
    %46 = arith.maximumf %44, %45 : vector<240x128xf32>
    %cst_35 = arith.constant dense<0.000000e+00> : vector<240x128xf32>
    %47 = tpu.matmul %5, %28, %cst_35 {dimension_numbers = #tpu.dot_dimension_numbers<[1], [0], [0], [1], [0, 0, 1, 1], [], []>} : vector<240x3xbf16>, vector<3x128xbf16>, vector<240x128xf32> -> vector<240x128xf32>
    %cst_36 = arith.constant dense<0.000000e+00> : vector<240x128xf32>
    %48 = tpu.matmul %8, %30, %cst_36 {dimension_numbers = #tpu.dot_dimension_numbers<[1], [0], [0], [1], [0, 0, 1, 1], [], []>} : vector<240x3xbf16>, vector<3x128xbf16>, vector<240x128xf32> -> vector<240x128xf32>
    %49 = arith.addf %47, %48 : vector<240x128xf32>
    %cst_37 = arith.constant dense<0.000000e+00> : vector<240x128xf32>
    %50 = tpu.matmul %14, %32, %cst_37 {dimension_numbers = #tpu.dot_dimension_numbers<[1], [0], [0], [1], [0, 0, 1, 1], [], []>} : vector<240x3xbf16>, vector<3x128xbf16>, vector<240x128xf32> -> vector<240x128xf32>
    %51 = arith.addf %49, %50 : vector<240x128xf32>
    %cst_38 = arith.constant dense<0.000000e+00> : vector<240x128xf32>
    %52 = tpu.matmul %17, %34, %cst_38 {dimension_numbers = #tpu.dot_dimension_numbers<[1], [0], [0], [1], [0, 0, 1, 1], [], []>} : vector<240x3xbf16>, vector<3x128xbf16>, vector<240x128xf32> -> vector<240x128xf32>
    %53 = arith.addf %51, %52 : vector<240x128xf32>
    %54 = vector.broadcast %35 : vector<1x128xf32> to vector<240x128xf32>
    %55 = arith.addf %53, %54 : vector<240x128xf32>
    %cst_39 = arith.constant 0.000000e+00 : f32
    %56 = vector.broadcast %cst_39 : f32 to vector<240x128xf32>
    %57 = arith.maximumf %55, %56 : vector<240x128xf32>
    %cst_40 = arith.constant dense<0.000000e+00> : vector<240x128xf32>
    %58 = tpu.matmul %11, %28, %cst_40 {dimension_numbers = #tpu.dot_dimension_numbers<[1], [0], [0], [1], [0, 0, 1, 1], [], []>} : vector<240x3xbf16>, vector<3x128xbf16>, vector<240x128xf32> -> vector<240x128xf32>
    %cst_41 = arith.constant dense<0.000000e+00> : vector<240x128xf32>
    %59 = tpu.matmul %14, %30, %cst_41 {dimension_numbers = #tpu.dot_dimension_numbers<[1], [0], [0], [1], [0, 0, 1, 1], [], []>} : vector<240x3xbf16>, vector<3x128xbf16>, vector<240x128xf32> -> vector<240x128xf32>
    %60 = arith.addf %58, %59 : vector<240x128xf32>
    %cst_42 = arith.constant dense<0.000000e+00> : vector<240x128xf32>
    %61 = tpu.matmul %20, %32, %cst_42 {dimension_numbers = #tpu.dot_dimension_numbers<[1], [0], [0], [1], [0, 0, 1, 1], [], []>} : vector<240x3xbf16>, vector<3x128xbf16>, vector<240x128xf32> -> vector<240x128xf32>
    %62 = arith.addf %60, %61 : vector<240x128xf32>
    %cst_43 = arith.constant dense<0.000000e+00> : vector<240x128xf32>
    %63 = tpu.matmul %23, %34, %cst_43 {dimension_numbers = #tpu.dot_dimension_numbers<[1], [0], [0], [1], [0, 0, 1, 1], [], []>} : vector<240x3xbf16>, vector<3x128xbf16>, vector<240x128xf32> -> vector<240x128xf32>
    %64 = arith.addf %62, %63 : vector<240x128xf32>
    %65 = vector.broadcast %35 : vector<1x128xf32> to vector<240x128xf32>
    %66 = arith.addf %64, %65 : vector<240x128xf32>
    %cst_44 = arith.constant 0.000000e+00 : f32
    %67 = vector.broadcast %cst_44 : f32 to vector<240x128xf32>
    %68 = arith.maximumf %66, %67 : vector<240x128xf32>
    %cst_45 = arith.constant dense<0.000000e+00> : vector<240x128xf32>
    %69 = tpu.matmul %14, %28, %cst_45 {dimension_numbers = #tpu.dot_dimension_numbers<[1], [0], [0], [1], [0, 0, 1, 1], [], []>} : vector<240x3xbf16>, vector<3x128xbf16>, vector<240x128xf32> -> vector<240x128xf32>
    %cst_46 = arith.constant dense<0.000000e+00> : vector<240x128xf32>
    %70 = tpu.matmul %17, %30, %cst_46 {dimension_numbers = #tpu.dot_dimension_numbers<[1], [0], [0], [1], [0, 0, 1, 1], [], []>} : vector<240x3xbf16>, vector<3x128xbf16>, vector<240x128xf32> -> vector<240x128xf32>
    %71 = arith.addf %69, %70 : vector<240x128xf32>
    %cst_47 = arith.constant dense<0.000000e+00> : vector<240x128xf32>
    %72 = tpu.matmul %23, %32, %cst_47 {dimension_numbers = #tpu.dot_dimension_numbers<[1], [0], [0], [1], [0, 0, 1, 1], [], []>} : vector<240x3xbf16>, vector<3x128xbf16>, vector<240x128xf32> -> vector<240x128xf32>
    %73 = arith.addf %71, %72 : vector<240x128xf32>
    %cst_48 = arith.constant dense<0.000000e+00> : vector<240x128xf32>
    %74 = tpu.matmul %26, %34, %cst_48 {dimension_numbers = #tpu.dot_dimension_numbers<[1], [0], [0], [1], [0, 0, 1, 1], [], []>} : vector<240x3xbf16>, vector<3x128xbf16>, vector<240x128xf32> -> vector<240x128xf32>
    %75 = arith.addf %73, %74 : vector<240x128xf32>
    %76 = vector.broadcast %35 : vector<1x128xf32> to vector<240x128xf32>
    %77 = arith.addf %75, %76 : vector<240x128xf32>
    %cst_49 = arith.constant 0.000000e+00 : f32
    %78 = vector.broadcast %cst_49 : f32 to vector<240x128xf32>
    %79 = arith.maximumf %77, %78 : vector<240x128xf32>
    %80 = arith.maximumf %46, %57 : vector<240x128xf32>
    %81 = arith.maximumf %68, %79 : vector<240x128xf32>
    %82 = arith.maximumf %80, %81 : vector<240x128xf32>
    %c0_50 = arith.constant 0 : index
    %c0_51 = arith.constant 0 : index
    %83 = vector.load %arg11[%c0_50, %c0_51] : memref<240x128xf32, #tpu.memory_space<vmem>>, vector<240x128xf32>
    tpu.vector_store %arg11[%c0_50, %c0_51], %82 {strides = array<i32>} : memref<240x128xf32, #tpu.memory_space<vmem>>, vector<240x128xf32>,
    %c0_52 = arith.constant 0 : index
    %c0_53 = arith.constant 0 : index
    %84 = tpu.strided_load %arg11[%c0_52, %c0_53] {strides = array<i32: 2, 1>} : memref<240x128xf32, #tpu.memory_space<vmem>>, vector<56x128xf32>
    %85 = arith.truncf %84 : vector<56x128xf32> to vector<56x128xbf16>
    %c1_54 = arith.constant 1 : index
    %c0_55 = arith.constant 0 : index
    %86 = tpu.strided_load %arg11[%c1_54, %c0_55] {strides = array<i32: 2, 1>} : memref<240x128xf32, #tpu.memory_space<vmem>>, vector<56x128xf32>
    %87 = arith.truncf %86 : vector<56x128xf32> to vector<56x128xbf16>
    %c2_56 = arith.constant 2 : index
    %c0_57 = arith.constant 0 : index
    %88 = tpu.strided_load %arg11[%c2_56, %c0_57] {strides = array<i32: 2, 1>} : memref<240x128xf32, #tpu.memory_space<vmem>>, vector<56x128xf32>
    %89 = arith.truncf %88 : vector<56x128xf32> to vector<56x128xbf16>
    %c16 = arith.constant 16 : index
    %c0_58 = arith.constant 0 : index
    %90 = tpu.strided_load %arg11[%c16, %c0_58] {strides = array<i32: 2, 1>} : memref<240x128xf32, #tpu.memory_space<vmem>>, vector<56x128xf32>
    %91 = arith.truncf %90 : vector<56x128xf32> to vector<56x128xbf16>
    %c17 = arith.constant 17 : index
    %c0_59 = arith.constant 0 : index
    %92 = tpu.strided_load %arg11[%c17, %c0_59] {strides = array<i32: 2, 1>} : memref<240x128xf32, #tpu.memory_space<vmem>>, vector<56x128xf32>
    %93 = arith.truncf %92 : vector<56x128xf32> to vector<56x128xbf16>
    %c18 = arith.constant 18 : index
    %c0_60 = arith.constant 0 : index
    %94 = tpu.strided_load %arg11[%c18, %c0_60] {strides = array<i32: 2, 1>} : memref<240x128xf32, #tpu.memory_space<vmem>>, vector<56x128xf32>
    %95 = arith.truncf %94 : vector<56x128xf32> to vector<56x128xbf16>
    %c32_61 = arith.constant 32 : index
    %c0_62 = arith.constant 0 : index
    %96 = tpu.strided_load %arg11[%c32_61, %c0_62] {strides = array<i32: 2, 1>} : memref<240x128xf32, #tpu.memory_space<vmem>>, vector<56x128xf32>
    %97 = arith.truncf %96 : vector<56x128xf32> to vector<56x128xbf16>
    %c33_63 = arith.constant 33 : index
    %c0_64 = arith.constant 0 : index
    %98 = tpu.strided_load %arg11[%c33_63, %c0_64] {strides = array<i32: 2, 1>} : memref<240x128xf32, #tpu.memory_space<vmem>>, vector<56x128xf32>
    %99 = arith.truncf %98 : vector<56x128xf32> to vector<56x128xbf16>
    %c34_65 = arith.constant 34 : index
    %c0_66 = arith.constant 0 : index
    %100 = tpu.strided_load %arg11[%c34_65, %c0_66] {strides = array<i32: 2, 1>} : memref<240x128xf32, #tpu.memory_space<vmem>>, vector<56x128xf32>
    %101 = arith.truncf %100 : vector<56x128xf32> to vector<56x128xbf16>
    %c0_67 = arith.constant 0 : index
    %c0_68 = arith.constant 0 : index
    %c0_69 = arith.constant 0 : index
    %102 = vector.load %arg4[%c0_67, %c0_68, %c0_69] : memref<4x128x128xbf16, #tpu.memory_space<vmem>>, vector<1x128x128xbf16>
    %103 = vector.shape_cast %102 : vector<1x128x128xbf16> to vector<128x128xbf16>
    %c1_70 = arith.constant 1 : index
    %c0_71 = arith.constant 0 : index
    %c0_72 = arith.constant 0 : index
    %104 = vector.load %arg4[%c1_70, %c0_71, %c0_72] : memref<4x128x128xbf16, #tpu.memory_space<vmem>>, vector<1x128x128xbf16>
    %105 = vector.shape_cast %104 : vector<1x128x128xbf16> to vector<128x128xbf16>
    %c2_73 = arith.constant 2 : index
    %c0_74 = arith.constant 0 : index
    %c0_75 = arith.constant 0 : index
    %106 = vector.load %arg4[%c2_73, %c0_74, %c0_75] : memref<4x128x128xbf16, #tpu.memory_space<vmem>>, vector<1x128x128xbf16>
    %107 = vector.shape_cast %106 : vector<1x128x128xbf16> to vector<128x128xbf16>
    %c3_76 = arith.constant 3 : index
    %c0_77 = arith.constant 0 : index
    %c0_78 = arith.constant 0 : index
    %108 = vector.load %arg4[%c3_76, %c0_77, %c0_78] : memref<4x128x128xbf16, #tpu.memory_space<vmem>>, vector<1x128x128xbf16>
    %109 = vector.shape_cast %108 : vector<1x128x128xbf16> to vector<128x128xbf16>
    %c0_79 = arith.constant 0 : index
    %c0_80 = arith.constant 0 : index
    %110 = vector.load %arg5[%c0_79, %c0_80] : memref<1x128xf32, #tpu.memory_space<vmem>>, vector<1x128xf32>
    %cst_81 = arith.constant dense<0.000000e+00> : vector<56x128xf32>
    %111 = tpu.matmul %85, %103, %cst_81 {dimension_numbers = #tpu.dot_dimension_numbers<[1], [0], [0], [1], [0, 0, 1, 1], [], []>} : vector<56x128xbf16>, vector<128x128xbf16>, vector<56x128xf32> -> vector<56x128xf32>
    %cst_82 = arith.constant dense<0.000000e+00> : vector<56x128xf32>
    %112 = tpu.matmul %87, %105, %cst_82 {dimension_numbers = #tpu.dot_dimension_numbers<[1], [0], [0], [1], [0, 0, 1, 1], [], []>} : vector<56x128xbf16>, vector<128x128xbf16>, vector<56x128xf32> -> vector<56x128xf32>
    %113 = arith.addf %111, %112 : vector<56x128xf32>
    %cst_83 = arith.constant dense<0.000000e+00> : vector<56x128xf32>
    %114 = tpu.matmul %91, %107, %cst_83 {dimension_numbers = #tpu.dot_dimension_numbers<[1], [0], [0], [1], [0, 0, 1, 1], [], []>} : vector<56x128xbf16>, vector<128x128xbf16>, vector<56x128xf32> -> vector<56x128xf32>
    %115 = arith.addf %113, %114 : vector<56x128xf32>
    %cst_84 = arith.constant dense<0.000000e+00> : vector<56x128xf32>
    %116 = tpu.matmul %93, %109, %cst_84 {dimension_numbers = #tpu.dot_dimension_numbers<[1], [0], [0], [1], [0, 0, 1, 1], [], []>} : vector<56x128xbf16>, vector<128x128xbf16>, vector<56x128xf32> -> vector<56x128xf32>
    %117 = arith.addf %115, %116 : vector<56x128xf32>
    %118 = vector.broadcast %110 : vector<1x128xf32> to vector<56x128xf32>
    %119 = arith.addf %117, %118 : vector<56x128xf32>
    %cst_85 = arith.constant 0.000000e+00 : f32
    %120 = vector.broadcast %cst_85 : f32 to vector<56x128xf32>
    %121 = arith.maximumf %119, %120 : vector<56x128xf32>
    %cst_86 = arith.constant dense<0.000000e+00> : vector<56x128xf32>
    %122 = tpu.matmul %87, %103, %cst_86 {dimension_numbers = #tpu.dot_dimension_numbers<[1], [0], [0], [1], [0, 0, 1, 1], [], []>} : vector<56x128xbf16>, vector<128x128xbf16>, vector<56x128xf32> -> vector<56x128xf32>
    %cst_87 = arith.constant dense<0.000000e+00> : vector<56x128xf32>
    %123 = tpu.matmul %89, %105, %cst_87 {dimension_numbers = #tpu.dot_dimension_numbers<[1], [0], [0], [1], [0, 0, 1, 1], [], []>} : vector<56x128xbf16>, vector<128x128xbf16>, vector<56x128xf32> -> vector<56x128xf32>
    %124 = arith.addf %122, %123 : vector<56x128xf32>
    %cst_88 = arith.constant dense<0.000000e+00> : vector<56x128xf32>
    %125 = tpu.matmul %93, %107, %cst_88 {dimension_numbers = #tpu.dot_dimension_numbers<[1], [0], [0], [1], [0, 0, 1, 1], [], []>} : vector<56x128xbf16>, vector<128x128xbf16>, vector<56x128xf32> -> vector<56x128xf32>
    %126 = arith.addf %124, %125 : vector<56x128xf32>
    %cst_89 = arith.constant dense<0.000000e+00> : vector<56x128xf32>
    %127 = tpu.matmul %95, %109, %cst_89 {dimension_numbers = #tpu.dot_dimension_numbers<[1], [0], [0], [1], [0, 0, 1, 1], [], []>} : vector<56x128xbf16>, vector<128x128xbf16>, vector<56x128xf32> -> vector<56x128xf32>
    %128 = arith.addf %126, %127 : vector<56x128xf32>
    %129 = vector.broadcast %110 : vector<1x128xf32> to vector<56x128xf32>
    %130 = arith.addf %128, %129 : vector<56x128xf32>
    %cst_90 = arith.constant 0.000000e+00 : f32
    %131 = vector.broadcast %cst_90 : f32 to vector<56x128xf32>
    %132 = arith.maximumf %130, %131 : vector<56x128xf32>
    %cst_91 = arith.constant dense<0.000000e+00> : vector<56x128xf32>
    %133 = tpu.matmul %91, %103, %cst_91 {dimension_numbers = #tpu.dot_dimension_numbers<[1], [0], [0], [1], [0, 0, 1, 1], [], []>} : vector<56x128xbf16>, vector<128x128xbf16>, vector<56x128xf32> -> vector<56x128xf32>
    %cst_92 = arith.constant dense<0.000000e+00> : vector<56x128xf32>
    %134 = tpu.matmul %93, %105, %cst_92 {dimension_numbers = #tpu.dot_dimension_numbers<[1], [0], [0], [1], [0, 0, 1, 1], [], []>} : vector<56x128xbf16>, vector<128x128xbf16>, vector<56x128xf32> -> vector<56x128xf32>
    %135 = arith.addf %133, %134 : vector<56x128xf32>
    %cst_93 = arith.constant dense<0.000000e+00> : vector<56x128xf32>
    %136 = tpu.matmul %97, %107, %cst_93 {dimension_numbers = #tpu.dot_dimension_numbers<[1], [0], [0], [1], [0, 0, 1, 1], [], []>} : vector<56x128xbf16>, vector<128x128xbf16>, vector<56x128xf32> -> vector<56x128xf32>
    %137 = arith.addf %135, %136 : vector<56x128xf32>
    %cst_94 = arith.constant dense<0.000000e+00> : vector<56x128xf32>
    %138 = tpu.matmul %99, %109, %cst_94 {dimension_numbers = #tpu.dot_dimension_numbers<[1], [0], [0], [1], [0, 0, 1, 1], [], []>} : vector<56x128xbf16>, vector<128x128xbf16>, vector<56x128xf32> -> vector<56x128xf32>
    %139 = arith.addf %137, %138 : vector<56x128xf32>
    %140 = vector.broadcast %110 : vector<1x128xf32> to vector<56x128xf32>
    %141 = arith.addf %139, %140 : vector<56x128xf32>
    %cst_95 = arith.constant 0.000000e+00 : f32
    %142 = vector.broadcast %cst_95 : f32 to vector<56x128xf32>
    %143 = arith.maximumf %141, %142 : vector<56x128xf32>
    %cst_96 = arith.constant dense<0.000000e+00> : vector<56x128xf32>
    %144 = tpu.matmul %93, %103, %cst_96 {dimension_numbers = #tpu.dot_dimension_numbers<[1], [0], [0], [1], [0, 0, 1, 1], [], []>} : vector<56x128xbf16>, vector<128x128xbf16>, vector<56x128xf32> -> vector<56x128xf32>
    %cst_97 = arith.constant dense<0.000000e+00> : vector<56x128xf32>
    %145 = tpu.matmul %95, %105, %cst_97 {dimension_numbers = #tpu.dot_dimension_numbers<[1], [0], [0], [1], [0, 0, 1, 1], [], []>} : vector<56x128xbf16>, vector<128x128xbf16>, vector<56x128xf32> -> vector<56x128xf32>
    %146 = arith.addf %144, %145 : vector<56x128xf32>
    %cst_98 = arith.constant dense<0.000000e+00> : vector<56x128xf32>
    %147 = tpu.matmul %99, %107, %cst_98 {dimension_numbers = #tpu.dot_dimension_numbers<[1], [0], [0], [1], [0, 0, 1, 1], [], []>} : vector<56x128xbf16>, vector<128x128xbf16>, vector<56x128xf32> -> vector<56x128xf32>
    %148 = arith.addf %146, %147 : vector<56x128xf32>
    %cst_99 = arith.constant dense<0.000000e+00> : vector<56x128xf32>
    %149 = tpu.matmul %101, %109, %cst_99 {dimension_numbers = #tpu.dot_dimension_numbers<[1], [0], [0], [1], [0, 0, 1, 1], [], []>} : vector<56x128xbf16>, vector<128x128xbf16>, vector<56x128xf32> -> vector<56x128xf32>
    %150 = arith.addf %148, %149 : vector<56x128xf32>
    %151 = vector.broadcast %110 : vector<1x128xf32> to vector<56x128xf32>
    %152 = arith.addf %150, %151 : vector<56x128xf32>
    %cst_100 = arith.constant 0.000000e+00 : f32
    %153 = vector.broadcast %cst_100 : f32 to vector<56x128xf32>
    %154 = arith.maximumf %152, %153 : vector<56x128xf32>
    %155 = arith.maximumf %121, %132 : vector<56x128xf32>
    %156 = arith.maximumf %143, %154 : vector<56x128xf32>
    %157 = arith.maximumf %155, %156 : vector<56x128xf32>
    %c0_101 = arith.constant 0 : index
    %c0_102 = arith.constant 0 : index
    %158 = vector.load %arg12[%c0_101, %c0_102] : memref<56x128xf32, #tpu.memory_space<vmem>>, vector<56x128xf32>
    tpu.vector_store %arg12[%c0_101, %c0_102], %157 {strides = array<i32>} : memref<56x128xf32, #tpu.memory_space<vmem>>, vector<56x128xf32>,
    %c0_103 = arith.constant 0 : index
    %c0_104 = arith.constant 0 : index
    %159 = tpu.strided_load %arg12[%c0_103, %c0_104] {strides = array<i32: 2, 1>} : memref<56x128xf32, #tpu.memory_space<vmem>>, vector<12x128xf32>
    %160 = arith.truncf %159 : vector<12x128xf32> to vector<12x128xbf16>
    %c1_105 = arith.constant 1 : index
    %c0_106 = arith.constant 0 : index
    %161 = tpu.strided_load %arg12[%c1_105, %c0_106] {strides = array<i32: 2, 1>} : memref<56x128xf32, #tpu.memory_space<vmem>>, vector<12x128xf32>
    %162 = arith.truncf %161 : vector<12x128xf32> to vector<12x128xbf16>
    %c2_107 = arith.constant 2 : index
    %c0_108 = arith.constant 0 : index
    %163 = tpu.strided_load %arg12[%c2_107, %c0_108] {strides = array<i32: 2, 1>} : memref<56x128xf32, #tpu.memory_space<vmem>>, vector<12x128xf32>
    %164 = arith.truncf %163 : vector<12x128xf32> to vector<12x128xbf16>
    %c8 = arith.constant 8 : index
    %c0_109 = arith.constant 0 : index
    %165 = tpu.strided_load %arg12[%c8, %c0_109] {strides = array<i32: 2, 1>} : memref<56x128xf32, #tpu.memory_space<vmem>>, vector<12x128xf32>
    %166 = arith.truncf %165 : vector<12x128xf32> to vector<12x128xbf16>
    %c9 = arith.constant 9 : index
    %c0_110 = arith.constant 0 : index
    %167 = tpu.strided_load %arg12[%c9, %c0_110] {strides = array<i32: 2, 1>} : memref<56x128xf32, #tpu.memory_space<vmem>>, vector<12x128xf32>
    %168 = arith.truncf %167 : vector<12x128xf32> to vector<12x128xbf16>
    %c10 = arith.constant 10 : index
    %c0_111 = arith.constant 0 : index
    %169 = tpu.strided_load %arg12[%c10, %c0_111] {strides = array<i32: 2, 1>} : memref<56x128xf32, #tpu.memory_space<vmem>>, vector<12x128xf32>
    %170 = arith.truncf %169 : vector<12x128xf32> to vector<12x128xbf16>
    %c16_112 = arith.constant 16 : index
    %c0_113 = arith.constant 0 : index
    %171 = tpu.strided_load %arg12[%c16_112, %c0_113] {strides = array<i32: 2, 1>} : memref<56x128xf32, #tpu.memory_space<vmem>>, vector<12x128xf32>
    %172 = arith.truncf %171 : vector<12x128xf32> to vector<12x128xbf16>
    %c17_114 = arith.constant 17 : index
    %c0_115 = arith.constant 0 : index
    %173 = tpu.strided_load %arg12[%c17_114, %c0_115] {strides = array<i32: 2, 1>} : memref<56x128xf32, #tpu.memory_space<vmem>>, vector<12x128xf32>
    %174 = arith.truncf %173 : vector<12x128xf32> to vector<12x128xbf16>
    %c18_116 = arith.constant 18 : index
    %c0_117 = arith.constant 0 : index
    %175 = tpu.strided_load %arg12[%c18_116, %c0_117] {strides = array<i32: 2, 1>} : memref<56x128xf32, #tpu.memory_space<vmem>>, vector<12x128xf32>
    %176 = arith.truncf %175 : vector<12x128xf32> to vector<12x128xbf16>
    %c0_118 = arith.constant 0 : index
    %c0_119 = arith.constant 0 : index
    %c0_120 = arith.constant 0 : index
    %177 = vector.load %arg6[%c0_118, %c0_119, %c0_120] : memref<4x128x128xbf16, #tpu.memory_space<vmem>>, vector<1x128x128xbf16>
    %178 = vector.shape_cast %177 : vector<1x128x128xbf16> to vector<128x128xbf16>
    %c1_121 = arith.constant 1 : index
    %c0_122 = arith.constant 0 : index
    %c0_123 = arith.constant 0 : index
    %179 = vector.load %arg6[%c1_121, %c0_122, %c0_123] : memref<4x128x128xbf16, #tpu.memory_space<vmem>>, vector<1x128x128xbf16>
    %180 = vector.shape_cast %179 : vector<1x128x128xbf16> to vector<128x128xbf16>
    %c2_124 = arith.constant 2 : index
    %c0_125 = arith.constant 0 : index
    %c0_126 = arith.constant 0 : index
    %181 = vector.load %arg6[%c2_124, %c0_125, %c0_126] : memref<4x128x128xbf16, #tpu.memory_space<vmem>>, vector<1x128x128xbf16>
    %182 = vector.shape_cast %181 : vector<1x128x128xbf16> to vector<128x128xbf16>
    %c3_127 = arith.constant 3 : index
    %c0_128 = arith.constant 0 : index
    %c0_129 = arith.constant 0 : index
    %183 = vector.load %arg6[%c3_127, %c0_128, %c0_129] : memref<4x128x128xbf16, #tpu.memory_space<vmem>>, vector<1x128x128xbf16>
    %184 = vector.shape_cast %183 : vector<1x128x128xbf16> to vector<128x128xbf16>
    %c0_130 = arith.constant 0 : index
    %c0_131 = arith.constant 0 : index
    %185 = vector.load %arg7[%c0_130, %c0_131] : memref<1x128xf32, #tpu.memory_space<vmem>>, vector<1x128xf32>
    %cst_132 = arith.constant dense<0.000000e+00> : vector<12x128xf32>
    %186 = tpu.matmul %160, %178, %cst_132 {dimension_numbers = #tpu.dot_dimension_numbers<[1], [0], [0], [1], [0, 0, 1, 1], [], []>} : vector<12x128xbf16>, vector<128x128xbf16>, vector<12x128xf32> -> vector<12x128xf32>
    %cst_133 = arith.constant dense<0.000000e+00> : vector<12x128xf32>
    %187 = tpu.matmul %162, %180, %cst_133 {dimension_numbers = #tpu.dot_dimension_numbers<[1], [0], [0], [1], [0, 0, 1, 1], [], []>} : vector<12x128xbf16>, vector<128x128xbf16>, vector<12x128xf32> -> vector<12x128xf32>
    %188 = arith.addf %186, %187 : vector<12x128xf32>
    %cst_134 = arith.constant dense<0.000000e+00> : vector<12x128xf32>
    %189 = tpu.matmul %166, %182, %cst_134 {dimension_numbers = #tpu.dot_dimension_numbers<[1], [0], [0], [1], [0, 0, 1, 1], [], []>} : vector<12x128xbf16>, vector<128x128xbf16>, vector<12x128xf32> -> vector<12x128xf32>
    %190 = arith.addf %188, %189 : vector<12x128xf32>
    %cst_135 = arith.constant dense<0.000000e+00> : vector<12x128xf32>
    %191 = tpu.matmul %168, %184, %cst_135 {dimension_numbers = #tpu.dot_dimension_numbers<[1], [0], [0], [1], [0, 0, 1, 1], [], []>} : vector<12x128xbf16>, vector<128x128xbf16>, vector<12x128xf32> -> vector<12x128xf32>
    %192 = arith.addf %190, %191 : vector<12x128xf32>
    %193 = vector.broadcast %185 : vector<1x128xf32> to vector<12x128xf32>
    %194 = arith.addf %192, %193 : vector<12x128xf32>
    %cst_136 = arith.constant 0.000000e+00 : f32
    %195 = vector.broadcast %cst_136 : f32 to vector<12x128xf32>
    %196 = arith.maximumf %194, %195 : vector<12x128xf32>
    %cst_137 = arith.constant dense<0.000000e+00> : vector<12x128xf32>
    %197 = tpu.matmul %162, %178, %cst_137 {dimension_numbers = #tpu.dot_dimension_numbers<[1], [0], [0], [1], [0, 0, 1, 1], [], []>} : vector<12x128xbf16>, vector<128x128xbf16>, vector<12x128xf32> -> vector<12x128xf32>
    %cst_138 = arith.constant dense<0.000000e+00> : vector<12x128xf32>
    %198 = tpu.matmul %164, %180, %cst_138 {dimension_numbers = #tpu.dot_dimension_numbers<[1], [0], [0], [1], [0, 0, 1, 1], [], []>} : vector<12x128xbf16>, vector<128x128xbf16>, vector<12x128xf32> -> vector<12x128xf32>
    %199 = arith.addf %197, %198 : vector<12x128xf32>
    %cst_139 = arith.constant dense<0.000000e+00> : vector<12x128xf32>
    %200 = tpu.matmul %168, %182, %cst_139 {dimension_numbers = #tpu.dot_dimension_numbers<[1], [0], [0], [1], [0, 0, 1, 1], [], []>} : vector<12x128xbf16>, vector<128x128xbf16>, vector<12x128xf32> -> vector<12x128xf32>
    %201 = arith.addf %199, %200 : vector<12x128xf32>
    %cst_140 = arith.constant dense<0.000000e+00> : vector<12x128xf32>
    %202 = tpu.matmul %170, %184, %cst_140 {dimension_numbers = #tpu.dot_dimension_numbers<[1], [0], [0], [1], [0, 0, 1, 1], [], []>} : vector<12x128xbf16>, vector<128x128xbf16>, vector<12x128xf32> -> vector<12x128xf32>
    %203 = arith.addf %201, %202 : vector<12x128xf32>
    %204 = vector.broadcast %185 : vector<1x128xf32> to vector<12x128xf32>
    %205 = arith.addf %203, %204 : vector<12x128xf32>
    %cst_141 = arith.constant 0.000000e+00 : f32
    %206 = vector.broadcast %cst_141 : f32 to vector<12x128xf32>
    %207 = arith.maximumf %205, %206 : vector<12x128xf32>
    %cst_142 = arith.constant dense<0.000000e+00> : vector<12x128xf32>
    %208 = tpu.matmul %166, %178, %cst_142 {dimension_numbers = #tpu.dot_dimension_numbers<[1], [0], [0], [1], [0, 0, 1, 1], [], []>} : vector<12x128xbf16>, vector<128x128xbf16>, vector<12x128xf32> -> vector<12x128xf32>
    %cst_143 = arith.constant dense<0.000000e+00> : vector<12x128xf32>
    %209 = tpu.matmul %168, %180, %cst_143 {dimension_numbers = #tpu.dot_dimension_numbers<[1], [0], [0], [1], [0, 0, 1, 1], [], []>} : vector<12x128xbf16>, vector<128x128xbf16>, vector<12x128xf32> -> vector<12x128xf32>
    %210 = arith.addf %208, %209 : vector<12x128xf32>
    %cst_144 = arith.constant dense<0.000000e+00> : vector<12x128xf32>
    %211 = tpu.matmul %172, %182, %cst_144 {dimension_numbers = #tpu.dot_dimension_numbers<[1], [0], [0], [1], [0, 0, 1, 1], [], []>} : vector<12x128xbf16>, vector<128x128xbf16>, vector<12x128xf32> -> vector<12x128xf32>
    %212 = arith.addf %210, %211 : vector<12x128xf32>
    %cst_145 = arith.constant dense<0.000000e+00> : vector<12x128xf32>
    %213 = tpu.matmul %174, %184, %cst_145 {dimension_numbers = #tpu.dot_dimension_numbers<[1], [0], [0], [1], [0, 0, 1, 1], [], []>} : vector<12x128xbf16>, vector<128x128xbf16>, vector<12x128xf32> -> vector<12x128xf32>
    %214 = arith.addf %212, %213 : vector<12x128xf32>
    %215 = vector.broadcast %185 : vector<1x128xf32> to vector<12x128xf32>
    %216 = arith.addf %214, %215 : vector<12x128xf32>
    %cst_146 = arith.constant 0.000000e+00 : f32
    %217 = vector.broadcast %cst_146 : f32 to vector<12x128xf32>
    %218 = arith.maximumf %216, %217 : vector<12x128xf32>
    %cst_147 = arith.constant dense<0.000000e+00> : vector<12x128xf32>
    %219 = tpu.matmul %168, %178, %cst_147 {dimension_numbers = #tpu.dot_dimension_numbers<[1], [0], [0], [1], [0, 0, 1, 1], [], []>} : vector<12x128xbf16>, vector<128x128xbf16>, vector<12x128xf32> -> vector<12x128xf32>
    %cst_148 = arith.constant dense<0.000000e+00> : vector<12x128xf32>
    %220 = tpu.matmul %170, %180, %cst_148 {dimension_numbers = #tpu.dot_dimension_numbers<[1], [0], [0], [1], [0, 0, 1, 1], [], []>} : vector<12x128xbf16>, vector<128x128xbf16>, vector<12x128xf32> -> vector<12x128xf32>
    %221 = arith.addf %219, %220 : vector<12x128xf32>
    %cst_149 = arith.constant dense<0.000000e+00> : vector<12x128xf32>
    %222 = tpu.matmul %174, %182, %cst_149 {dimension_numbers = #tpu.dot_dimension_numbers<[1], [0], [0], [1], [0, 0, 1, 1], [], []>} : vector<12x128xbf16>, vector<128x128xbf16>, vector<12x128xf32> -> vector<12x128xf32>
    %223 = arith.addf %221, %222 : vector<12x128xf32>
    %cst_150 = arith.constant dense<0.000000e+00> : vector<12x128xf32>
    %224 = tpu.matmul %176, %184, %cst_150 {dimension_numbers = #tpu.dot_dimension_numbers<[1], [0], [0], [1], [0, 0, 1, 1], [], []>} : vector<12x128xbf16>, vector<128x128xbf16>, vector<12x128xf32> -> vector<12x128xf32>
    %225 = arith.addf %223, %224 : vector<12x128xf32>
    %226 = vector.broadcast %185 : vector<1x128xf32> to vector<12x128xf32>
    %227 = arith.addf %225, %226 : vector<12x128xf32>
    %cst_151 = arith.constant 0.000000e+00 : f32
    %228 = vector.broadcast %cst_151 : f32 to vector<12x128xf32>
    %229 = arith.maximumf %227, %228 : vector<12x128xf32>
    %230 = arith.maximumf %196, %207 : vector<12x128xf32>
    %231 = arith.maximumf %218, %229 : vector<12x128xf32>
    %232 = arith.maximumf %230, %231 : vector<12x128xf32>
    %233 = vector.extract_strided_slice %232 {offsets = [0, 0], sizes = [1, 128], strides = [1, 1]} : vector<12x128xf32> to vector<1x128xf32>
    %234 = arith.truncf %233 : vector<1x128xf32> to vector<1x128xbf16>
    %c0_152 = arith.constant 0 : index
    %c0_153 = arith.constant 0 : index
    %c0_154 = arith.constant 0 : index
    %235 = vector.load %arg8[%c0_152, %c0_153, %c0_154] : memref<9x128x10xbf16, #tpu.memory_space<vmem>>, vector<1x128x10xbf16>
    %236 = vector.shape_cast %235 : vector<1x128x10xbf16> to vector<128x10xbf16>
    %cst_155 = arith.constant dense<0.000000e+00> : vector<1x10xf32>
    %237 = tpu.matmul %234, %236, %cst_155 {dimension_numbers = #tpu.dot_dimension_numbers<[1], [0], [0], [1], [0, 0, 1, 1], [], []>} : vector<1x128xbf16>, vector<128x10xbf16>, vector<1x10xf32> -> vector<1x10xf32>
    %238 = vector.extract_strided_slice %232 {offsets = [1, 0], sizes = [1, 128], strides = [1, 1]} : vector<12x128xf32> to vector<1x128xf32>
    %239 = arith.truncf %238 : vector<1x128xf32> to vector<1x128xbf16>
    %c1_156 = arith.constant 1 : index
    %c0_157 = arith.constant 0 : index
    %c0_158 = arith.constant 0 : index
    %240 = vector.load %arg8[%c1_156, %c0_157, %c0_158] : memref<9x128x10xbf16, #tpu.memory_space<vmem>>, vector<1x128x10xbf16>
    %241 = vector.shape_cast %240 : vector<1x128x10xbf16> to vector<128x10xbf16>
    %cst_159 = arith.constant dense<0.000000e+00> : vector<1x10xf32>
    %242 = tpu.matmul %239, %241, %cst_159 {dimension_numbers = #tpu.dot_dimension_numbers<[1], [0], [0], [1], [0, 0, 1, 1], [], []>} : vector<1x128xbf16>, vector<128x10xbf16>, vector<1x10xf32> -> vector<1x10xf32>
    %243 = arith.addf %237, %242 : vector<1x10xf32>
    %244 = vector.extract_strided_slice %232 {offsets = [2, 0], sizes = [1, 128], strides = [1, 1]} : vector<12x128xf32> to vector<1x128xf32>
    %245 = arith.truncf %244 : vector<1x128xf32> to vector<1x128xbf16>
    %c2_160 = arith.constant 2 : index
    %c0_161 = arith.constant 0 : index
    %c0_162 = arith.constant 0 : index
    %246 = vector.load %arg8[%c2_160, %c0_161, %c0_162] : memref<9x128x10xbf16, #tpu.memory_space<vmem>>, vector<1x128x10xbf16>
    %247 = vector.shape_cast %246 : vector<1x128x10xbf16> to vector<128x10xbf16>
    %cst_163 = arith.constant dense<0.000000e+00> : vector<1x10xf32>
    %248 = tpu.matmul %245, %247, %cst_163 {dimension_numbers = #tpu.dot_dimension_numbers<[1], [0], [0], [1], [0, 0, 1, 1], [], []>} : vector<1x128xbf16>, vector<128x10xbf16>, vector<1x10xf32> -> vector<1x10xf32>
    %249 = arith.addf %243, %248 : vector<1x10xf32>
    %250 = vector.extract_strided_slice %232 {offsets = [4, 0], sizes = [1, 128], strides = [1, 1]} : vector<12x128xf32> to vector<1x128xf32>
    %251 = arith.truncf %250 : vector<1x128xf32> to vector<1x128xbf16>
    %c3_164 = arith.constant 3 : index
    %c0_165 = arith.constant 0 : index
    %c0_166 = arith.constant 0 : index
    %252 = vector.load %arg8[%c3_164, %c0_165, %c0_166] : memref<9x128x10xbf16, #tpu.memory_space<vmem>>, vector<1x128x10xbf16>
    %253 = vector.shape_cast %252 : vector<1x128x10xbf16> to vector<128x10xbf16>
    %cst_167 = arith.constant dense<0.000000e+00> : vector<1x10xf32>
    %254 = tpu.matmul %251, %253, %cst_167 {dimension_numbers = #tpu.dot_dimension_numbers<[1], [0], [0], [1], [0, 0, 1, 1], [], []>} : vector<1x128xbf16>, vector<128x10xbf16>, vector<1x10xf32> -> vector<1x10xf32>
    %255 = arith.addf %249, %254 : vector<1x10xf32>
    %256 = vector.extract_strided_slice %232 {offsets = [5, 0], sizes = [1, 128], strides = [1, 1]} : vector<12x128xf32> to vector<1x128xf32>
    %257 = arith.truncf %256 : vector<1x128xf32> to vector<1x128xbf16>
    %c4 = arith.constant 4 : index
    %c0_168 = arith.constant 0 : index
    %c0_169 = arith.constant 0 : index
    %258 = vector.load %arg8[%c4, %c0_168, %c0_169] : memref<9x128x10xbf16, #tpu.memory_space<vmem>>, vector<1x128x10xbf16>
    %259 = vector.shape_cast %258 : vector<1x128x10xbf16> to vector<128x10xbf16>
    %cst_170 = arith.constant dense<0.000000e+00> : vector<1x10xf32>
    %260 = tpu.matmul %257, %259, %cst_170 {dimension_numbers = #tpu.dot_dimension_numbers<[1], [0], [0], [1], [0, 0, 1, 1], [], []>} : vector<1x128xbf16>, vector<128x10xbf16>, vector<1x10xf32> -> vector<1x10xf32>
    %261 = arith.addf %255, %260 : vector<1x10xf32>
    %262 = vector.extract_strided_slice %232 {offsets = [6, 0], sizes = [1, 128], strides = [1, 1]} : vector<12x128xf32> to vector<1x128xf32>
    %263 = arith.truncf %262 : vector<1x128xf32> to vector<1x128xbf16>
    %c5 = arith.constant 5 : index
    %c0_171 = arith.constant 0 : index
    %c0_172 = arith.constant 0 : index
    %264 = vector.load %arg8[%c5, %c0_171, %c0_172] : memref<9x128x10xbf16, #tpu.memory_space<vmem>>, vector<1x128x10xbf16>
    %265 = vector.shape_cast %264 : vector<1x128x10xbf16> to vector<128x10xbf16>
    %cst_173 = arith.constant dense<0.000000e+00> : vector<1x10xf32>
    %266 = tpu.matmul %263, %265, %cst_173 {dimension_numbers = #tpu.dot_dimension_numbers<[1], [0], [0], [1], [0, 0, 1, 1], [], []>} : vector<1x128xbf16>, vector<128x10xbf16>, vector<1x10xf32> -> vector<1x10xf32>
    %267 = arith.addf %261, %266 : vector<1x10xf32>
    %268 = vector.extract_strided_slice %232 {offsets = [8, 0], sizes = [1, 128], strides = [1, 1]} : vector<12x128xf32> to vector<1x128xf32>
    %269 = arith.truncf %268 : vector<1x128xf32> to vector<1x128xbf16>
    %c6 = arith.constant 6 : index
    %c0_174 = arith.constant 0 : index
    %c0_175 = arith.constant 0 : index
    %270 = vector.load %arg8[%c6, %c0_174, %c0_175] : memref<9x128x10xbf16, #tpu.memory_space<vmem>>, vector<1x128x10xbf16>
    %271 = vector.shape_cast %270 : vector<1x128x10xbf16> to vector<128x10xbf16>
    %cst_176 = arith.constant dense<0.000000e+00> : vector<1x10xf32>
    %272 = tpu.matmul %269, %271, %cst_176 {dimension_numbers = #tpu.dot_dimension_numbers<[1], [0], [0], [1], [0, 0, 1, 1], [], []>} : vector<1x128xbf16>, vector<128x10xbf16>, vector<1x10xf32> -> vector<1x10xf32>
    %273 = arith.addf %267, %272 : vector<1x10xf32>
    %274 = vector.extract_strided_slice %232 {offsets = [9, 0], sizes = [1, 128], strides = [1, 1]} : vector<12x128xf32> to vector<1x128xf32>
    %275 = arith.truncf %274 : vector<1x128xf32> to vector<1x128xbf16>
    %c7 = arith.constant 7 : index
    %c0_177 = arith.constant 0 : index
    %c0_178 = arith.constant 0 : index
    %276 = vector.load %arg8[%c7, %c0_177, %c0_178] : memref<9x128x10xbf16, #tpu.memory_space<vmem>>, vector<1x128x10xbf16>
    %277 = vector.shape_cast %276 : vector<1x128x10xbf16> to vector<128x10xbf16>
    %cst_179 = arith.constant dense<0.000000e+00> : vector<1x10xf32>
    %278 = tpu.matmul %275, %277, %cst_179 {dimension_numbers = #tpu.dot_dimension_numbers<[1], [0], [0], [1], [0, 0, 1, 1], [], []>} : vector<1x128xbf16>, vector<128x10xbf16>, vector<1x10xf32> -> vector<1x10xf32>
    %279 = arith.addf %273, %278 : vector<1x10xf32>
    %280 = vector.extract_strided_slice %232 {offsets = [10, 0], sizes = [1, 128], strides = [1, 1]} : vector<12x128xf32> to vector<1x128xf32>
    %281 = arith.truncf %280 : vector<1x128xf32> to vector<1x128xbf16>
    %c8_180 = arith.constant 8 : index
    %c0_181 = arith.constant 0 : index
    %c0_182 = arith.constant 0 : index
    %282 = vector.load %arg8[%c8_180, %c0_181, %c0_182] : memref<9x128x10xbf16, #tpu.memory_space<vmem>>, vector<1x128x10xbf16>
    %283 = vector.shape_cast %282 : vector<1x128x10xbf16> to vector<128x10xbf16>
    %cst_183 = arith.constant dense<0.000000e+00> : vector<1x10xf32>
    %284 = tpu.matmul %281, %283, %cst_183 {dimension_numbers = #tpu.dot_dimension_numbers<[1], [0], [0], [1], [0, 0, 1, 1], [], []>} : vector<1x128xbf16>, vector<128x10xbf16>, vector<1x10xf32> -> vector<1x10xf32>
    %285 = arith.addf %279, %284 : vector<1x10xf32>
    %c0_184 = arith.constant 0 : index
    %c0_185 = arith.constant 0 : index
    %286 = vector.load %arg9[%c0_184, %c0_185] : memref<1x10xf32, #tpu.memory_space<vmem>>, vector<1x10xf32>
    %287 = arith.addf %285, %286 : vector<1x10xf32>
    %cst_186 = arith.constant dense<0xFF800000> : vector<1xf32>
    %288 = vector.multi_reduction <maximumf>, %287, %cst_186 [1] : vector<1x10xf32> to vector<1xf32>
    %289 = vector.shape_cast %288 : vector<1xf32> to vector<1x1xf32>
    %290 = vector.broadcast %289 : vector<1x1xf32> to vector<1x10xf32>
    %291 = arith.subf %287, %290 : vector<1x10xf32>
    %292 = math.exp %291 : vector<1x10xf32>
    %cst_187 = arith.constant dense<0.000000e+00> : vector<1xf32>
    %293 = vector.multi_reduction <add>, %292, %cst_187 [1] : vector<1x10xf32> to vector<1xf32>
    %294 = vector.shape_cast %293 : vector<1xf32> to vector<1x1xf32>
    %295 = vector.broadcast %294 : vector<1x1xf32> to vector<1x10xf32>
    %296 = arith.divf %292, %295 : vector<1x10xf32>
    %c0_188 = arith.constant 0 : index
    %c0_189 = arith.constant 0 : index
    %c0_190 = arith.constant 0 : index
    %297 = vector.load %arg10[%c0_188, %c0_189, %c0_190] : memref<1x1x10xf32, #tpu.memory_space<vmem>>, vector<1x1x10xf32>
    %298 = vector.shape_cast %297 : vector<1x1x10xf32> to vector<1x10xf32>
    %299 = vector.shape_cast %296 : vector<1x10xf32> to vector<1x1x10xf32>
    tpu.vector_store %arg10[%c0_188, %c0_189, %c0_190], %299 {strides = array<i32>} : memref<1x1x10xf32, #tpu.memory_space<vmem>>, vector<1x1x10xf32>,
    return
  }
  func.func @transform_0(%arg0: i32) -> (i32, i32, i32) {
    %c0_i32 = arith.constant 0 : i32
    %c0_i32_0 = arith.constant 0 : i32
    %c0_i32_1 = arith.constant 0 : i32
    return %arg0, %c0_i32, %c0_i32_0 : i32, i32, i32
  }
  func.func @transform_1(%arg0: i32) -> (i32, i32, i32) {
    %c0_i32 = arith.constant 0 : i32
    %c0_i32_0 = arith.constant 0 : i32
    %c0_i32_1 = arith.constant 0 : i32
    %c0_i32_2 = arith.constant 0 : i32
    return %c0_i32, %c0_i32_0, %c0_i32_1 : i32, i32, i32
  }
  func.func @transform_2(%arg0: i32) -> (i32, i32) {
    %c0_i32 = arith.constant 0 : i32
    %c0_i32_0 = arith.constant 0 : i32
    %c0_i32_1 = arith.constant 0 : i32
    return %c0_i32, %c0_i32_0 : i32, i32
  }
  func.func @transform_3(%arg0: i32) -> (i32, i32, i32) {
    %c0_i32 = arith.constant 0 : i32
    %c0_i32_0 = arith.constant 0 : i32
    %c0_i32_1 = arith.constant 0 : i32
    %c0_i32_2 = arith.constant 0 : i32
    return %c0_i32, %c0_i32_0, %c0_i32_1 : i32, i32, i32
  }
  func.func @transform_4(%arg0: i32) -> (i32, i32) {
    %c0_i32 = arith.constant 0 : i32
    %c0_i32_0 = arith.constant 0 : i32
    %c0_i32_1 = arith.constant 0 : i32
    return %c0_i32, %c0_i32_0 : i32, i32
  }
  func.func @transform_5(%arg0: i32) -> (i32, i32, i32) {
    %c0_i32 = arith.constant 0 : i32
    %c0_i32_0 = arith.constant 0 : i32
    %c0_i32_1 = arith.constant 0 : i32
    %c0_i32_2 = arith.constant 0 : i32
    return %c0_i32, %c0_i32_0, %c0_i32_1 : i32, i32, i32
  }
  func.func @transform_6(%arg0: i32) -> (i32, i32) {
    %c0_i32 = arith.constant 0 : i32
    %c0_i32_0 = arith.constant 0 : i32
    %c0_i32_1 = arith.constant 0 : i32
    return %c0_i32, %c0_i32_0 : i32, i32
  }
  func.func @transform_7(%arg0: i32) -> (i32, i32, i32) {
    %c0_i32 = arith.constant 0 : i32
    %c0_i32_0 = arith.constant 0 : i32
    %c0_i32_1 = arith.constant 0 : i32
    %c0_i32_2 = arith.constant 0 : i32
    return %c0_i32, %c0_i32_0, %c0_i32_1 : i32, i32, i32
  }
  func.func @transform_8(%arg0: i32) -> (i32, i32) {
    %c0_i32 = arith.constant 0 : i32
    %c0_i32_0 = arith.constant 0 : i32
    %c0_i32_1 = arith.constant 0 : i32
    return %c0_i32, %c0_i32_0 : i32, i32
  }
  func.func @transform_9(%arg0: i32) -> (i32, i32, i32) {
    %c0_i32 = arith.constant 0 : i32
    %c0_i32_0 = arith.constant 0 : i32
    %c0_i32_1 = arith.constant 0 : i32
    return %arg0, %c0_i32, %c0_i32_0 : i32, i32, i32
  }
}

</mosaic_0001>

<llo_original>
// kernel: cnn_forward.1
$region0: #{cnn_forward.1}
  #allocation0 [shape = 'u32[]', space=smem, size = 0x4, offset = 0x4, fixed_abs, tag = 'smem constant byte address 0x4 - core index']
  #allocation1 [shape = 'u32[144,128]{1,0:T(1,128)}', space=vmem, size = 0x12000, scoped, tag = 'internal scratch']
  #allocation2 [shape = 'f32[240,128]{1,0:T(8,128)}', space=vmem, size = 0x1e000, scoped, tag = 'scratch operand']
  #allocation3 [shape = 'f32[56,128]{1,0:T(8,128)}', space=vmem, size = 0x7000, scoped, tag = 'scratch operand']
  %s0 = inlined_call_operand.vmem [shape: f32[2,1024,3], index: 0, kind: input, shape index: {}]
  %s1 = inlined_call_operand.vmem [shape: bf16[4,3,128], index: 1, kind: input, shape index: {}]
  %s2 = inlined_call_operand.vmem [shape: f32[1,128], index: 2, kind: input, shape index: {}]
  %s3 = inlined_call_operand.vmem [shape: bf16[4,128,128], index: 3, kind: input, shape index: {}]
  %s4 = inlined_call_operand.vmem [shape: f32[1,128], index: 4, kind: input, shape index: {}]
  %s5 = inlined_call_operand.vmem [shape: bf16[4,128,128], index: 5, kind: input, shape index: {}]
  %s6 = inlined_call_operand.vmem [shape: f32[1,128], index: 6, kind: input, shape index: {}]
  %s7 = inlined_call_operand.vmem [shape: bf16[9,128,10], index: 7, kind: input, shape index: {}]
  %s8 = inlined_call_operand.vmem [shape: f32[1,10], index: 8, kind: input, shape index: {}]
  %s9 = inlined_call_operand.hbm [shape: f32[2,1,10], index: 9, kind: output, shape index: {}]
  %s10 = sld [smem:[#allocation0]]
  $region69: #{cnn_forward.1} parent=0
    _
  %s12 = ssub.s32 1, %s10
  %s13 = scalar_select 0, %s12, %s10
  $region1: #{cnn_forward.1} parent=0
    #allocation4 [shape = 'u8[1024]{0}', space=vmem, size = 0x400, scoped, tag = 'output window, operand 0']
    #allocation5 [shape = 's32[2]{0}', space=sflag, size = 0x8, scoped, tag = 'scoped memory for cnn_forward.1']
    %14 = vsyncpa [#allocation5], 0
    %s15 = scalar_lea.sflag [#allocation5], 1
    %16 = vsyncpa %s15, 0
    loop: start=0, step=1, limit=4
    $region2: #{cnn_forward.1} parent=1 // loop_pre_header
      _
    $region3: #{cnn_forward.1} parent=1 // loop_header
      %s18 = sphi 0, %s22
      %p19 = scmp.ge.s32.totalorder %s18, 4
      %s28 = sphi 0, %s30
      %s31 = sphi 0, %s28
      %s32 = sphi 0, %s31
      %s48 = sphi 0, %s32
      %s52 = sphi 0, %s52
      %s54 = sphi 0, %s52
      %s55 = sphi 0, %s54
      %s69 = sphi 0, %s55
      %s73 = sphi 0, %s73
      %s75 = sphi 0, %s73
      %s76 = sphi 0, %s75
      %s90 = sphi 0, %s76
      %s94 = sphi 0, %s94
      %s96 = sphi 0, %s94
      %s97 = sphi 0, %s96
      %s111 = sphi 0, %s97
      %s115 = sphi 0, %s115
      %s117 = sphi 0, %s115
      %s118 = sphi 0, %s117
      %s132 = sphi 0, %s118
      %s136 = sphi 0, %s136
      %s138 = sphi 0, %s136
      %s139 = sphi 0, %s138
      %s153 = sphi 0, %s139
      %s157 = sphi 0, %s157
      %s159 = sphi 0, %s157
      %s160 = sphi 0, %s159
      %s174 = sphi 0, %s160
      %s178 = sphi 0, %s178
      %s180 = sphi 0, %s178
      %s181 = sphi 0, %s180
      %s195 = sphi 0, %s181
      %s199 = sphi 0, %s199
      %s201 = sphi 0, %s199
      %s202 = sphi 0, %s201
      %s216 = sphi 0, %s202
      %s222 = sphi 0, %s224
      %s225 = sphi 0, %s222
      %s226 = sphi 0, %s225
      %s242 = sphi 0, %s226
    $region4: #{cnn_forward.1} parent=1 // loop_header_branch
      %21 = sbr.rel (%p19) target = $region8
    $region5: #{cnn_forward.1} parent=1 // loop_body
      %s23 = ssub.s32 %s18, 1
      %s24 = ssub.s32 %s18, 2
      %s25 = sadd.s32 %s18, 1
      %s26 = ssub.s32 %s18, %s25
      %p27 = scmp.eq.s32.totalorder %s26, 0
      %s29 = sadd.s32 %s28, 1
      %s30 = scalar_select %p27, %s28, %s29
      %p33 = pneg %p27
      %p34 = scmp.eq.s32.totalorder %s18, 1
      %p35 = por %p33, %p34
      %p36 = scmp.ne.s32.totalorder %s28, %s31
      %p37 = scmp.eq.s32.totalorder %s18, 0
      %p38 = por %p36, %p37
      %p39 = scmp.ne.s32.totalorder %s28, %s31
      %p40 = scmp.eq.s32.totalorder %s23, 1
      %p41 = por %p39, %p40
      %p42 = scmp.ne.s32.totalorder %s31, %s32
      %p43 = scmp.eq.s32.totalorder %s23, 0
      %p44 = por %p42, %p43
      %p45 = scmp.ne.s32.totalorder %s31, %s32
      %p46 = scmp.eq.s32.totalorder %s24, 1
      %p47 = por %p45, %p46
      %p49 = scmp.ne.s32.totalorder %s32, %s48
      %p50 = scmp.eq.s32.totalorder %s24, 0
      %p51 = por %p49, %p50
      %s53 = sadd.s32 %s52, 1
      %p56 = scmp.eq.s32.totalorder %s18, 1
      %p57 = scmp.ne.s32.totalorder %s52, %s54
      %p58 = scmp.eq.s32.totalorder %s18, 0
      %p59 = por %p57, %p58
      %p60 = scmp.ne.s32.totalorder %s52, %s54
      %p61 = scmp.eq.s32.totalorder %s23, 1
      %p62 = por %p60, %p61
      %p63 = scmp.ne.s32.totalorder %s54, %s55
      %p64 = scmp.eq.s32.totalorder %s23, 0
      %p65 = por %p63, %p64
      %p66 = scmp.ne.s32.totalorder %s54, %s55
      %p67 = scmp.eq.s32.totalorder %s24, 1
      %p68 = por %p66, %p67
      %p70 = scmp.ne.s32.totalorder %s55, %s69
      %p71 = scmp.eq.s32.totalorder %s24, 0
      %p72 = por %p70, %p71
      %s74 = sadd.s32 %s73, 1
      %p77 = scmp.eq.s32.totalorder %s18, 1
      %p78 = scmp.ne.s32.totalorder %s73, %s75
      %p79 = scmp.eq.s32.totalorder %s18, 0
      %p80 = por %p78, %p79
      %p81 = scmp.ne.s32.totalorder %s73, %s75
      %p82 = scmp.eq.s32.totalorder %s23, 1
      %p83 = por %p81, %p82
      %p84 = scmp.ne.s32.totalorder %s75, %s76
      %p85 = scmp.eq.s32.totalorder %s23, 0
      %p86 = por %p84, %p85
      %p87 = scmp.ne.s32.totalorder %s75, %s76
      %p88 = scmp.eq.s32.totalorder %s24, 1
      %p89 = por %p87, %p88
      %p91 = scmp.ne.s32.totalorder %s76, %s90
      %p92 = scmp.eq.s32.totalorder %s24, 0
      %p93 = por %p91, %p92
      %s95 = sadd.s32 %s94, 1
      %p98 = scmp.eq.s32.totalorder %s18, 1
      %p99 = scmp.ne.s32.totalorder %s94, %s96
      %p100 = scmp.eq.s32.totalorder %s18, 0
      %p101 = por %p99, %p100
      %p102 = scmp.ne.s32.totalorder %s94, %s96
      %p103 = scmp.eq.s32.totalorder %s23, 1
      %p104 = por %p102, %p103
      %p105 = scmp.ne.s32.totalorder %s96, %s97
      %p106 = scmp.eq.s32.totalorder %s23, 0
      %p107 = por %p105, %p106
      %p108 = scmp.ne.s32.totalorder %s96, %s97
      %p109 = scmp.eq.s32.totalorder %s24, 1
      %p110 = por %p108, %p109
      %p112 = scmp.ne.s32.totalorder %s97, %s111
      %p113 = scmp.eq.s32.totalorder %s24, 0
      %p114 = por %p112, %p113
      %s116 = sadd.s32 %s115, 1
      %p119 = scmp.eq.s32.totalorder %s18, 1
      %p120 = scmp.ne.s32.totalorder %s115, %s117
      %p121 = scmp.eq.s32.totalorder %s18, 0
      %p122 = por %p120, %p121
      %p123 = scmp.ne.s32.totalorder %s115, %s117
      %p124 = scmp.eq.s32.totalorder %s23, 1
      %p125 = por %p123, %p124
      %p126 = scmp.ne.s32.totalorder %s117, %s118
      %p127 = scmp.eq.s32.totalorder %s23, 0
      %p128 = por %p126, %p127
      %p129 = scmp.ne.s32.totalorder %s117, %s118
      %p130 = scmp.eq.s32.totalorder %s24, 1
      %p131 = por %p129, %p130
      %p133 = scmp.ne.s32.totalorder %s118, %s132
      %p134 = scmp.eq.s32.totalorder %s24, 0
      %p135 = por %p133, %p134
      %s137 = sadd.s32 %s136, 1
      %p140 = scmp.eq.s32.totalorder %s18, 1
      %p141 = scmp.ne.s32.totalorder %s136, %s138
      %p142 = scmp.eq.s32.totalorder %s18, 0
      %p143 = por %p141, %p142
      %p144 = scmp.ne.s32.totalorder %s136, %s138
      %p145 = scmp.eq.s32.totalorder %s23, 1
      %p146 = por %p144, %p145
      %p147 = scmp.ne.s32.totalorder %s138, %s139
      %p148 = scmp.eq.s32.totalorder %s23, 0
      %p149 = por %p147, %p148
      %p150 = scmp.ne.s32.totalorder %s138, %s139
      %p151 = scmp.eq.s32.totalorder %s24, 1
      %p152 = por %p150, %p151
      %p154 = scmp.ne.s32.totalorder %s139, %s153
      %p155 = scmp.eq.s32.totalorder %s24, 0
      %p156 = por %p154, %p155
      %s158 = sadd.s32 %s157, 1
      %p161 = scmp.eq.s32.totalorder %s18, 1
      %p162 = scmp.ne.s32.totalorder %s157, %s159
      %p163 = scmp.eq.s32.totalorder %s18, 0
      %p164 = por %p162, %p163
      %p165 = scmp.ne.s32.totalorder %s157, %s159
      %p166 = scmp.eq.s32.totalorder %s23, 1
      %p167 = por %p165, %p166
      %p168 = scmp.ne.s32.totalorder %s159, %s160
      %p169 = scmp.eq.s32.totalorder %s23, 0
      %p170 = por %p168, %p169
      %p171 = scmp.ne.s32.totalorder %s159, %s160
      %p172 = scmp.eq.s32.totalorder %s24, 1
      %p173 = por %p171, %p172
      %p175 = scmp.ne.s32.totalorder %s160, %s174
      %p176 = scmp.eq.s32.totalorder %s24, 0
      %p177 = por %p175, %p176
      %s179 = sadd.s32 %s178, 1
      %p182 = scmp.eq.s32.totalorder %s18, 1
      %p183 = scmp.ne.s32.totalorder %s178, %s180
      %p184 = scmp.eq.s32.totalorder %s18, 0
      %p185 = por %p183, %p184
      %p186 = scmp.ne.s32.totalorder %s178, %s180
      %p187 = scmp.eq.s32.totalorder %s23, 1
      %p188 = por %p186, %p187
      %p189 = scmp.ne.s32.totalorder %s180, %s181
      %p190 = scmp.eq.s32.totalorder %s23, 0
      %p191 = por %p189, %p190
      %p192 = scmp.ne.s32.totalorder %s180, %s181
      %p193 = scmp.eq.s32.totalorder %s24, 1
      %p194 = por %p192, %p193
      %p196 = scmp.ne.s32.totalorder %s181, %s195
      %p197 = scmp.eq.s32.totalorder %s24, 0
      %p198 = por %p196, %p197
      %s200 = sadd.s32 %s199, 1
      %p203 = scmp.eq.s32.totalorder %s18, 1
      %p204 = scmp.ne.s32.totalorder %s199, %s201
      %p205 = scmp.eq.s32.totalorder %s18, 0
      %p206 = por %p204, %p205
      %p207 = scmp.ne.s32.totalorder %s199, %s201
      %p208 = scmp.eq.s32.totalorder %s23, 1
      %p209 = por %p207, %p208
      %p210 = scmp.ne.s32.totalorder %s201, %s202
      %p211 = scmp.eq.s32.totalorder %s23, 0
      %p212 = por %p210, %p211
      %p213 = scmp.ne.s32.totalorder %s201, %s202
      %p214 = scmp.eq.s32.totalorder %s24, 1
      %p215 = por %p213, %p214
      %p217 = scmp.ne.s32.totalorder %s202, %s216
      %p218 = scmp.eq.s32.totalorder %s24, 0
      %p219 = por %p217, %p218
      %s220 = ssub.s32 %s18, %s25
      %p221 = scmp.eq.s32.totalorder %s220, 0
      %s223 = sadd.s32 %s222, 1
      %s224 = scalar_select %p221, %s222, %s223
      %p227 = pneg %p221
      %p228 = scmp.eq.s32.totalorder %s18, 1
      %p229 = por %p227, %p228
      %p230 = scmp.ne.s32.totalorder %s222, %s225
      %p231 = scmp.eq.s32.totalorder %s18, 0
      %p232 = por %p230, %p231
      %p233 = scmp.ne.s32.totalorder %s222, %s225
      %p234 = scmp.eq.s32.totalorder %s23, 1
      %p235 = por %p233, %p234
      %p236 = scmp.ne.s32.totalorder %s225, %s226
      %p237 = scmp.eq.s32.totalorder %s23, 0
      %p238 = por %p236, %p237
      %p239 = scmp.ne.s32.totalorder %s225, %s226
      %p240 = scmp.eq.s32.totalorder %s24, 1
      %p241 = por %p239, %p240
      %p243 = scmp.ne.s32.totalorder %s226, %s242
      %p244 = scmp.eq.s32.totalorder %s24, 0
      %p245 = por %p243, %p244
      %p246 = scmp.le.s32.totalorder 1, %s18
      %p247 = scmp.lt.s32.totalorder %s18, 3
      %p248 = pnand %p246, %p247
      %p249 = pneg %p248
      // Predicated region
      $region9: #{cnn_forward.1} parent=5 // pred_check
        _
      $region10: #{cnn_forward.1} parent=5 // pred_check_branch
        %251 = sbr.rel (%p248) target = $region12
      $region11: #{cnn_forward.1} parent=5 // pred_region
        %s252 = ssub.s32 %s18, 1
        // Predicated region
        $region13: #{cnn_forward.1} parent=11 // pred_check
          %p253 = pneg %p65
        $region14: #{cnn_forward.1} parent=11 // pred_check_branch
          %255 = sbr.rel (%p253) target = $region16
        $region15: #{cnn_forward.1} parent=11 // pred_region
          _
        $region16: #{cnn_forward.1} parent=11 // pred_fallthru
          _
        // Predicated region
        $region17: #{cnn_forward.1} parent=11 // pred_check
          %p256 = pneg %p86
        $region18: #{cnn_forward.1} parent=11 // pred_check_branch
          %258 = sbr.rel (%p256) target = $region20
        $region19: #{cnn_forward.1} parent=11 // pred_region
          _
        $region20: #{cnn_forward.1} parent=11 // pred_fallthru
          _
        // Predicated region
        $region21: #{cnn_forward.1} parent=11 // pred_check
          %p259 = pneg %p107
        $region22: #{cnn_forward.1} parent=11 // pred_check_branch
          %261 = sbr.rel (%p259) target = $region24
        $region23: #{cnn_forward.1} parent=11 // pred_region
          _
        $region24: #{cnn_forward.1} parent=11 // pred_fallthru
          _
        // Predicated region
        $region25: #{cnn_forward.1} parent=11 // pred_check
          %p262 = pneg %p128
        $region26: #{cnn_forward.1} parent=11 // pred_check_branch
          %264 = sbr.rel (%p262) target = $region28
        $region27: #{cnn_forward.1} parent=11 // pred_region
          _
        $region28: #{cnn_forward.1} parent=11 // pred_fallthru
          _
        // Predicated region
        $region29: #{cnn_forward.1} parent=11 // pred_check
          %p265 = pneg %p149
        $region30: #{cnn_forward.1} parent=11 // pred_check_branch
          %267 = sbr.rel (%p265) target = $region32
        $region31: #{cnn_forward.1} parent=11 // pred_region
          _
        $region32: #{cnn_forward.1} parent=11 // pred_fallthru
          _
        // Predicated region
        $region33: #{cnn_forward.1} parent=11 // pred_check
          %p268 = pneg %p170
        $region34: #{cnn_forward.1} parent=11 // pred_check_branch
          %270 = sbr.rel (%p268) target = $region36
        $region35: #{cnn_forward.1} parent=11 // pred_region
          _
        $region36: #{cnn_forward.1} parent=11 // pred_fallthru
          _
        // Predicated region
        $region37: #{cnn_forward.1} parent=11 // pred_check
          %p271 = pneg %p191
        $region38: #{cnn_forward.1} parent=11 // pred_check_branch
          %273 = sbr.rel (%p271) target = $region40
        $region39: #{cnn_forward.1} parent=11 // pred_region
          _
        $region40: #{cnn_forward.1} parent=11 // pred_fallthru
          _
        // Predicated region
        $region41: #{cnn_forward.1} parent=11 // pred_check
          %p274 = pneg %p212
        $region42: #{cnn_forward.1} parent=11 // pred_check_branch
          %276 = sbr.rel (%p274) target = $region44
        $region43: #{cnn_forward.1} parent=11 // pred_region
          _
        $region44: #{cnn_forward.1} parent=11 // pred_fallthru
          _
      $region12: #{cnn_forward.1} parent=5 // pred_fallthru
        _
      %p277 = scmp.lt.s32.totalorder %s18, 2
      // Predicated region
      $region45: #{cnn_forward.1} parent=5 // pred_check
        %p278 = pneg %p277
      $region46: #{cnn_forward.1} parent=5 // pred_check_branch
        %280 = sbr.rel (%p278) target = $region48
      $region47: #{cnn_forward.1} parent=5 // pred_region
        // Predicated region
        $region49: #{cnn_forward.1} parent=47 // pred_check
          %p281 = pneg %p38
        $region50: #{cnn_forward.1} parent=47 // pred_check_branch
          %283 = sbr.rel (%p281) target = $region52
        $region51: #{cnn_forward.1} parent=47 // pred_region
          %p284 = scmp.lt.s32.totalorder %s18, 1
          %s285 = scalar_select %p284, %s18, 1
          %s286 = smul.addr %s285, 128
          %s287 = smul.addr %s286, 8
          %s288 = scalar_lea.vmem %s0, %s287
        $region52: #{cnn_forward.1} parent=47 // pred_fallthru
          _
      $region48: #{cnn_forward.1} parent=5 // pred_fallthru
        _
      %p289 = scmp.le.s32.totalorder 1, %s18
      %p290 = scmp.lt.s32.totalorder %s18, 3
      %p291 = pnand %p289, %p290
      %p292 = pneg %p291
      // Predicated region
      $region53: #{cnn_forward.1} parent=5 // pred_check
        _
      $region54: #{cnn_forward.1} parent=5 // pred_check_branch
        %294 = sbr.rel (%p291) target = $region56
      $region55: #{cnn_forward.1} parent=5 // pred_region
        %s295 = ssub.s32 %s18, 1
        %p296 = scmp.lt.s32.totalorder %s23, 1
        %s297 = scalar_select %p296, %s23, 1
        %s298 = smul.addr %s297, 128
        %s299 = smul.addr %s298, 8
        %s300 = scalar_lea.vmem %s0, %s299
        %p301 = pneg %p44
        %p302 = pneg %p41
        %p303 = pneg %p65
        %p304 = pneg %p62
        %p305 = pneg %p86
        %p306 = pneg %p83
        %p307 = pneg %p107
        %p308 = pneg %p104
        %p309 = pneg %p128
        %p310 = pneg %p125
        %p311 = pneg %p149
        %p312 = pneg %p146
        %p313 = pneg %p170
        %p314 = pneg %p167
        %p315 = pneg %p191
        %p316 = pneg %p188
        %p317 = pneg %p212
        %p318 = pneg %p209
        %p319 = pneg %p238
        %p320 = pneg %p235
        %s321 = sand.u32 %s225, 1
        %s322 = scalar_lea.sflag [#allocation5], %s321
        %s323 = sand.u32 %s225, 1
        %s324 = scalar_lea.vmem [#allocation4], %s323
        %p325 = scmp.lt.s32.totalorder %s23, 1
        %s326 = scalar_select %p325, %s23, 1
        %s327 = smul.addr %s326, 128
        %s328 = smul.addr %s327, 8
        %s329 = scalar_lea.vmem %s0, %s328
        %v331 = vld [vmem:[%s329] ss:$2 sm:$0xff]
        %s332 = scalar_lea.vmem %s329, 16
        %v333 = vld [vmem:[%s332] ss:$2 sm:$0xff]
        %s334 = scalar_lea.vmem %s329, 32
        %v335 = vld [vmem:[%s334] ss:$2 sm:$0xff]
        %s336 = scalar_lea.vmem %s329, 48
        %v337 = vld [vmem:[%s336] ss:$2 sm:$0xff]
        %s338 = scalar_lea.vmem %s329, 64
        %v339 = vld [vmem:[%s338] ss:$2 sm:$0xff]
        %s340 = scalar_lea.vmem %s329, 80
        %v341 = vld [vmem:[%s340] ss:$2 sm:$0xff]
        %s342 = scalar_lea.vmem %s329, 96
        %v343 = vld [vmem:[%s342] ss:$2 sm:$0xff]
        %s344 = scalar_lea.vmem %s329, 112
        %v345 = vld [vmem:[%s344] ss:$2 sm:$0xff]
        %s346 = scalar_lea.vmem %s329, 128
        %v347 = vld [vmem:[%s346] ss:$2 sm:$0xff]
        %s348 = scalar_lea.vmem %s329, 144
        %v349 = vld [vmem:[%s348] ss:$2 sm:$0xff]
        %s350 = scalar_lea.vmem %s329, 160
        %v351 = vld [vmem:[%s350] ss:$2 sm:$0xff]
        %s352 = scalar_lea.vmem %s329, 176
        %v353 = vld [vmem:[%s352] ss:$2 sm:$0xff]
        %s354 = scalar_lea.vmem %s329, 192
        %v355 = vld [vmem:[%s354] ss:$2 sm:$0xff]
        %s356 = scalar_lea.vmem %s329, 208
        %v357 = vld [vmem:[%s356] ss:$2 sm:$0xff]
        %s358 = scalar_lea.vmem %s329, 224
        %v359 = vld [vmem:[%s358] ss:$2 sm:$0xff]
        %s360 = scalar_lea.vmem %s329, 240
        %v361 = vld [vmem:[%s360] ss:$2 sm:$0xff]
        %s362 = scalar_lea.vmem %s329, 256
        %v363 = vld [vmem:[%s362] ss:$2 sm:$0xff]
        %s364 = scalar_lea.vmem %s329, 272
        %v365 = vld [vmem:[%s364] ss:$2 sm:$0xff]
        %s366 = scalar_lea.vmem %s329, 288
        %v367 = vld [vmem:[%s366] ss:$2 sm:$0xff]
        %s368 = scalar_lea.vmem %s329, 304
        %v369 = vld [vmem:[%s368] ss:$2 sm:$0xff]
        %s370 = scalar_lea.vmem %s329, 320
        %v371 = vld [vmem:[%s370] ss:$2 sm:$0xff]
        %s372 = scalar_lea.vmem %s329, 336
        %v373 = vld [vmem:[%s372] ss:$2 sm:$0xff]
        %s374 = scalar_lea.vmem %s329, 352
        %v375 = vld [vmem:[%s374] ss:$2 sm:$0xff]
        %s376 = scalar_lea.vmem %s329, 368
        %v377 = vld [vmem:[%s376] ss:$2 sm:$0xff]
        %s378 = scalar_lea.vmem %s329, 384
        %v379 = vld [vmem:[%s378] ss:$2 sm:$0xff]
        %s380 = scalar_lea.vmem %s329, 400
        %v381 = vld [vmem:[%s380] ss:$2 sm:$0xff]
        %s382 = scalar_lea.vmem %s329, 416
        %v383 = vld [vmem:[%s382] ss:$2 sm:$0xff]
        %s384 = scalar_lea.vmem %s329, 432
        %v385 = vld [vmem:[%s384] ss:$2 sm:$0xff]
        %s386 = scalar_lea.vmem %s329, 448
        %v387 = vld [vmem:[%s386] ss:$2 sm:$0xff]
        %s388 = scalar_lea.vmem %s329, 464
        %v389 = vld [vmem:[%s388] ss:$2 sm:$0xff]
        %v390 = vpack.c.bf16 %v333, %v331
        %v391 = vpack.c.bf16 %v337, %v335
        %v392 = vpack.c.bf16 %v341, %v339
        %v393 = vpack.c.bf16 %v345, %v343
        %v394 = vpack.c.bf16 %v349, %v347
        %v395 = vpack.c.bf16 %v353, %v351
        %v396 = vpack.c.bf16 %v357, %v355
        %v397 = vpack.c.bf16 %v361, %v359
        %v398 = vpack.c.bf16 %v365, %v363
        %v399 = vpack.c.bf16 %v369, %v367
        %v400 = vpack.c.bf16 %v373, %v371
        %v401 = vpack.c.bf16 %v377, %v375
        %v402 = vpack.c.bf16 %v381, %v379
        %v403 = vpack.c.bf16 %v385, %v383
        %v404 = vpack.c.bf16 %v389, %v387
        %s405 = scalar_lea.vmem %s329, 1
        %v406 = vld [vmem:[%s405] ss:$2 sm:$0xff]
        %s407 = scalar_lea.vmem %s329, 17
        %v408 = vld [vmem:[%s407] ss:$2 sm:$0xff]
        %s409 = scalar_lea.vmem %s329, 33
        %v410 = vld [vmem:[%s409] ss:$2 sm:$0xff]
        %s411 = scalar_lea.vmem %s329, 49
        %v412 = vld [vmem:[%s411] ss:$2 sm:$0xff]
        %s413 = scalar_lea.vmem %s329, 65
        %v414 = vld [vmem:[%s413] ss:$2 sm:$0xff]
        %s415 = scalar_lea.vmem %s329, 81
        %v416 = vld [vmem:[%s415] ss:$2 sm:$0xff]
        %s417 = scalar_lea.vmem %s329, 97
        %v418 = vld [vmem:[%s417] ss:$2 sm:$0xff]
        %s419 = scalar_lea.vmem %s329, 113
        %v420 = vld [vmem:[%s419] ss:$2 sm:$0xff]
        %s421 = scalar_lea.vmem %s329, 129
        %v422 = vld [vmem:[%s421] ss:$2 sm:$0xff]
        %s423 = scalar_lea.vmem %s329, 145
        %v424 = vld [vmem:[%s423] ss:$2 sm:$0xff]
        %s425 = scalar_lea.vmem %s329, 161
        %v426 = vld [vmem:[%s425] ss:$2 sm:$0xff]
        %s427 = scalar_lea.vmem %s329, 177
        %v428 = vld [vmem:[%s427] ss:$2 sm:$0xff]
        %s429 = scalar_lea.vmem %s329, 193
        %v430 = vld [vmem:[%s429] ss:$2 sm:$0xff]
        %s431 = scalar_lea.vmem %s329, 209
        %v432 = vld [vmem:[%s431] ss:$2 sm:$0xff]
        %s433 = scalar_lea.vmem %s329, 225
        %v434 = vld [vmem:[%s433] ss:$2 sm:$0xff]
        %s435 = scalar_lea.vmem %s329, 241
        %v436 = vld [vmem:[%s435] ss:$2 sm:$0xff]
        %s437 = scalar_lea.vmem %s329, 257
        %v438 = vld [vmem:[%s437] ss:$2 sm:$0xff]
        %s439 = scalar_lea.vmem %s329, 273
        %v440 = vld [vmem:[%s439] ss:$2 sm:$0xff]
        %s441 = scalar_lea.vmem %s329, 289
        %v442 = vld [vmem:[%s441] ss:$2 sm:$0xff]
        %s443 = scalar_lea.vmem %s329, 305
        %v444 = vld [vmem:[%s443] ss:$2 sm:$0xff]
        %s445 = scalar_lea.vmem %s329, 321
        %v446 = vld [vmem:[%s445] ss:$2 sm:$0xff]
        %s447 = scalar_lea.vmem %s329, 337
        %v448 = vld [vmem:[%s447] ss:$2 sm:$0xff]
        %s449 = scalar_lea.vmem %s329, 353
        %v450 = vld [vmem:[%s449] ss:$2 sm:$0xff]
        %s451 = scalar_lea.vmem %s329, 369
        %v452 = vld [vmem:[%s451] ss:$2 sm:$0xff]
        %s453 = scalar_lea.vmem %s329, 385
        %v454 = vld [vmem:[%s453] ss:$2 sm:$0xff]
        %s455 = scalar_lea.vmem %s329, 401
        %v456 = vld [vmem:[%s455] ss:$2 sm:$0xff]
        %s457 = scalar_lea.vmem %s329, 417
        %v458 = vld [vmem:[%s457] ss:$2 sm:$0xff]
        %s459 = scalar_lea.vmem %s329, 433
        %v460 = vld [vmem:[%s459] ss:$2 sm:$0xff]
        %s461 = scalar_lea.vmem %s329, 449
        %v462 = vld [vmem:[%s461] ss:$2 sm:$0xff]
        %s463 = scalar_lea.vmem %s329, 465
        %v464 = vld [vmem:[%s463] ss:$2 sm:$0xff]
        %v465 = vpack.c.bf16 %v408, %v406
        %v466 = vpack.c.bf16 %v412, %v410
        %v467 = vpack.c.bf16 %v416, %v414
        %v468 = vpack.c.bf16 %v420, %v418
        %v469 = vpack.c.bf16 %v424, %v422
        %v470 = vpack.c.bf16 %v428, %v426
        %v471 = vpack.c.bf16 %v432, %v430
        %v472 = vpack.c.bf16 %v436, %v434
        %v473 = vpack.c.bf16 %v440, %v438
        %v474 = vpack.c.bf16 %v444, %v442
        %v475 = vpack.c.bf16 %v448, %v446
        %v476 = vpack.c.bf16 %v452, %v450
        %v477 = vpack.c.bf16 %v456, %v454
        %v478 = vpack.c.bf16 %v460, %v458
        %v479 = vpack.c.bf16 %v464, %v462
        %s480 = scalar_lea.vmem %s329, 2
        %v481 = vld [vmem:[%s480] ss:$2 sm:$0xff]
        %s482 = scalar_lea.vmem %s329, 18
        %v483 = vld [vmem:[%s482] ss:$2 sm:$0xff]
        %s484 = scalar_lea.vmem %s329, 34
        %v485 = vld [vmem:[%s484] ss:$2 sm:$0xff]
        %s486 = scalar_lea.vmem %s329, 50
        %v487 = vld [vmem:[%s486] ss:$2 sm:$0xff]
        %s488 = scalar_lea.vmem %s329, 66
        %v489 = vld [vmem:[%s488] ss:$2 sm:$0xff]
        %s490 = scalar_lea.vmem %s329, 82
        %v491 = vld [vmem:[%s490] ss:$2 sm:$0xff]
        %s492 = scalar_lea.vmem %s329, 98
        %v493 = vld [vmem:[%s492] ss:$2 sm:$0xff]
        %s494 = scalar_lea.vmem %s329, 114
        %v495 = vld [vmem:[%s494] ss:$2 sm:$0xff]
        %s496 = scalar_lea.vmem %s329, 130
        %v497 = vld [vmem:[%s496] ss:$2 sm:$0xff]
        %s498 = scalar_lea.vmem %s329, 146
        %v499 = vld [vmem:[%s498] ss:$2 sm:$0xff]
        %s500 = scalar_lea.vmem %s329, 162
        %v501 = vld [vmem:[%s500] ss:$2 sm:$0xff]
        %s502 = scalar_lea.vmem %s329, 178
        %v503 = vld [vmem:[%s502] ss:$2 sm:$0xff]
        %s504 = scalar_lea.vmem %s329, 194
        %v505 = vld [vmem:[%s504] ss:$2 sm:$0xff]
        %s506 = scalar_lea.vmem %s329, 210
        %v507 = vld [vmem:[%s506] ss:$2 sm:$0xff]
        %s508 = scalar_lea.vmem %s329, 226
        %v509 = vld [vmem:[%s508] ss:$2 sm:$0xff]
        %s510 = scalar_lea.vmem %s329, 242
        %v511 = vld [vmem:[%s510] ss:$2 sm:$0xff]
        %s512 = scalar_lea.vmem %s329, 258
        %v513 = vld [vmem:[%s512] ss:$2 sm:$0xff]
        %s514 = scalar_lea.vmem %s329, 274
        %v515 = vld [vmem:[%s514] ss:$2 sm:$0xff]
        %s516 = scalar_lea.vmem %s329, 290
        %v517 = vld [vmem:[%s516] ss:$2 sm:$0xff]
        %s518 = scalar_lea.vmem %s329, 306
        %v519 = vld [vmem:[%s518] ss:$2 sm:$0xff]
        %s520 = scalar_lea.vmem %s329, 322
        %v521 = vld [vmem:[%s520] ss:$2 sm:$0xff]
        %s522 = scalar_lea.vmem %s329, 338
        %v523 = vld [vmem:[%s522] ss:$2 sm:$0xff]
        %s524 = scalar_lea.vmem %s329, 354
        %v525 = vld [vmem:[%s524] ss:$2 sm:$0xff]
        %s526 = scalar_lea.vmem %s329, 370
        %v527 = vld [vmem:[%s526] ss:$2 sm:$0xff]
        %s528 = scalar_lea.vmem %s329, 386
        %v529 = vld [vmem:[%s528] ss:$2 sm:$0xff]
        %s530 = scalar_lea.vmem %s329, 402
        %v531 = vld [vmem:[%s530] ss:$2 sm:$0xff]
        %s532 = scalar_lea.vmem %s329, 418
        %v533 = vld [vmem:[%s532] ss:$2 sm:$0xff]
        %s534 = scalar_lea.vmem %s329, 434
        %v535 = vld [vmem:[%s534] ss:$2 sm:$0xff]
        %s536 = scalar_lea.vmem %s329, 450
        %v537 = vld [vmem:[%s536] ss:$2 sm:$0xff]
        %s538 = scalar_lea.vmem %s329, 466
        %v539 = vld [vmem:[%s538] ss:$2 sm:$0xff]
        %v540 = vpack.c.bf16 %v483, %v481
        %v541 = vpack.c.bf16 %v487, %v485
        %v542 = vpack.c.bf16 %v491, %v489
        %v543 = vpack.c.bf16 %v495, %v493
        %v544 = vpack.c.bf16 %v499, %v497
        %v545 = vpack.c.bf16 %v503, %v501
        %v546 = vpack.c.bf16 %v507, %v505
        %v547 = vpack.c.bf16 %v511, %v509
        %v548 = vpack.c.bf16 %v515, %v513
        %v549 = vpack.c.bf16 %v519, %v517
        %v550 = vpack.c.bf16 %v523, %v521
        %v551 = vpack.c.bf16 %v527, %v525
        %v552 = vpack.c.bf16 %v531, %v529
        %v553 = vpack.c.bf16 %v535, %v533
        %v554 = vpack.c.bf16 %v539, %v537
        %s555 = scalar_lea.vmem %s329, 480
        %v556 = vld [vmem:[%s555] ss:$2 sm:$0xff]
        %s557 = scalar_lea.vmem %s329, 496
        %v558 = vld [vmem:[%s557] ss:$2 sm:$0xff]
        %v559 = vpack.c.bf16 %v558, %v556
        %s560 = scalar_lea.vmem %s329, 481
        %v561 = vld [vmem:[%s560] ss:$2 sm:$0xff]
        %s562 = scalar_lea.vmem %s329, 497
        %v563 = vld [vmem:[%s562] ss:$2 sm:$0xff]
        %v564 = vpack.c.bf16 %v563, %v561
        %s565 = scalar_lea.vmem %s329, 482
        %v566 = vld [vmem:[%s565] ss:$2 sm:$0xff]
        %s567 = scalar_lea.vmem %s329, 498
        %v568 = vld [vmem:[%s567] ss:$2 sm:$0xff]
        %v569 = vpack.c.bf16 %v568, %v566
        %s570 = scalar_lea.vmem %s329, 512
        %v571 = vld [vmem:[%s570] ss:$2 sm:$0xff]
        %s572 = scalar_lea.vmem %s329, 528
        %v573 = vld [vmem:[%s572] ss:$2 sm:$0xff]
        %v574 = vpack.c.bf16 %v573, %v571
        %s575 = scalar_lea.vmem %s329, 513
        %v576 = vld [vmem:[%s575] ss:$2 sm:$0xff]
        %s577 = scalar_lea.vmem %s329, 529
        %v578 = vld [vmem:[%s577] ss:$2 sm:$0xff]
        %v579 = vpack.c.bf16 %v578, %v576
        %s580 = scalar_lea.vmem %s329, 514
        %v581 = vld [vmem:[%s580] ss:$2 sm:$0xff]
        %s582 = scalar_lea.vmem %s329, 530
        %v583 = vld [vmem:[%s582] ss:$2 sm:$0xff]
        %v584 = vpack.c.bf16 %v583, %v581
        %v585 = vld [vmem:[%s1] sm:$0x3]
        %s586 = scalar_lea.vmem %s1, 2
        %v587 = vld [vmem:[%s586] sm:$0x3]
        %s588 = scalar_lea.vmem %s1, 4
        %v589 = vld [vmem:[%s588] sm:$0x3]
        %s590 = scalar_lea.vmem %s1, 6
        %v591 = vld [vmem:[%s590] sm:$0x3]
        %v592 = vld [vmem:[%s2] sm:$0x1]
        %vm593 = vcmask 23552
        %v595 = vsel %vm593, %v465, 0
        %v598 = vsel %vm593, %v466, 0
        %v601 = vsel %vm593, %v467, 0
        %v604 = vsel %vm593, %v468, 0
        %v607 = vsel %vm593, %v469, 0
        %v610 = vsel %vm593, %v470, 0
        %v613 = vsel %vm593, %v471, 0
        %v616 = vsel %vm593, %v472, 0
        %v619 = vsel %vm593, %v473, 0
        %v622 = vsel %vm593, %v474, 0
        %v625 = vsel %vm593, %v475, 0
        %v628 = vsel %vm593, %v476, 0
        %v631 = vsel %vm593, %v477, 0
        %v634 = vsel %vm593, %v478, 0
        %v637 = vsel %vm593, %v479, 0
        %vm639 = vcmask 1040384
        %vm640 = vcmask 1041408
        %v641 = vsel %vm639, 4294967295, 65535
        %v642 = vsel %vm640, %v641, 0
        %v644 = vand.u32 %v587, %v642
        %646 = vmatprep.subr.bf16.mxu0 0
        %647 = vmatpush1.bf16.msra.mxu0 %v644
        %648 = vmatprep.subr.bf16.mxu0 0
        %649 = vmatpush1.bf16.msra.mxu0 0
        %650 = vmatprep.subr.bf16.mxu0 0
        %651 = vmatpush1.bf16.msra.mxu0 0
        %652 = vmatprep.subr.bf16.mxu0 0
        %653 = vmatpush1.bf16.msra.mxu0 0
        %654 = vmatprep.subr.bf16.mxu0 0
        %655 = vmatpush1.bf16.msra.mxu0 0
        %656 = vmatprep.subr.bf16.mxu0 0
        %657 = vmatpush1.bf16.msra.mxu0 0
        %658 = vmatprep.subr.bf16.mxu0 0
        %659 = vmatpush1.bf16.msra.mxu0 0
        %660 = vmatprep.subr.bf16.mxu0 0
        %661 = vmatpush1.bf16.msra.mxu0 0
        %662 = vmatprep.subr.bf16.mxu0 0
        %663 = vmatpush1.bf16.msra.mxu0 0
        %664 = vmatprep.subr.bf16.mxu0 0
        %665 = vmatpush1.bf16.msra.mxu0 0
        %666 = vmatprep.subr.bf16.mxu0 0
        %667 = vmatpush1.bf16.msra.mxu0 0
        %668 = vmatprep.subr.bf16.mxu0 0
        %669 = vmatpush1.bf16.msra.mxu0 0
        %670 = vmatprep.subr.bf16.mxu0 0
        %671 = vmatpush1.bf16.msra.mxu0 0
        %672 = vmatprep.subr.bf16.mxu0 0
        %673 = vmatpush1.bf16.msra.mxu0 0
        %674 = vmatprep.subr.bf16.mxu0 0
        %675 = vmatpush1.bf16.msra.mxu0 0
        %676 = vmatprep.subr.bf16.mxu0 0
        %677 = vmatpush1.bf16.msra.mxu0 0
        %678 = vmatprep.mubr.bf16.mxu0 0
        %679 = vmatmul.mubr.bf16.gmra.mrb[0].mxu0 %v595
        %v680 = vpop.f32.mrb[0].mxu0
        %v681 = vadd.f32 0.0, %v680
        %v682 = vpop.f32.mrb[0].mxu0
        %v683 = vpop.f32.mrb[0].mxu0
        %v684 = vadd.f32 0.0, %v683
        %v685 = vpop.f32.mrb[0].mxu0
        %686 = vmatprep.mubr.bf16.mxu0 0
        %687 = vmatmul.mubr.bf16.gmra.mrb[0].mxu0 %v598
        %v688 = vpop.f32.mrb[0].mxu0
        %v689 = vadd.f32 0.0, %v688
        %v690 = vpop.f32.mrb[0].mxu0
        %v691 = vpop.f32.mrb[0].mxu0
        %v692 = vadd.f32 0.0, %v691
        %v693 = vpop.f32.mrb[0].mxu0
        %694 = vmatprep.mubr.bf16.mxu0 0
        %695 = vmatmul.mubr.bf16.gmra.mrb[0].mxu0 %v601
        %v696 = vpop.f32.mrb[0].mxu0
        %v697 = vadd.f32 0.0, %v696
        %v698 = vpop.f32.mrb[0].mxu0
        %v699 = vpop.f32.mrb[0].mxu0
        %v700 = vadd.f32 0.0, %v699
        %v701 = vpop.f32.mrb[0].mxu0
        %702 = vmatprep.mubr.bf16.mxu0 0
        %703 = vmatmul.mubr.bf16.gmra.mrb[0].mxu0 %v604
        %v704 = vpop.f32.mrb[0].mxu0
        %v705 = vadd.f32 0.0, %v704
        %v706 = vpop.f32.mrb[0].mxu0
        %v707 = vpop.f32.mrb[0].mxu0
        %v708 = vadd.f32 0.0, %v707
        %v709 = vpop.f32.mrb[0].mxu0
        %710 = vmatprep.mubr.bf16.mxu0 0
        %711 = vmatmul.mubr.bf16.gmra.mrb[0].mxu0 %v607
        %v712 = vpop.f32.mrb[0].mxu0
        %v713 = vadd.f32 0.0, %v712
        %v714 = vpop.f32.mrb[0].mxu0
        %v715 = vpop.f32.mrb[0].mxu0
        %v716 = vadd.f32 0.0, %v715
        %v717 = vpop.f32.mrb[0].mxu0
        %718 = vmatprep.mubr.bf16.mxu0 0
        %719 = vmatmul.mubr.bf16.gmra.mrb[0].mxu0 %v610
        %v720 = vpop.f32.mrb[0].mxu0
        %v721 = vadd.f32 0.0, %v720
        %v722 = vpop.f32.mrb[0].mxu0
        %v723 = vpop.f32.mrb[0].mxu0
        %v724 = vadd.f32 0.0, %v723
        %v725 = vpop.f32.mrb[0].mxu0
        %726 = vmatprep.mubr.bf16.mxu0 0
        %727 = vmatmul.mubr.bf16.gmra.mrb[0].mxu0 %v613
        %v728 = vpop.f32.mrb[0].mxu0
        %v729 = vadd.f32 0.0, %v728
        %v730 = vpop.f32.mrb[0].mxu0
        %v731 = vpop.f32.mrb[0].mxu0
        %v732 = vadd.f32 0.0, %v731
        %v733 = vpop.f32.mrb[0].mxu0
        %734 = vmatprep.mubr.bf16.mxu0 0
        %735 = vmatmul.mubr.bf16.gmra.mrb[0].mxu0 %v616
        %v736 = vpop.f32.mrb[0].mxu0
        %v737 = vadd.f32 0.0, %v736
        %v738 = vpop.f32.mrb[0].mxu0
        %v739 = vpop.f32.mrb[0].mxu0
        %v740 = vadd.f32 0.0, %v739
        %v741 = vpop.f32.mrb[0].mxu0
        %742 = vmatprep.mubr.bf16.mxu0 0
        %743 = vmatmul.mubr.bf16.gmra.mrb[0].mxu0 %v619
        %v744 = vpop.f32.mrb[0].mxu0
        %v745 = vadd.f32 0.0, %v744
        %v746 = vpop.f32.mrb[0].mxu0
        %v747 = vpop.f32.mrb[0].mxu0
        %v748 = vadd.f32 0.0, %v747
        %v749 = vpop.f32.mrb[0].mxu0
        %750 = vmatprep.mubr.bf16.mxu0 0
        %751 = vmatmul.mubr.bf16.gmra.mrb[0].mxu0 %v622
        %v752 = vpop.f32.mrb[0].mxu0
        %v753 = vadd.f32 0.0, %v752
        %v754 = vpop.f32.mrb[0].mxu0
        %v755 = vpop.f32.mrb[0].mxu0
        %v756 = vadd.f32 0.0, %v755
        %v757 = vpop.f32.mrb[0].mxu0
        %758 = vmatprep.mubr.bf16.mxu0 0
        %759 = vmatmul.mubr.bf16.gmra.mrb[0].mxu0 %v625
        %v760 = vpop.f32.mrb[0].mxu0
        %v761 = vadd.f32 0.0, %v760
        %v762 = vpop.f32.mrb[0].mxu0
        %v763 = vpop.f32.mrb[0].mxu0
        %v764 = vadd.f32 0.0, %v763
        %v765 = vpop.f32.mrb[0].mxu0
        %766 = vmatprep.mubr.bf16.mxu0 0
        %767 = vmatmul.mubr.bf16.gmra.mrb[0].mxu0 %v628
        %v768 = vpop.f32.mrb[0].mxu0
        %v769 = vadd.f32 0.0, %v768
        %v770 = vpop.f32.mrb[0].mxu0
        %v771 = vpop.f32.mrb[0].mxu0
        %v772 = vadd.f32 0.0, %v771
        %v773 = vpop.f32.mrb[0].mxu0
        %774 = vmatprep.mubr.bf16.mxu0 0
        %775 = vmatmul.mubr.bf16.gmra.mrb[0].mxu0 %v631
        %v776 = vpop.f32.mrb[0].mxu0
        %v777 = vadd.f32 0.0, %v776
        %v778 = vpop.f32.mrb[0].mxu0
        %v779 = vpop.f32.mrb[0].mxu0
        %v780 = vadd.f32 0.0, %v779
        %v781 = vpop.f32.mrb[0].mxu0
        %782 = vmatprep.mubr.bf16.mxu0 0
        %783 = vmatmul.mubr.bf16.gmra.mrb[0].mxu0 %v634
        %v784 = vpop.f32.mrb[0].mxu0
        %v785 = vadd.f32 0.0, %v784
        %v786 = vpop.f32.mrb[0].mxu0
        %v787 = vpop.f32.mrb[0].mxu0
        %v788 = vadd.f32 0.0, %v787
        %v789 = vpop.f32.mrb[0].mxu0
        %790 = vmatprep.mubr.bf16.mxu0 0
        %791 = vmatmul.mubr.bf16.gmra.mrb[0].mxu0 %v637
        %v792 = vpop.f32.mrb[0].mxu0
        %v793 = vadd.f32 0.0, %v792
        %v794 = vpop.f32.mrb[0].mxu0
        %v795 = vpop.f32.mrb[0].mxu0
        %v796 = vadd.f32 0.0, %v795
        %v797 = vpop.f32.mrb[0].mxu0
        %798 = vdwg.mxu0
        %v800 = vsel %vm593, %v390, 0
        %v803 = vsel %vm593, %v391, 0
        %v806 = vsel %vm593, %v392, 0
        %v809 = vsel %vm593, %v393, 0
        %v812 = vsel %vm593, %v394, 0
        %v815 = vsel %vm593, %v395, 0
        %v818 = vsel %vm593, %v396, 0
        %v821 = vsel %vm593, %v397, 0
        %v824 = vsel %vm593, %v398, 0
        %v827 = vsel %vm593, %v399, 0
        %v830 = vsel %vm593, %v400, 0
        %v833 = vsel %vm593, %v401, 0
        %v836 = vsel %vm593, %v402, 0
        %v839 = vsel %vm593, %v403, 0
        %v842 = vsel %vm593, %v404, 0
        %v845 = vand.u32 %v585, %v642
        %847 = vmatprep.subr.bf16.mxu0 0
        %848 = vmatpush1.bf16.msra.mxu0 %v845
        %849 = vmatprep.subr.bf16.mxu0 0
        %850 = vmatpush1.bf16.msra.mxu0 0
        %851 = vmatprep.subr.bf16.mxu0 0
        %852 = vmatpush1.bf16.msra.mxu0 0
        %853 = vmatprep.subr.bf16.mxu0 0
        %854 = vmatpush1.bf16.msra.mxu0 0
        %855 = vmatprep.subr.bf16.mxu0 0
        %856 = vmatpush1.bf16.msra.mxu0 0
        %857 = vmatprep.subr.bf16.mxu0 0
        %858 = vmatpush1.bf16.msra.mxu0 0
        %859 = vmatprep.subr.bf16.mxu0 0
        %860 = vmatpush1.bf16.msra.mxu0 0
        %861 = vmatprep.subr.bf16.mxu0 0
        %862 = vmatpush1.bf16.msra.mxu0 0
        %863 = vmatprep.subr.bf16.mxu0 0
        %864 = vmatpush1.bf16.msra.mxu0 0
        %865 = vmatprep.subr.bf16.mxu0 0
        %866 = vmatpush1.bf16.msra.mxu0 0
        %867 = vmatprep.subr.bf16.mxu0 0
        %868 = vmatpush1.bf16.msra.mxu0 0
        %869 = vmatprep.subr.bf16.mxu0 0
        %870 = vmatpush1.bf16.msra.mxu0 0
        %871 = vmatprep.subr.bf16.mxu0 0
        %872 = vmatpush1.bf16.msra.mxu0 0
        %873 = vmatprep.subr.bf16.mxu0 0
        %874 = vmatpush1.bf16.msra.mxu0 0
        %875 = vmatprep.subr.bf16.mxu0 0
        %876 = vmatpush1.bf16.msra.mxu0 0
        %877 = vmatprep.subr.bf16.mxu0 0
        %878 = vmatpush1.bf16.msra.mxu0 0
        %879 = vmatprep.mubr.bf16.mxu0 0
        %880 = vmatmul.mubr.bf16.gmra.mrb[0].mxu0 %v800
        %v881 = vpop.f32.mrb[0].mxu0
        %v882 = vadd.f32 %v681, %v881
        %v883 = vpop.f32.mrb[0].mxu0
        %v884 = vpop.f32.mrb[0].mxu0
        %v885 = vadd.f32 %v684, %v884
        %v886 = vpop.f32.mrb[0].mxu0
        %887 = vmatprep.mubr.bf16.mxu0 0
        %888 = vmatmul.mubr.bf16.gmra.mrb[0].mxu0 %v803
        %v889 = vpop.f32.mrb[0].mxu0
        %v890 = vadd.f32 %v689, %v889
        %v891 = vpop.f32.mrb[0].mxu0
        %v892 = vpop.f32.mrb[0].mxu0
        %v893 = vadd.f32 %v692, %v892
        %v894 = vpop.f32.mrb[0].mxu0
        %895 = vmatprep.mubr.bf16.mxu0 0
        %896 = vmatmul.mubr.bf16.gmra.mrb[0].mxu0 %v806
        %v897 = vpop.f32.mrb[0].mxu0
        %v898 = vadd.f32 %v697, %v897
        %v899 = vpop.f32.mrb[0].mxu0
        %v900 = vpop.f32.mrb[0].mxu0
        %v901 = vadd.f32 %v700, %v900
        %v902 = vpop.f32.mrb[0].mxu0
        %903 = vmatprep.mubr.bf16.mxu0 0
        %904 = vmatmul.mubr.bf16.gmra.mrb[0].mxu0 %v809
        %v905 = vpop.f32.mrb[0].mxu0
        %v906 = vadd.f32 %v705, %v905
        %v907 = vpop.f32.mrb[0].mxu0
        %v908 = vpop.f32.mrb[0].mxu0
        %v909 = vadd.f32 %v708, %v908
        %v910 = vpop.f32.mrb[0].mxu0
        %911 = vmatprep.mubr.bf16.mxu0 0
        %912 = vmatmul.mubr.bf16.gmra.mrb[0].mxu0 %v812
        %v913 = vpop.f32.mrb[0].mxu0
        %v914 = vadd.f32 %v713, %v913
        %v915 = vpop.f32.mrb[0].mxu0
        %v916 = vpop.f32.mrb[0].mxu0
        %v917 = vadd.f32 %v716, %v916
        %v918 = vpop.f32.mrb[0].mxu0
        %919 = vmatprep.mubr.bf16.mxu0 0
        %920 = vmatmul.mubr.bf16.gmra.mrb[0].mxu0 %v815
        %v921 = vpop.f32.mrb[0].mxu0
        %v922 = vadd.f32 %v721, %v921
        %v923 = vpop.f32.mrb[0].mxu0
        %v924 = vpop.f32.mrb[0].mxu0
        %v925 = vadd.f32 %v724, %v924
        %v926 = vpop.f32.mrb[0].mxu0
        %927 = vmatprep.mubr.bf16.mxu0 0
        %928 = vmatmul.mubr.bf16.gmra.mrb[0].mxu0 %v818
        %v929 = vpop.f32.mrb[0].mxu0
        %v930 = vadd.f32 %v729, %v929
        %v931 = vpop.f32.mrb[0].mxu0
        %v932 = vpop.f32.mrb[0].mxu0
        %v933 = vadd.f32 %v732, %v932
        %v934 = vpop.f32.mrb[0].mxu0
        %935 = vmatprep.mubr.bf16.mxu0 0
        %936 = vmatmul.mubr.bf16.gmra.mrb[0].mxu0 %v821
        %v937 = vpop.f32.mrb[0].mxu0
        %v938 = vadd.f32 %v737, %v937
        %v939 = vpop.f32.mrb[0].mxu0
        %v940 = vpop.f32.mrb[0].mxu0
        %v941 = vadd.f32 %v740, %v940
        %v942 = vpop.f32.mrb[0].mxu0
        %943 = vmatprep.mubr.bf16.mxu0 0
        %944 = vmatmul.mubr.bf16.gmra.mrb[0].mxu0 %v824
        %v945 = vpop.f32.mrb[0].mxu0
        %v946 = vadd.f32 %v745, %v945
        %v947 = vpop.f32.mrb[0].mxu0
        %v948 = vpop.f32.mrb[0].mxu0
        %v949 = vadd.f32 %v748, %v948
        %v950 = vpop.f32.mrb[0].mxu0
        %951 = vmatprep.mubr.bf16.mxu0 0
        %952 = vmatmul.mubr.bf16.gmra.mrb[0].mxu0 %v827
        %v953 = vpop.f32.mrb[0].mxu0
        %v954 = vadd.f32 %v753, %v953
        %v955 = vpop.f32.mrb[0].mxu0
        %v956 = vpop.f32.mrb[0].mxu0
        %v957 = vadd.f32 %v756, %v956
        %v958 = vpop.f32.mrb[0].mxu0
        %959 = vmatprep.mubr.bf16.mxu0 0
        %960 = vmatmul.mubr.bf16.gmra.mrb[0].mxu0 %v830
        %v961 = vpop.f32.mrb[0].mxu0
        %v962 = vadd.f32 %v761, %v961
        %v963 = vpop.f32.mrb[0].mxu0
        %v964 = vpop.f32.mrb[0].mxu0
        %v965 = vadd.f32 %v764, %v964
        %v966 = vpop.f32.mrb[0].mxu0
        %967 = vmatprep.mubr.bf16.mxu0 0
        %968 = vmatmul.mubr.bf16.gmra.mrb[0].mxu0 %v833
        %v969 = vpop.f32.mrb[0].mxu0
        %v970 = vadd.f32 %v769, %v969
        %v971 = vpop.f32.mrb[0].mxu0
        %v972 = vpop.f32.mrb[0].mxu0
        %v973 = vadd.f32 %v772, %v972
        %v974 = vpop.f32.mrb[0].mxu0
        %975 = vmatprep.mubr.bf16.mxu0 0
        %976 = vmatmul.mubr.bf16.gmra.mrb[0].mxu0 %v836
        %v977 = vpop.f32.mrb[0].mxu0
        %v978 = vadd.f32 %v777, %v977
        %v979 = vpop.f32.mrb[0].mxu0
        %v980 = vpop.f32.mrb[0].mxu0
        %v981 = vadd.f32 %v780, %v980
        %v982 = vpop.f32.mrb[0].mxu0
        %983 = vmatprep.mubr.bf16.mxu0 0
        %984 = vmatmul.mubr.bf16.gmra.mrb[0].mxu0 %v839
        %v985 = vpop.f32.mrb[0].mxu0
        %v986 = vadd.f32 %v785, %v985
        %v987 = vpop.f32.mrb[0].mxu0
        %v988 = vpop.f32.mrb[0].mxu0
        %v989 = vadd.f32 %v788, %v988
        %v990 = vpop.f32.mrb[0].mxu0
        %991 = vmatprep.mubr.bf16.mxu0 0
        %992 = vmatmul.mubr.bf16.gmra.mrb[0].mxu0 %v842
        %v993 = vpop.f32.mrb[0].mxu0
        %v994 = vadd.f32 %v793, %v993
        %v995 = vpop.f32.mrb[0].mxu0
        %v996 = vpop.f32.mrb[0].mxu0
        %v997 = vadd.f32 %v796, %v996
        %v998 = vpop.f32.mrb[0].mxu0
        %999 = vdwg.mxu0
        %v1001 = vsel %vm593, %v559, 0
        %v1004 = vand.u32 %v589, %v642
        %1006 = vmatprep.subr.bf16.mxu0 0
        %1007 = vmatpush1.bf16.msra.mxu0 %v1004
        %1008 = vmatprep.subr.bf16.mxu0 0
        %1009 = vmatpush1.bf16.msra.mxu0 0
        %1010 = vmatprep.subr.bf16.mxu0 0
        %1011 = vmatpush1.bf16.msra.mxu0 0
        %1012 = vmatprep.subr.bf16.mxu0 0
        %1013 = vmatpush1.bf16.msra.mxu0 0
        %1014 = vmatprep.subr.bf16.mxu0 0
        %1015 = vmatpush1.bf16.msra.mxu0 0
        %1016 = vmatprep.subr.bf16.mxu0 0
        %1017 = vmatpush1.bf16.msra.mxu0 0
        %1018 = vmatprep.subr.bf16.mxu0 0
        %1019 = vmatpush1.bf16.msra.mxu0 0
        %1020 = vmatprep.subr.bf16.mxu0 0
        %1021 = vmatpush1.bf16.msra.mxu0 0
        %1022 = vmatprep.subr.bf16.mxu0 0
        %1023 = vmatpush1.bf16.msra.mxu0 0
        %1024 = vmatprep.subr.bf16.mxu0 0
        %1025 = vmatpush1.bf16.msra.mxu0 0
        %1026 = vmatprep.subr.bf16.mxu0 0
        %1027 = vmatpush1.bf16.msra.mxu0 0
        %1028 = vmatprep.subr.bf16.mxu0 0
        %1029 = vmatpush1.bf16.msra.mxu0 0
        %1030 = vmatprep.subr.bf16.mxu0 0
        %1031 = vmatpush1.bf16.msra.mxu0 0
        %1032 = vmatprep.subr.bf16.mxu0 0
        %1033 = vmatpush1.bf16.msra.mxu0 0
        %1034 = vmatprep.subr.bf16.mxu0 0
        %1035 = vmatpush1.bf16.msra.mxu0 0
        %1036 = vmatprep.subr.bf16.mxu0 0
        %1037 = vmatpush1.bf16.msra.mxu0 0
        %1038 = vmatprep.mubr.bf16.mxu0 0
        %1039 = vmatmul.mubr.bf16.gmra.mrb[0].mxu0 %v803
        %v1040 = vpop.f32.mrb[0].mxu0
        %v1041 = vadd.f32 0.0, %v1040
        %v1042 = vpop.f32.mrb[0].mxu0
        %v1043 = vpop.f32.mrb[0].mxu0
        %v1044 = vadd.f32 0.0, %v1043
        %v1045 = vpop.f32.mrb[0].mxu0
        %1046 = vmatprep.mubr.bf16.mxu0 0
        %1047 = vmatmul.mubr.bf16.gmra.mrb[0].mxu0 %v806
        %v1048 = vpop.f32.mrb[0].mxu0
        %v1049 = vadd.f32 0.0, %v1048
        %v1050 = vpop.f32.mrb[0].mxu0
        %v1051 = vpop.f32.mrb[0].mxu0
        %v1052 = vadd.f32 0.0, %v1051
        %v1053 = vpop.f32.mrb[0].mxu0
        %1054 = vmatprep.mubr.bf16.mxu0 0
        %1055 = vmatmul.mubr.bf16.gmra.mrb[0].mxu0 %v809
        %v1056 = vpop.f32.mrb[0].mxu0
        %v1057 = vadd.f32 0.0, %v1056
        %v1058 = vpop.f32.mrb[0].mxu0
        %v1059 = vpop.f32.mrb[0].mxu0
        %v1060 = vadd.f32 0.0, %v1059
        %v1061 = vpop.f32.mrb[0].mxu0
        %1062 = vmatprep.mubr.bf16.mxu0 0
        %1063 = vmatmul.mubr.bf16.gmra.mrb[0].mxu0 %v812
        %v1064 = vpop.f32.mrb[0].mxu0
        %v1065 = vadd.f32 0.0, %v1064
        %v1066 = vpop.f32.mrb[0].mxu0
        %v1067 = vpop.f32.mrb[0].mxu0
        %v1068 = vadd.f32 0.0, %v1067
        %v1069 = vpop.f32.mrb[0].mxu0
        %1070 = vmatprep.mubr.bf16.mxu0 0
        %1071 = vmatmul.mubr.bf16.gmra.mrb[0].mxu0 %v815
        %v1072 = vpop.f32.mrb[0].mxu0
        %v1073 = vadd.f32 0.0, %v1072
        %v1074 = vpop.f32.mrb[0].mxu0
        %v1075 = vpop.f32.mrb[0].mxu0
        %v1076 = vadd.f32 0.0, %v1075
        %v1077 = vpop.f32.mrb[0].mxu0
        %1078 = vmatprep.mubr.bf16.mxu0 0
        %1079 = vmatmul.mubr.bf16.gmra.mrb[0].mxu0 %v818
        %v1080 = vpop.f32.mrb[0].mxu0
        %v1081 = vadd.f32 0.0, %v1080
        %v1082 = vpop.f32.mrb[0].mxu0
        %v1083 = vpop.f32.mrb[0].mxu0
        %v1084 = vadd.f32 0.0, %v1083
        %v1085 = vpop.f32.mrb[0].mxu0
        %1086 = vmatprep.mubr.bf16.mxu0 0
        %1087 = vmatmul.mubr.bf16.gmra.mrb[0].mxu0 %v821
        %v1088 = vpop.f32.mrb[0].mxu0
        %v1089 = vadd.f32 0.0, %v1088
        %v1090 = vpop.f32.mrb[0].mxu0
        %v1091 = vpop.f32.mrb[0].mxu0
        %v1092 = vadd.f32 0.0, %v1091
        %v1093 = vpop.f32.mrb[0].mxu0
        %1094 = vmatprep.mubr.bf16.mxu0 0
        %1095 = vmatmul.mubr.bf16.gmra.mrb[0].mxu0 %v824
        %v1096 = vpop.f32.mrb[0].mxu0
        %v1097 = vadd.f32 0.0, %v1096
        %v1098 = vpop.f32.mrb[0].mxu0
        %v1099 = vpop.f32.mrb[0].mxu0
        %v1100 = vadd.f32 0.0, %v1099
        %v1101 = vpop.f32.mrb[0].mxu0
        %1102 = vmatprep.mubr.bf16.mxu0 0
        %1103 = vmatmul.mubr.bf16.gmra.mrb[0].mxu0 %v827
        %v1104 = vpop.f32.mrb[0].mxu0
        %v1105 = vadd.f32 0.0, %v1104
        %v1106 = vpop.f32.mrb[0].mxu0
        %v1107 = vpop.f32.mrb[0].mxu0
        %v1108 = vadd.f32 0.0, %v1107
        %v1109 = vpop.f32.mrb[0].mxu0
        %1110 = vmatprep.mubr.bf16.mxu0 0
        %1111 = vmatmul.mubr.bf16.gmra.mrb[0].mxu0 %v830
        %v1112 = vpop.f32.mrb[0].mxu0
        %v1113 = vadd.f32 0.0, %v1112
        %v1114 = vpop.f32.mrb[0].mxu0
        %v1115 = vpop.f32.mrb[0].mxu0
        %v1116 = vadd.f32 0.0, %v1115
        %v1117 = vpop.f32.mrb[0].mxu0
        %1118 = vmatprep.mubr.bf16.mxu0 0
        %1119 = vmatmul.mubr.bf16.gmra.mrb[0].mxu0 %v833
        %v1120 = vpop.f32.mrb[0].mxu0
        %v1121 = vadd.f32 0.0, %v1120
        %v1122 = vpop.f32.mrb[0].mxu0
        %v1123 = vpop.f32.mrb[0].mxu0
        %v1124 = vadd.f32 0.0, %v1123
        %v1125 = vpop.f32.mrb[0].mxu0
        %1126 = vmatprep.mubr.bf16.mxu0 0
        %1127 = vmatmul.mubr.bf16.gmra.mrb[0].mxu0 %v836
        %v1128 = vpop.f32.mrb[0].mxu0
        %v1129 = vadd.f32 0.0, %v1128
        %v1130 = vpop.f32.mrb[0].mxu0
        %v1131 = vpop.f32.mrb[0].mxu0
        %v1132 = vadd.f32 0.0, %v1131
        %v1133 = vpop.f32.mrb[0].mxu0
        %1134 = vmatprep.mubr.bf16.mxu0 0
        %1135 = vmatmul.mubr.bf16.gmra.mrb[0].mxu0 %v839
        %v1136 = vpop.f32.mrb[0].mxu0
        %v1137 = vadd.f32 0.0, %v1136
        %v1138 = vpop.f32.mrb[0].mxu0
        %v1139 = vpop.f32.mrb[0].mxu0
        %v1140 = vadd.f32 0.0, %v1139
        %v1141 = vpop.f32.mrb[0].mxu0
        %1142 = vmatprep.mubr.bf16.mxu0 0
        %1143 = vmatmul.mubr.bf16.gmra.mrb[0].mxu0 %v842
        %v1144 = vpop.f32.mrb[0].mxu0
        %v1145 = vadd.f32 0.0, %v1144
        %v1146 = vpop.f32.mrb[0].mxu0
        %v1147 = vpop.f32.mrb[0].mxu0
        %v1148 = vadd.f32 0.0, %v1147
        %v1149 = vpop.f32.mrb[0].mxu0
        %1150 = vmatprep.mubr.bf16.mxu0 0
        %1151 = vmatmul.mubr.bf16.gmra.mrb[0].mxu0 %v1001
        %v1152 = vpop.f32.mrb[0].mxu0
        %v1153 = vadd.f32 0.0, %v1152
        %v1154 = vpop.f32.mrb[0].mxu0
        %v1155 = vpop.f32.mrb[0].mxu0
        %v1156 = vadd.f32 0.0, %v1155
        %v1157 = vpop.f32.mrb[0].mxu0
        %1158 = vdwg.mxu0
        %v1159 = vadd.f32 %v882, %v1041
        %v1160 = vadd.f32 %v885, %v1044
        %v1161 = vadd.f32 %v890, %v1049
        %v1162 = vadd.f32 %v893, %v1052
        %v1163 = vadd.f32 %v898, %v1057
        %v1164 = vadd.f32 %v901, %v1060
        %v1165 = vadd.f32 %v906, %v1065
        %v1166 = vadd.f32 %v909, %v1068
        %v1167 = vadd.f32 %v914, %v1073
        %v1168 = vadd.f32 %v917, %v1076
        %v1169 = vadd.f32 %v922, %v1081
        %v1170 = vadd.f32 %v925, %v1084
        %v1171 = vadd.f32 %v930, %v1089
        %v1172 = vadd.f32 %v933, %v1092
        %v1173 = vadd.f32 %v938, %v1097
        %v1174 = vadd.f32 %v941, %v1100
        %v1175 = vadd.f32 %v946, %v1105
        %v1176 = vadd.f32 %v949, %v1108
        %v1177 = vadd.f32 %v954, %v1113
        %v1178 = vadd.f32 %v957, %v1116
        %v1179 = vadd.f32 %v962, %v1121
        %v1180 = vadd.f32 %v965, %v1124
        %v1181 = vadd.f32 %v970, %v1129
        %v1182 = vadd.f32 %v973, %v1132
        %v1183 = vadd.f32 %v978, %v1137
        %v1184 = vadd.f32 %v981, %v1140
        %v1185 = vadd.f32 %v986, %v1145
        %v1186 = vadd.f32 %v989, %v1148
        %v1187 = vadd.f32 %v994, %v1153
        %v1188 = vadd.f32 %v997, %v1156
        %v1190 = vsel %vm593, %v564, 0
        %v1193 = vand.u32 %v591, %v642
        %1195 = vmatprep.subr.bf16.mxu0 0
        %1196 = vmatpush1.bf16.msra.mxu0 %v1193
        %1197 = vmatprep.subr.bf16.mxu0 0
        %1198 = vmatpush1.bf16.msra.mxu0 0
        %1199 = vmatprep.subr.bf16.mxu0 0
        %1200 = vmatpush1.bf16.msra.mxu0 0
        %1201 = vmatprep.subr.bf16.mxu0 0
        %1202 = vmatpush1.bf16.msra.mxu0 0
        %1203 = vmatprep.subr.bf16.mxu0 0
        %1204 = vmatpush1.bf16.msra.mxu0 0
        %1205 = vmatprep.subr.bf16.mxu0 0
        %1206 = vmatpush1.bf16.msra.mxu0 0
        %1207 = vmatprep.subr.bf16.mxu0 0
        %1208 = vmatpush1.bf16.msra.mxu0 0
        %1209 = vmatprep.subr.bf16.mxu0 0
        %1210 = vmatpush1.bf16.msra.mxu0 0
        %1211 = vmatprep.subr.bf16.mxu0 0
        %1212 = vmatpush1.bf16.msra.mxu0 0
        %1213 = vmatprep.subr.bf16.mxu0 0
        %1214 = vmatpush1.bf16.msra.mxu0 0
        %1215 = vmatprep.subr.bf16.mxu0 0
        %1216 = vmatpush1.bf16.msra.mxu0 0
        %1217 = vmatprep.subr.bf16.mxu0 0
        %1218 = vmatpush1.bf16.msra.mxu0 0
        %1219 = vmatprep.subr.bf16.mxu0 0
        %1220 = vmatpush1.bf16.msra.mxu0 0
        %1221 = vmatprep.subr.bf16.mxu0 0
        %1222 = vmatpush1.bf16.msra.mxu0 0
        %1223 = vmatprep.subr.bf16.mxu0 0
        %1224 = vmatpush1.bf16.msra.mxu0 0
        %1225 = vmatprep.subr.bf16.mxu0 0
        %1226 = vmatpush1.bf16.msra.mxu0 0
        %1227 = vmatprep.mubr.bf16.mxu0 0
        %1228 = vmatmul.mubr.bf16.gmra.mrb[0].mxu0 %v598
        %v1229 = vpop.f32.mrb[0].mxu0
        %v1230 = vadd.f32 0.0, %v1229
        %v1231 = vpop.f32.mrb[0].mxu0
        %v1232 = vpop.f32.mrb[0].mxu0
        %v1233 = vadd.f32 0.0, %v1232
        %v1234 = vpop.f32.mrb[0].mxu0
        %1235 = vmatprep.mubr.bf16.mxu0 0
        %1236 = vmatmul.mubr.bf16.gmra.mrb[0].mxu0 %v601
        %v1237 = vpop.f32.mrb[0].mxu0
        %v1238 = vadd.f32 0.0, %v1237
        %v1239 = vpop.f32.mrb[0].mxu0
        %v1240 = vpop.f32.mrb[0].mxu0
        %v1241 = vadd.f32 0.0, %v1240
        %v1242 = vpop.f32.mrb[0].mxu0
        %1243 = vmatprep.mubr.bf16.mxu0 0
        %1244 = vmatmul.mubr.bf16.gmra.mrb[0].mxu0 %v604
        %v1245 = vpop.f32.mrb[0].mxu0
        %v1246 = vadd.f32 0.0, %v1245
        %v1247 = vpop.f32.mrb[0].mxu0
        %v1248 = vpop.f32.mrb[0].mxu0
        %v1249 = vadd.f32 0.0, %v1248
        %v1250 = vpop.f32.mrb[0].mxu0
        %1251 = vmatprep.mubr.bf16.mxu0 0
        %1252 = vmatmul.mubr.bf16.gmra.mrb[0].mxu0 %v607
        %v1253 = vpop.f32.mrb[0].mxu0
        %v1254 = vadd.f32 0.0, %v1253
        %v1255 = vpop.f32.mrb[0].mxu0
        %v1256 = vpop.f32.mrb[0].mxu0
        %v1257 = vadd.f32 0.0, %v1256
        %v1258 = vpop.f32.mrb[0].mxu0
        %1259 = vmatprep.mubr.bf16.mxu0 0
        %1260 = vmatmul.mubr.bf16.gmra.mrb[0].mxu0 %v610
        %v1261 = vpop.f32.mrb[0].mxu0
        %v1262 = vadd.f32 0.0, %v1261
        %v1263 = vpop.f32.mrb[0].mxu0
        %v1264 = vpop.f32.mrb[0].mxu0
        %v1265 = vadd.f32 0.0, %v1264
        %v1266 = vpop.f32.mrb[0].mxu0
        %1267 = vmatprep.mubr.bf16.mxu0 0
        %1268 = vmatmul.mubr.bf16.gmra.mrb[0].mxu0 %v613
        %v1269 = vpop.f32.mrb[0].mxu0
        %v1270 = vadd.f32 0.0, %v1269
        %v1271 = vpop.f32.mrb[0].mxu0
        %v1272 = vpop.f32.mrb[0].mxu0
        %v1273 = vadd.f32 0.0, %v1272
        %v1274 = vpop.f32.mrb[0].mxu0
        %1275 = vmatprep.mubr.bf16.mxu0 0
        %1276 = vmatmul.mubr.bf16.gmra.mrb[0].mxu0 %v616
        %v1277 = vpop.f32.mrb[0].mxu0
        %v1278 = vadd.f32 0.0, %v1277
        %v1279 = vpop.f32.mrb[0].mxu0
        %v1280 = vpop.f32.mrb[0].mxu0
        %v1281 = vadd.f32 0.0, %v1280
        %v1282 = vpop.f32.mrb[0].mxu0
        %1283 = vmatprep.mubr.bf16.mxu0 0
        %1284 = vmatmul.mubr.bf16.gmra.mrb[0].mxu0 %v619
        %v1285 = vpop.f32.mrb[0].mxu0
        %v1286 = vadd.f32 0.0, %v1285
        %v1287 = vpop.f32.mrb[0].mxu0
        %v1288 = vpop.f32.mrb[0].mxu0
        %v1289 = vadd.f32 0.0, %v1288
        %v1290 = vpop.f32.mrb[0].mxu0
        %1291 = vmatprep.mubr.bf16.mxu0 0
        %1292 = vmatmul.mubr.bf16.gmra.mrb[0].mxu0 %v622
        %v1293 = vpop.f32.mrb[0].mxu0
        %v1294 = vadd.f32 0.0, %v1293
        %v1295 = vpop.f32.mrb[0].mxu0
        %v1296 = vpop.f32.mrb[0].mxu0
        %v1297 = vadd.f32 0.0, %v1296
        %v1298 = vpop.f32.mrb[0].mxu0
        %1299 = vmatprep.mubr.bf16.mxu0 0
        %1300 = vmatmul.mubr.bf16.gmra.mrb[0].mxu0 %v625
        %v1301 = vpop.f32.mrb[0].mxu0
        %v1302 = vadd.f32 0.0, %v1301
        %v1303 = vpop.f32.mrb[0].mxu0
        %v1304 = vpop.f32.mrb[0].mxu0
        %v1305 = vadd.f32 0.0, %v1304
        %v1306 = vpop.f32.mrb[0].mxu0
        %1307 = vmatprep.mubr.bf16.mxu0 0
        %1308 = vmatmul.mubr.bf16.gmra.mrb[0].mxu0 %v628
        %v1309 = vpop.f32.mrb[0].mxu0
        %v1310 = vadd.f32 0.0, %v1309
        %v1311 = vpop.f32.mrb[0].mxu0
        %v1312 = vpop.f32.mrb[0].mxu0
        %v1313 = vadd.f32 0.0, %v1312
        %v1314 = vpop.f32.mrb[0].mxu0
        %1315 = vmatprep.mubr.bf16.mxu0 0
        %1316 = vmatmul.mubr.bf16.gmra.mrb[0].mxu0 %v631
        %v1317 = vpop.f32.mrb[0].mxu0
        %v1318 = vadd.f32 0.0, %v1317
        %v1319 = vpop.f32.mrb[0].mxu0
        %v1320 = vpop.f32.mrb[0].mxu0
        %v1321 = vadd.f32 0.0, %v1320
        %v1322 = vpop.f32.mrb[0].mxu0
        %1323 = vmatprep.mubr.bf16.mxu0 0
        %1324 = vmatmul.mubr.bf16.gmra.mrb[0].mxu0 %v634
        %v1325 = vpop.f32.mrb[0].mxu0
        %v1326 = vadd.f32 0.0, %v1325
        %v1327 = vpop.f32.mrb[0].mxu0
        %v1328 = vpop.f32.mrb[0].mxu0
        %v1329 = vadd.f32 0.0, %v1328
        %v1330 = vpop.f32.mrb[0].mxu0
        %1331 = vmatprep.mubr.bf16.mxu0 0
        %1332 = vmatmul.mubr.bf16.gmra.mrb[0].mxu0 %v637
        %v1333 = vpop.f32.mrb[0].mxu0
        %v1334 = vadd.f32 0.0, %v1333
        %v1335 = vpop.f32.mrb[0].mxu0
        %v1336 = vpop.f32.mrb[0].mxu0
        %v1337 = vadd.f32 0.0, %v1336
        %v1338 = vpop.f32.mrb[0].mxu0
        %1339 = vmatprep.mubr.bf16.mxu0 0
        %1340 = vmatmul.mubr.bf16.gmra.mrb[0].mxu0 %v1190
        %v1341 = vpop.f32.mrb[0].mxu0
        %v1342 = vadd.f32 0.0, %v1341
        %v1343 = vpop.f32.mrb[0].mxu0
        %v1344 = vpop.f32.mrb[0].mxu0
        %v1345 = vadd.f32 0.0, %v1344
        %v1346 = vpop.f32.mrb[0].mxu0
        %1347 = vdwg.mxu0
        %v1348 = vadd.f32 %v1159, %v1230
        %v1349 = vadd.f32 %v1160, %v1233
        %v1350 = vadd.f32 %v1161, %v1238
        %v1351 = vadd.f32 %v1162, %v1241
        %v1352 = vadd.f32 %v1163, %v1246
        %v1353 = vadd.f32 %v1164, %v1249
        %v1354 = vadd.f32 %v1165, %v1254
        %v1355 = vadd.f32 %v1166, %v1257
        %v1356 = vadd.f32 %v1167, %v1262
        %v1357 = vadd.f32 %v1168, %v1265
        %v1358 = vadd.f32 %v1169, %v1270
        %v1359 = vadd.f32 %v1170, %v1273
        %v1360 = vadd.f32 %v1171, %v1278
        %v1361 = vadd.f32 %v1172, %v1281
        %v1362 = vadd.f32 %v1173, %v1286
        %v1363 = vadd.f32 %v1174, %v1289
        %v1364 = vadd.f32 %v1175, %v1294
        %v1365 = vadd.f32 %v1176, %v1297
        %v1366 = vadd.f32 %v1177, %v1302
        %v1367 = vadd.f32 %v1178, %v1305
        %v1368 = vadd.f32 %v1179, %v1310
        %v1369 = vadd.f32 %v1180, %v1313
        %v1370 = vadd.f32 %v1181, %v1318
        %v1371 = vadd.f32 %v1182, %v1321
        %v1372 = vadd.f32 %v1183, %v1326
        %v1373 = vadd.f32 %v1184, %v1329
        %v1374 = vadd.f32 %v1185, %v1334
        %v1375 = vadd.f32 %v1186, %v1337
        %v1376 = vadd.f32 %v1187, %v1342
        %v1377 = vadd.f32 %v1188, %v1345
        %v1379 = vlaneseq
        %v1380 = vshrl.u32 %v1379, 7
        %v1381 = vsub.s32 0, %v1380
        %v1382 = vrot.slane %v592, %v1381
        %v1384 = vadd.f32 %v1348, %v1382
        %v1385 = vadd.f32 %v1349, %v1382
        %v1386 = vadd.f32 %v1350, %v1382
        %v1387 = vadd.f32 %v1351, %v1382
        %v1388 = vadd.f32 %v1352, %v1382
        %v1389 = vadd.f32 %v1353, %v1382
        %v1390 = vadd.f32 %v1354, %v1382
        %v1391 = vadd.f32 %v1355, %v1382
        %v1392 = vadd.f32 %v1356, %v1382
        %v1393 = vadd.f32 %v1357, %v1382
        %v1394 = vadd.f32 %v1358, %v1382
        %v1395 = vadd.f32 %v1359, %v1382
        %v1396 = vadd.f32 %v1360, %v1382
        %v1397 = vadd.f32 %v1361, %v1382
        %v1398 = vadd.f32 %v1362, %v1382
        %v1399 = vadd.f32 %v1363, %v1382
        %v1400 = vadd.f32 %v1364, %v1382
        %v1401 = vadd.f32 %v1365, %v1382
        %v1402 = vadd.f32 %v1366, %v1382
        %v1403 = vadd.f32 %v1367, %v1382
        %v1404 = vadd.f32 %v1368, %v1382
        %v1405 = vadd.f32 %v1369, %v1382
        %v1406 = vadd.f32 %v1370, %v1382
        %v1407 = vadd.f32 %v1371, %v1382
        %v1408 = vadd.f32 %v1372, %v1382
        %v1409 = vadd.f32 %v1373, %v1382
        %v1410 = vadd.f32 %v1374, %v1382
        %v1411 = vadd.f32 %v1375, %v1382
        %v1412 = vadd.f32 %v1376, %v1382
        %v1413 = vadd.f32 %v1377, %v1382
        %v1414 = vmax.f32 %v1384, 0.0
        %v1415 = vmax.f32 %v1385, 0.0
        %v1416 = vmax.f32 %v1386, 0.0
        %v1417 = vmax.f32 %v1387, 0.0
        %v1418 = vmax.f32 %v1388, 0.0
        %v1419 = vmax.f32 %v1389, 0.0
        %v1420 = vmax.f32 %v1390, 0.0
        %v1421 = vmax.f32 %v1391, 0.0
        %v1422 = vmax.f32 %v1392, 0.0
        %v1423 = vmax.f32 %v1393, 0.0
        %v1424 = vmax.f32 %v1394, 0.0
        %v1425 = vmax.f32 %v1395, 0.0
        %v1426 = vmax.f32 %v1396, 0.0
        %v1427 = vmax.f32 %v1397, 0.0
        %v1428 = vmax.f32 %v1398, 0.0
        %v1429 = vmax.f32 %v1399, 0.0
        %v1430 = vmax.f32 %v1400, 0.0
        %v1431 = vmax.f32 %v1401, 0.0
        %v1432 = vmax.f32 %v1402, 0.0
        %v1433 = vmax.f32 %v1403, 0.0
        %v1434 = vmax.f32 %v1404, 0.0
        %v1435 = vmax.f32 %v1405, 0.0
        %v1436 = vmax.f32 %v1406, 0.0
        %v1437 = vmax.f32 %v1407, 0.0
        %v1438 = vmax.f32 %v1408, 0.0
        %v1439 = vmax.f32 %v1409, 0.0
        %v1440 = vmax.f32 %v1410, 0.0
        %v1441 = vmax.f32 %v1411, 0.0
        %v1442 = vmax.f32 %v1412, 0.0
        %v1443 = vmax.f32 %v1413, 0.0
        %v1445 = vsel %vm593, %v540, 0
        %v1448 = vsel %vm593, %v541, 0
        %v1451 = vsel %vm593, %v542, 0
        %v1454 = vsel %vm593, %v543, 0
        %v1457 = vsel %vm593, %v544, 0
        %v1460 = vsel %vm593, %v545, 0
        %v1463 = vsel %vm593, %v546, 0
        %v1466 = vsel %vm593, %v547, 0
        %v1469 = vsel %vm593, %v548, 0
        %v1472 = vsel %vm593, %v549, 0
        %v1475 = vsel %vm593, %v550, 0
        %v1478 = vsel %vm593, %v551, 0
        %v1481 = vsel %vm593, %v552, 0
        %v1484 = vsel %vm593, %v553, 0
        %v1487 = vsel %vm593, %v554, 0
        %1489 = vmatprep.subr.bf16.mxu0 0
        %1490 = vmatpush1.bf16.msra.mxu0 %v644
        %1491 = vmatprep.subr.bf16.mxu0 0
        %1492 = vmatpush1.bf16.msra.mxu0 0
        %1493 = vmatprep.subr.bf16.mxu0 0
        %1494 = vmatpush1.bf16.msra.mxu0 0
        %1495 = vmatprep.subr.bf16.mxu0 0
        %1496 = vmatpush1.bf16.msra.mxu0 0
        %1497 = vmatprep.subr.bf16.mxu0 0
        %1498 = vmatpush1.bf16.msra.mxu0 0
        %1499 = vmatprep.subr.bf16.mxu0 0
        %1500 = vmatpush1.bf16.msra.mxu0 0
        %1501 = vmatprep.subr.bf16.mxu0 0
        %1502 = vmatpush1.bf16.msra.mxu0 0
        %1503 = vmatprep.subr.bf16.mxu0 0
        %1504 = vmatpush1.bf16.msra.mxu0 0
        %1505 = vmatprep.subr.bf16.mxu0 0
        %1506 = vmatpush1.bf16.msra.mxu0 0
        %1507 = vmatprep.subr.bf16.mxu0 0
        %1508 = vmatpush1.bf16.msra.mxu0 0
        %1509 = vmatprep.subr.bf16.mxu0 0
        %1510 = vmatpush1.bf16.msra.mxu0 0
        %1511 = vmatprep.subr.bf16.mxu0 0
        %1512 = vmatpush1.bf16.msra.mxu0 0
        %1513 = vmatprep.subr.bf16.mxu0 0
        %1514 = vmatpush1.bf16.msra.mxu0 0
        %1515 = vmatprep.subr.bf16.mxu0 0
        %1516 = vmatpush1.bf16.msra.mxu0 0
        %1517 = vmatprep.subr.bf16.mxu0 0
        %1518 = vmatpush1.bf16.msra.mxu0 0
        %1519 = vmatprep.subr.bf16.mxu0 0
        %1520 = vmatpush1.bf16.msra.mxu0 0
        %1521 = vmatprep.mubr.bf16.mxu0 0
        %1522 = vmatmul.mubr.bf16.gmra.mrb[0].mxu0 %v1445
        %v1523 = vpop.f32.mrb[0].mxu0
        %v1524 = vadd.f32 0.0, %v1523
        %v1525 = vpop.f32.mrb[0].mxu0
        %v1526 = vpop.f32.mrb[0].mxu0
        %v1527 = vadd.f32 0.0, %v1526
        %v1528 = vpop.f32.mrb[0].mxu0
        %1529 = vmatprep.mubr.bf16.mxu0 0
        %1530 = vmatmul.mubr.bf16.gmra.mrb[0].mxu0 %v1448
        %v1531 = vpop.f32.mrb[0].mxu0
        %v1532 = vadd.f32 0.0, %v1531
        %v1533 = vpop.f32.mrb[0].mxu0
        %v1534 = vpop.f32.mrb[0].mxu0
        %v1535 = vadd.f32 0.0, %v1534
        %v1536 = vpop.f32.mrb[0].mxu0
        %1537 = vmatprep.mubr.bf16.mxu0 0
        %1538 = vmatmul.mubr.bf16.gmra.mrb[0].mxu0 %v1451
        %v1539 = vpop.f32.mrb[0].mxu0
        %v1540 = vadd.f32 0.0, %v1539
        %v1541 = vpop.f32.mrb[0].mxu0
        %v1542 = vpop.f32.mrb[0].mxu0
        %v1543 = vadd.f32 0.0, %v1542
        %v1544 = vpop.f32.mrb[0].mxu0
        %1545 = vmatprep.mubr.bf16.mxu0 0
        %1546 = vmatmul.mubr.bf16.gmra.mrb[0].mxu0 %v1454
        %v1547 = vpop.f32.mrb[0].mxu0
        %v1548 = vadd.f32 0.0, %v1547
        %v1549 = vpop.f32.mrb[0].mxu0
        %v1550 = vpop.f32.mrb[0].mxu0
        %v1551 = vadd.f32 0.0, %v1550
        %v1552 = vpop.f32.mrb[0].mxu0
        %1553 = vmatprep.mubr.bf16.mxu0 0
        %1554 = vmatmul.mubr.bf16.gmra.mrb[0].mxu0 %v1457
        %v1555 = vpop.f32.mrb[0].mxu0
        %v1556 = vadd.f32 0.0, %v1555
        %v1557 = vpop.f32.mrb[0].mxu0
        %v1558 = vpop.f32.mrb[0].mxu0
        %v1559 = vadd.f32 0.0, %v1558
        %v1560 = vpop.f32.mrb[0].mxu0
        %1561 = vmatprep.mubr.bf16.mxu0 0
        %1562 = vmatmul.mubr.bf16.gmra.mrb[0].mxu0 %v1460
        %v1563 = vpop.f32.mrb[0].mxu0
        %v1564 = vadd.f32 0.0, %v1563
        %v1565 = vpop.f32.mrb[0].mxu0
        %v1566 = vpop.f32.mrb[0].mxu0
        %v1567 = vadd.f32 0.0, %v1566
        %v1568 = vpop.f32.mrb[0].mxu0
        %1569 = vmatprep.mubr.bf16.mxu0 0
        %1570 = vmatmul.mubr.bf16.gmra.mrb[0].mxu0 %v1463
        %v1571 = vpop.f32.mrb[0].mxu0
        %v1572 = vadd.f32 0.0, %v1571
        %v1573 = vpop.f32.mrb[0].mxu0
        %v1574 = vpop.f32.mrb[0].mxu0
        %v1575 = vadd.f32 0.0, %v1574
        %v1576 = vpop.f32.mrb[0].mxu0
        %1577 = vmatprep.mubr.bf16.mxu0 0
        %1578 = vmatmul.mubr.bf16.gmra.mrb[0].mxu0 %v1466
        %v1579 = vpop.f32.mrb[0].mxu0
        %v1580 = vadd.f32 0.0, %v1579
        %v1581 = vpop.f32.mrb[0].mxu0
        %v1582 = vpop.f32.mrb[0].mxu0
        %v1583 = vadd.f32 0.0, %v1582
        %v1584 = vpop.f32.mrb[0].mxu0
        %1585 = vmatprep.mubr.bf16.mxu0 0
        %1586 = vmatmul.mubr.bf16.gmra.mrb[0].mxu0 %v1469
        %v1587 = vpop.f32.mrb[0].mxu0
        %v1588 = vadd.f32 0.0, %v1587
        %v1589 = vpop.f32.mrb[0].mxu0
        %v1590 = vpop.f32.mrb[0].mxu0
        %v1591 = vadd.f32 0.0, %v1590
        %v1592 = vpop.f32.mrb[0].mxu0
        %1593 = vmatprep.mubr.bf16.mxu0 0
        %1594 = vmatmul.mubr.bf16.gmra.mrb[0].mxu0 %v1472
        %v1595 = vpop.f32.mrb[0].mxu0
        %v1596 = vadd.f32 0.0, %v1595
        %v1597 = vpop.f32.mrb[0].mxu0
        %v1598 = vpop.f32.mrb[0].mxu0
        %v1599 = vadd.f32 0.0, %v1598
        %v1600 = vpop.f32.mrb[0].mxu0
        %1601 = vmatprep.mubr.bf16.mxu0 0
        %1602 = vmatmul.mubr.bf16.gmra.mrb[0].mxu0 %v1475
        %v1603 = vpop.f32.mrb[0].mxu0
        %v1604 = vadd.f32 0.0, %v1603
        %v1605 = vpop.f32.mrb[0].mxu0
        %v1606 = vpop.f32.mrb[0].mxu0
        %v1607 = vadd.f32 0.0, %v1606
        %v1608 = vpop.f32.mrb[0].mxu0
        %1609 = vmatprep.mubr.bf16.mxu0 0
        %1610 = vmatmul.mubr.bf16.gmra.mrb[0].mxu0 %v1478
        %v1611 = vpop.f32.mrb[0].mxu0
        %v1612 = vadd.f32 0.0, %v1611
        %v1613 = vpop.f32.mrb[0].mxu0
        %v1614 = vpop.f32.mrb[0].mxu0
        %v1615 = vadd.f32 0.0, %v1614
        %v1616 = vpop.f32.mrb[0].mxu0
        %1617 = vmatprep.mubr.bf16.mxu0 0
        %1618 = vmatmul.mubr.bf16.gmra.mrb[0].mxu0 %v1481
        %v1619 = vpop.f32.mrb[0].mxu0
        %v1620 = vadd.f32 0.0, %v1619
        %v1621 = vpop.f32.mrb[0].mxu0
        %v1622 = vpop.f32.mrb[0].mxu0
        %v1623 = vadd.f32 0.0, %v1622
        %v1624 = vpop.f32.mrb[0].mxu0
        %1625 = vmatprep.mubr.bf16.mxu0 0
        %1626 = vmatmul.mubr.bf16.gmra.mrb[0].mxu0 %v1484
        %v1627 = vpop.f32.mrb[0].mxu0
        %v1628 = vadd.f32 0.0, %v1627
        %v1629 = vpop.f32.mrb[0].mxu0
        %v1630 = vpop.f32.mrb[0].mxu0
        %v1631 = vadd.f32 0.0, %v1630
        %v1632 = vpop.f32.mrb[0].mxu0
        %1633 = vmatprep.mubr.bf16.mxu0 0
        %1634 = vmatmul.mubr.bf16.gmra.mrb[0].mxu0 %v1487
        %v1635 = vpop.f32.mrb[0].mxu0
        %v1636 = vadd.f32 0.0, %v1635
        %v1637 = vpop.f32.mrb[0].mxu0
        %v1638 = vpop.f32.mrb[0].mxu0
        %v1639 = vadd.f32 0.0, %v1638
        %v1640 = vpop.f32.mrb[0].mxu0
        %1641 = vdwg.mxu0
        %1642 = vmatprep.subr.bf16.mxu0 0
        %1643 = vmatpush1.bf16.msra.mxu0 %v845
        %1644 = vmatprep.subr.bf16.mxu0 0
        %1645 = vmatpush1.bf16.msra.mxu0 0
        %1646 = vmatprep.subr.bf16.mxu0 0
        %1647 = vmatpush1.bf16.msra.mxu0 0
        %1648 = vmatprep.subr.bf16.mxu0 0
        %1649 = vmatpush1.bf16.msra.mxu0 0
        %1650 = vmatprep.subr.bf16.mxu0 0
        %1651 = vmatpush1.bf16.msra.mxu0 0
        %1652 = vmatprep.subr.bf16.mxu0 0
        %1653 = vmatpush1.bf16.msra.mxu0 0
        %1654 = vmatprep.subr.bf16.mxu0 0
        %1655 = vmatpush1.bf16.msra.mxu0 0
        %1656 = vmatprep.subr.bf16.mxu0 0
        %1657 = vmatpush1.bf16.msra.mxu0 0
        %1658 = vmatprep.subr.bf16.mxu0 0
        %1659 = vmatpush1.bf16.msra.mxu0 0
        %1660 = vmatprep.subr.bf16.mxu0 0
        %1661 = vmatpush1.bf16.msra.mxu0 0
        %1662 = vmatprep.subr.bf16.mxu0 0
        %1663 = vmatpush1.bf16.msra.mxu0 0
        %1664 = vmatprep.subr.bf16.mxu0 0
        %1665 = vmatpush1.bf16.msra.mxu0 0
        %1666 = vmatprep.subr.bf16.mxu0 0
        %1667 = vmatpush1.bf16.msra.mxu0 0
        %1668 = vmatprep.subr.bf16.mxu0 0
        %1669 = vmatpush1.bf16.msra.mxu0 0
        %1670 = vmatprep.subr.bf16.mxu0 0
        %1671 = vmatpush1.bf16.msra.mxu0 0
        %1672 = vmatprep.subr.bf16.mxu0 0
        %1673 = vmatpush1.bf16.msra.mxu0 0
        %1674 = vmatprep.mubr.bf16.mxu0 0
        %1675 = vmatmul.mubr.bf16.gmra.mrb[0].mxu0 %v595
        %v1676 = vpop.f32.mrb[0].mxu0
        %v1677 = vadd.f32 %v1524, %v1676
        %v1678 = vpop.f32.mrb[0].mxu0
        %v1679 = vpop.f32.mrb[0].mxu0
        %v1680 = vadd.f32 %v1527, %v1679
        %v1681 = vpop.f32.mrb[0].mxu0
        %1682 = vmatprep.mubr.bf16.mxu0 0
        %1683 = vmatmul.mubr.bf16.gmra.mrb[0].mxu0 %v598
        %v1684 = vpop.f32.mrb[0].mxu0
        %v1685 = vadd.f32 %v1532, %v1684
        %v1686 = vpop.f32.mrb[0].mxu0
        %v1687 = vpop.f32.mrb[0].mxu0
        %v1688 = vadd.f32 %v1535, %v1687
        %v1689 = vpop.f32.mrb[0].mxu0
        %1690 = vmatprep.mubr.bf16.mxu0 0
        %1691 = vmatmul.mubr.bf16.gmra.mrb[0].mxu0 %v601
        %v1692 = vpop.f32.mrb[0].mxu0
        %v1693 = vadd.f32 %v1540, %v1692
        %v1694 = vpop.f32.mrb[0].mxu0
        %v1695 = vpop.f32.mrb[0].mxu0
        %v1696 = vadd.f32 %v1543, %v1695
        %v1697 = vpop.f32.mrb[0].mxu0
        %1698 = vmatprep.mubr.bf16.mxu0 0
        %1699 = vmatmul.mubr.bf16.gmra.mrb[0].mxu0 %v604
        %v1700 = vpop.f32.mrb[0].mxu0
        %v1701 = vadd.f32 %v1548, %v1700
        %v1702 = vpop.f32.mrb[0].mxu0
        %v1703 = vpop.f32.mrb[0].mxu0
        %v1704 = vadd.f32 %v1551, %v1703
        %v1705 = vpop.f32.mrb[0].mxu0
        %1706 = vmatprep.mubr.bf16.mxu0 0
        %1707 = vmatmul.mubr.bf16.gmra.mrb[0].mxu0 %v607
        %v1708 = vpop.f32.mrb[0].mxu0
        %v1709 = vadd.f32 %v1556, %v1708
        %v1710 = vpop.f32.mrb[0].mxu0
        %v1711 = vpop.f32.mrb[0].mxu0
        %v1712 = vadd.f32 %v1559, %v1711
        %v1713 = vpop.f32.mrb[0].mxu0
        %1714 = vmatprep.mubr.bf16.mxu0 0
        %1715 = vmatmul.mubr.bf16.gmra.mrb[0].mxu0 %v610
        %v1716 = vpop.f32.mrb[0].mxu0
        %v1717 = vadd.f32 %v1564, %v1716
        %v1718 = vpop.f32.mrb[0].mxu0
        %v1719 = vpop.f32.mrb[0].mxu0
        %v1720 = vadd.f32 %v1567, %v1719
        %v1721 = vpop.f32.mrb[0].mxu0
        %1722 = vmatprep.mubr.bf16.mxu0 0
        %1723 = vmatmul.mubr.bf16.gmra.mrb[0].mxu0 %v613
        %v1724 = vpop.f32.mrb[0].mxu0
        %v1725 = vadd.f32 %v1572, %v1724
        %v1726 = vpop.f32.mrb[0].mxu0
        %v1727 = vpop.f32.mrb[0].mxu0
        %v1728 = vadd.f32 %v1575, %v1727
        %v1729 = vpop.f32.mrb[0].mxu0
        %1730 = vmatprep.mubr.bf16.mxu0 0
        %1731 = vmatmul.mubr.bf16.gmra.mrb[0].mxu0 %v616
        %v1732 = vpop.f32.mrb[0].mxu0
        %v1733 = vadd.f32 %v1580, %v1732
        %v1734 = vpop.f32.mrb[0].mxu0
        %v1735 = vpop.f32.mrb[0].mxu0
        %v1736 = vadd.f32 %v1583, %v1735
        %v1737 = vpop.f32.mrb[0].mxu0
        %1738 = vmatprep.mubr.bf16.mxu0 0
        %1739 = vmatmul.mubr.bf16.gmra.mrb[0].mxu0 %v619
        %v1740 = vpop.f32.mrb[0].mxu0
        %v1741 = vadd.f32 %v1588, %v1740
        %v1742 = vpop.f32.mrb[0].mxu0
        %v1743 = vpop.f32.mrb[0].mxu0
        %v1744 = vadd.f32 %v1591, %v1743
        %v1745 = vpop.f32.mrb[0].mxu0
        %1746 = vmatprep.mubr.bf16.mxu0 0
        %1747 = vmatmul.mubr.bf16.gmra.mrb[0].mxu0 %v622
        %v1748 = vpop.f32.mrb[0].mxu0
        %v1749 = vadd.f32 %v1596, %v1748
        %v1750 = vpop.f32.mrb[0].mxu0
        %v1751 = vpop.f32.mrb[0].mxu0
        %v1752 = vadd.f32 %v1599, %v1751
        %v1753 = vpop.f32.mrb[0].mxu0
        %1754 = vmatprep.mubr.bf16.mxu0 0
        %1755 = vmatmul.mubr.bf16.gmra.mrb[0].mxu0 %v625
        %v1756 = vpop.f32.mrb[0].mxu0
        %v1757 = vadd.f32 %v1604, %v1756
        %v1758 = vpop.f32.mrb[0].mxu0
        %v1759 = vpop.f32.mrb[0].mxu0
        %v1760 = vadd.f32 %v1607, %v1759
        %v1761 = vpop.f32.mrb[0].mxu0
        %1762 = vmatprep.mubr.bf16.mxu0 0
        %1763 = vmatmul.mubr.bf16.gmra.mrb[0].mxu0 %v628
        %v1764 = vpop.f32.mrb[0].mxu0
        %v1765 = vadd.f32 %v1612, %v1764
        %v1766 = vpop.f32.mrb[0].mxu0
        %v1767 = vpop.f32.mrb[0].mxu0
        %v1768 = vadd.f32 %v1615, %v1767
        %v1769 = vpop.f32.mrb[0].mxu0
        %1770 = vmatprep.mubr.bf16.mxu0 0
        %1771 = vmatmul.mubr.bf16.gmra.mrb[0].mxu0 %v631
        %v1772 = vpop.f32.mrb[0].mxu0
        %v1773 = vadd.f32 %v1620, %v1772
        %v1774 = vpop.f32.mrb[0].mxu0
        %v1775 = vpop.f32.mrb[0].mxu0
        %v1776 = vadd.f32 %v1623, %v1775
        %v1777 = vpop.f32.mrb[0].mxu0
        %1778 = vmatprep.mubr.bf16.mxu0 0
        %1779 = vmatmul.mubr.bf16.gmra.mrb[0].mxu0 %v634
        %v1780 = vpop.f32.mrb[0].mxu0
        %v1781 = vadd.f32 %v1628, %v1780
        %v1782 = vpop.f32.mrb[0].mxu0
        %v1783 = vpop.f32.mrb[0].mxu0
        %v1784 = vadd.f32 %v1631, %v1783
        %v1785 = vpop.f32.mrb[0].mxu0
        %1786 = vmatprep.mubr.bf16.mxu0 0
        %1787 = vmatmul.mubr.bf16.gmra.mrb[0].mxu0 %v637
        %v1788 = vpop.f32.mrb[0].mxu0
        %v1789 = vadd.f32 %v1636, %v1788
        %v1790 = vpop.f32.mrb[0].mxu0
        %v1791 = vpop.f32.mrb[0].mxu0
        %v1792 = vadd.f32 %v1639, %v1791
        %v1793 = vpop.f32.mrb[0].mxu0
        %1794 = vdwg.mxu0
        %1795 = vmatprep.subr.bf16.mxu0 0
        %1796 = vmatpush1.bf16.msra.mxu0 %v1004
        %1797 = vmatprep.subr.bf16.mxu0 0
        %1798 = vmatpush1.bf16.msra.mxu0 0
        %1799 = vmatprep.subr.bf16.mxu0 0
        %1800 = vmatpush1.bf16.msra.mxu0 0
        %1801 = vmatprep.subr.bf16.mxu0 0
        %1802 = vmatpush1.bf16.msra.mxu0 0
        %1803 = vmatprep.subr.bf16.mxu0 0
        %1804 = vmatpush1.bf16.msra.mxu0 0
        %1805 = vmatprep.subr.bf16.mxu0 0
        %1806 = vmatpush1.bf16.msra.mxu0 0
        %1807 = vmatprep.subr.bf16.mxu0 0
        %1808 = vmatpush1.bf16.msra.mxu0 0
        %1809 = vmatprep.subr.bf16.mxu0 0
        %1810 = vmatpush1.bf16.msra.mxu0 0
        %1811 = vmatprep.subr.bf16.mxu0 0
        %1812 = vmatpush1.bf16.msra.mxu0 0
        %1813 = vmatprep.subr.bf16.mxu0 0
        %1814 = vmatpush1.bf16.msra.mxu0 0
        %1815 = vmatprep.subr.bf16.mxu0 0
        %1816 = vmatpush1.bf16.msra.mxu0 0
        %1817 = vmatprep.subr.bf16.mxu0 0
        %1818 = vmatpush1.bf16.msra.mxu0 0
        %1819 = vmatprep.subr.bf16.mxu0 0
        %1820 = vmatpush1.bf16.msra.mxu0 0
        %1821 = vmatprep.subr.bf16.mxu0 0
        %1822 = vmatpush1.bf16.msra.mxu0 0
        %1823 = vmatprep.subr.bf16.mxu0 0
        %1824 = vmatpush1.bf16.msra.mxu0 0
        %1825 = vmatprep.subr.bf16.mxu0 0
        %1826 = vmatpush1.bf16.msra.mxu0 0
        %1827 = vmatprep.mubr.bf16.mxu0 0
        %1828 = vmatmul.mubr.bf16.gmra.mrb[0].mxu0 %v598
        %v1829 = vpop.f32.mrb[0].mxu0
        %v1830 = vadd.f32 0.0, %v1829
        %v1831 = vpop.f32.mrb[0].mxu0
        %v1832 = vpop.f32.mrb[0].mxu0
        %v1833 = vadd.f32 0.0, %v1832
        %v1834 = vpop.f32.mrb[0].mxu0
        %1835 = vmatprep.mubr.bf16.mxu0 0
        %1836 = vmatmul.mubr.bf16.gmra.mrb[0].mxu0 %v601
        %v1837 = vpop.f32.mrb[0].mxu0
        %v1838 = vadd.f32 0.0, %v1837
        %v1839 = vpop.f32.mrb[0].mxu0
        %v1840 = vpop.f32.mrb[0].mxu0
        %v1841 = vadd.f32 0.0, %v1840
        %v1842 = vpop.f32.mrb[0].mxu0
        %1843 = vmatprep.mubr.bf16.mxu0 0
        %1844 = vmatmul.mubr.bf16.gmra.mrb[0].mxu0 %v604
        %v1845 = vpop.f32.mrb[0].mxu0
        %v1846 = vadd.f32 0.0, %v1845
        %v1847 = vpop.f32.mrb[0].mxu0
        %v1848 = vpop.f32.mrb[0].mxu0
        %v1849 = vadd.f32 0.0, %v1848
        %v1850 = vpop.f32.mrb[0].mxu0
        %1851 = vmatprep.mubr.bf16.mxu0 0
        %1852 = vmatmul.mubr.bf16.gmra.mrb[0].mxu0 %v607
        %v1853 = vpop.f32.mrb[0].mxu0
        %v1854 = vadd.f32 0.0, %v1853
        %v1855 = vpop.f32.mrb[0].mxu0
        %v1856 = vpop.f32.mrb[0].mxu0
        %v1857 = vadd.f32 0.0, %v1856
        %v1858 = vpop.f32.mrb[0].mxu0
        %1859 = vmatprep.mubr.bf16.mxu0 0
        %1860 = vmatmul.mubr.bf16.gmra.mrb[0].mxu0 %v610
        %v1861 = vpop.f32.mrb[0].mxu0
        %v1862 = vadd.f32 0.0, %v1861
        %v1863 = vpop.f32.mrb[0].mxu0
        %v1864 = vpop.f32.mrb[0].mxu0
        %v1865 = vadd.f32 0.0, %v1864
        %v1866 = vpop.f32.mrb[0].mxu0
        %1867 = vmatprep.mubr.bf16.mxu0 0
        %1868 = vmatmul.mubr.bf16.gmra.mrb[0].mxu0 %v613
        %v1869 = vpop.f32.mrb[0].mxu0
        %v1870 = vadd.f32 0.0, %v1869
        %v1871 = vpop.f32.mrb[0].mxu0
        %v1872 = vpop.f32.mrb[0].mxu0
        %v1873 = vadd.f32 0.0, %v1872
        %v1874 = vpop.f32.mrb[0].mxu0
        %1875 = vmatprep.mubr.bf16.mxu0 0
        %1876 = vmatmul.mubr.bf16.gmra.mrb[0].mxu0 %v616
        %v1877 = vpop.f32.mrb[0].mxu0
        %v1878 = vadd.f32 0.0, %v1877
        %v1879 = vpop.f32.mrb[0].mxu0
        %v1880 = vpop.f32.mrb[0].mxu0
        %v1881 = vadd.f32 0.0, %v1880
        %v1882 = vpop.f32.mrb[0].mxu0
        %1883 = vmatprep.mubr.bf16.mxu0 0
        %1884 = vmatmul.mubr.bf16.gmra.mrb[0].mxu0 %v619
        %v1885 = vpop.f32.mrb[0].mxu0
        %v1886 = vadd.f32 0.0, %v1885
        %v1887 = vpop.f32.mrb[0].mxu0
        %v1888 = vpop.f32.mrb[0].mxu0
        %v1889 = vadd.f32 0.0, %v1888
        %v1890 = vpop.f32.mrb[0].mxu0
        %1891 = vmatprep.mubr.bf16.mxu0 0
        %1892 = vmatmul.mubr.bf16.gmra.mrb[0].mxu0 %v622
        %v1893 = vpop.f32.mrb[0].mxu0
        %v1894 = vadd.f32 0.0, %v1893
        %v1895 = vpop.f32.mrb[0].mxu0
        %v1896 = vpop.f32.mrb[0].mxu0
        %v1897 = vadd.f32 0.0, %v1896
        %v1898 = vpop.f32.mrb[0].mxu0
        %1899 = vmatprep.mubr.bf16.mxu0 0
        %1900 = vmatmul.mubr.bf16.gmra.mrb[0].mxu0 %v625
        %v1901 = vpop.f32.mrb[0].mxu0
        %v1902 = vadd.f32 0.0, %v1901
        %v1903 = vpop.f32.mrb[0].mxu0
        %v1904 = vpop.f32.mrb[0].mxu0
        %v1905 = vadd.f32 0.0, %v1904
        %v1906 = vpop.f32.mrb[0].mxu0
        %1907 = vmatprep.mubr.bf16.mxu0 0
        %1908 = vmatmul.mubr.bf16.gmra.mrb[0].mxu0 %v628
        %v1909 = vpop.f32.mrb[0].mxu0
        %v1910 = vadd.f32 0.0, %v1909
        %v1911 = vpop.f32.mrb[0].mxu0
        %v1912 = vpop.f32.mrb[0].mxu0
        %v1913 = vadd.f32 0.0, %v1912
        %v1914 = vpop.f32.mrb[0].mxu0
        %1915 = vmatprep.mubr.bf16.mxu0 0
        %1916 = vmatmul.mubr.bf16.gmra.mrb[0].mxu0 %v631
        %v1917 = vpop.f32.mrb[0].mxu0
        %v1918 = vadd.f32 0.0, %v1917
        %v1919 = vpop.f32.mrb[0].mxu0
        %v1920 = vpop.f32.mrb[0].mxu0
        %v1921 = vadd.f32 0.0, %v1920
        %v1922 = vpop.f32.mrb[0].mxu0
        %1923 = vmatprep.mubr.bf16.mxu0 0
        %1924 = vmatmul.mubr.bf16.gmra.mrb[0].mxu0 %v634
        %v1925 = vpop.f32.mrb[0].mxu0
        %v1926 = vadd.f32 0.0, %v1925
        %v1927 = vpop.f32.mrb[0].mxu0
        %v1928 = vpop.f32.mrb[0].mxu0
        %v1929 = vadd.f32 0.0, %v1928
        %v1930 = vpop.f32.mrb[0].mxu0
        %1931 = vmatprep.mubr.bf16.mxu0 0
        %1932 = vmatmul.mubr.bf16.gmra.mrb[0].mxu0 %v637
        %v1933 = vpop.f32.mrb[0].mxu0
        %v1934 = vadd.f32 0.0, %v1933
        %v1935 = vpop.f32.mrb[0].mxu0
        %v1936 = vpop.f32.mrb[0].mxu0
        %v1937 = vadd.f32 0.0, %v1936
        %v1938 = vpop.f32.mrb[0].mxu0
        %1939 = vmatprep.mubr.bf16.mxu0 0
        %1940 = vmatmul.mubr.bf16.gmra.mrb[0].mxu0 %v1190
        %v1941 = vpop.f32.mrb[0].mxu0
        %v1942 = vadd.f32 0.0, %v1941
        %v1943 = vpop.f32.mrb[0].mxu0
        %v1944 = vpop.f32.mrb[0].mxu0
        %v1945 = vadd.f32 0.0, %v1944
        %v1946 = vpop.f32.mrb[0].mxu0
        %1947 = vdwg.mxu0
        %v1948 = vadd.f32 %v1677, %v1830
        %v1949 = vadd.f32 %v1680, %v1833
        %v1950 = vadd.f32 %v1685, %v1838
        %v1951 = vadd.f32 %v1688, %v1841
        %v1952 = vadd.f32 %v1693, %v1846
        %v1953 = vadd.f32 %v1696, %v1849
        %v1954 = vadd.f32 %v1701, %v1854
        %v1955 = vadd.f32 %v1704, %v1857
        %v1956 = vadd.f32 %v1709, %v1862
        %v1957 = vadd.f32 %v1712, %v1865
        %v1958 = vadd.f32 %v1717, %v1870
        %v1959 = vadd.f32 %v1720, %v1873
        %v1960 = vadd.f32 %v1725, %v1878
        %v1961 = vadd.f32 %v1728, %v1881
        %v1962 = vadd.f32 %v1733, %v1886
        %v1963 = vadd.f32 %v1736, %v1889
        %v1964 = vadd.f32 %v1741, %v1894
        %v1965 = vadd.f32 %v1744, %v1897
        %v1966 = vadd.f32 %v1749, %v1902
        %v1967 = vadd.f32 %v1752, %v1905
        %v1968 = vadd.f32 %v1757, %v1910
        %v1969 = vadd.f32 %v1760, %v1913
        %v1970 = vadd.f32 %v1765, %v1918
        %v1971 = vadd.f32 %v1768, %v1921
        %v1972 = vadd.f32 %v1773, %v1926
        %v1973 = vadd.f32 %v1776, %v1929
        %v1974 = vadd.f32 %v1781, %v1934
        %v1975 = vadd.f32 %v1784, %v1937
        %v1976 = vadd.f32 %v1789, %v1942
        %v1977 = vadd.f32 %v1792, %v1945
        %v1979 = vsel %vm593, %v569, 0
        %1981 = vmatprep.subr.bf16.mxu0 0
        %1982 = vmatpush1.bf16.msra.mxu0 %v1193
        %1983 = vmatprep.subr.bf16.mxu0 0
        %1984 = vmatpush1.bf16.msra.mxu0 0
        %1985 = vmatprep.subr.bf16.mxu0 0
        %1986 = vmatpush1.bf16.msra.mxu0 0
        %1987 = vmatprep.subr.bf16.mxu0 0
        %1988 = vmatpush1.bf16.msra.mxu0 0
        %1989 = vmatprep.subr.bf16.mxu0 0
        %1990 = vmatpush1.bf16.msra.mxu0 0
        %1991 = vmatprep.subr.bf16.mxu0 0
        %1992 = vmatpush1.bf16.msra.mxu0 0
        %1993 = vmatprep.subr.bf16.mxu0 0
        %1994 = vmatpush1.bf16.msra.mxu0 0
        %1995 = vmatprep.subr.bf16.mxu0 0
        %1996 = vmatpush1.bf16.msra.mxu0 0
        %1997 = vmatprep.subr.bf16.mxu0 0
        %1998 = vmatpush1.bf16.msra.mxu0 0
        %1999 = vmatprep.subr.bf16.mxu0 0
        %2000 = vmatpush1.bf16.msra.mxu0 0
        %2001 = vmatprep.subr.bf16.mxu0 0
        %2002 = vmatpush1.bf16.msra.mxu0 0
        %2003 = vmatprep.subr.bf16.mxu0 0
        %2004 = vmatpush1.bf16.msra.mxu0 0
        %2005 = vmatprep.subr.bf16.mxu0 0
        %2006 = vmatpush1.bf16.msra.mxu0 0
        %2007 = vmatprep.subr.bf16.mxu0 0
        %2008 = vmatpush1.bf16.msra.mxu0 0
        %2009 = vmatprep.subr.bf16.mxu0 0
        %2010 = vmatpush1.bf16.msra.mxu0 0
        %2011 = vmatprep.subr.bf16.mxu0 0
        %2012 = vmatpush1.bf16.msra.mxu0 0
        %2013 = vmatprep.mubr.bf16.mxu0 0
        %2014 = vmatmul.mubr.bf16.gmra.mrb[0].mxu0 %v1448
        %v2015 = vpop.f32.mrb[0].mxu0
        %v2016 = vadd.f32 0.0, %v2015
        %v2017 = vpop.f32.mrb[0].mxu0
        %v2018 = vpop.f32.mrb[0].mxu0
        %v2019 = vadd.f32 0.0, %v2018
        %v2020 = vpop.f32.mrb[0].mxu0
        %2021 = vmatprep.mubr.bf16.mxu0 0
        %2022 = vmatmul.mubr.bf16.gmra.mrb[0].mxu0 %v1451
        %v2023 = vpop.f32.mrb[0].mxu0
        %v2024 = vadd.f32 0.0, %v2023
        %v2025 = vpop.f32.mrb[0].mxu0
        %v2026 = vpop.f32.mrb[0].mxu0
        %v2027 = vadd.f32 0.0, %v2026
        %v2028 = vpop.f32.mrb[0].mxu0
        %2029 = vmatprep.mubr.bf16.mxu0 0
        %2030 = vmatmul.mubr.bf16.gmra.mrb[0].mxu0 %v1454
        %v2031 = vpop.f32.mrb[0].mxu0
        %v2032 = vadd.f32 0.0, %v2031
        %v2033 = vpop.f32.mrb[0].mxu0
        %v2034 = vpop.f32.mrb[0].mxu0
        %v2035 = vadd.f32 0.0, %v2034
        %v2036 = vpop.f32.mrb[0].mxu0
        %2037 = vmatprep.mubr.bf16.mxu0 0
        %2038 = vmatmul.mubr.bf16.gmra.mrb[0].mxu0 %v1457
        %v2039 = vpop.f32.mrb[0].mxu0
        %v2040 = vadd.f32 0.0, %v2039
        %v2041 = vpop.f32.mrb[0].mxu0
        %v2042 = vpop.f32.mrb[0].mxu0
        %v2043 = vadd.f32 0.0, %v2042
        %v2044 = vpop.f32.mrb[0].mxu0
        %2045 = vmatprep.mubr.bf16.mxu0 0
        %2046 = vmatmul.mubr.bf16.gmra.mrb[0].mxu0 %v1460
        %v2047 = vpop.f32.mrb[0].mxu0
        %v2048 = vadd.f32 0.0, %v2047
        %v2049 = vpop.f32.mrb[0].mxu0
        %v2050 = vpop.f32.mrb[0].mxu0
        %v2051 = vadd.f32 0.0, %v2050
        %v2052 = vpop.f32.mrb[0].mxu0
        %2053 = vmatprep.mubr.bf16.mxu0 0
        %2054 = vmatmul.mubr.bf16.gmra.mrb[0].mxu0 %v1463
        %v2055 = vpop.f32.mrb[0].mxu0
        %v2056 = vadd.f32 0.0, %v2055
        %v2057 = vpop.f32.mrb[0].mxu0
        %v2058 = vpop.f32.mrb[0].mxu0
        %v2059 = vadd.f32 0.0, %v2058
        %v2060 = vpop.f32.mrb[0].mxu0
        %2061 = vmatprep.mubr.bf16.mxu0 0
        %2062 = vmatmul.mubr.bf16.gmra.mrb[0].mxu0 %v1466
        %v2063 = vpop.f32.mrb[0].mxu0
        %v2064 = vadd.f32 0.0, %v2063
        %v2065 = vpop.f32.mrb[0].mxu0
        %v2066 = vpop.f32.mrb[0].mxu0
        %v2067 = vadd.f32 0.0, %v2066
        %v2068 = vpop.f32.mrb[0].mxu0
        %2069 = vmatprep.mubr.bf16.mxu0 0
        %2070 = vmatmul.mubr.bf16.gmra.mrb[0].mxu0 %v1469
        %v2071 = vpop.f32.mrb[0].mxu0
        %v2072 = vadd.f32 0.0, %v2071
        %v2073 = vpop.f32.mrb[0].mxu0
        %v2074 = vpop.f32.mrb[0].mxu0
        %v2075 = vadd.f32 0.0, %v2074
        %v2076 = vpop.f32.mrb[0].mxu0
        %2077 = vmatprep.mubr.bf16.mxu0 0
        %2078 = vmatmul.mubr.bf16.gmra.mrb[0].mxu0 %v1472
        %v2079 = vpop.f32.mrb[0].mxu0
        %v2080 = vadd.f32 0.0, %v2079
        %v2081 = vpop.f32.mrb[0].mxu0
        %v2082 = vpop.f32.mrb[0].mxu0
        %v2083 = vadd.f32 0.0, %v2082
        %v2084 = vpop.f32.mrb[0].mxu0
        %2085 = vmatprep.mubr.bf16.mxu0 0
        %2086 = vmatmul.mubr.bf16.gmra.mrb[0].mxu0 %v1475
        %v2087 = vpop.f32.mrb[0].mxu0
        %v2088 = vadd.f32 0.0, %v2087
        %v2089 = vpop.f32.mrb[0].mxu0
        %v2090 = vpop.f32.mrb[0].mxu0
        %v2091 = vadd.f32 0.0, %v2090
        %v2092 = vpop.f32.mrb[0].mxu0
        %2093 = vmatprep.mubr.bf16.mxu0 0
        %2094 = vmatmul.mubr.bf16.gmra.mrb[0].mxu0 %v1478
        %v2095 = vpop.f32.mrb[0].mxu0
        %v2096 = vadd.f32 0.0, %v2095
        %v2097 = vpop.f32.mrb[0].mxu0
        %v2098 = vpop.f32.mrb[0].mxu0
        %v2099 = vadd.f32 0.0, %v2098
        %v2100 = vpop.f32.mrb[0].mxu0
        %2101 = vmatprep.mubr.bf16.mxu0 0
        %2102 = vmatmul.mubr.bf16.gmra.mrb[0].mxu0 %v1481
        %v2103 = vpop.f32.mrb[0].mxu0
        %v2104 = vadd.f32 0.0, %v2103
        %v2105 = vpop.f32.mrb[0].mxu0
        %v2106 = vpop.f32.mrb[0].mxu0
        %v2107 = vadd.f32 0.0, %v2106
        %v2108 = vpop.f32.mrb[0].mxu0
        %2109 = vmatprep.mubr.bf16.mxu0 0
        %2110 = vmatmul.mubr.bf16.gmra.mrb[0].mxu0 %v1484
        %v2111 = vpop.f32.mrb[0].mxu0
        %v2112 = vadd.f32 0.0, %v2111
        %v2113 = vpop.f32.mrb[0].mxu0
        %v2114 = vpop.f32.mrb[0].mxu0
        %v2115 = vadd.f32 0.0, %v2114
        %v2116 = vpop.f32.mrb[0].mxu0
        %2117 = vmatprep.mubr.bf16.mxu0 0
        %2118 = vmatmul.mubr.bf16.gmra.mrb[0].mxu0 %v1487
        %v2119 = vpop.f32.mrb[0].mxu0
        %v2120 = vadd.f32 0.0, %v2119
        %v2121 = vpop.f32.mrb[0].mxu0
        %v2122 = vpop.f32.mrb[0].mxu0
        %v2123 = vadd.f32 0.0, %v2122
        %v2124 = vpop.f32.mrb[0].mxu0
        %2125 = vmatprep.mubr.bf16.mxu0 0
        %2126 = vmatmul.mubr.bf16.gmra.mrb[0].mxu0 %v1979
        %v2127 = vpop.f32.mrb[0].mxu0
        %v2128 = vadd.f32 0.0, %v2127
        %v2129 = vpop.f32.mrb[0].mxu0
        %v2130 = vpop.f32.mrb[0].mxu0
        %v2131 = vadd.f32 0.0, %v2130
        %v2132 = vpop.f32.mrb[0].mxu0
        %2133 = vdwg.mxu0
        %v2134 = vadd.f32 %v1948, %v2016
        %v2135 = vadd.f32 %v1949, %v2019
        %v2136 = vadd.f32 %v1950, %v2024
        %v2137 = vadd.f32 %v1951, %v2027
        %v2138 = vadd.f32 %v1952, %v2032
        %v2139 = vadd.f32 %v1953, %v2035
        %v2140 = vadd.f32 %v1954, %v2040
        %v2141 = vadd.f32 %v1955, %v2043
        %v2142 = vadd.f32 %v1956, %v2048
        %v2143 = vadd.f32 %v1957, %v2051
        %v2144 = vadd.f32 %v1958, %v2056
        %v2145 = vadd.f32 %v1959, %v2059
        %v2146 = vadd.f32 %v1960, %v2064
        %v2147 = vadd.f32 %v1961, %v2067
        %v2148 = vadd.f32 %v1962, %v2072
        %v2149 = vadd.f32 %v1963, %v2075
        %v2150 = vadd.f32 %v1964, %v2080
        %v2151 = vadd.f32 %v1965, %v2083
        %v2152 = vadd.f32 %v1966, %v2088
        %v2153 = vadd.f32 %v1967, %v2091
        %v2154 = vadd.f32 %v1968, %v2096
        %v2155 = vadd.f32 %v1969, %v2099
        %v2156 = vadd.f32 %v1970, %v2104
        %v2157 = vadd.f32 %v1971, %v2107
        %v2158 = vadd.f32 %v1972, %v2112
        %v2159 = vadd.f32 %v1973, %v2115
        %v2160 = vadd.f32 %v1974, %v2120
        %v2161 = vadd.f32 %v1975, %v2123
        %v2162 = vadd.f32 %v1976, %v2128
        %v2163 = vadd.f32 %v1977, %v2131
        %v2164 = vadd.f32 %v2134, %v1382
        %v2165 = vadd.f32 %v2135, %v1382
        %v2166 = vadd.f32 %v2136, %v1382
        %v2167 = vadd.f32 %v2137, %v1382
        %v2168 = vadd.f32 %v2138, %v1382
        %v2169 = vadd.f32 %v2139, %v1382
        %v2170 = vadd.f32 %v2140, %v1382
        %v2171 = vadd.f32 %v2141, %v1382
        %v2172 = vadd.f32 %v2142, %v1382
        %v2173 = vadd.f32 %v2143, %v1382
        %v2174 = vadd.f32 %v2144, %v1382
        %v2175 = vadd.f32 %v2145, %v1382
        %v2176 = vadd.f32 %v2146, %v1382
        %v2177 = vadd.f32 %v2147, %v1382
        %v2178 = vadd.f32 %v2148, %v1382
        %v2179 = vadd.f32 %v2149, %v1382
        %v2180 = vadd.f32 %v2150, %v1382
        %v2181 = vadd.f32 %v2151, %v1382
        %v2182 = vadd.f32 %v2152, %v1382
        %v2183 = vadd.f32 %v2153, %v1382
        %v2184 = vadd.f32 %v2154, %v1382
        %v2185 = vadd.f32 %v2155, %v1382
        %v2186 = vadd.f32 %v2156, %v1382
        %v2187 = vadd.f32 %v2157, %v1382
        %v2188 = vadd.f32 %v2158, %v1382
        %v2189 = vadd.f32 %v2159, %v1382
        %v2190 = vadd.f32 %v2160, %v1382
        %v2191 = vadd.f32 %v2161, %v1382
        %v2192 = vadd.f32 %v2162, %v1382
        %v2193 = vadd.f32 %v2163, %v1382
        %v2194 = vmax.f32 %v2164, 0.0
        %v2195 = vmax.f32 %v2165, 0.0
        %v2196 = vmax.f32 %v2166, 0.0
        %v2197 = vmax.f32 %v2167, 0.0
        %v2198 = vmax.f32 %v2168, 0.0
        %v2199 = vmax.f32 %v2169, 0.0
        %v2200 = vmax.f32 %v2170, 0.0
        %v2201 = vmax.f32 %v2171, 0.0
        %v2202 = vmax.f32 %v2172, 0.0
        %v2203 = vmax.f32 %v2173, 0.0
        %v2204 = vmax.f32 %v2174, 0.0
        %v2205 = vmax.f32 %v2175, 0.0
        %v2206 = vmax.f32 %v2176, 0.0
        %v2207 = vmax.f32 %v2177, 0.0
        %v2208 = vmax.f32 %v2178, 0.0
        %v2209 = vmax.f32 %v2179, 0.0
        %v2210 = vmax.f32 %v2180, 0.0
        %v2211 = vmax.f32 %v2181, 0.0
        %v2212 = vmax.f32 %v2182, 0.0
        %v2213 = vmax.f32 %v2183, 0.0
        %v2214 = vmax.f32 %v2184, 0.0
        %v2215 = vmax.f32 %v2185, 0.0
        %v2216 = vmax.f32 %v2186, 0.0
        %v2217 = vmax.f32 %v2187, 0.0
        %v2218 = vmax.f32 %v2188, 0.0
        %v2219 = vmax.f32 %v2189, 0.0
        %v2220 = vmax.f32 %v2190, 0.0
        %v2221 = vmax.f32 %v2191, 0.0
        %v2222 = vmax.f32 %v2192, 0.0
        %v2223 = vmax.f32 %v2193, 0.0
        %2224 = vmatprep.subr.bf16.mxu0 0
        %2225 = vmatpush1.bf16.msra.mxu0 %v644
        %2226 = vmatprep.subr.bf16.mxu0 0
        %2227 = vmatpush1.bf16.msra.mxu0 0
        %2228 = vmatprep.subr.bf16.mxu0 0
        %2229 = vmatpush1.bf16.msra.mxu0 0
        %2230 = vmatprep.subr.bf16.mxu0 0
        %2231 = vmatpush1.bf16.msra.mxu0 0
        %2232 = vmatprep.subr.bf16.mxu0 0
        %2233 = vmatpush1.bf16.msra.mxu0 0
        %2234 = vmatprep.subr.bf16.mxu0 0
        %2235 = vmatpush1.bf16.msra.mxu0 0
        %2236 = vmatprep.subr.bf16.mxu0 0
        %2237 = vmatpush1.bf16.msra.mxu0 0
        %2238 = vmatprep.subr.bf16.mxu0 0
        %2239 = vmatpush1.bf16.msra.mxu0 0
        %2240 = vmatprep.subr.bf16.mxu0 0
        %2241 = vmatpush1.bf16.msra.mxu0 0
        %2242 = vmatprep.subr.bf16.mxu0 0
        %2243 = vmatpush1.bf16.msra.mxu0 0
        %2244 = vmatprep.subr.bf16.mxu0 0
        %2245 = vmatpush1.bf16.msra.mxu0 0
        %2246 = vmatprep.subr.bf16.mxu0 0
        %2247 = vmatpush1.bf16.msra.mxu0 0
        %2248 = vmatprep.subr.bf16.mxu0 0
        %2249 = vmatpush1.bf16.msra.mxu0 0
        %2250 = vmatprep.subr.bf16.mxu0 0
        %2251 = vmatpush1.bf16.msra.mxu0 0
        %2252 = vmatprep.subr.bf16.mxu0 0
        %2253 = vmatpush1.bf16.msra.mxu0 0
        %2254 = vmatprep.subr.bf16.mxu0 0
        %2255 = vmatpush1.bf16.msra.mxu0 0
        %2256 = vmatprep.mubr.bf16.mxu0 0
        %2257 = vmatmul.mubr.bf16.gmra.mrb[0].mxu0 %v598
        %v2258 = vpop.f32.mrb[0].mxu0
        %v2259 = vadd.f32 0.0, %v2258
        %v2260 = vpop.f32.mrb[0].mxu0
        %v2261 = vpop.f32.mrb[0].mxu0
        %v2262 = vadd.f32 0.0, %v2261
        %v2263 = vpop.f32.mrb[0].mxu0
        %2264 = vmatprep.mubr.bf16.mxu0 0
        %2265 = vmatmul.mubr.bf16.gmra.mrb[0].mxu0 %v601
        %v2266 = vpop.f32.mrb[0].mxu0
        %v2267 = vadd.f32 0.0, %v2266
        %v2268 = vpop.f32.mrb[0].mxu0
        %v2269 = vpop.f32.mrb[0].mxu0
        %v2270 = vadd.f32 0.0, %v2269
        %v2271 = vpop.f32.mrb[0].mxu0
        %2272 = vmatprep.mubr.bf16.mxu0 0
        %2273 = vmatmul.mubr.bf16.gmra.mrb[0].mxu0 %v604
        %v2274 = vpop.f32.mrb[0].mxu0
        %v2275 = vadd.f32 0.0, %v2274
        %v2276 = vpop.f32.mrb[0].mxu0
        %v2277 = vpop.f32.mrb[0].mxu0
        %v2278 = vadd.f32 0.0, %v2277
        %v2279 = vpop.f32.mrb[0].mxu0
        %2280 = vmatprep.mubr.bf16.mxu0 0
        %2281 = vmatmul.mubr.bf16.gmra.mrb[0].mxu0 %v607
        %v2282 = vpop.f32.mrb[0].mxu0
        %v2283 = vadd.f32 0.0, %v2282
        %v2284 = vpop.f32.mrb[0].mxu0
        %v2285 = vpop.f32.mrb[0].mxu0
        %v2286 = vadd.f32 0.0, %v2285
        %v2287 = vpop.f32.mrb[0].mxu0
        %2288 = vmatprep.mubr.bf16.mxu0 0
        %2289 = vmatmul.mubr.bf16.gmra.mrb[0].mxu0 %v610
        %v2290 = vpop.f32.mrb[0].mxu0
        %v2291 = vadd.f32 0.0, %v2290
        %v2292 = vpop.f32.mrb[0].mxu0
        %v2293 = vpop.f32.mrb[0].mxu0
        %v2294 = vadd.f32 0.0, %v2293
        %v2295 = vpop.f32.mrb[0].mxu0
        %2296 = vmatprep.mubr.bf16.mxu0 0
        %2297 = vmatmul.mubr.bf16.gmra.mrb[0].mxu0 %v613
        %v2298 = vpop.f32.mrb[0].mxu0
        %v2299 = vadd.f32 0.0, %v2298
        %v2300 = vpop.f32.mrb[0].mxu0
        %v2301 = vpop.f32.mrb[0].mxu0
        %v2302 = vadd.f32 0.0, %v2301
        %v2303 = vpop.f32.mrb[0].mxu0
        %2304 = vmatprep.mubr.bf16.mxu0 0
        %2305 = vmatmul.mubr.bf16.gmra.mrb[0].mxu0 %v616
        %v2306 = vpop.f32.mrb[0].mxu0
        %v2307 = vadd.f32 0.0, %v2306
        %v2308 = vpop.f32.mrb[0].mxu0
        %v2309 = vpop.f32.mrb[0].mxu0
        %v2310 = vadd.f32 0.0, %v2309
        %v2311 = vpop.f32.mrb[0].mxu0
        %2312 = vmatprep.mubr.bf16.mxu0 0
        %2313 = vmatmul.mubr.bf16.gmra.mrb[0].mxu0 %v619
        %v2314 = vpop.f32.mrb[0].mxu0
        %v2315 = vadd.f32 0.0, %v2314
        %v2316 = vpop.f32.mrb[0].mxu0
        %v2317 = vpop.f32.mrb[0].mxu0
        %v2318 = vadd.f32 0.0, %v2317
        %v2319 = vpop.f32.mrb[0].mxu0
        %2320 = vmatprep.mubr.bf16.mxu0 0
        %2321 = vmatmul.mubr.bf16.gmra.mrb[0].mxu0 %v622
        %v2322 = vpop.f32.mrb[0].mxu0
        %v2323 = vadd.f32 0.0, %v2322
        %v2324 = vpop.f32.mrb[0].mxu0
        %v2325 = vpop.f32.mrb[0].mxu0
        %v2326 = vadd.f32 0.0, %v2325
        %v2327 = vpop.f32.mrb[0].mxu0
        %2328 = vmatprep.mubr.bf16.mxu0 0
        %2329 = vmatmul.mubr.bf16.gmra.mrb[0].mxu0 %v625
        %v2330 = vpop.f32.mrb[0].mxu0
        %v2331 = vadd.f32 0.0, %v2330
        %v2332 = vpop.f32.mrb[0].mxu0
        %v2333 = vpop.f32.mrb[0].mxu0
        %v2334 = vadd.f32 0.0, %v2333
        %v2335 = vpop.f32.mrb[0].mxu0
        %2336 = vmatprep.mubr.bf16.mxu0 0
        %2337 = vmatmul.mubr.bf16.gmra.mrb[0].mxu0 %v628
        %v2338 = vpop.f32.mrb[0].mxu0
        %v2339 = vadd.f32 0.0, %v2338
        %v2340 = vpop.f32.mrb[0].mxu0
        %v2341 = vpop.f32.mrb[0].mxu0
        %v2342 = vadd.f32 0.0, %v2341
        %v2343 = vpop.f32.mrb[0].mxu0
        %2344 = vmatprep.mubr.bf16.mxu0 0
        %2345 = vmatmul.mubr.bf16.gmra.mrb[0].mxu0 %v631
        %v2346 = vpop.f32.mrb[0].mxu0
        %v2347 = vadd.f32 0.0, %v2346
        %v2348 = vpop.f32.mrb[0].mxu0
        %v2349 = vpop.f32.mrb[0].mxu0
        %v2350 = vadd.f32 0.0, %v2349
        %v2351 = vpop.f32.mrb[0].mxu0
        %2352 = vmatprep.mubr.bf16.mxu0 0
        %2353 = vmatmul.mubr.bf16.gmra.mrb[0].mxu0 %v634
        %v2354 = vpop.f32.mrb[0].mxu0
        %v2355 = vadd.f32 0.0, %v2354
        %v2356 = vpop.f32.mrb[0].mxu0
        %v2357 = vpop.f32.mrb[0].mxu0
        %v2358 = vadd.f32 0.0, %v2357
        %v2359 = vpop.f32.mrb[0].mxu0
        %2360 = vmatprep.mubr.bf16.mxu0 0
        %2361 = vmatmul.mubr.bf16.gmra.mrb[0].mxu0 %v637
        %v2362 = vpop.f32.mrb[0].mxu0
        %v2363 = vadd.f32 0.0, %v2362
        %v2364 = vpop.f32.mrb[0].mxu0
        %v2365 = vpop.f32.mrb[0].mxu0
        %v2366 = vadd.f32 0.0, %v2365
        %v2367 = vpop.f32.mrb[0].mxu0
        %2368 = vmatprep.mubr.bf16.mxu0 0
        %2369 = vmatmul.mubr.bf16.gmra.mrb[0].mxu0 %v1190
        %v2370 = vpop.f32.mrb[0].mxu0
        %v2371 = vadd.f32 0.0, %v2370
        %v2372 = vpop.f32.mrb[0].mxu0
        %v2373 = vpop.f32.mrb[0].mxu0
        %v2374 = vadd.f32 0.0, %v2373
        %v2375 = vpop.f32.mrb[0].mxu0
        %2376 = vdwg.mxu0
        %2377 = vmatprep.subr.bf16.mxu0 0
        %2378 = vmatpush1.bf16.msra.mxu0 %v845
        %2379 = vmatprep.subr.bf16.mxu0 0
        %2380 = vmatpush1.bf16.msra.mxu0 0
        %2381 = vmatprep.subr.bf16.mxu0 0
        %2382 = vmatpush1.bf16.msra.mxu0 0
        %2383 = vmatprep.subr.bf16.mxu0 0
        %2384 = vmatpush1.bf16.msra.mxu0 0
        %2385 = vmatprep.subr.bf16.mxu0 0
        %2386 = vmatpush1.bf16.msra.mxu0 0
        %2387 = vmatprep.subr.bf16.mxu0 0
        %2388 = vmatpush1.bf16.msra.mxu0 0
        %2389 = vmatprep.subr.bf16.mxu0 0
        %2390 = vmatpush1.bf16.msra.mxu0 0
        %2391 = vmatprep.subr.bf16.mxu0 0
        %2392 = vmatpush1.bf16.msra.mxu0 0
        %2393 = vmatprep.subr.bf16.mxu0 0
        %2394 = vmatpush1.bf16.msra.mxu0 0
        %2395 = vmatprep.subr.bf16.mxu0 0
        %2396 = vmatpush1.bf16.msra.mxu0 0
        %2397 = vmatprep.subr.bf16.mxu0 0
        %2398 = vmatpush1.bf16.msra.mxu0 0
        %2399 = vmatprep.subr.bf16.mxu0 0
        %2400 = vmatpush1.bf16.msra.mxu0 0
        %2401 = vmatprep.subr.bf16.mxu0 0
        %2402 = vmatpush1.bf16.msra.mxu0 0
        %2403 = vmatprep.subr.bf16.mxu0 0
        %2404 = vmatpush1.bf16.msra.mxu0 0
        %2405 = vmatprep.subr.bf16.mxu0 0
        %2406 = vmatpush1.bf16.msra.mxu0 0
        %2407 = vmatprep.subr.bf16.mxu0 0
        %2408 = vmatpush1.bf16.msra.mxu0 0
        %2409 = vmatprep.mubr.bf16.mxu0 0
        %2410 = vmatmul.mubr.bf16.gmra.mrb[0].mxu0 %v803
        %v2411 = vpop.f32.mrb[0].mxu0
        %v2412 = vadd.f32 %v2259, %v2411
        %v2413 = vpop.f32.mrb[0].mxu0
        %v2414 = vpop.f32.mrb[0].mxu0
        %v2415 = vadd.f32 %v2262, %v2414
        %v2416 = vpop.f32.mrb[0].mxu0
        %2417 = vmatprep.mubr.bf16.mxu0 0
        %2418 = vmatmul.mubr.bf16.gmra.mrb[0].mxu0 %v806
        %v2419 = vpop.f32.mrb[0].mxu0
        %v2420 = vadd.f32 %v2267, %v2419
        %v2421 = vpop.f32.mrb[0].mxu0
        %v2422 = vpop.f32.mrb[0].mxu0
        %v2423 = vadd.f32 %v2270, %v2422
        %v2424 = vpop.f32.mrb[0].mxu0
        %2425 = vmatprep.mubr.bf16.mxu0 0
        %2426 = vmatmul.mubr.bf16.gmra.mrb[0].mxu0 %v809
        %v2427 = vpop.f32.mrb[0].mxu0
        %v2428 = vadd.f32 %v2275, %v2427
        %v2429 = vpop.f32.mrb[0].mxu0
        %v2430 = vpop.f32.mrb[0].mxu0
        %v2431 = vadd.f32 %v2278, %v2430
        %v2432 = vpop.f32.mrb[0].mxu0
        %2433 = vmatprep.mubr.bf16.mxu0 0
        %2434 = vmatmul.mubr.bf16.gmra.mrb[0].mxu0 %v812
        %v2435 = vpop.f32.mrb[0].mxu0
        %v2436 = vadd.f32 %v2283, %v2435
        %v2437 = vpop.f32.mrb[0].mxu0
        %v2438 = vpop.f32.mrb[0].mxu0
        %v2439 = vadd.f32 %v2286, %v2438
        %v2440 = vpop.f32.mrb[0].mxu0
        %2441 = vmatprep.mubr.bf16.mxu0 0
        %2442 = vmatmul.mubr.bf16.gmra.mrb[0].mxu0 %v815
        %v2443 = vpop.f32.mrb[0].mxu0
        %v2444 = vadd.f32 %v2291, %v2443
        %v2445 = vpop.f32.mrb[0].mxu0
        %v2446 = vpop.f32.mrb[0].mxu0
        %v2447 = vadd.f32 %v2294, %v2446
        %v2448 = vpop.f32.mrb[0].mxu0
        %2449 = vmatprep.mubr.bf16.mxu0 0
        %2450 = vmatmul.mubr.bf16.gmra.mrb[0].mxu0 %v818
        %v2451 = vpop.f32.mrb[0].mxu0
        %v2452 = vadd.f32 %v2299, %v2451
        %v2453 = vpop.f32.mrb[0].mxu0
        %v2454 = vpop.f32.mrb[0].mxu0
        %v2455 = vadd.f32 %v2302, %v2454
        %v2456 = vpop.f32.mrb[0].mxu0
        %2457 = vmatprep.mubr.bf16.mxu0 0
        %2458 = vmatmul.mubr.bf16.gmra.mrb[0].mxu0 %v821
        %v2459 = vpop.f32.mrb[0].mxu0
        %v2460 = vadd.f32 %v2307, %v2459
        %v2461 = vpop.f32.mrb[0].mxu0
        %v2462 = vpop.f32.mrb[0].mxu0
        %v2463 = vadd.f32 %v2310, %v2462
        %v2464 = vpop.f32.mrb[0].mxu0
        %2465 = vmatprep.mubr.bf16.mxu0 0
        %2466 = vmatmul.mubr.bf16.gmra.mrb[0].mxu0 %v824
        %v2467 = vpop.f32.mrb[0].mxu0
        %v2468 = vadd.f32 %v2315, %v2467
        %v2469 = vpop.f32.mrb[0].mxu0
        %v2470 = vpop.f32.mrb[0].mxu0
        %v2471 = vadd.f32 %v2318, %v2470
        %v2472 = vpop.f32.mrb[0].mxu0
        %2473 = vmatprep.mubr.bf16.mxu0 0
        %2474 = vmatmul.mubr.bf16.gmra.mrb[0].mxu0 %v827
        %v2475 = vpop.f32.mrb[0].mxu0
        %v2476 = vadd.f32 %v2323, %v2475
        %v2477 = vpop.f32.mrb[0].mxu0
        %v2478 = vpop.f32.mrb[0].mxu0
        %v2479 = vadd.f32 %v2326, %v2478
        %v2480 = vpop.f32.mrb[0].mxu0
        %2481 = vmatprep.mubr.bf16.mxu0 0
        %2482 = vmatmul.mubr.bf16.gmra.mrb[0].mxu0 %v830
        %v2483 = vpop.f32.mrb[0].mxu0
        %v2484 = vadd.f32 %v2331, %v2483
        %v2485 = vpop.f32.mrb[0].mxu0
        %v2486 = vpop.f32.mrb[0].mxu0
        %v2487 = vadd.f32 %v2334, %v2486
        %v2488 = vpop.f32.mrb[0].mxu0
        %2489 = vmatprep.mubr.bf16.mxu0 0
        %2490 = vmatmul.mubr.bf16.gmra.mrb[0].mxu0 %v833
        %v2491 = vpop.f32.mrb[0].mxu0
        %v2492 = vadd.f32 %v2339, %v2491
        %v2493 = vpop.f32.mrb[0].mxu0
        %v2494 = vpop.f32.mrb[0].mxu0
        %v2495 = vadd.f32 %v2342, %v2494
        %v2496 = vpop.f32.mrb[0].mxu0
        %2497 = vmatprep.mubr.bf16.mxu0 0
        %2498 = vmatmul.mubr.bf16.gmra.mrb[0].mxu0 %v836
        %v2499 = vpop.f32.mrb[0].mxu0
        %v2500 = vadd.f32 %v2347, %v2499
        %v2501 = vpop.f32.mrb[0].mxu0
        %v2502 = vpop.f32.mrb[0].mxu0
        %v2503 = vadd.f32 %v2350, %v2502
        %v2504 = vpop.f32.mrb[0].mxu0
        %2505 = vmatprep.mubr.bf16.mxu0 0
        %2506 = vmatmul.mubr.bf16.gmra.mrb[0].mxu0 %v839
        %v2507 = vpop.f32.mrb[0].mxu0
        %v2508 = vadd.f32 %v2355, %v2507
        %v2509 = vpop.f32.mrb[0].mxu0
        %v2510 = vpop.f32.mrb[0].mxu0
        %v2511 = vadd.f32 %v2358, %v2510
        %v2512 = vpop.f32.mrb[0].mxu0
        %2513 = vmatprep.mubr.bf16.mxu0 0
        %2514 = vmatmul.mubr.bf16.gmra.mrb[0].mxu0 %v842
        %v2515 = vpop.f32.mrb[0].mxu0
        %v2516 = vadd.f32 %v2363, %v2515
        %v2517 = vpop.f32.mrb[0].mxu0
        %v2518 = vpop.f32.mrb[0].mxu0
        %v2519 = vadd.f32 %v2366, %v2518
        %v2520 = vpop.f32.mrb[0].mxu0
        %2521 = vmatprep.mubr.bf16.mxu0 0
        %2522 = vmatmul.mubr.bf16.gmra.mrb[0].mxu0 %v1001
        %v2523 = vpop.f32.mrb[0].mxu0
        %v2524 = vadd.f32 %v2371, %v2523
        %v2525 = vpop.f32.mrb[0].mxu0
        %v2526 = vpop.f32.mrb[0].mxu0
        %v2527 = vadd.f32 %v2374, %v2526
        %v2528 = vpop.f32.mrb[0].mxu0
        %2529 = vdwg.mxu0
        %v2531 = vsel %vm593, %v574, 0
        %2533 = vmatprep.subr.bf16.mxu0 0
        %2534 = vmatpush1.bf16.msra.mxu0 %v1004
        %2535 = vmatprep.subr.bf16.mxu0 0
        %2536 = vmatpush1.bf16.msra.mxu0 0
        %2537 = vmatprep.subr.bf16.mxu0 0
        %2538 = vmatpush1.bf16.msra.mxu0 0
        %2539 = vmatprep.subr.bf16.mxu0 0
        %2540 = vmatpush1.bf16.msra.mxu0 0
        %2541 = vmatprep.subr.bf16.mxu0 0
        %2542 = vmatpush1.bf16.msra.mxu0 0
        %2543 = vmatprep.subr.bf16.mxu0 0
        %2544 = vmatpush1.bf16.msra.mxu0 0
        %2545 = vmatprep.subr.bf16.mxu0 0
        %2546 = vmatpush1.bf16.msra.mxu0 0
        %2547 = vmatprep.subr.bf16.mxu0 0
        %2548 = vmatpush1.bf16.msra.mxu0 0
        %2549 = vmatprep.subr.bf16.mxu0 0
        %2550 = vmatpush1.bf16.msra.mxu0 0
        %2551 = vmatprep.subr.bf16.mxu0 0
        %2552 = vmatpush1.bf16.msra.mxu0 0
        %2553 = vmatprep.subr.bf16.mxu0 0
        %2554 = vmatpush1.bf16.msra.mxu0 0
        %2555 = vmatprep.subr.bf16.mxu0 0
        %2556 = vmatpush1.bf16.msra.mxu0 0
        %2557 = vmatprep.subr.bf16.mxu0 0
        %2558 = vmatpush1.bf16.msra.mxu0 0
        %2559 = vmatprep.subr.bf16.mxu0 0
        %2560 = vmatpush1.bf16.msra.mxu0 0
        %2561 = vmatprep.subr.bf16.mxu0 0
        %2562 = vmatpush1.bf16.msra.mxu0 0
        %2563 = vmatprep.subr.bf16.mxu0 0
        %2564 = vmatpush1.bf16.msra.mxu0 0
        %2565 = vmatprep.mubr.bf16.mxu0 0
        %2566 = vmatmul.mubr.bf16.gmra.mrb[0].mxu0 %v806
        %v2567 = vpop.f32.mrb[0].mxu0
        %v2568 = vadd.f32 0.0, %v2567
        %v2569 = vpop.f32.mrb[0].mxu0
        %v2570 = vpop.f32.mrb[0].mxu0
        %v2571 = vadd.f32 0.0, %v2570
        %v2572 = vpop.f32.mrb[0].mxu0
        %2573 = vmatprep.mubr.bf16.mxu0 0
        %2574 = vmatmul.mubr.bf16.gmra.mrb[0].mxu0 %v809
        %v2575 = vpop.f32.mrb[0].mxu0
        %v2576 = vadd.f32 0.0, %v2575
        %v2577 = vpop.f32.mrb[0].mxu0
        %v2578 = vpop.f32.mrb[0].mxu0
        %v2579 = vadd.f32 0.0, %v2578
        %v2580 = vpop.f32.mrb[0].mxu0
        %2581 = vmatprep.mubr.bf16.mxu0 0
        %2582 = vmatmul.mubr.bf16.gmra.mrb[0].mxu0 %v812
        %v2583 = vpop.f32.mrb[0].mxu0
        %v2584 = vadd.f32 0.0, %v2583
        %v2585 = vpop.f32.mrb[0].mxu0
        %v2586 = vpop.f32.mrb[0].mxu0
        %v2587 = vadd.f32 0.0, %v2586
        %v2588 = vpop.f32.mrb[0].mxu0
        %2589 = vmatprep.mubr.bf16.mxu0 0
        %2590 = vmatmul.mubr.bf16.gmra.mrb[0].mxu0 %v815
        %v2591 = vpop.f32.mrb[0].mxu0
        %v2592 = vadd.f32 0.0, %v2591
        %v2593 = vpop.f32.mrb[0].mxu0
        %v2594 = vpop.f32.mrb[0].mxu0
        %v2595 = vadd.f32 0.0, %v2594
        %v2596 = vpop.f32.mrb[0].mxu0
        %2597 = vmatprep.mubr.bf16.mxu0 0
        %2598 = vmatmul.mubr.bf16.gmra.mrb[0].mxu0 %v818
        %v2599 = vpop.f32.mrb[0].mxu0
        %v2600 = vadd.f32 0.0, %v2599
        %v2601 = vpop.f32.mrb[0].mxu0
        %v2602 = vpop.f32.mrb[0].mxu0
        %v2603 = vadd.f32 0.0, %v2602
        %v2604 = vpop.f32.mrb[0].mxu0
        %2605 = vmatprep.mubr.bf16.mxu0 0
        %2606 = vmatmul.mubr.bf16.gmra.mrb[0].mxu0 %v821
        %v2607 = vpop.f32.mrb[0].mxu0
        %v2608 = vadd.f32 0.0, %v2607
        %v2609 = vpop.f32.mrb[0].mxu0
        %v2610 = vpop.f32.mrb[0].mxu0
        %v2611 = vadd.f32 0.0, %v2610
        %v2612 = vpop.f32.mrb[0].mxu0
        %2613 = vmatprep.mubr.bf16.mxu0 0
        %2614 = vmatmul.mubr.bf16.gmra.mrb[0].mxu0 %v824
        %v2615 = vpop.f32.mrb[0].mxu0
        %v2616 = vadd.f32 0.0, %v2615
        %v2617 = vpop.f32.mrb[0].mxu0
        %v2618 = vpop.f32.mrb[0].mxu0
        %v2619 = vadd.f32 0.0, %v2618
        %v2620 = vpop.f32.mrb[0].mxu0
        %2621 = vmatprep.mubr.bf16.mxu0 0
        %2622 = vmatmul.mubr.bf16.gmra.mrb[0].mxu0 %v827
        %v2623 = vpop.f32.mrb[0].mxu0
        %v2624 = vadd.f32 0.0, %v2623
        %v2625 = vpop.f32.mrb[0].mxu0
        %v2626 = vpop.f32.mrb[0].mxu0
        %v2627 = vadd.f32 0.0, %v2626
        %v2628 = vpop.f32.mrb[0].mxu0
        %2629 = vmatprep.mubr.bf16.mxu0 0
        %2630 = vmatmul.mubr.bf16.gmra.mrb[0].mxu0 %v830
        %v2631 = vpop.f32.mrb[0].mxu0
        %v2632 = vadd.f32 0.0, %v2631
        %v2633 = vpop.f32.mrb[0].mxu0
        %v2634 = vpop.f32.mrb[0].mxu0
        %v2635 = vadd.f32 0.0, %v2634
        %v2636 = vpop.f32.mrb[0].mxu0
        %2637 = vmatprep.mubr.bf16.mxu0 0
        %2638 = vmatmul.mubr.bf16.gmra.mrb[0].mxu0 %v833
        %v2639 = vpop.f32.mrb[0].mxu0
        %v2640 = vadd.f32 0.0, %v2639
        %v2641 = vpop.f32.mrb[0].mxu0
        %v2642 = vpop.f32.mrb[0].mxu0
        %v2643 = vadd.f32 0.0, %v2642
        %v2644 = vpop.f32.mrb[0].mxu0
        %2645 = vmatprep.mubr.bf16.mxu0 0
        %2646 = vmatmul.mubr.bf16.gmra.mrb[0].mxu0 %v836
        %v2647 = vpop.f32.mrb[0].mxu0
        %v2648 = vadd.f32 0.0, %v2647
        %v2649 = vpop.f32.mrb[0].mxu0
        %v2650 = vpop.f32.mrb[0].mxu0
        %v2651 = vadd.f32 0.0, %v2650
        %v2652 = vpop.f32.mrb[0].mxu0
        %2653 = vmatprep.mubr.bf16.mxu0 0
        %2654 = vmatmul.mubr.bf16.gmra.mrb[0].mxu0 %v839
        %v2655 = vpop.f32.mrb[0].mxu0
        %v2656 = vadd.f32 0.0, %v2655
        %v2657 = vpop.f32.mrb[0].mxu0
        %v2658 = vpop.f32.mrb[0].mxu0
        %v2659 = vadd.f32 0.0, %v2658
        %v2660 = vpop.f32.mrb[0].mxu0
        %2661 = vmatprep.mubr.bf16.mxu0 0
        %2662 = vmatmul.mubr.bf16.gmra.mrb[0].mxu0 %v842
        %v2663 = vpop.f32.mrb[0].mxu0
        %v2664 = vadd.f32 0.0, %v2663
        %v2665 = vpop.f32.mrb[0].mxu0
        %v2666 = vpop.f32.mrb[0].mxu0
        %v2667 = vadd.f32 0.0, %v2666
        %v2668 = vpop.f32.mrb[0].mxu0
        %2669 = vmatprep.mubr.bf16.mxu0 0
        %2670 = vmatmul.mubr.bf16.gmra.mrb[0].mxu0 %v1001
        %v2671 = vpop.f32.mrb[0].mxu0
        %v2672 = vadd.f32 0.0, %v2671
        %v2673 = vpop.f32.mrb[0].mxu0
        %v2674 = vpop.f32.mrb[0].mxu0
        %v2675 = vadd.f32 0.0, %v2674
        %v2676 = vpop.f32.mrb[0].mxu0
        %2677 = vmatprep.mubr.bf16.mxu0 0
        %2678 = vmatmul.mubr.bf16.gmra.mrb[0].mxu0 %v2531
        %v2679 = vpop.f32.mrb[0].mxu0
        %v2680 = vadd.f32 0.0, %v2679
        %v2681 = vpop.f32.mrb[0].mxu0
        %v2682 = vpop.f32.mrb[0].mxu0
        %v2683 = vadd.f32 0.0, %v2682
        %v2684 = vpop.f32.mrb[0].mxu0
        %2685 = vdwg.mxu0
        %v2686 = vadd.f32 %v2412, %v2568
        %v2687 = vadd.f32 %v2415, %v2571
        %v2688 = vadd.f32 %v2420, %v2576
        %v2689 = vadd.f32 %v2423, %v2579
        %v2690 = vadd.f32 %v2428, %v2584
        %v2691 = vadd.f32 %v2431, %v2587
        %v2692 = vadd.f32 %v2436, %v2592
        %v2693 = vadd.f32 %v2439, %v2595
        %v2694 = vadd.f32 %v2444, %v2600
        %v2695 = vadd.f32 %v2447, %v2603
        %v2696 = vadd.f32 %v2452, %v2608
        %v2697 = vadd.f32 %v2455, %v2611
        %v2698 = vadd.f32 %v2460, %v2616
        %v2699 = vadd.f32 %v2463, %v2619
        %v2700 = vadd.f32 %v2468, %v2624
        %v2701 = vadd.f32 %v2471, %v2627
        %v2702 = vadd.f32 %v2476, %v2632
        %v2703 = vadd.f32 %v2479, %v2635
        %v2704 = vadd.f32 %v2484, %v2640
        %v2705 = vadd.f32 %v2487, %v2643
        %v2706 = vadd.f32 %v2492, %v2648
        %v2707 = vadd.f32 %v2495, %v2651
        %v2708 = vadd.f32 %v2500, %v2656
        %v2709 = vadd.f32 %v2503, %v2659
        %v2710 = vadd.f32 %v2508, %v2664
        %v2711 = vadd.f32 %v2511, %v2667
        %v2712 = vadd.f32 %v2516, %v2672
        %v2713 = vadd.f32 %v2519, %v2675
        %v2714 = vadd.f32 %v2524, %v2680
        %v2715 = vadd.f32 %v2527, %v2683
        %v2717 = vsel %vm593, %v579, 0
        %2719 = vmatprep.subr.bf16.mxu0 0
        %2720 = vmatpush1.bf16.msra.mxu0 %v1193
        %2721 = vmatprep.subr.bf16.mxu0 0
        %2722 = vmatpush1.bf16.msra.mxu0 0
        %2723 = vmatprep.subr.bf16.mxu0 0
        %2724 = vmatpush1.bf16.msra.mxu0 0
        %2725 = vmatprep.subr.bf16.mxu0 0
        %2726 = vmatpush1.bf16.msra.mxu0 0
        %2727 = vmatprep.subr.bf16.mxu0 0
        %2728 = vmatpush1.bf16.msra.mxu0 0
        %2729 = vmatprep.subr.bf16.mxu0 0
        %2730 = vmatpush1.bf16.msra.mxu0 0
        %2731 = vmatprep.subr.bf16.mxu0 0
        %2732 = vmatpush1.bf16.msra.mxu0 0
        %2733 = vmatprep.subr.bf16.mxu0 0
        %2734 = vmatpush1.bf16.msra.mxu0 0
        %2735 = vmatprep.subr.bf16.mxu0 0
        %2736 = vmatpush1.bf16.msra.mxu0 0
        %2737 = vmatprep.subr.bf16.mxu0 0
        %2738 = vmatpush1.bf16.msra.mxu0 0
        %2739 = vmatprep.subr.bf16.mxu0 0
        %2740 = vmatpush1.bf16.msra.mxu0 0
        %2741 = vmatprep.subr.bf16.mxu0 0
        %2742 = vmatpush1.bf16.msra.mxu0 0
        %2743 = vmatprep.subr.bf16.mxu0 0
        %2744 = vmatpush1.bf16.msra.mxu0 0
        %2745 = vmatprep.subr.bf16.mxu0 0
        %2746 = vmatpush1.bf16.msra.mxu0 0
        %2747 = vmatprep.subr.bf16.mxu0 0
        %2748 = vmatpush1.bf16.msra.mxu0 0
        %2749 = vmatprep.subr.bf16.mxu0 0
        %2750 = vmatpush1.bf16.msra.mxu0 0
        %2751 = vmatprep.mubr.bf16.mxu0 0
        %2752 = vmatmul.mubr.bf16.gmra.mrb[0].mxu0 %v601
        %v2753 = vpop.f32.mrb[0].mxu0
        %v2754 = vadd.f32 0.0, %v2753
        %v2755 = vpop.f32.mrb[0].mxu0
        %v2756 = vpop.f32.mrb[0].mxu0
        %v2757 = vadd.f32 0.0, %v2756
        %v2758 = vpop.f32.mrb[0].mxu0
        %2759 = vmatprep.mubr.bf16.mxu0 0
        %2760 = vmatmul.mubr.bf16.gmra.mrb[0].mxu0 %v604
        %v2761 = vpop.f32.mrb[0].mxu0
        %v2762 = vadd.f32 0.0, %v2761
        %v2763 = vpop.f32.mrb[0].mxu0
        %v2764 = vpop.f32.mrb[0].mxu0
        %v2765 = vadd.f32 0.0, %v2764
        %v2766 = vpop.f32.mrb[0].mxu0
        %2767 = vmatprep.mubr.bf16.mxu0 0
        %2768 = vmatmul.mubr.bf16.gmra.mrb[0].mxu0 %v607
        %v2769 = vpop.f32.mrb[0].mxu0
        %v2770 = vadd.f32 0.0, %v2769
        %v2771 = vpop.f32.mrb[0].mxu0
        %v2772 = vpop.f32.mrb[0].mxu0
        %v2773 = vadd.f32 0.0, %v2772
        %v2774 = vpop.f32.mrb[0].mxu0
        %2775 = vmatprep.mubr.bf16.mxu0 0
        %2776 = vmatmul.mubr.bf16.gmra.mrb[0].mxu0 %v610
        %v2777 = vpop.f32.mrb[0].mxu0
        %v2778 = vadd.f32 0.0, %v2777
        %v2779 = vpop.f32.mrb[0].mxu0
        %v2780 = vpop.f32.mrb[0].mxu0
        %v2781 = vadd.f32 0.0, %v2780
        %v2782 = vpop.f32.mrb[0].mxu0
        %2783 = vmatprep.mubr.bf16.mxu0 0
        %2784 = vmatmul.mubr.bf16.gmra.mrb[0].mxu0 %v613
        %v2785 = vpop.f32.mrb[0].mxu0
        %v2786 = vadd.f32 0.0, %v2785
        %v2787 = vpop.f32.mrb[0].mxu0
        %v2788 = vpop.f32.mrb[0].mxu0
        %v2789 = vadd.f32 0.0, %v2788
        %v2790 = vpop.f32.mrb[0].mxu0
        %2791 = vmatprep.mubr.bf16.mxu0 0
        %2792 = vmatmul.mubr.bf16.gmra.mrb[0].mxu0 %v616
        %v2793 = vpop.f32.mrb[0].mxu0
        %v2794 = vadd.f32 0.0, %v2793
        %v2795 = vpop.f32.mrb[0].mxu0
        %v2796 = vpop.f32.mrb[0].mxu0
        %v2797 = vadd.f32 0.0, %v2796
        %v2798 = vpop.f32.mrb[0].mxu0
        %2799 = vmatprep.mubr.bf16.mxu0 0
        %2800 = vmatmul.mubr.bf16.gmra.mrb[0].mxu0 %v619
        %v2801 = vpop.f32.mrb[0].mxu0
        %v2802 = vadd.f32 0.0, %v2801
        %v2803 = vpop.f32.mrb[0].mxu0
        %v2804 = vpop.f32.mrb[0].mxu0
        %v2805 = vadd.f32 0.0, %v2804
        %v2806 = vpop.f32.mrb[0].mxu0
        %2807 = vmatprep.mubr.bf16.mxu0 0
        %2808 = vmatmul.mubr.bf16.gmra.mrb[0].mxu0 %v622
        %v2809 = vpop.f32.mrb[0].mxu0
        %v2810 = vadd.f32 0.0, %v2809
        %v2811 = vpop.f32.mrb[0].mxu0
        %v2812 = vpop.f32.mrb[0].mxu0
        %v2813 = vadd.f32 0.0, %v2812
        %v2814 = vpop.f32.mrb[0].mxu0
        %2815 = vmatprep.mubr.bf16.mxu0 0
        %2816 = vmatmul.mubr.bf16.gmra.mrb[0].mxu0 %v625
        %v2817 = vpop.f32.mrb[0].mxu0
        %v2818 = vadd.f32 0.0, %v2817
        %v2819 = vpop.f32.mrb[0].mxu0
        %v2820 = vpop.f32.mrb[0].mxu0
        %v2821 = vadd.f32 0.0, %v2820
        %v2822 = vpop.f32.mrb[0].mxu0
        %2823 = vmatprep.mubr.bf16.mxu0 0
        %2824 = vmatmul.mubr.bf16.gmra.mrb[0].mxu0 %v628
        %v2825 = vpop.f32.mrb[0].mxu0
        %v2826 = vadd.f32 0.0, %v2825
        %v2827 = vpop.f32.mrb[0].mxu0
        %v2828 = vpop.f32.mrb[0].mxu0
        %v2829 = vadd.f32 0.0, %v2828
        %v2830 = vpop.f32.mrb[0].mxu0
        %2831 = vmatprep.mubr.bf16.mxu0 0
        %2832 = vmatmul.mubr.bf16.gmra.mrb[0].mxu0 %v631
        %v2833 = vpop.f32.mrb[0].mxu0
        %v2834 = vadd.f32 0.0, %v2833
        %v2835 = vpop.f32.mrb[0].mxu0
        %v2836 = vpop.f32.mrb[0].mxu0
        %v2837 = vadd.f32 0.0, %v2836
        %v2838 = vpop.f32.mrb[0].mxu0
        %2839 = vmatprep.mubr.bf16.mxu0 0
        %2840 = vmatmul.mubr.bf16.gmra.mrb[0].mxu0 %v634
        %v2841 = vpop.f32.mrb[0].mxu0
        %v2842 = vadd.f32 0.0, %v2841
        %v2843 = vpop.f32.mrb[0].mxu0
        %v2844 = vpop.f32.mrb[0].mxu0
        %v2845 = vadd.f32 0.0, %v2844
        %v2846 = vpop.f32.mrb[0].mxu0
        %2847 = vmatprep.mubr.bf16.mxu0 0
        %2848 = vmatmul.mubr.bf16.gmra.mrb[0].mxu0 %v637
        %v2849 = vpop.f32.mrb[0].mxu0
        %v2850 = vadd.f32 0.0, %v2849
        %v2851 = vpop.f32.mrb[0].mxu0
        %v2852 = vpop.f32.mrb[0].mxu0
        %v2853 = vadd.f32 0.0, %v2852
        %v2854 = vpop.f32.mrb[0].mxu0
        %2855 = vmatprep.mubr.bf16.mxu0 0
        %2856 = vmatmul.mubr.bf16.gmra.mrb[0].mxu0 %v1190
        %v2857 = vpop.f32.mrb[0].mxu0
        %v2858 = vadd.f32 0.0, %v2857
        %v2859 = vpop.f32.mrb[0].mxu0
        %v2860 = vpop.f32.mrb[0].mxu0
        %v2861 = vadd.f32 0.0, %v2860
        %v2862 = vpop.f32.mrb[0].mxu0
        %2863 = vmatprep.mubr.bf16.mxu0 0
        %2864 = vmatmul.mubr.bf16.gmra.mrb[0].mxu0 %v2717
        %v2865 = vpop.f32.mrb[0].mxu0
        %v2866 = vadd.f32 0.0, %v2865
        %v2867 = vpop.f32.mrb[0].mxu0
        %v2868 = vpop.f32.mrb[0].mxu0
        %v2869 = vadd.f32 0.0, %v2868
        %v2870 = vpop.f32.mrb[0].mxu0
        %2871 = vdwg.mxu0
        %v2872 = vadd.f32 %v2686, %v2754
        %v2873 = vadd.f32 %v2687, %v2757
        %v2874 = vadd.f32 %v2688, %v2762
        %v2875 = vadd.f32 %v2689, %v2765
        %v2876 = vadd.f32 %v2690, %v2770
        %v2877 = vadd.f32 %v2691, %v2773
        %v2878 = vadd.f32 %v2692, %v2778
        %v2879 = vadd.f32 %v2693, %v2781
        %v2880 = vadd.f32 %v2694, %v2786
        %v2881 = vadd.f32 %v2695, %v2789
        %v2882 = vadd.f32 %v2696, %v2794
        %v2883 = vadd.f32 %v2697, %v2797
        %v2884 = vadd.f32 %v2698, %v2802
        %v2885 = vadd.f32 %v2699, %v2805
        %v2886 = vadd.f32 %v2700, %v2810
        %v2887 = vadd.f32 %v2701, %v2813
        %v2888 = vadd.f32 %v2702, %v2818
        %v2889 = vadd.f32 %v2703, %v2821
        %v2890 = vadd.f32 %v2704, %v2826
        %v2891 = vadd.f32 %v2705, %v2829
        %v2892 = vadd.f32 %v2706, %v2834
        %v2893 = vadd.f32 %v2707, %v2837
        %v2894 = vadd.f32 %v2708, %v2842
        %v2895 = vadd.f32 %v2709, %v2845
        %v2896 = vadd.f32 %v2710, %v2850
        %v2897 = vadd.f32 %v2711, %v2853
        %v2898 = vadd.f32 %v2712, %v2858
        %v2899 = vadd.f32 %v2713, %v2861
        %v2900 = vadd.f32 %v2714, %v2866
        %v2901 = vadd.f32 %v2715, %v2869
        %v2902 = vadd.f32 %v2872, %v1382
        %v2903 = vadd.f32 %v2873, %v1382
        %v2904 = vadd.f32 %v2874, %v1382
        %v2905 = vadd.f32 %v2875, %v1382
        %v2906 = vadd.f32 %v2876, %v1382
        %v2907 = vadd.f32 %v2877, %v1382
        %v2908 = vadd.f32 %v2878, %v1382
        %v2909 = vadd.f32 %v2879, %v1382
        %v2910 = vadd.f32 %v2880, %v1382
        %v2911 = vadd.f32 %v2881, %v1382
        %v2912 = vadd.f32 %v2882, %v1382
        %v2913 = vadd.f32 %v2883, %v1382
        %v2914 = vadd.f32 %v2884, %v1382
        %v2915 = vadd.f32 %v2885, %v1382
        %v2916 = vadd.f32 %v2886, %v1382
        %v2917 = vadd.f32 %v2887, %v1382
        %v2918 = vadd.f32 %v2888, %v1382
        %v2919 = vadd.f32 %v2889, %v1382
        %v2920 = vadd.f32 %v2890, %v1382
        %v2921 = vadd.f32 %v2891, %v1382
        %v2922 = vadd.f32 %v2892, %v1382
        %v2923 = vadd.f32 %v2893, %v1382
        %v2924 = vadd.f32 %v2894, %v1382
        %v2925 = vadd.f32 %v2895, %v1382
        %v2926 = vadd.f32 %v2896, %v1382
        %v2927 = vadd.f32 %v2897, %v1382
        %v2928 = vadd.f32 %v2898, %v1382
        %v2929 = vadd.f32 %v2899, %v1382
        %v2930 = vadd.f32 %v2900, %v1382
        %v2931 = vadd.f32 %v2901, %v1382
        %v2932 = vmax.f32 %v2902, 0.0
        %v2933 = vmax.f32 %v2903, 0.0
        %v2934 = vmax.f32 %v2904, 0.0
        %v2935 = vmax.f32 %v2905, 0.0
        %v2936 = vmax.f32 %v2906, 0.0
        %v2937 = vmax.f32 %v2907, 0.0
        %v2938 = vmax.f32 %v2908, 0.0
        %v2939 = vmax.f32 %v2909, 0.0
        %v2940 = vmax.f32 %v2910, 0.0
        %v2941 = vmax.f32 %v2911, 0.0
        %v2942 = vmax.f32 %v2912, 0.0
        %v2943 = vmax.f32 %v2913, 0.0
        %v2944 = vmax.f32 %v2914, 0.0
        %v2945 = vmax.f32 %v2915, 0.0
        %v2946 = vmax.f32 %v2916, 0.0
        %v2947 = vmax.f32 %v2917, 0.0
        %v2948 = vmax.f32 %v2918, 0.0
        %v2949 = vmax.f32 %v2919, 0.0
        %v2950 = vmax.f32 %v2920, 0.0
        %v2951 = vmax.f32 %v2921, 0.0
        %v2952 = vmax.f32 %v2922, 0.0
        %v2953 = vmax.f32 %v2923, 0.0
        %v2954 = vmax.f32 %v2924, 0.0
        %v2955 = vmax.f32 %v2925, 0.0
        %v2956 = vmax.f32 %v2926, 0.0
        %v2957 = vmax.f32 %v2927, 0.0
        %v2958 = vmax.f32 %v2928, 0.0
        %v2959 = vmax.f32 %v2929, 0.0
        %v2960 = vmax.f32 %v2930, 0.0
        %v2961 = vmax.f32 %v2931, 0.0
        %2962 = vmatprep.subr.bf16.mxu0 0
        %2963 = vmatpush1.bf16.msra.mxu0 %v644
        %2964 = vmatprep.subr.bf16.mxu0 0
        %2965 = vmatpush1.bf16.msra.mxu0 0
        %2966 = vmatprep.subr.bf16.mxu0 0
        %2967 = vmatpush1.bf16.msra.mxu0 0
        %2968 = vmatprep.subr.bf16.mxu0 0
        %2969 = vmatpush1.bf16.msra.mxu0 0
        %2970 = vmatprep.subr.bf16.mxu0 0
        %2971 = vmatpush1.bf16.msra.mxu0 0
        %2972 = vmatprep.subr.bf16.mxu0 0
        %2973 = vmatpush1.bf16.msra.mxu0 0
        %2974 = vmatprep.subr.bf16.mxu0 0
        %2975 = vmatpush1.bf16.msra.mxu0 0
        %2976 = vmatprep.subr.bf16.mxu0 0
        %2977 = vmatpush1.bf16.msra.mxu0 0
        %2978 = vmatprep.subr.bf16.mxu0 0
        %2979 = vmatpush1.bf16.msra.mxu0 0
        %2980 = vmatprep.subr.bf16.mxu0 0
        %2981 = vmatpush1.bf16.msra.mxu0 0
        %2982 = vmatprep.subr.bf16.mxu0 0
        %2983 = vmatpush1.bf16.msra.mxu0 0
        %2984 = vmatprep.subr.bf16.mxu0 0
        %2985 = vmatpush1.bf16.msra.mxu0 0
        %2986 = vmatprep.subr.bf16.mxu0 0
        %2987 = vmatpush1.bf16.msra.mxu0 0
        %2988 = vmatprep.subr.bf16.mxu0 0
        %2989 = vmatpush1.bf16.msra.mxu0 0
        %2990 = vmatprep.subr.bf16.mxu0 0
        %2991 = vmatpush1.bf16.msra.mxu0 0
        %2992 = vmatprep.subr.bf16.mxu0 0
        %2993 = vmatpush1.bf16.msra.mxu0 0
        %2994 = vmatprep.mubr.bf16.mxu0 0
        %2995 = vmatmul.mubr.bf16.gmra.mrb[0].mxu0 %v1448
        %v2996 = vpop.f32.mrb[0].mxu0
        %v2997 = vadd.f32 0.0, %v2996
        %v2998 = vpop.f32.mrb[0].mxu0
        %v2999 = vpop.f32.mrb[0].mxu0
        %v3000 = vadd.f32 0.0, %v2999
        %v3001 = vpop.f32.mrb[0].mxu0
        %3002 = vmatprep.mubr.bf16.mxu0 0
        %3003 = vmatmul.mubr.bf16.gmra.mrb[0].mxu0 %v1451
        %v3004 = vpop.f32.mrb[0].mxu0
        %v3005 = vadd.f32 0.0, %v3004
        %v3006 = vpop.f32.mrb[0].mxu0
        %v3007 = vpop.f32.mrb[0].mxu0
        %v3008 = vadd.f32 0.0, %v3007
        %v3009 = vpop.f32.mrb[0].mxu0
        %3010 = vmatprep.mubr.bf16.mxu0 0
        %3011 = vmatmul.mubr.bf16.gmra.mrb[0].mxu0 %v1454
        %v3012 = vpop.f32.mrb[0].mxu0
        %v3013 = vadd.f32 0.0, %v3012
        %v3014 = vpop.f32.mrb[0].mxu0
        %v3015 = vpop.f32.mrb[0].mxu0
        %v3016 = vadd.f32 0.0, %v3015
        %v3017 = vpop.f32.mrb[0].mxu0
        %3018 = vmatprep.mubr.bf16.mxu0 0
        %3019 = vmatmul.mubr.bf16.gmra.mrb[0].mxu0 %v1457
        %v3020 = vpop.f32.mrb[0].mxu0
        %v3021 = vadd.f32 0.0, %v3020
        %v3022 = vpop.f32.mrb[0].mxu0
        %v3023 = vpop.f32.mrb[0].mxu0
        %v3024 = vadd.f32 0.0, %v3023
        %v3025 = vpop.f32.mrb[0].mxu0
        %3026 = vmatprep.mubr.bf16.mxu0 0
        %3027 = vmatmul.mubr.bf16.gmra.mrb[0].mxu0 %v1460
        %v3028 = vpop.f32.mrb[0].mxu0
        %v3029 = vadd.f32 0.0, %v3028
        %v3030 = vpop.f32.mrb[0].mxu0
        %v3031 = vpop.f32.mrb[0].mxu0
        %v3032 = vadd.f32 0.0, %v3031
        %v3033 = vpop.f32.mrb[0].mxu0
        %3034 = vmatprep.mubr.bf16.mxu0 0
        %3035 = vmatmul.mubr.bf16.gmra.mrb[0].mxu0 %v1463
        %v3036 = vpop.f32.mrb[0].mxu0
        %v3037 = vadd.f32 0.0, %v3036
        %v3038 = vpop.f32.mrb[0].mxu0
        %v3039 = vpop.f32.mrb[0].mxu0
        %v3040 = vadd.f32 0.0, %v3039
        %v3041 = vpop.f32.mrb[0].mxu0
        %3042 = vmatprep.mubr.bf16.mxu0 0
        %3043 = vmatmul.mubr.bf16.gmra.mrb[0].mxu0 %v1466
        %v3044 = vpop.f32.mrb[0].mxu0
        %v3045 = vadd.f32 0.0, %v3044
        %v3046 = vpop.f32.mrb[0].mxu0
        %v3047 = vpop.f32.mrb[0].mxu0
        %v3048 = vadd.f32 0.0, %v3047
        %v3049 = vpop.f32.mrb[0].mxu0
        %3050 = vmatprep.mubr.bf16.mxu0 0
        %3051 = vmatmul.mubr.bf16.gmra.mrb[0].mxu0 %v1469
        %v3052 = vpop.f32.mrb[0].mxu0
        %v3053 = vadd.f32 0.0, %v3052
        %v3054 = vpop.f32.mrb[0].mxu0
        %v3055 = vpop.f32.mrb[0].mxu0
        %v3056 = vadd.f32 0.0, %v3055
        %v3057 = vpop.f32.mrb[0].mxu0
        %3058 = vmatprep.mubr.bf16.mxu0 0
        %3059 = vmatmul.mubr.bf16.gmra.mrb[0].mxu0 %v1472
        %v3060 = vpop.f32.mrb[0].mxu0
        %v3061 = vadd.f32 0.0, %v3060
        %v3062 = vpop.f32.mrb[0].mxu0
        %v3063 = vpop.f32.mrb[0].mxu0
        %v3064 = vadd.f32 0.0, %v3063
        %v3065 = vpop.f32.mrb[0].mxu0
        %3066 = vmatprep.mubr.bf16.mxu0 0
        %3067 = vmatmul.mubr.bf16.gmra.mrb[0].mxu0 %v1475
        %v3068 = vpop.f32.mrb[0].mxu0
        %v3069 = vadd.f32 0.0, %v3068
        %v3070 = vpop.f32.mrb[0].mxu0
        %v3071 = vpop.f32.mrb[0].mxu0
        %v3072 = vadd.f32 0.0, %v3071
        %v3073 = vpop.f32.mrb[0].mxu0
        %3074 = vmatprep.mubr.bf16.mxu0 0
        %3075 = vmatmul.mubr.bf16.gmra.mrb[0].mxu0 %v1478
        %v3076 = vpop.f32.mrb[0].mxu0
        %v3077 = vadd.f32 0.0, %v3076
        %v3078 = vpop.f32.mrb[0].mxu0
        %v3079 = vpop.f32.mrb[0].mxu0
        %v3080 = vadd.f32 0.0, %v3079
        %v3081 = vpop.f32.mrb[0].mxu0
        %3082 = vmatprep.mubr.bf16.mxu0 0
        %3083 = vmatmul.mubr.bf16.gmra.mrb[0].mxu0 %v1481
        %v3084 = vpop.f32.mrb[0].mxu0
        %v3085 = vadd.f32 0.0, %v3084
        %v3086 = vpop.f32.mrb[0].mxu0
        %v3087 = vpop.f32.mrb[0].mxu0
        %v3088 = vadd.f32 0.0, %v3087
        %v3089 = vpop.f32.mrb[0].mxu0
        %3090 = vmatprep.mubr.bf16.mxu0 0
        %3091 = vmatmul.mubr.bf16.gmra.mrb[0].mxu0 %v1484
        %v3092 = vpop.f32.mrb[0].mxu0
        %v3093 = vadd.f32 0.0, %v3092
        %v3094 = vpop.f32.mrb[0].mxu0
        %v3095 = vpop.f32.mrb[0].mxu0
        %v3096 = vadd.f32 0.0, %v3095
        %v3097 = vpop.f32.mrb[0].mxu0
        %3098 = vmatprep.mubr.bf16.mxu0 0
        %3099 = vmatmul.mubr.bf16.gmra.mrb[0].mxu0 %v1487
        %v3100 = vpop.f32.mrb[0].mxu0
        %v3101 = vadd.f32 0.0, %v3100
        %v3102 = vpop.f32.mrb[0].mxu0
        %v3103 = vpop.f32.mrb[0].mxu0
        %v3104 = vadd.f32 0.0, %v3103
        %v3105 = vpop.f32.mrb[0].mxu0
        %3106 = vmatprep.mubr.bf16.mxu0 0
        %3107 = vmatmul.mubr.bf16.gmra.mrb[0].mxu0 %v1979
        %v3108 = vpop.f32.mrb[0].mxu0
        %v3109 = vadd.f32 0.0, %v3108
        %v3110 = vpop.f32.mrb[0].mxu0
        %v3111 = vpop.f32.mrb[0].mxu0
        %v3112 = vadd.f32 0.0, %v3111
        %v3113 = vpop.f32.mrb[0].mxu0
        %3114 = vdwg.mxu0
        %3115 = vmatprep.subr.bf16.mxu0 0
        %3116 = vmatpush1.bf16.msra.mxu0 %v845
        %3117 = vmatprep.subr.bf16.mxu0 0
        %3118 = vmatpush1.bf16.msra.mxu0 0
        %3119 = vmatprep.subr.bf16.mxu0 0
        %3120 = vmatpush1.bf16.msra.mxu0 0
        %3121 = vmatprep.subr.bf16.mxu0 0
        %3122 = vmatpush1.bf16.msra.mxu0 0
        %3123 = vmatprep.subr.bf16.mxu0 0
        %3124 = vmatpush1.bf16.msra.mxu0 0
        %3125 = vmatprep.subr.bf16.mxu0 0
        %3126 = vmatpush1.bf16.msra.mxu0 0
        %3127 = vmatprep.subr.bf16.mxu0 0
        %3128 = vmatpush1.bf16.msra.mxu0 0
        %3129 = vmatprep.subr.bf16.mxu0 0
        %3130 = vmatpush1.bf16.msra.mxu0 0
        %3131 = vmatprep.subr.bf16.mxu0 0
        %3132 = vmatpush1.bf16.msra.mxu0 0
        %3133 = vmatprep.subr.bf16.mxu0 0
        %3134 = vmatpush1.bf16.msra.mxu0 0
        %3135 = vmatprep.subr.bf16.mxu0 0
        %3136 = vmatpush1.bf16.msra.mxu0 0
        %3137 = vmatprep.subr.bf16.mxu0 0
        %3138 = vmatpush1.bf16.msra.mxu0 0
        %3139 = vmatprep.subr.bf16.mxu0 0
        %3140 = vmatpush1.bf16.msra.mxu0 0
        %3141 = vmatprep.subr.bf16.mxu0 0
        %3142 = vmatpush1.bf16.msra.mxu0 0
        %3143 = vmatprep.subr.bf16.mxu0 0
        %3144 = vmatpush1.bf16.msra.mxu0 0
        %3145 = vmatprep.subr.bf16.mxu0 0
        %3146 = vmatpush1.bf16.msra.mxu0 0
        %3147 = vmatprep.mubr.bf16.mxu0 0
        %3148 = vmatmul.mubr.bf16.gmra.mrb[0].mxu0 %v598
        %v3149 = vpop.f32.mrb[0].mxu0
        %v3150 = vadd.f32 %v2997, %v3149
        %v3151 = vpop.f32.mrb[0].mxu0
        %v3152 = vpop.f32.mrb[0].mxu0
        %v3153 = vadd.f32 %v3000, %v3152
        %v3154 = vpop.f32.mrb[0].mxu0
        %3155 = vmatprep.mubr.bf16.mxu0 0
        %3156 = vmatmul.mubr.bf16.gmra.mrb[0].mxu0 %v601
        %v3157 = vpop.f32.mrb[0].mxu0
        %v3158 = vadd.f32 %v3005, %v3157
        %v3159 = vpop.f32.mrb[0].mxu0
        %v3160 = vpop.f32.mrb[0].mxu0
        %v3161 = vadd.f32 %v3008, %v3160
        %v3162 = vpop.f32.mrb[0].mxu0
        %3163 = vmatprep.mubr.bf16.mxu0 0
        %3164 = vmatmul.mubr.bf16.gmra.mrb[0].mxu0 %v604
        %v3165 = vpop.f32.mrb[0].mxu0
        %v3166 = vadd.f32 %v3013, %v3165
        %v3167 = vpop.f32.mrb[0].mxu0
        %v3168 = vpop.f32.mrb[0].mxu0
        %v3169 = vadd.f32 %v3016, %v3168
        %v3170 = vpop.f32.mrb[0].mxu0
        %3171 = vmatprep.mubr.bf16.mxu0 0
        %3172 = vmatmul.mubr.bf16.gmra.mrb[0].mxu0 %v607
        %v3173 = vpop.f32.mrb[0].mxu0
        %v3174 = vadd.f32 %v3021, %v3173
        %v3175 = vpop.f32.mrb[0].mxu0
        %v3176 = vpop.f32.mrb[0].mxu0
        %v3177 = vadd.f32 %v3024, %v3176
        %v3178 = vpop.f32.mrb[0].mxu0
        %3179 = vmatprep.mubr.bf16.mxu0 0
        %3180 = vmatmul.mubr.bf16.gmra.mrb[0].mxu0 %v610
        %v3181 = vpop.f32.mrb[0].mxu0
        %v3182 = vadd.f32 %v3029, %v3181
        %v3183 = vpop.f32.mrb[0].mxu0
        %v3184 = vpop.f32.mrb[0].mxu0
        %v3185 = vadd.f32 %v3032, %v3184
        %v3186 = vpop.f32.mrb[0].mxu0
        %3187 = vmatprep.mubr.bf16.mxu0 0
        %3188 = vmatmul.mubr.bf16.gmra.mrb[0].mxu0 %v613
        %v3189 = vpop.f32.mrb[0].mxu0
        %v3190 = vadd.f32 %v3037, %v3189
        %v3191 = vpop.f32.mrb[0].mxu0
        %v3192 = vpop.f32.mrb[0].mxu0
        %v3193 = vadd.f32 %v3040, %v3192
        %v3194 = vpop.f32.mrb[0].mxu0
        %3195 = vmatprep.mubr.bf16.mxu0 0
        %3196 = vmatmul.mubr.bf16.gmra.mrb[0].mxu0 %v616
        %v3197 = vpop.f32.mrb[0].mxu0
        %v3198 = vadd.f32 %v3045, %v3197
        %v3199 = vpop.f32.mrb[0].mxu0
        %v3200 = vpop.f32.mrb[0].mxu0
        %v3201 = vadd.f32 %v3048, %v3200
        %v3202 = vpop.f32.mrb[0].mxu0
        %3203 = vmatprep.mubr.bf16.mxu0 0
        %3204 = vmatmul.mubr.bf16.gmra.mrb[0].mxu0 %v619
        %v3205 = vpop.f32.mrb[0].mxu0
        %v3206 = vadd.f32 %v3053, %v3205
        %v3207 = vpop.f32.mrb[0].mxu0
        %v3208 = vpop.f32.mrb[0].mxu0
        %v3209 = vadd.f32 %v3056, %v3208
        %v3210 = vpop.f32.mrb[0].mxu0
        %3211 = vmatprep.mubr.bf16.mxu0 0
        %3212 = vmatmul.mubr.bf16.gmra.mrb[0].mxu0 %v622
        %v3213 = vpop.f32.mrb[0].mxu0
        %v3214 = vadd.f32 %v3061, %v3213
        %v3215 = vpop.f32.mrb[0].mxu0
        %v3216 = vpop.f32.mrb[0].mxu0
        %v3217 = vadd.f32 %v3064, %v3216
        %v3218 = vpop.f32.mrb[0].mxu0
        %3219 = vmatprep.mubr.bf16.mxu0 0
        %3220 = vmatmul.mubr.bf16.gmra.mrb[0].mxu0 %v625
        %v3221 = vpop.f32.mrb[0].mxu0
        %v3222 = vadd.f32 %v3069, %v3221
        %v3223 = vpop.f32.mrb[0].mxu0
        %v3224 = vpop.f32.mrb[0].mxu0
        %v3225 = vadd.f32 %v3072, %v3224
        %v3226 = vpop.f32.mrb[0].mxu0
        %3227 = vmatprep.mubr.bf16.mxu0 0
        %3228 = vmatmul.mubr.bf16.gmra.mrb[0].mxu0 %v628
        %v3229 = vpop.f32.mrb[0].mxu0
        %v3230 = vadd.f32 %v3077, %v3229
        %v3231 = vpop.f32.mrb[0].mxu0
        %v3232 = vpop.f32.mrb[0].mxu0
        %v3233 = vadd.f32 %v3080, %v3232
        %v3234 = vpop.f32.mrb[0].mxu0
        %3235 = vmatprep.mubr.bf16.mxu0 0
        %3236 = vmatmul.mubr.bf16.gmra.mrb[0].mxu0 %v631
        %v3237 = vpop.f32.mrb[0].mxu0
        %v3238 = vadd.f32 %v3085, %v3237
        %v3239 = vpop.f32.mrb[0].mxu0
        %v3240 = vpop.f32.mrb[0].mxu0
        %v3241 = vadd.f32 %v3088, %v3240
        %v3242 = vpop.f32.mrb[0].mxu0
        %3243 = vmatprep.mubr.bf16.mxu0 0
        %3244 = vmatmul.mubr.bf16.gmra.mrb[0].mxu0 %v634
        %v3245 = vpop.f32.mrb[0].mxu0
        %v3246 = vadd.f32 %v3093, %v3245
        %v3247 = vpop.f32.mrb[0].mxu0
        %v3248 = vpop.f32.mrb[0].mxu0
        %v3249 = vadd.f32 %v3096, %v3248
        %v3250 = vpop.f32.mrb[0].mxu0
        %3251 = vmatprep.mubr.bf16.mxu0 0
        %3252 = vmatmul.mubr.bf16.gmra.mrb[0].mxu0 %v637
        %v3253 = vpop.f32.mrb[0].mxu0
        %v3254 = vadd.f32 %v3101, %v3253
        %v3255 = vpop.f32.mrb[0].mxu0
        %v3256 = vpop.f32.mrb[0].mxu0
        %v3257 = vadd.f32 %v3104, %v3256
        %v3258 = vpop.f32.mrb[0].mxu0
        %3259 = vmatprep.mubr.bf16.mxu0 0
        %3260 = vmatmul.mubr.bf16.gmra.mrb[0].mxu0 %v1190
        %v3261 = vpop.f32.mrb[0].mxu0
        %v3262 = vadd.f32 %v3109, %v3261
        %v3263 = vpop.f32.mrb[0].mxu0
        %v3264 = vpop.f32.mrb[0].mxu0
        %v3265 = vadd.f32 %v3112, %v3264
        %v3266 = vpop.f32.mrb[0].mxu0
        %3267 = vdwg.mxu0
        %3268 = vmatprep.subr.bf16.mxu0 0
        %3269 = vmatpush1.bf16.msra.mxu0 %v1004
        %3270 = vmatprep.subr.bf16.mxu0 0
        %3271 = vmatpush1.bf16.msra.mxu0 0
        %3272 = vmatprep.subr.bf16.mxu0 0
        %3273 = vmatpush1.bf16.msra.mxu0 0
        %3274 = vmatprep.subr.bf16.mxu0 0
        %3275 = vmatpush1.bf16.msra.mxu0 0
        %3276 = vmatprep.subr.bf16.mxu0 0
        %3277 = vmatpush1.bf16.msra.mxu0 0
        %3278 = vmatprep.subr.bf16.mxu0 0
        %3279 = vmatpush1.bf16.msra.mxu0 0
        %3280 = vmatprep.subr.bf16.mxu0 0
        %3281 = vmatpush1.bf16.msra.mxu0 0
        %3282 = vmatprep.subr.bf16.mxu0 0
        %3283 = vmatpush1.bf16.msra.mxu0 0
        %3284 = vmatprep.subr.bf16.mxu0 0
        %3285 = vmatpush1.bf16.msra.mxu0 0
        %3286 = vmatprep.subr.bf16.mxu0 0
        %3287 = vmatpush1.bf16.msra.mxu0 0
        %3288 = vmatprep.subr.bf16.mxu0 0
        %3289 = vmatpush1.bf16.msra.mxu0 0
        %3290 = vmatprep.subr.bf16.mxu0 0
        %3291 = vmatpush1.bf16.msra.mxu0 0
        %3292 = vmatprep.subr.bf16.mxu0 0
        %3293 = vmatpush1.bf16.msra.mxu0 0
        %3294 = vmatprep.subr.bf16.mxu0 0
        %3295 = vmatpush1.bf16.msra.mxu0 0
        %3296 = vmatprep.subr.bf16.mxu0 0
        %3297 = vmatpush1.bf16.msra.mxu0 0
        %3298 = vmatprep.subr.bf16.mxu0 0
        %3299 = vmatpush1.bf16.msra.mxu0 0
        %3300 = vmatprep.mubr.bf16.mxu0 0
        %3301 = vmatmul.mubr.bf16.gmra.mrb[0].mxu0 %v601
        %v3302 = vpop.f32.mrb[0].mxu0
        %v3303 = vadd.f32 0.0, %v3302
        %v3304 = vpop.f32.mrb[0].mxu0
        %v3305 = vpop.f32.mrb[0].mxu0
        %v3306 = vadd.f32 0.0, %v3305
        %v3307 = vpop.f32.mrb[0].mxu0
        %3308 = vmatprep.mubr.bf16.mxu0 0
        %3309 = vmatmul.mubr.bf16.gmra.mrb[0].mxu0 %v604
        %v3310 = vpop.f32.mrb[0].mxu0
        %v3311 = vadd.f32 0.0, %v3310
        %v3312 = vpop.f32.mrb[0].mxu0
        %v3313 = vpop.f32.mrb[0].mxu0
        %v3314 = vadd.f32 0.0, %v3313
        %v3315 = vpop.f32.mrb[0].mxu0
        %3316 = vmatprep.mubr.bf16.mxu0 0
        %3317 = vmatmul.mubr.bf16.gmra.mrb[0].mxu0 %v607
        %v3318 = vpop.f32.mrb[0].mxu0
        %v3319 = vadd.f32 0.0, %v3318
        %v3320 = vpop.f32.mrb[0].mxu0
        %v3321 = vpop.f32.mrb[0].mxu0
        %v3322 = vadd.f32 0.0, %v3321
        %v3323 = vpop.f32.mrb[0].mxu0
        %3324 = vmatprep.mubr.bf16.mxu0 0
        %3325 = vmatmul.mubr.bf16.gmra.mrb[0].mxu0 %v610
        %v3326 = vpop.f32.mrb[0].mxu0
        %v3327 = vadd.f32 0.0, %v3326
        %v3328 = vpop.f32.mrb[0].mxu0
        %v3329 = vpop.f32.mrb[0].mxu0
        %v3330 = vadd.f32 0.0, %v3329
        %v3331 = vpop.f32.mrb[0].mxu0
        %3332 = vmatprep.mubr.bf16.mxu0 0
        %3333 = vmatmul.mubr.bf16.gmra.mrb[0].mxu0 %v613
        %v3334 = vpop.f32.mrb[0].mxu0
        %v3335 = vadd.f32 0.0, %v3334
        %v3336 = vpop.f32.mrb[0].mxu0
        %v3337 = vpop.f32.mrb[0].mxu0
        %v3338 = vadd.f32 0.0, %v3337
        %v3339 = vpop.f32.mrb[0].mxu0
        %3340 = vmatprep.mubr.bf16.mxu0 0
        %3341 = vmatmul.mubr.bf16.gmra.mrb[0].mxu0 %v616
        %v3342 = vpop.f32.mrb[0].mxu0
        %v3343 = vadd.f32 0.0, %v3342
        %v3344 = vpop.f32.mrb[0].mxu0
        %v3345 = vpop.f32.mrb[0].mxu0
        %v3346 = vadd.f32 0.0, %v3345
        %v3347 = vpop.f32.mrb[0].mxu0
        %3348 = vmatprep.mubr.bf16.mxu0 0
        %3349 = vmatmul.mubr.bf16.gmra.mrb[0].mxu0 %v619
        %v3350 = vpop.f32.mrb[0].mxu0
        %v3351 = vadd.f32 0.0, %v3350
        %v3352 = vpop.f32.mrb[0].mxu0
        %v3353 = vpop.f32.mrb[0].mxu0
        %v3354 = vadd.f32 0.0, %v3353
        %v3355 = vpop.f32.mrb[0].mxu0
        %3356 = vmatprep.mubr.bf16.mxu0 0
        %3357 = vmatmul.mubr.bf16.gmra.mrb[0].mxu0 %v622
        %v3358 = vpop.f32.mrb[0].mxu0
        %v3359 = vadd.f32 0.0, %v3358
        %v3360 = vpop.f32.mrb[0].mxu0
        %v3361 = vpop.f32.mrb[0].mxu0
        %v3362 = vadd.f32 0.0, %v3361
        %v3363 = vpop.f32.mrb[0].mxu0
        %3364 = vmatprep.mubr.bf16.mxu0 0
        %3365 = vmatmul.mubr.bf16.gmra.mrb[0].mxu0 %v625
        %v3366 = vpop.f32.mrb[0].mxu0
        %v3367 = vadd.f32 0.0, %v3366
        %v3368 = vpop.f32.mrb[0].mxu0
        %v3369 = vpop.f32.mrb[0].mxu0
        %v3370 = vadd.f32 0.0, %v3369
        %v3371 = vpop.f32.mrb[0].mxu0
        %3372 = vmatprep.mubr.bf16.mxu0 0
        %3373 = vmatmul.mubr.bf16.gmra.mrb[0].mxu0 %v628
        %v3374 = vpop.f32.mrb[0].mxu0
        %v3375 = vadd.f32 0.0, %v3374
        %v3376 = vpop.f32.mrb[0].mxu0
        %v3377 = vpop.f32.mrb[0].mxu0
        %v3378 = vadd.f32 0.0, %v3377
        %v3379 = vpop.f32.mrb[0].mxu0
        %3380 = vmatprep.mubr.bf16.mxu0 0
        %3381 = vmatmul.mubr.bf16.gmra.mrb[0].mxu0 %v631
        %v3382 = vpop.f32.mrb[0].mxu0
        %v3383 = vadd.f32 0.0, %v3382
        %v3384 = vpop.f32.mrb[0].mxu0
        %v3385 = vpop.f32.mrb[0].mxu0
        %v3386 = vadd.f32 0.0, %v3385
        %v3387 = vpop.f32.mrb[0].mxu0
        %3388 = vmatprep.mubr.bf16.mxu0 0
        %3389 = vmatmul.mubr.bf16.gmra.mrb[0].mxu0 %v634
        %v3390 = vpop.f32.mrb[0].mxu0
        %v3391 = vadd.f32 0.0, %v3390
        %v3392 = vpop.f32.mrb[0].mxu0
        %v3393 = vpop.f32.mrb[0].mxu0
        %v3394 = vadd.f32 0.0, %v3393
        %v3395 = vpop.f32.mrb[0].mxu0
        %3396 = vmatprep.mubr.bf16.mxu0 0
        %3397 = vmatmul.mubr.bf16.gmra.mrb[0].mxu0 %v637
        %v3398 = vpop.f32.mrb[0].mxu0
        %v3399 = vadd.f32 0.0, %v3398
        %v3400 = vpop.f32.mrb[0].mxu0
        %v3401 = vpop.f32.mrb[0].mxu0
        %v3402 = vadd.f32 0.0, %v3401
        %v3403 = vpop.f32.mrb[0].mxu0
        %3404 = vmatprep.mubr.bf16.mxu0 0
        %3405 = vmatmul.mubr.bf16.gmra.mrb[0].mxu0 %v1190
        %v3406 = vpop.f32.mrb[0].mxu0
        %v3407 = vadd.f32 0.0, %v3406
        %v3408 = vpop.f32.mrb[0].mxu0
        %v3409 = vpop.f32.mrb[0].mxu0
        %v3410 = vadd.f32 0.0, %v3409
        %v3411 = vpop.f32.mrb[0].mxu0
        %3412 = vmatprep.mubr.bf16.mxu0 0
        %3413 = vmatmul.mubr.bf16.gmra.mrb[0].mxu0 %v2717
        %v3414 = vpop.f32.mrb[0].mxu0
        %v3415 = vadd.f32 0.0, %v3414
        %v3416 = vpop.f32.mrb[0].mxu0
        %v3417 = vpop.f32.mrb[0].mxu0
        %v3418 = vadd.f32 0.0, %v3417
        %v3419 = vpop.f32.mrb[0].mxu0
        %3420 = vdwg.mxu0
        %v3421 = vadd.f32 %v3150, %v3303
        %v3422 = vadd.f32 %v3153, %v3306
        %v3423 = vadd.f32 %v3158, %v3311
        %v3424 = vadd.f32 %v3161, %v3314
        %v3425 = vadd.f32 %v3166, %v3319
        %v3426 = vadd.f32 %v3169, %v3322
        %v3427 = vadd.f32 %v3174, %v3327
        %v3428 = vadd.f32 %v3177, %v3330
        %v3429 = vadd.f32 %v3182, %v3335
        %v3430 = vadd.f32 %v3185, %v3338
        %v3431 = vadd.f32 %v3190, %v3343
        %v3432 = vadd.f32 %v3193, %v3346
        %v3433 = vadd.f32 %v3198, %v3351
        %v3434 = vadd.f32 %v3201, %v3354
        %v3435 = vadd.f32 %v3206, %v3359
        %v3436 = vadd.f32 %v3209, %v3362
        %v3437 = vadd.f32 %v3214, %v3367
        %v3438 = vadd.f32 %v3217, %v3370
        %v3439 = vadd.f32 %v3222, %v3375
        %v3440 = vadd.f32 %v3225, %v3378
        %v3441 = vadd.f32 %v3230, %v3383
        %v3442 = vadd.f32 %v3233, %v3386
        %v3443 = vadd.f32 %v3238, %v3391
        %v3444 = vadd.f32 %v3241, %v3394
        %v3445 = vadd.f32 %v3246, %v3399
        %v3446 = vadd.f32 %v3249, %v3402
        %v3447 = vadd.f32 %v3254, %v3407
        %v3448 = vadd.f32 %v3257, %v3410
        %v3449 = vadd.f32 %v3262, %v3415
        %v3450 = vadd.f32 %v3265, %v3418
        %v3452 = vsel %vm593, %v584, 0
        %3454 = vmatprep.subr.bf16.mxu0 0
        %3455 = vmatpush1.bf16.msra.mxu0 %v1193
        %3456 = vmatprep.subr.bf16.mxu0 0
        %3457 = vmatpush1.bf16.msra.mxu0 0
        %3458 = vmatprep.subr.bf16.mxu0 0
        %3459 = vmatpush1.bf16.msra.mxu0 0
        %3460 = vmatprep.subr.bf16.mxu0 0
        %3461 = vmatpush1.bf16.msra.mxu0 0
        %3462 = vmatprep.subr.bf16.mxu0 0
        %3463 = vmatpush1.bf16.msra.mxu0 0
        %3464 = vmatprep.subr.bf16.mxu0 0
        %3465 = vmatpush1.bf16.msra.mxu0 0
        %3466 = vmatprep.subr.bf16.mxu0 0
        %3467 = vmatpush1.bf16.msra.mxu0 0
        %3468 = vmatprep.subr.bf16.mxu0 0
        %3469 = vmatpush1.bf16.msra.mxu0 0
        %3470 = vmatprep.subr.bf16.mxu0 0
        %3471 = vmatpush1.bf16.msra.mxu0 0
        %3472 = vmatprep.subr.bf16.mxu0 0
        %3473 = vmatpush1.bf16.msra.mxu0 0
        %3474 = vmatprep.subr.bf16.mxu0 0
        %3475 = vmatpush1.bf16.msra.mxu0 0
        %3476 = vmatprep.subr.bf16.mxu0 0
        %3477 = vmatpush1.bf16.msra.mxu0 0
        %3478 = vmatprep.subr.bf16.mxu0 0
        %3479 = vmatpush1.bf16.msra.mxu0 0
        %3480 = vmatprep.subr.bf16.mxu0 0
        %3481 = vmatpush1.bf16.msra.mxu0 0
        %3482 = vmatprep.subr.bf16.mxu0 0
        %3483 = vmatpush1.bf16.msra.mxu0 0
        %3484 = vmatprep.subr.bf16.mxu0 0
        %3485 = vmatpush1.bf16.msra.mxu0 0
        %3486 = vmatprep.mubr.bf16.mxu0 0
        %3487 = vmatmul.mubr.bf16.gmra.mrb[0].mxu0 %v1451
        %v3488 = vpop.f32.mrb[0].mxu0
        %v3489 = vadd.f32 0.0, %v3488
        %v3490 = vpop.f32.mrb[0].mxu0
        %v3491 = vpop.f32.mrb[0].mxu0
        %v3492 = vadd.f32 0.0, %v3491
        %v3493 = vpop.f32.mrb[0].mxu0
        %3494 = vmatprep.mubr.bf16.mxu0 0
        %3495 = vmatmul.mubr.bf16.gmra.mrb[0].mxu0 %v1454
        %v3496 = vpop.f32.mrb[0].mxu0
        %v3497 = vadd.f32 0.0, %v3496
        %v3498 = vpop.f32.mrb[0].mxu0
        %v3499 = vpop.f32.mrb[0].mxu0
        %v3500 = vadd.f32 0.0, %v3499
        %v3501 = vpop.f32.mrb[0].mxu0
        %3502 = vmatprep.mubr.bf16.mxu0 0
        %3503 = vmatmul.mubr.bf16.gmra.mrb[0].mxu0 %v1457
        %v3504 = vpop.f32.mrb[0].mxu0
        %v3505 = vadd.f32 0.0, %v3504
        %v3506 = vpop.f32.mrb[0].mxu0
        %v3507 = vpop.f32.mrb[0].mxu0
        %v3508 = vadd.f32 0.0, %v3507
        %v3509 = vpop.f32.mrb[0].mxu0
        %3510 = vmatprep.mubr.bf16.mxu0 0
        %3511 = vmatmul.mubr.bf16.gmra.mrb[0].mxu0 %v1460
        %v3512 = vpop.f32.mrb[0].mxu0
        %v3513 = vadd.f32 0.0, %v3512
        %v3514 = vpop.f32.mrb[0].mxu0
        %v3515 = vpop.f32.mrb[0].mxu0
        %v3516 = vadd.f32 0.0, %v3515
        %v3517 = vpop.f32.mrb[0].mxu0
        %3518 = vmatprep.mubr.bf16.mxu0 0
        %3519 = vmatmul.mubr.bf16.gmra.mrb[0].mxu0 %v1463
        %v3520 = vpop.f32.mrb[0].mxu0
        %v3521 = vadd.f32 0.0, %v3520
        %v3522 = vpop.f32.mrb[0].mxu0
        %v3523 = vpop.f32.mrb[0].mxu0
        %v3524 = vadd.f32 0.0, %v3523
        %v3525 = vpop.f32.mrb[0].mxu0
        %3526 = vmatprep.mubr.bf16.mxu0 0
        %3527 = vmatmul.mubr.bf16.gmra.mrb[0].mxu0 %v1466
        %v3528 = vpop.f32.mrb[0].mxu0
        %v3529 = vadd.f32 0.0, %v3528
        %v3530 = vpop.f32.mrb[0].mxu0
        %v3531 = vpop.f32.mrb[0].mxu0
        %v3532 = vadd.f32 0.0, %v3531
        %v3533 = vpop.f32.mrb[0].mxu0
        %3534 = vmatprep.mubr.bf16.mxu0 0
        %3535 = vmatmul.mubr.bf16.gmra.mrb[0].mxu0 %v1469
        %v3536 = vpop.f32.mrb[0].mxu0
        %v3537 = vadd.f32 0.0, %v3536
        %v3538 = vpop.f32.mrb[0].mxu0
        %v3539 = vpop.f32.mrb[0].mxu0
        %v3540 = vadd.f32 0.0, %v3539
        %v3541 = vpop.f32.mrb[0].mxu0
        %3542 = vmatprep.mubr.bf16.mxu0 0
        %3543 = vmatmul.mubr.bf16.gmra.mrb[0].mxu0 %v1472
        %v3544 = vpop.f32.mrb[0].mxu0
        %v3545 = vadd.f32 0.0, %v3544
        %v3546 = vpop.f32.mrb[0].mxu0
        %v3547 = vpop.f32.mrb[0].mxu0
        %v3548 = vadd.f32 0.0, %v3547
        %v3549 = vpop.f32.mrb[0].mxu0
        %3550 = vmatprep.mubr.bf16.mxu0 0
        %3551 = vmatmul.mubr.bf16.gmra.mrb[0].mxu0 %v1475
        %v3552 = vpop.f32.mrb[0].mxu0
        %v3553 = vadd.f32 0.0, %v3552
        %v3554 = vpop.f32.mrb[0].mxu0
        %v3555 = vpop.f32.mrb[0].mxu0
        %v3556 = vadd.f32 0.0, %v3555
        %v3557 = vpop.f32.mrb[0].mxu0
        %3558 = vmatprep.mubr.bf16.mxu0 0
        %3559 = vmatmul.mubr.bf16.gmra.mrb[0].mxu0 %v1478
        %v3560 = vpop.f32.mrb[0].mxu0
        %v3561 = vadd.f32 0.0, %v3560
        %v3562 = vpop.f32.mrb[0].mxu0
        %v3563 = vpop.f32.mrb[0].mxu0
        %v3564 = vadd.f32 0.0, %v3563
        %v3565 = vpop.f32.mrb[0].mxu0
        %3566 = vmatprep.mubr.bf16.mxu0 0
        %3567 = vmatmul.mubr.bf16.gmra.mrb[0].mxu0 %v1481
        %v3568 = vpop.f32.mrb[0].mxu0
        %v3569 = vadd.f32 0.0, %v3568
        %v3570 = vpop.f32.mrb[0].mxu0
        %v3571 = vpop.f32.mrb[0].mxu0
        %v3572 = vadd.f32 0.0, %v3571
        %v3573 = vpop.f32.mrb[0].mxu0
        %3574 = vmatprep.mubr.bf16.mxu0 0
        %3575 = vmatmul.mubr.bf16.gmra.mrb[0].mxu0 %v1484
        %v3576 = vpop.f32.mrb[0].mxu0
        %v3577 = vadd.f32 0.0, %v3576
        %v3578 = vpop.f32.mrb[0].mxu0
        %v3579 = vpop.f32.mrb[0].mxu0
        %v3580 = vadd.f32 0.0, %v3579
        %v3581 = vpop.f32.mrb[0].mxu0
        %3582 = vmatprep.mubr.bf16.mxu0 0
        %3583 = vmatmul.mubr.bf16.gmra.mrb[0].mxu0 %v1487
        %v3584 = vpop.f32.mrb[0].mxu0
        %v3585 = vadd.f32 0.0, %v3584
        %v3586 = vpop.f32.mrb[0].mxu0
        %v3587 = vpop.f32.mrb[0].mxu0
        %v3588 = vadd.f32 0.0, %v3587
        %v3589 = vpop.f32.mrb[0].mxu0
        %3590 = vmatprep.mubr.bf16.mxu0 0
        %3591 = vmatmul.mubr.bf16.gmra.mrb[0].mxu0 %v1979
        %v3592 = vpop.f32.mrb[0].mxu0
        %v3593 = vadd.f32 0.0, %v3592
        %v3594 = vpop.f32.mrb[0].mxu0
        %v3595 = vpop.f32.mrb[0].mxu0
        %v3596 = vadd.f32 0.0, %v3595
        %v3597 = vpop.f32.mrb[0].mxu0
        %3598 = vmatprep.mubr.bf16.mxu0 0
        %3599 = vmatmul.mubr.bf16.gmra.mrb[0].mxu0 %v3452
        %v3600 = vpop.f32.mrb[0].mxu0
        %v3601 = vadd.f32 0.0, %v3600
        %v3602 = vpop.f32.mrb[0].mxu0
        %v3603 = vpop.f32.mrb[0].mxu0
        %v3604 = vadd.f32 0.0, %v3603
        %v3605 = vpop.f32.mrb[0].mxu0
        %3606 = vdwg.mxu0
        %v3607 = vadd.f32 %v3421, %v3489
        %v3608 = vadd.f32 %v3422, %v3492
        %v3609 = vadd.f32 %v3423, %v3497
        %v3610 = vadd.f32 %v3424, %v3500
        %v3611 = vadd.f32 %v3425, %v3505
        %v3612 = vadd.f32 %v3426, %v3508
        %v3613 = vadd.f32 %v3427, %v3513
        %v3614 = vadd.f32 %v3428, %v3516
        %v3615 = vadd.f32 %v3429, %v3521
        %v3616 = vadd.f32 %v3430, %v3524
        %v3617 = vadd.f32 %v3431, %v3529
        %v3618 = vadd.f32 %v3432, %v3532
        %v3619 = vadd.f32 %v3433, %v3537
        %v3620 = vadd.f32 %v3434, %v3540
        %v3621 = vadd.f32 %v3435, %v3545
        %v3622 = vadd.f32 %v3436, %v3548
        %v3623 = vadd.f32 %v3437, %v3553
        %v3624 = vadd.f32 %v3438, %v3556
        %v3625 = vadd.f32 %v3439, %v3561
        %v3626 = vadd.f32 %v3440, %v3564
        %v3627 = vadd.f32 %v3441, %v3569
        %v3628 = vadd.f32 %v3442, %v3572
        %v3629 = vadd.f32 %v3443, %v3577
        %v3630 = vadd.f32 %v3444, %v3580
        %v3631 = vadd.f32 %v3445, %v3585
        %v3632 = vadd.f32 %v3446, %v3588
        %v3633 = vadd.f32 %v3447, %v3593
        %v3634 = vadd.f32 %v3448, %v3596
        %v3635 = vadd.f32 %v3449, %v3601
        %v3636 = vadd.f32 %v3450, %v3604
        %v3637 = vadd.f32 %v3607, %v1382
        %v3638 = vadd.f32 %v3608, %v1382
        %v3639 = vadd.f32 %v3609, %v1382
        %v3640 = vadd.f32 %v3610, %v1382
        %v3641 = vadd.f32 %v3611, %v1382
        %v3642 = vadd.f32 %v3612, %v1382
        %v3643 = vadd.f32 %v3613, %v1382
        %v3644 = vadd.f32 %v3614, %v1382
        %v3645 = vadd.f32 %v3615, %v1382
        %v3646 = vadd.f32 %v3616, %v1382
        %v3647 = vadd.f32 %v3617, %v1382
        %v3648 = vadd.f32 %v3618, %v1382
        %v3649 = vadd.f32 %v3619, %v1382
        %v3650 = vadd.f32 %v3620, %v1382
        %v3651 = vadd.f32 %v3621, %v1382
        %v3652 = vadd.f32 %v3622, %v1382
        %v3653 = vadd.f32 %v3623, %v1382
        %v3654 = vadd.f32 %v3624, %v1382
        %v3655 = vadd.f32 %v3625, %v1382
        %v3656 = vadd.f32 %v3626, %v1382
        %v3657 = vadd.f32 %v3627, %v1382
        %v3658 = vadd.f32 %v3628, %v1382
        %v3659 = vadd.f32 %v3629, %v1382
        %v3660 = vadd.f32 %v3630, %v1382
        %v3661 = vadd.f32 %v3631, %v1382
        %v3662 = vadd.f32 %v3632, %v1382
        %v3663 = vadd.f32 %v3633, %v1382
        %v3664 = vadd.f32 %v3634, %v1382
        %v3665 = vadd.f32 %v3635, %v1382
        %v3666 = vadd.f32 %v3636, %v1382
        %v3667 = vmax.f32 %v3637, 0.0
        %v3668 = vmax.f32 %v3638, 0.0
        %v3669 = vmax.f32 %v3639, 0.0
        %v3670 = vmax.f32 %v3640, 0.0
        %v3671 = vmax.f32 %v3641, 0.0
        %v3672 = vmax.f32 %v3642, 0.0
        %v3673 = vmax.f32 %v3643, 0.0
        %v3674 = vmax.f32 %v3644, 0.0
        %v3675 = vmax.f32 %v3645, 0.0
        %v3676 = vmax.f32 %v3646, 0.0
        %v3677 = vmax.f32 %v3647, 0.0
        %v3678 = vmax.f32 %v3648, 0.0
        %v3679 = vmax.f32 %v3649, 0.0
        %v3680 = vmax.f32 %v3650, 0.0
        %v3681 = vmax.f32 %v3651, 0.0
        %v3682 = vmax.f32 %v3652, 0.0
        %v3683 = vmax.f32 %v3653, 0.0
        %v3684 = vmax.f32 %v3654, 0.0
        %v3685 = vmax.f32 %v3655, 0.0
        %v3686 = vmax.f32 %v3656, 0.0
        %v3687 = vmax.f32 %v3657, 0.0
        %v3688 = vmax.f32 %v3658, 0.0
        %v3689 = vmax.f32 %v3659, 0.0
        %v3690 = vmax.f32 %v3660, 0.0
        %v3691 = vmax.f32 %v3661, 0.0
        %v3692 = vmax.f32 %v3662, 0.0
        %v3693 = vmax.f32 %v3663, 0.0
        %v3694 = vmax.f32 %v3664, 0.0
        %v3695 = vmax.f32 %v3665, 0.0
        %v3696 = vmax.f32 %v3666, 0.0
        %v3697 = vmax.f32 %v1414, %v2194
        %v3698 = vmax.f32 %v1415, %v2195
        %v3699 = vmax.f32 %v1416, %v2196
        %v3700 = vmax.f32 %v1417, %v2197
        %v3701 = vmax.f32 %v1418, %v2198
        %v3702 = vmax.f32 %v1419, %v2199
        %v3703 = vmax.f32 %v1420, %v2200
        %v3704 = vmax.f32 %v1421, %v2201
        %v3705 = vmax.f32 %v1422, %v2202
        %v3706 = vmax.f32 %v1423, %v2203
        %v3707 = vmax.f32 %v1424, %v2204
        %v3708 = vmax.f32 %v1425, %v2205
        %v3709 = vmax.f32 %v1426, %v2206
        %v3710 = vmax.f32 %v1427, %v2207
        %v3711 = vmax.f32 %v1428, %v2208
        %v3712 = vmax.f32 %v1429, %v2209
        %v3713 = vmax.f32 %v1430, %v2210
        %v3714 = vmax.f32 %v1431, %v2211
        %v3715 = vmax.f32 %v1432, %v2212
        %v3716 = vmax.f32 %v1433, %v2213
        %v3717 = vmax.f32 %v1434, %v2214
        %v3718 = vmax.f32 %v1435, %v2215
        %v3719 = vmax.f32 %v1436, %v2216
        %v3720 = vmax.f32 %v1437, %v2217
        %v3721 = vmax.f32 %v1438, %v2218
        %v3722 = vmax.f32 %v1439, %v2219
        %v3723 = vmax.f32 %v1440, %v2220
        %v3724 = vmax.f32 %v1441, %v2221
        %v3725 = vmax.f32 %v1442, %v2222
        %v3726 = vmax.f32 %v1443, %v2223
        %v3727 = vmax.f32 %v2932, %v3667
        %v3728 = vmax.f32 %v2933, %v3668
        %v3729 = vmax.f32 %v2934, %v3669
        %v3730 = vmax.f32 %v2935, %v3670
        %v3731 = vmax.f32 %v2936, %v3671
        %v3732 = vmax.f32 %v2937, %v3672
        %v3733 = vmax.f32 %v2938, %v3673
        %v3734 = vmax.f32 %v2939, %v3674
        %v3735 = vmax.f32 %v2940, %v3675
        %v3736 = vmax.f32 %v2941, %v3676
        %v3737 = vmax.f32 %v2942, %v3677
        %v3738 = vmax.f32 %v2943, %v3678
        %v3739 = vmax.f32 %v2944, %v3679
        %v3740 = vmax.f32 %v2945, %v3680
        %v3741 = vmax.f32 %v2946, %v3681
        %v3742 = vmax.f32 %v2947, %v3682
        %v3743 = vmax.f32 %v2948, %v3683
        %v3744 = vmax.f32 %v2949, %v3684
        %v3745 = vmax.f32 %v2950, %v3685
        %v3746 = vmax.f32 %v2951, %v3686
        %v3747 = vmax.f32 %v2952, %v3687
        %v3748 = vmax.f32 %v2953, %v3688
        %v3749 = vmax.f32 %v2954, %v3689
        %v3750 = vmax.f32 %v2955, %v3690
        %v3751 = vmax.f32 %v2956, %v3691
        %v3752 = vmax.f32 %v2957, %v3692
        %v3753 = vmax.f32 %v2958, %v3693
        %v3754 = vmax.f32 %v2959, %v3694
        %v3755 = vmax.f32 %v2960, %v3695
        %v3756 = vmax.f32 %v2961, %v3696
        %v3757 = vmax.f32 %v3697, %v3727
        %v3758 = vmax.f32 %v3698, %v3728
        %v3759 = vmax.f32 %v3699, %v3729
        %v3760 = vmax.f32 %v3700, %v3730
        %v3761 = vmax.f32 %v3701, %v3731
        %v3762 = vmax.f32 %v3702, %v3732
        %v3763 = vmax.f32 %v3703, %v3733
        %v3764 = vmax.f32 %v3704, %v3734
        %v3765 = vmax.f32 %v3705, %v3735
        %v3766 = vmax.f32 %v3706, %v3736
        %v3767 = vmax.f32 %v3707, %v3737
        %v3768 = vmax.f32 %v3708, %v3738
        %v3769 = vmax.f32 %v3709, %v3739
        %v3770 = vmax.f32 %v3710, %v3740
        %v3771 = vmax.f32 %v3711, %v3741
        %v3772 = vmax.f32 %v3712, %v3742
        %v3773 = vmax.f32 %v3713, %v3743
        %v3774 = vmax.f32 %v3714, %v3744
        %v3775 = vmax.f32 %v3715, %v3745
        %v3776 = vmax.f32 %v3716, %v3746
        %v3777 = vmax.f32 %v3717, %v3747
        %v3778 = vmax.f32 %v3718, %v3748
        %v3779 = vmax.f32 %v3719, %v3749
        %v3780 = vmax.f32 %v3720, %v3750
        %v3781 = vmax.f32 %v3721, %v3751
        %v3782 = vmax.f32 %v3722, %v3752
        %v3783 = vmax.f32 %v3723, %v3753
        %v3784 = vmax.f32 %v3724, %v3754
        %v3785 = vmax.f32 %v3725, %v3755
        %v3786 = vmax.f32 %v3726, %v3756
        %3787 = vst [vmem:[#allocation2] sm:$0xff] %v3757
        %3788 = vst [vmem:[#allocation2 + $0x8] sm:$0xff] %v3758
        %3789 = vst [vmem:[#allocation2 + $0x10] sm:$0xff] %v3759
        %3790 = vst [vmem:[#allocation2 + $0x18] sm:$0xff] %v3760
        %3791 = vst [vmem:[#allocation2 + $0x20] sm:$0xff] %v3761
        %3792 = vst [vmem:[#allocation2 + $0x28] sm:$0xff] %v3762
        %3793 = vst [vmem:[#allocation2 + $0x30] sm:$0xff] %v3763
        %3794 = vst [vmem:[#allocation2 + $0x38] sm:$0xff] %v3764
        %3795 = vst [vmem:[#allocation2 + $0x40] sm:$0xff] %v3765
        %3796 = vst [vmem:[#allocation2 + $0x48] sm:$0xff] %v3766
        %3797 = vst [vmem:[#allocation2 + $0x50] sm:$0xff] %v3767
        %3798 = vst [vmem:[#allocation2 + $0x58] sm:$0xff] %v3768
        %3799 = vst [vmem:[#allocation2 + $0x60] sm:$0xff] %v3769
        %3800 = vst [vmem:[#allocation2 + $0x68] sm:$0xff] %v3770
        %3801 = vst [vmem:[#allocation2 + $0x70] sm:$0xff] %v3771
        %3802 = vst [vmem:[#allocation2 + $0x78] sm:$0xff] %v3772
        %3803 = vst [vmem:[#allocation2 + $0x80] sm:$0xff] %v3773
        %3804 = vst [vmem:[#allocation2 + $0x88] sm:$0xff] %v3774
        %3805 = vst [vmem:[#allocation2 + $0x90] sm:$0xff] %v3775
        %3806 = vst [vmem:[#allocation2 + $0x98] sm:$0xff] %v3776
        %3807 = vst [vmem:[#allocation2 + $0xa0] sm:$0xff] %v3777
        %3808 = vst [vmem:[#allocation2 + $0xa8] sm:$0xff] %v3778
        %3809 = vst [vmem:[#allocation2 + $0xb0] sm:$0xff] %v3779
        %3810 = vst [vmem:[#allocation2 + $0xb8] sm:$0xff] %v3780
        %3811 = vst [vmem:[#allocation2 + $0xc0] sm:$0xff] %v3781
        %3812 = vst [vmem:[#allocation2 + $0xc8] sm:$0xff] %v3782
        %3813 = vst [vmem:[#allocation2 + $0xd0] sm:$0xff] %v3783
        %3814 = vst [vmem:[#allocation2 + $0xd8] sm:$0xff] %v3784
        %3815 = vst [vmem:[#allocation2 + $0xe0] sm:$0xff] %v3785
        %3816 = vst [vmem:[#allocation2 + $0xe8] sm:$0xff] %v3786
        %v3817 = vld [vmem:[#allocation2] ss:$2 sm:$0xff]
        %s3818 = scalar_lea.vmem [#allocation2], 16
        %v3819 = vld [vmem:[%s3818] ss:$2 sm:$0xff]
        %s3820 = scalar_lea.vmem [#allocation2], 32
        %v3821 = vld [vmem:[%s3820] ss:$2 sm:$0xff]
        %s3822 = scalar_lea.vmem [#allocation2], 48
        %v3823 = vld [vmem:[%s3822] ss:$2 sm:$0xff]
        %s3824 = scalar_lea.vmem [#allocation2], 64
        %v3825 = vld [vmem:[%s3824] ss:$2 sm:$0xff]
        %s3826 = scalar_lea.vmem [#allocation2], 80
        %v3827 = vld [vmem:[%s3826] ss:$2 sm:$0xff]
        %s3828 = scalar_lea.vmem [#allocation2], 96
        %v3829 = vld [vmem:[%s3828] ss:$2 sm:$0xff]
        %v3830 = vpack.c.bf16 %v3819, %v3817
        %v3831 = vpack.c.bf16 %v3823, %v3821
        %v3832 = vpack.c.bf16 %v3827, %v3825
        %v3833 = vpack.c.bf16 %v3829, %v3829
        %s3834 = scalar_lea.vmem [#allocation2], 1
        %v3835 = vld [vmem:[%s3834] ss:$2 sm:$0xff]
        %s3836 = scalar_lea.vmem [#allocation2], 17
        %v3837 = vld [vmem:[%s3836] ss:$2 sm:$0xff]
        %s3838 = scalar_lea.vmem [#allocation2], 33
        %v3839 = vld [vmem:[%s3838] ss:$2 sm:$0xff]
        %s3840 = scalar_lea.vmem [#allocation2], 49
        %v3841 = vld [vmem:[%s3840] ss:$2 sm:$0xff]
        %s3842 = scalar_lea.vmem [#allocation2], 65
        %v3843 = vld [vmem:[%s3842] ss:$2 sm:$0xff]
        %s3844 = scalar_lea.vmem [#allocation2], 81
        %v3845 = vld [vmem:[%s3844] ss:$2 sm:$0xff]
        %s3846 = scalar_lea.vmem [#allocation2], 97
        %v3847 = vld [vmem:[%s3846] ss:$2 sm:$0xff]
        %v3848 = vpack.c.bf16 %v3837, %v3835
        %v3849 = vpack.c.bf16 %v3841, %v3839
        %v3850 = vpack.c.bf16 %v3845, %v3843
        %v3851 = vpack.c.bf16 %v3847, %v3847
        %s3852 = scalar_lea.vmem [#allocation2], 2
        %v3853 = vld [vmem:[%s3852] ss:$2 sm:$0xff]
        %s3854 = scalar_lea.vmem [#allocation2], 18
        %v3855 = vld [vmem:[%s3854] ss:$2 sm:$0xff]
        %s3856 = scalar_lea.vmem [#allocation2], 34
        %v3857 = vld [vmem:[%s3856] ss:$2 sm:$0xff]
        %s3858 = scalar_lea.vmem [#allocation2], 50
        %v3859 = vld [vmem:[%s3858] ss:$2 sm:$0xff]
        %s3860 = scalar_lea.vmem [#allocation2], 66
        %v3861 = vld [vmem:[%s3860] ss:$2 sm:$0xff]
        %s3862 = scalar_lea.vmem [#allocation2], 82
        %v3863 = vld [vmem:[%s3862] ss:$2 sm:$0xff]
        %s3864 = scalar_lea.vmem [#allocation2], 98
        %v3865 = vld [vmem:[%s3864] ss:$2 sm:$0xff]
        %v3866 = vpack.c.bf16 %v3855, %v3853
        %v3867 = vpack.c.bf16 %v3859, %v3857
        %v3868 = vpack.c.bf16 %v3863, %v3861
        %v3869 = vpack.c.bf16 %v3865, %v3865
        %s3870 = scalar_lea.vmem [#allocation2], 112
        %v3871 = vld [vmem:[%s3870] ss:$2 sm:$0xff]
        %v3872 = vpack.c.bf16 %v3821, %v3819
        %v3873 = vpack.c.bf16 %v3825, %v3823
        %v3874 = vpack.c.bf16 %v3829, %v3827
        %v3875 = vpack.c.bf16 %v3871, %v3871
        %s3876 = scalar_lea.vmem [#allocation2], 113
        %v3877 = vld [vmem:[%s3876] ss:$2 sm:$0xff]
        %v3878 = vpack.c.bf16 %v3839, %v3837
        %v3879 = vpack.c.bf16 %v3843, %v3841
        %v3880 = vpack.c.bf16 %v3847, %v3845
        %v3881 = vpack.c.bf16 %v3877, %v3877
        %s3882 = scalar_lea.vmem [#allocation2], 114
        %v3883 = vld [vmem:[%s3882] ss:$2 sm:$0xff]
        %v3884 = vpack.c.bf16 %v3857, %v3855
        %v3885 = vpack.c.bf16 %v3861, %v3859
        %v3886 = vpack.c.bf16 %v3865, %v3863
        %v3887 = vpack.c.bf16 %v3883, %v3883
        %s3888 = scalar_lea.vmem [#allocation2], 128
        %v3889 = vld [vmem:[%s3888] ss:$2 sm:$0xff]
        %v3890 = vpack.c.bf16 %v3871, %v3829
        %v3891 = vpack.c.bf16 %v3889, %v3889
        %s3892 = scalar_lea.vmem [#allocation2], 129
        %v3893 = vld [vmem:[%s3892] ss:$2 sm:$0xff]
        %v3894 = vpack.c.bf16 %v3877, %v3847
        %v3895 = vpack.c.bf16 %v3893, %v3893
        %s3896 = scalar_lea.vmem [#allocation2], 130
        %v3897 = vld [vmem:[%s3896] ss:$2 sm:$0xff]
        %v3898 = vpack.c.bf16 %v3883, %v3865
        %v3899 = vpack.c.bf16 %v3897, %v3897
        %v3900 = vld [vmem:[%s3] sm:$0xf]
        %v3901 = vld [vmem:[%s3 + $0x4] sm:$0xf]
        %v3902 = vld [vmem:[%s3 + $0x8] sm:$0xf]
        %v3903 = vld [vmem:[%s3 + $0xc] sm:$0xf]
        %v3904 = vld [vmem:[%s3 + $0x10] sm:$0xf]
        %v3905 = vld [vmem:[%s3 + $0x14] sm:$0xf]
        %v3906 = vld [vmem:[%s3 + $0x18] sm:$0xf]
        %v3907 = vld [vmem:[%s3 + $0x1c] sm:$0xf]
        %v3908 = vld [vmem:[%s3 + $0x20] sm:$0xf]
        %v3909 = vld [vmem:[%s3 + $0x24] sm:$0xf]
        %v3910 = vld [vmem:[%s3 + $0x28] sm:$0xf]
        %v3911 = vld [vmem:[%s3 + $0x2c] sm:$0xf]
        %v3912 = vld [vmem:[%s3 + $0x30] sm:$0xf]
        %v3913 = vld [vmem:[%s3 + $0x34] sm:$0xf]
        %v3914 = vld [vmem:[%s3 + $0x38] sm:$0xf]
        %v3915 = vld [vmem:[%s3 + $0x3c] sm:$0xf]
        %s3916 = scalar_lea.vmem %s3, 64
        %v3917 = vld [vmem:[%s3916] sm:$0xf]
        %v3918 = vld [vmem:[%s3916 + $0x4] sm:$0xf]
        %v3919 = vld [vmem:[%s3916 + $0x8] sm:$0xf]
        %v3920 = vld [vmem:[%s3916 + $0xc] sm:$0xf]
        %v3921 = vld [vmem:[%s3916 + $0x10] sm:$0xf]
        %v3922 = vld [vmem:[%s3916 + $0x14] sm:$0xf]
        %v3923 = vld [vmem:[%s3916 + $0x18] sm:$0xf]
        %v3924 = vld [vmem:[%s3916 + $0x1c] sm:$0xf]
        %v3925 = vld [vmem:[%s3916 + $0x20] sm:$0xf]
        %v3926 = vld [vmem:[%s3916 + $0x24] sm:$0xf]
        %v3927 = vld [vmem:[%s3916 + $0x28] sm:$0xf]
        %v3928 = vld [vmem:[%s3916 + $0x2c] sm:$0xf]
        %v3929 = vld [vmem:[%s3916 + $0x30] sm:$0xf]
        %v3930 = vld [vmem:[%s3916 + $0x34] sm:$0xf]
        %v3931 = vld [vmem:[%s3916 + $0x38] sm:$0xf]
        %v3932 = vld [vmem:[%s3916 + $0x3c] sm:$0xf]
        %s3933 = scalar_lea.vmem %s3, 128
        %v3934 = vld [vmem:[%s3933] sm:$0xf]
        %v3935 = vld [vmem:[%s3933 + $0x4] sm:$0xf]
        %v3936 = vld [vmem:[%s3933 + $0x8] sm:$0xf]
        %v3937 = vld [vmem:[%s3933 + $0xc] sm:$0xf]
        %v3938 = vld [vmem:[%s3933 + $0x10] sm:$0xf]
        %v3939 = vld [vmem:[%s3933 + $0x14] sm:$0xf]
        %v3940 = vld [vmem:[%s3933 + $0x18] sm:$0xf]
        %v3941 = vld [vmem:[%s3933 + $0x1c] sm:$0xf]
        %v3942 = vld [vmem:[%s3933 + $0x20] sm:$0xf]
        %v3943 = vld [vmem:[%s3933 + $0x24] sm:$0xf]
        %v3944 = vld [vmem:[%s3933 + $0x28] sm:$0xf]
        %v3945 = vld [vmem:[%s3933 + $0x2c] sm:$0xf]
        %v3946 = vld [vmem:[%s3933 + $0x30] sm:$0xf]
        %v3947 = vld [vmem:[%s3933 + $0x34] sm:$0xf]
        %v3948 = vld [vmem:[%s3933 + $0x38] sm:$0xf]
        %v3949 = vld [vmem:[%s3933 + $0x3c] sm:$0xf]
        %s3950 = scalar_lea.vmem %s3, 192
        %v3951 = vld [vmem:[%s3950] sm:$0xf]
        %v3952 = vld [vmem:[%s3950 + $0x4] sm:$0xf]
        %v3953 = vld [vmem:[%s3950 + $0x8] sm:$0xf]
        %v3954 = vld [vmem:[%s3950 + $0xc] sm:$0xf]
        %v3955 = vld [vmem:[%s3950 + $0x10] sm:$0xf]
        %v3956 = vld [vmem:[%s3950 + $0x14] sm:$0xf]
        %v3957 = vld [vmem:[%s3950 + $0x18] sm:$0xf]
        %v3958 = vld [vmem:[%s3950 + $0x1c] sm:$0xf]
        %v3959 = vld [vmem:[%s3950 + $0x20] sm:$0xf]
        %v3960 = vld [vmem:[%s3950 + $0x24] sm:$0xf]
        %v3961 = vld [vmem:[%s3950 + $0x28] sm:$0xf]
        %v3962 = vld [vmem:[%s3950 + $0x2c] sm:$0xf]
        %v3963 = vld [vmem:[%s3950 + $0x30] sm:$0xf]
        %v3964 = vld [vmem:[%s3950 + $0x34] sm:$0xf]
        %v3965 = vld [vmem:[%s3950 + $0x38] sm:$0xf]
        %v3966 = vld [vmem:[%s3950 + $0x3c] sm:$0xf]
        %v3967 = vld [vmem:[%s4] sm:$0x1]
        %v3984 = vunpack.c.l.b16 %v3917
        %v3985 = vunpack.c.l.b16 %v3918
        %v3986 = vunpack.c.l.b16 %v3919
        %v3987 = vunpack.c.l.b16 %v3920
        %v3988 = vunpack.c.l.b16 %v3921
        %v3989 = vunpack.c.l.b16 %v3922
        %v3990 = vunpack.c.l.b16 %v3923
        %v3991 = vunpack.c.l.b16 %v3924
        %v3992 = vunpack.c.l.b16 %v3925
        %v3993 = vunpack.c.l.b16 %v3926
        %v3994 = vunpack.c.l.b16 %v3927
        %v3995 = vunpack.c.l.b16 %v3928
        %v3996 = vunpack.c.l.b16 %v3929
        %v3997 = vunpack.c.l.b16 %v3930
        %v3998 = vunpack.c.l.b16 %v3931
        %v3999 = vunpack.c.l.b16 %v3932
        %v4000 = vpack.c.b16 %v3985, %v3984
        %v4001 = vpack.c.b16 %v3987, %v3986
        %v4002 = vpack.c.b16 %v3989, %v3988
        %v4003 = vpack.c.b16 %v3991, %v3990
        %v4004 = vpack.c.b16 %v3993, %v3992
        %v4005 = vpack.c.b16 %v3995, %v3994
        %v4006 = vpack.c.b16 %v3997, %v3996
        %v4007 = vpack.c.b16 %v3999, %v3998
        %4016 = vmatprep.subr.bf16.mxu0 0
        %4017 = vmatpush1.bf16.msra.mxu0 %v4000
        %4018 = vmatprep.subr.bf16.mxu0 0
        %4019 = vmatpush1.bf16.msra.mxu0 %v4001
        %4020 = vmatprep.subr.bf16.mxu0 0
        %4021 = vmatpush1.bf16.msra.mxu0 %v4002
        %4022 = vmatprep.subr.bf16.mxu0 0
        %4023 = vmatpush1.bf16.msra.mxu0 %v4003
        %4024 = vmatprep.subr.bf16.mxu0 0
        %4025 = vmatpush1.bf16.msra.mxu0 %v4004
        %4026 = vmatprep.subr.bf16.mxu0 0
        %4027 = vmatpush1.bf16.msra.mxu0 %v4005
        %4028 = vmatprep.subr.bf16.mxu0 0
        %4029 = vmatpush1.bf16.msra.mxu0 %v4006
        %4030 = vmatprep.subr.bf16.mxu0 0
        %4031 = vmatpush1.bf16.msra.mxu0 %v4007
        %4032 = vmatprep.subr.bf16.mxu0 0
        %4033 = vmatpush1.bf16.msra.mxu0 0
        %4034 = vmatprep.subr.bf16.mxu0 0
        %4035 = vmatpush1.bf16.msra.mxu0 0
        %4036 = vmatprep.subr.bf16.mxu0 0
        %4037 = vmatpush1.bf16.msra.mxu0 0
        %4038 = vmatprep.subr.bf16.mxu0 0
        %4039 = vmatpush1.bf16.msra.mxu0 0
        %4040 = vmatprep.subr.bf16.mxu0 0
        %4041 = vmatpush1.bf16.msra.mxu0 0
        %4042 = vmatprep.subr.bf16.mxu0 0
        %4043 = vmatpush1.bf16.msra.mxu0 0
        %4044 = vmatprep.subr.bf16.mxu0 0
        %4045 = vmatpush1.bf16.msra.mxu0 0
        %4046 = vmatprep.subr.bf16.mxu0 0
        %4047 = vmatpush1.bf16.msra.mxu0 0
        %4048 = vmatprep.mubr.bf16.mxu0 0
        %4049 = vmatmul.mubr.bf16.gmra.mrb[0].mxu0 %v3848
        %v4050 = vpop.f32.mrb[0].mxu0
        %v4051 = vadd.f32 0.0, %v4050
        %v4052 = vpop.f32.mrb[0].mxu0
        %v4053 = vpop.f32.mrb[0].mxu0
        %v4054 = vadd.f32 0.0, %v4053
        %v4055 = vpop.f32.mrb[0].mxu0
        %4056 = vmatprep.mubr.bf16.mxu0 0
        %4057 = vmatmul.mubr.bf16.gmra.mrb[0].mxu0 %v3849
        %v4058 = vpop.f32.mrb[0].mxu0
        %v4059 = vadd.f32 0.0, %v4058
        %v4060 = vpop.f32.mrb[0].mxu0
        %v4061 = vpop.f32.mrb[0].mxu0
        %v4062 = vadd.f32 0.0, %v4061
        %v4063 = vpop.f32.mrb[0].mxu0
        %4064 = vmatprep.mubr.bf16.mxu0 0
        %4065 = vmatmul.mubr.bf16.gmra.mrb[0].mxu0 %v3850
        %v4066 = vpop.f32.mrb[0].mxu0
        %v4067 = vadd.f32 0.0, %v4066
        %v4068 = vpop.f32.mrb[0].mxu0
        %v4069 = vpop.f32.mrb[0].mxu0
        %v4070 = vadd.f32 0.0, %v4069
        %v4071 = vpop.f32.mrb[0].mxu0
        %4072 = vmatprep.mubr.bf16.mxu0 0
        %4073 = vmatmul.mubr.bf16.gmra.mrb[0].mxu0 %v3851
        %v4074 = vpop.f32.mrb[0].mxu0
        %v4075 = vadd.f32 0.0, %v4074
        %v4076 = vpop.f32.mrb[0].mxu0
        %v4077 = vpop.f32.mrb[0].mxu0
        %v4078 = vpop.f32.mrb[0].mxu0
        %4079 = vdwg.mxu0
        %v4096 = vunpack.c.l.b16 %v3900
        %v4097 = vunpack.c.l.b16 %v3901
        %v4098 = vunpack.c.l.b16 %v3902
        %v4099 = vunpack.c.l.b16 %v3903
        %v4100 = vunpack.c.l.b16 %v3904
        %v4101 = vunpack.c.l.b16 %v3905
        %v4102 = vunpack.c.l.b16 %v3906
        %v4103 = vunpack.c.l.b16 %v3907
        %v4104 = vunpack.c.l.b16 %v3908
        %v4105 = vunpack.c.l.b16 %v3909
        %v4106 = vunpack.c.l.b16 %v3910
        %v4107 = vunpack.c.l.b16 %v3911
        %v4108 = vunpack.c.l.b16 %v3912
        %v4109 = vunpack.c.l.b16 %v3913
        %v4110 = vunpack.c.l.b16 %v3914
        %v4111 = vunpack.c.l.b16 %v3915
        %v4112 = vpack.c.b16 %v4097, %v4096
        %v4113 = vpack.c.b16 %v4099, %v4098
        %v4114 = vpack.c.b16 %v4101, %v4100
        %v4115 = vpack.c.b16 %v4103, %v4102
        %v4116 = vpack.c.b16 %v4105, %v4104
        %v4117 = vpack.c.b16 %v4107, %v4106
        %v4118 = vpack.c.b16 %v4109, %v4108
        %v4119 = vpack.c.b16 %v4111, %v4110
        %4128 = vmatprep.subr.bf16.mxu0 0
        %4129 = vmatpush1.bf16.msra.mxu0 %v4112
        %4130 = vmatprep.subr.bf16.mxu0 0
        %4131 = vmatpush1.bf16.msra.mxu0 %v4113
        %4132 = vmatprep.subr.bf16.mxu0 0
        %4133 = vmatpush1.bf16.msra.mxu0 %v4114
        %4134 = vmatprep.subr.bf16.mxu0 0
        %4135 = vmatpush1.bf16.msra.mxu0 %v4115
        %4136 = vmatprep.subr.bf16.mxu0 0
        %4137 = vmatpush1.bf16.msra.mxu0 %v4116
        %4138 = vmatprep.subr.bf16.mxu0 0
        %4139 = vmatpush1.bf16.msra.mxu0 %v4117
        %4140 = vmatprep.subr.bf16.mxu0 0
        %4141 = vmatpush1.bf16.msra.mxu0 %v4118
        %4142 = vmatprep.subr.bf16.mxu0 0
        %4143 = vmatpush1.bf16.msra.mxu0 %v4119
        %4144 = vmatprep.subr.bf16.mxu0 0
        %4145 = vmatpush1.bf16.msra.mxu0 0
        %4146 = vmatprep.subr.bf16.mxu0 0
        %4147 = vmatpush1.bf16.msra.mxu0 0
        %4148 = vmatprep.subr.bf16.mxu0 0
        %4149 = vmatpush1.bf16.msra.mxu0 0
        %4150 = vmatprep.subr.bf16.mxu0 0
        %4151 = vmatpush1.bf16.msra.mxu0 0
        %4152 = vmatprep.subr.bf16.mxu0 0
        %4153 = vmatpush1.bf16.msra.mxu0 0
        %4154 = vmatprep.subr.bf16.mxu0 0
        %4155 = vmatpush1.bf16.msra.mxu0 0
        %4156 = vmatprep.subr.bf16.mxu0 0
        %4157 = vmatpush1.bf16.msra.mxu0 0
        %4158 = vmatprep.subr.bf16.mxu0 0
        %4159 = vmatpush1.bf16.msra.mxu0 0
        %4160 = vmatprep.mubr.bf16.mxu0 0
        %4161 = vmatmul.mubr.bf16.gmra.mrb[0].mxu0 %v3830
        %v4162 = vpop.f32.mrb[0].mxu0
        %v4163 = vadd.f32 %v4051, %v4162
        %v4164 = vpop.f32.mrb[0].mxu0
        %v4165 = vpop.f32.mrb[0].mxu0
        %v4166 = vadd.f32 %v4054, %v4165
        %v4167 = vpop.f32.mrb[0].mxu0
        %4168 = vmatprep.mubr.bf16.mxu0 0
        %4169 = vmatmul.mubr.bf16.gmra.mrb[0].mxu0 %v3831
        %v4170 = vpop.f32.mrb[0].mxu0
        %v4171 = vadd.f32 %v4059, %v4170
        %v4172 = vpop.f32.mrb[0].mxu0
        %v4173 = vpop.f32.mrb[0].mxu0
        %v4174 = vadd.f32 %v4062, %v4173
        %v4175 = vpop.f32.mrb[0].mxu0
        %4176 = vmatprep.mubr.bf16.mxu0 0
        %4177 = vmatmul.mubr.bf16.gmra.mrb[0].mxu0 %v3832
        %v4178 = vpop.f32.mrb[0].mxu0
        %v4179 = vadd.f32 %v4067, %v4178
        %v4180 = vpop.f32.mrb[0].mxu0
        %v4181 = vpop.f32.mrb[0].mxu0
        %v4182 = vadd.f32 %v4070, %v4181
        %v4183 = vpop.f32.mrb[0].mxu0
        %4184 = vmatprep.mubr.bf16.mxu0 0
        %4185 = vmatmul.mubr.bf16.gmra.mrb[0].mxu0 %v3833
        %v4186 = vpop.f32.mrb[0].mxu0
        %v4187 = vadd.f32 %v4075, %v4186
        %v4188 = vpop.f32.mrb[0].mxu0
        %v4189 = vpop.f32.mrb[0].mxu0
        %v4190 = vpop.f32.mrb[0].mxu0
        %4191 = vdwg.mxu0
        %v4208 = vunpack.c.l.b16 %v3934
        %v4209 = vunpack.c.l.b16 %v3935
        %v4210 = vunpack.c.l.b16 %v3936
        %v4211 = vunpack.c.l.b16 %v3937
        %v4212 = vunpack.c.l.b16 %v3938
        %v4213 = vunpack.c.l.b16 %v3939
        %v4214 = vunpack.c.l.b16 %v3940
        %v4215 = vunpack.c.l.b16 %v3941
        %v4216 = vunpack.c.l.b16 %v3942
        %v4217 = vunpack.c.l.b16 %v3943
        %v4218 = vunpack.c.l.b16 %v3944
        %v4219 = vunpack.c.l.b16 %v3945
        %v4220 = vunpack.c.l.b16 %v3946
        %v4221 = vunpack.c.l.b16 %v3947
        %v4222 = vunpack.c.l.b16 %v3948
        %v4223 = vunpack.c.l.b16 %v3949
        %v4224 = vpack.c.b16 %v4209, %v4208
        %v4225 = vpack.c.b16 %v4211, %v4210
        %v4226 = vpack.c.b16 %v4213, %v4212
        %v4227 = vpack.c.b16 %v4215, %v4214
        %v4228 = vpack.c.b16 %v4217, %v4216
        %v4229 = vpack.c.b16 %v4219, %v4218
        %v4230 = vpack.c.b16 %v4221, %v4220
        %v4231 = vpack.c.b16 %v4223, %v4222
        %4240 = vmatprep.subr.bf16.mxu0 0
        %4241 = vmatpush1.bf16.msra.mxu0 %v4224
        %4242 = vmatprep.subr.bf16.mxu0 0
        %4243 = vmatpush1.bf16.msra.mxu0 %v4225
        %4244 = vmatprep.subr.bf16.mxu0 0
        %4245 = vmatpush1.bf16.msra.mxu0 %v4226
        %4246 = vmatprep.subr.bf16.mxu0 0
        %4247 = vmatpush1.bf16.msra.mxu0 %v4227
        %4248 = vmatprep.subr.bf16.mxu0 0
        %4249 = vmatpush1.bf16.msra.mxu0 %v4228
        %4250 = vmatprep.subr.bf16.mxu0 0
        %4251 = vmatpush1.bf16.msra.mxu0 %v4229
        %4252 = vmatprep.subr.bf16.mxu0 0
        %4253 = vmatpush1.bf16.msra.mxu0 %v4230
        %4254 = vmatprep.subr.bf16.mxu0 0
        %4255 = vmatpush1.bf16.msra.mxu0 %v4231
        %4256 = vmatprep.subr.bf16.mxu0 0
        %4257 = vmatpush1.bf16.msra.mxu0 0
        %4258 = vmatprep.subr.bf16.mxu0 0
        %4259 = vmatpush1.bf16.msra.mxu0 0
        %4260 = vmatprep.subr.bf16.mxu0 0
        %4261 = vmatpush1.bf16.msra.mxu0 0
        %4262 = vmatprep.subr.bf16.mxu0 0
        %4263 = vmatpush1.bf16.msra.mxu0 0
        %4264 = vmatprep.subr.bf16.mxu0 0
        %4265 = vmatpush1.bf16.msra.mxu0 0
        %4266 = vmatprep.subr.bf16.mxu0 0
        %4267 = vmatpush1.bf16.msra.mxu0 0
        %4268 = vmatprep.subr.bf16.mxu0 0
        %4269 = vmatpush1.bf16.msra.mxu0 0
        %4270 = vmatprep.subr.bf16.mxu0 0
        %4271 = vmatpush1.bf16.msra.mxu0 0
        %4272 = vmatprep.mubr.bf16.mxu0 0
        %4273 = vmatmul.mubr.bf16.gmra.mrb[0].mxu0 %v3872
        %v4274 = vpop.f32.mrb[0].mxu0
        %v4275 = vadd.f32 0.0, %v4274
        %v4276 = vpop.f32.mrb[0].mxu0
        %v4277 = vpop.f32.mrb[0].mxu0
        %v4278 = vadd.f32 0.0, %v4277
        %v4279 = vpop.f32.mrb[0].mxu0
        %4280 = vmatprep.mubr.bf16.mxu0 0
        %4281 = vmatmul.mubr.bf16.gmra.mrb[0].mxu0 %v3873
        %v4282 = vpop.f32.mrb[0].mxu0
        %v4283 = vadd.f32 0.0, %v4282
        %v4284 = vpop.f32.mrb[0].mxu0
        %v4285 = vpop.f32.mrb[0].mxu0
        %v4286 = vadd.f32 0.0, %v4285
        %v4287 = vpop.f32.mrb[0].mxu0
        %4288 = vmatprep.mubr.bf16.mxu0 0
        %4289 = vmatmul.mubr.bf16.gmra.mrb[0].mxu0 %v3874
        %v4290 = vpop.f32.mrb[0].mxu0
        %v4291 = vadd.f32 0.0, %v4290
        %v4292 = vpop.f32.mrb[0].mxu0
        %v4293 = vpop.f32.mrb[0].mxu0
        %v4294 = vadd.f32 0.0, %v4293
        %v4295 = vpop.f32.mrb[0].mxu0
        %4296 = vmatprep.mubr.bf16.mxu0 0
        %4297 = vmatmul.mubr.bf16.gmra.mrb[0].mxu0 %v3875
        %v4298 = vpop.f32.mrb[0].mxu0
        %v4299 = vadd.f32 0.0, %v4298
        %v4300 = vpop.f32.mrb[0].mxu0
        %v4301 = vpop.f32.mrb[0].mxu0
        %v4302 = vpop.f32.mrb[0].mxu0
        %4303 = vdwg.mxu0
        %v4304 = vadd.f32 %v4163, %v4275
        %v4305 = vadd.f32 %v4166, %v4278
        %v4306 = vadd.f32 %v4171, %v4283
        %v4307 = vadd.f32 %v4174, %v4286
        %v4308 = vadd.f32 %v4179, %v4291
        %v4309 = vadd.f32 %v4182, %v4294
        %v4310 = vadd.f32 %v4187, %v4299
        %v4327 = vunpack.c.l.b16 %v3951
        %v4328 = vunpack.c.l.b16 %v3952
        %v4329 = vunpack.c.l.b16 %v3953
        %v4330 = vunpack.c.l.b16 %v3954
        %v4331 = vunpack.c.l.b16 %v3955
        %v4332 = vunpack.c.l.b16 %v3956
        %v4333 = vunpack.c.l.b16 %v3957
        %v4334 = vunpack.c.l.b16 %v3958
        %v4335 = vunpack.c.l.b16 %v3959
        %v4336 = vunpack.c.l.b16 %v3960
        %v4337 = vunpack.c.l.b16 %v3961
        %v4338 = vunpack.c.l.b16 %v3962
        %v4339 = vunpack.c.l.b16 %v3963
        %v4340 = vunpack.c.l.b16 %v3964
        %v4341 = vunpack.c.l.b16 %v3965
        %v4342 = vunpack.c.l.b16 %v3966
        %v4343 = vpack.c.b16 %v4328, %v4327
        %v4344 = vpack.c.b16 %v4330, %v4329
        %v4345 = vpack.c.b16 %v4332, %v4331
        %v4346 = vpack.c.b16 %v4334, %v4333
        %v4347 = vpack.c.b16 %v4336, %v4335
        %v4348 = vpack.c.b16 %v4338, %v4337
        %v4349 = vpack.c.b16 %v4340, %v4339
        %v4350 = vpack.c.b16 %v4342, %v4341
        %4359 = vmatprep.subr.bf16.mxu0 0
        %4360 = vmatpush1.bf16.msra.mxu0 %v4343
        %4361 = vmatprep.subr.bf16.mxu0 0
        %4362 = vmatpush1.bf16.msra.mxu0 %v4344
        %4363 = vmatprep.subr.bf16.mxu0 0
        %4364 = vmatpush1.bf16.msra.mxu0 %v4345
        %4365 = vmatprep.subr.bf16.mxu0 0
        %4366 = vmatpush1.bf16.msra.mxu0 %v4346
        %4367 = vmatprep.subr.bf16.mxu0 0
        %4368 = vmatpush1.bf16.msra.mxu0 %v4347
        %4369 = vmatprep.subr.bf16.mxu0 0
        %4370 = vmatpush1.bf16.msra.mxu0 %v4348
        %4371 = vmatprep.subr.bf16.mxu0 0
        %4372 = vmatpush1.bf16.msra.mxu0 %v4349
        %4373 = vmatprep.subr.bf16.mxu0 0
        %4374 = vmatpush1.bf16.msra.mxu0 %v4350
        %4375 = vmatprep.subr.bf16.mxu0 0
        %4376 = vmatpush1.bf16.msra.mxu0 0
        %4377 = vmatprep.subr.bf16.mxu0 0
        %4378 = vmatpush1.bf16.msra.mxu0 0
        %4379 = vmatprep.subr.bf16.mxu0 0
        %4380 = vmatpush1.bf16.msra.mxu0 0
        %4381 = vmatprep.subr.bf16.mxu0 0
        %4382 = vmatpush1.bf16.msra.mxu0 0
        %4383 = vmatprep.subr.bf16.mxu0 0
        %4384 = vmatpush1.bf16.msra.mxu0 0
        %4385 = vmatprep.subr.bf16.mxu0 0
        %4386 = vmatpush1.bf16.msra.mxu0 0
        %4387 = vmatprep.subr.bf16.mxu0 0
        %4388 = vmatpush1.bf16.msra.mxu0 0
        %4389 = vmatprep.subr.bf16.mxu0 0
        %4390 = vmatpush1.bf16.msra.mxu0 0
        %4391 = vmatprep.mubr.bf16.mxu0 0
        %4392 = vmatmul.mubr.bf16.gmra.mrb[0].mxu0 %v3878
        %v4393 = vpop.f32.mrb[0].mxu0
        %v4394 = vadd.f32 0.0, %v4393
        %v4395 = vpop.f32.mrb[0].mxu0
        %v4396 = vpop.f32.mrb[0].mxu0
        %v4397 = vadd.f32 0.0, %v4396
        %v4398 = vpop.f32.mrb[0].mxu0
        %4399 = vmatprep.mubr.bf16.mxu0 0
        %4400 = vmatmul.mubr.bf16.gmra.mrb[0].mxu0 %v3879
        %v4401 = vpop.f32.mrb[0].mxu0
        %v4402 = vadd.f32 0.0, %v4401
        %v4403 = vpop.f32.mrb[0].mxu0
        %v4404 = vpop.f32.mrb[0].mxu0
        %v4405 = vadd.f32 0.0, %v4404
        %v4406 = vpop.f32.mrb[0].mxu0
        %4407 = vmatprep.mubr.bf16.mxu0 0
        %4408 = vmatmul.mubr.bf16.gmra.mrb[0].mxu0 %v3880
        %v4409 = vpop.f32.mrb[0].mxu0
        %v4410 = vadd.f32 0.0, %v4409
        %v4411 = vpop.f32.mrb[0].mxu0
        %v4412 = vpop.f32.mrb[0].mxu0
        %v4413 = vadd.f32 0.0, %v4412
        %v4414 = vpop.f32.mrb[0].mxu0
        %4415 = vmatprep.mubr.bf16.mxu0 0
        %4416 = vmatmul.mubr.bf16.gmra.mrb[0].mxu0 %v3881
        %v4417 = vpop.f32.mrb[0].mxu0
        %v4418 = vadd.f32 0.0, %v4417
        %v4419 = vpop.f32.mrb[0].mxu0
        %v4420 = vpop.f32.mrb[0].mxu0
        %v4421 = vpop.f32.mrb[0].mxu0
        %4422 = vdwg.mxu0
        %v4423 = vadd.f32 %v4304, %v4394
        %v4424 = vadd.f32 %v4305, %v4397
        %v4425 = vadd.f32 %v4306, %v4402
        %v4426 = vadd.f32 %v4307, %v4405
        %v4427 = vadd.f32 %v4308, %v4410
        %v4428 = vadd.f32 %v4309, %v4413
        %v4429 = vadd.f32 %v4310, %v4418
        %v4431 = vlaneseq
        %v4432 = vshrl.u32 %v4431, 7
        %v4433 = vsub.s32 0, %v4432
        %v4434 = vrot.slane %v3967, %v4433
        %v4436 = vadd.f32 %v4423, %v4434
        %v4437 = vadd.f32 %v4424, %v4434
        %v4438 = vadd.f32 %v4425, %v4434
        %v4439 = vadd.f32 %v4426, %v4434
        %v4440 = vadd.f32 %v4427, %v4434
        %v4441 = vadd.f32 %v4428, %v4434
        %v4442 = vadd.f32 %v4429, %v4434
        %v4443 = vmax.f32 %v4436, 0.0
        %v4444 = vmax.f32 %v4437, 0.0
        %v4445 = vmax.f32 %v4438, 0.0
        %v4446 = vmax.f32 %v4439, 0.0
        %v4447 = vmax.f32 %v4440, 0.0
        %v4448 = vmax.f32 %v4441, 0.0
        %v4449 = vmax.f32 %v4442, 0.0
        %4450 = vmatprep.subr.bf16.mxu0 0
        %4451 = vmatpush1.bf16.msra.mxu0 %v4000
        %4452 = vmatprep.subr.bf16.mxu0 0
        %4453 = vmatpush1.bf16.msra.mxu0 %v4001
        %4454 = vmatprep.subr.bf16.mxu0 0
        %4455 = vmatpush1.bf16.msra.mxu0 %v4002
        %4456 = vmatprep.subr.bf16.mxu0 0
        %4457 = vmatpush1.bf16.msra.mxu0 %v4003
        %4458 = vmatprep.subr.bf16.mxu0 0
        %4459 = vmatpush1.bf16.msra.mxu0 %v4004
        %4460 = vmatprep.subr.bf16.mxu0 0
        %4461 = vmatpush1.bf16.msra.mxu0 %v4005
        %4462 = vmatprep.subr.bf16.mxu0 0
        %4463 = vmatpush1.bf16.msra.mxu0 %v4006
        %4464 = vmatprep.subr.bf16.mxu0 0
        %4465 = vmatpush1.bf16.msra.mxu0 %v4007
        %4466 = vmatprep.subr.bf16.mxu0 0
        %4467 = vmatpush1.bf16.msra.mxu0 0
        %4468 = vmatprep.subr.bf16.mxu0 0
        %4469 = vmatpush1.bf16.msra.mxu0 0
        %4470 = vmatprep.subr.bf16.mxu0 0
        %4471 = vmatpush1.bf16.msra.mxu0 0
        %4472 = vmatprep.subr.bf16.mxu0 0
        %4473 = vmatpush1.bf16.msra.mxu0 0
        %4474 = vmatprep.subr.bf16.mxu0 0
        %4475 = vmatpush1.bf16.msra.mxu0 0
        %4476 = vmatprep.subr.bf16.mxu0 0
        %4477 = vmatpush1.bf16.msra.mxu0 0
        %4478 = vmatprep.subr.bf16.mxu0 0
        %4479 = vmatpush1.bf16.msra.mxu0 0
        %4480 = vmatprep.subr.bf16.mxu0 0
        %4481 = vmatpush1.bf16.msra.mxu0 0
        %4482 = vmatprep.mubr.bf16.mxu0 0
        %4483 = vmatmul.mubr.bf16.gmra.mrb[0].mxu0 %v3866
        %v4484 = vpop.f32.mrb[0].mxu0
        %v4485 = vadd.f32 0.0, %v4484
        %v4486 = vpop.f32.mrb[0].mxu0
        %v4487 = vpop.f32.mrb[0].mxu0
        %v4488 = vadd.f32 0.0, %v4487
        %v4489 = vpop.f32.mrb[0].mxu0
        %4490 = vmatprep.mubr.bf16.mxu0 0
        %4491 = vmatmul.mubr.bf16.gmra.mrb[0].mxu0 %v3867
        %v4492 = vpop.f32.mrb[0].mxu0
        %v4493 = vadd.f32 0.0, %v4492
        %v4494 = vpop.f32.mrb[0].mxu0
        %v4495 = vpop.f32.mrb[0].mxu0
        %v4496 = vadd.f32 0.0, %v4495
        %v4497 = vpop.f32.mrb[0].mxu0
        %4498 = vmatprep.mubr.bf16.mxu0 0
        %4499 = vmatmul.mubr.bf16.gmra.mrb[0].mxu0 %v3868
        %v4500 = vpop.f32.mrb[0].mxu0
        %v4501 = vadd.f32 0.0, %v4500
        %v4502 = vpop.f32.mrb[0].mxu0
        %v4503 = vpop.f32.mrb[0].mxu0
        %v4504 = vadd.f32 0.0, %v4503
        %v4505 = vpop.f32.mrb[0].mxu0
        %4506 = vmatprep.mubr.bf16.mxu0 0
        %4507 = vmatmul.mubr.bf16.gmra.mrb[0].mxu0 %v3869
        %v4508 = vpop.f32.mrb[0].mxu0
        %v4509 = vadd.f32 0.0, %v4508
        %v4510 = vpop.f32.mrb[0].mxu0
        %v4511 = vpop.f32.mrb[0].mxu0
        %v4512 = vpop.f32.mrb[0].mxu0
        %4513 = vdwg.mxu0
        %4514 = vmatprep.subr.bf16.mxu0 0
        %4515 = vmatpush1.bf16.msra.mxu0 %v4112
        %4516 = vmatprep.subr.bf16.mxu0 0
        %4517 = vmatpush1.bf16.msra.mxu0 %v4113
        %4518 = vmatprep.subr.bf16.mxu0 0
        %4519 = vmatpush1.bf16.msra.mxu0 %v4114
        %4520 = vmatprep.subr.bf16.mxu0 0
        %4521 = vmatpush1.bf16.msra.mxu0 %v4115
        %4522 = vmatprep.subr.bf16.mxu0 0
        %4523 = vmatpush1.bf16.msra.mxu0 %v4116
        %4524 = vmatprep.subr.bf16.mxu0 0
        %4525 = vmatpush1.bf16.msra.mxu0 %v4117
        %4526 = vmatprep.subr.bf16.mxu0 0
        %4527 = vmatpush1.bf16.msra.mxu0 %v4118
        %4528 = vmatprep.subr.bf16.mxu0 0
        %4529 = vmatpush1.bf16.msra.mxu0 %v4119
        %4530 = vmatprep.subr.bf16.mxu0 0
        %4531 = vmatpush1.bf16.msra.mxu0 0
        %4532 = vmatprep.subr.bf16.mxu0 0
        %4533 = vmatpush1.bf16.msra.mxu0 0
        %4534 = vmatprep.subr.bf16.mxu0 0
        %4535 = vmatpush1.bf16.msra.mxu0 0
        %4536 = vmatprep.subr.bf16.mxu0 0
        %4537 = vmatpush1.bf16.msra.mxu0 0
        %4538 = vmatprep.subr.bf16.mxu0 0
        %4539 = vmatpush1.bf16.msra.mxu0 0
        %4540 = vmatprep.subr.bf16.mxu0 0
        %4541 = vmatpush1.bf16.msra.mxu0 0
        %4542 = vmatprep.subr.bf16.mxu0 0
        %4543 = vmatpush1.bf16.msra.mxu0 0
        %4544 = vmatprep.subr.bf16.mxu0 0
        %4545 = vmatpush1.bf16.msra.mxu0 0
        %4546 = vmatprep.mubr.bf16.mxu0 0
        %4547 = vmatmul.mubr.bf16.gmra.mrb[0].mxu0 %v3848
        %v4548 = vpop.f32.mrb[0].mxu0
        %v4549 = vadd.f32 %v4485, %v4548
        %v4550 = vpop.f32.mrb[0].mxu0
        %v4551 = vpop.f32.mrb[0].mxu0
        %v4552 = vadd.f32 %v4488, %v4551
        %v4553 = vpop.f32.mrb[0].mxu0
        %4554 = vmatprep.mubr.bf16.mxu0 0
        %4555 = vmatmul.mubr.bf16.gmra.mrb[0].mxu0 %v3849
        %v4556 = vpop.f32.mrb[0].mxu0
        %v4557 = vadd.f32 %v4493, %v4556
        %v4558 = vpop.f32.mrb[0].mxu0
        %v4559 = vpop.f32.mrb[0].mxu0
        %v4560 = vadd.f32 %v4496, %v4559
        %v4561 = vpop.f32.mrb[0].mxu0
        %4562 = vmatprep.mubr.bf16.mxu0 0
        %4563 = vmatmul.mubr.bf16.gmra.mrb[0].mxu0 %v3850
        %v4564 = vpop.f32.mrb[0].mxu0
        %v4565 = vadd.f32 %v4501, %v4564
        %v4566 = vpop.f32.mrb[0].mxu0
        %v4567 = vpop.f32.mrb[0].mxu0
        %v4568 = vadd.f32 %v4504, %v4567
        %v4569 = vpop.f32.mrb[0].mxu0
        %4570 = vmatprep.mubr.bf16.mxu0 0
        %4571 = vmatmul.mubr.bf16.gmra.mrb[0].mxu0 %v3851
        %v4572 = vpop.f32.mrb[0].mxu0
        %v4573 = vadd.f32 %v4509, %v4572
        %v4574 = vpop.f32.mrb[0].mxu0
        %v4575 = vpop.f32.mrb[0].mxu0
        %v4576 = vpop.f32.mrb[0].mxu0
        %4577 = vdwg.mxu0
        %4578 = vmatprep.subr.bf16.mxu0 0
        %4579 = vmatpush1.bf16.msra.mxu0 %v4224
        %4580 = vmatprep.subr.bf16.mxu0 0
        %4581 = vmatpush1.bf16.msra.mxu0 %v4225
        %4582 = vmatprep.subr.bf16.mxu0 0
        %4583 = vmatpush1.bf16.msra.mxu0 %v4226
        %4584 = vmatprep.subr.bf16.mxu0 0
        %4585 = vmatpush1.bf16.msra.mxu0 %v4227
        %4586 = vmatprep.subr.bf16.mxu0 0
        %4587 = vmatpush1.bf16.msra.mxu0 %v4228
        %4588 = vmatprep.subr.bf16.mxu0 0
        %4589 = vmatpush1.bf16.msra.mxu0 %v4229
        %4590 = vmatprep.subr.bf16.mxu0 0
        %4591 = vmatpush1.bf16.msra.mxu0 %v4230
        %4592 = vmatprep.subr.bf16.mxu0 0
        %4593 = vmatpush1.bf16.msra.mxu0 %v4231
        %4594 = vmatprep.subr.bf16.mxu0 0
        %4595 = vmatpush1.bf16.msra.mxu0 0
        %4596 = vmatprep.subr.bf16.mxu0 0
        %4597 = vmatpush1.bf16.msra.mxu0 0
        %4598 = vmatprep.subr.bf16.mxu0 0
        %4599 = vmatpush1.bf16.msra.mxu0 0
        %4600 = vmatprep.subr.bf16.mxu0 0
        %4601 = vmatpush1.bf16.msra.mxu0 0
        %4602 = vmatprep.subr.bf16.mxu0 0
        %4603 = vmatpush1.bf16.msra.mxu0 0
        %4604 = vmatprep.subr.bf16.mxu0 0
        %4605 = vmatpush1.bf16.msra.mxu0 0
        %4606 = vmatprep.subr.bf16.mxu0 0
        %4607 = vmatpush1.bf16.msra.mxu0 0
        %4608 = vmatprep.subr.bf16.mxu0 0
        %4609 = vmatpush1.bf16.msra.mxu0 0
        %4610 = vmatprep.mubr.bf16.mxu0 0
        %4611 = vmatmul.mubr.bf16.gmra.mrb[0].mxu0 %v3878
        %v4612 = vpop.f32.mrb[0].mxu0
        %v4613 = vadd.f32 0.0, %v4612
        %v4614 = vpop.f32.mrb[0].mxu0
        %v4615 = vpop.f32.mrb[0].mxu0
        %v4616 = vadd.f32 0.0, %v4615
        %v4617 = vpop.f32.mrb[0].mxu0
        %4618 = vmatprep.mubr.bf16.mxu0 0
        %4619 = vmatmul.mubr.bf16.gmra.mrb[0].mxu0 %v3879
        %v4620 = vpop.f32.mrb[0].mxu0
        %v4621 = vadd.f32 0.0, %v4620
        %v4622 = vpop.f32.mrb[0].mxu0
        %v4623 = vpop.f32.mrb[0].mxu0
        %v4624 = vadd.f32 0.0, %v4623
        %v4625 = vpop.f32.mrb[0].mxu0
        %4626 = vmatprep.mubr.bf16.mxu0 0
        %4627 = vmatmul.mubr.bf16.gmra.mrb[0].mxu0 %v3880
        %v4628 = vpop.f32.mrb[0].mxu0
        %v4629 = vadd.f32 0.0, %v4628
        %v4630 = vpop.f32.mrb[0].mxu0
        %v4631 = vpop.f32.mrb[0].mxu0
        %v4632 = vadd.f32 0.0, %v4631
        %v4633 = vpop.f32.mrb[0].mxu0
        %4634 = vmatprep.mubr.bf16.mxu0 0
        %4635 = vmatmul.mubr.bf16.gmra.mrb[0].mxu0 %v3881
        %v4636 = vpop.f32.mrb[0].mxu0
        %v4637 = vadd.f32 0.0, %v4636
        %v4638 = vpop.f32.mrb[0].mxu0
        %v4639 = vpop.f32.mrb[0].mxu0
        %v4640 = vpop.f32.mrb[0].mxu0
        %4641 = vdwg.mxu0
        %v4642 = vadd.f32 %v4549, %v4613
        %v4643 = vadd.f32 %v4552, %v4616
        %v4644 = vadd.f32 %v4557, %v4621
        %v4645 = vadd.f32 %v4560, %v4624
        %v4646 = vadd.f32 %v4565, %v4629
        %v4647 = vadd.f32 %v4568, %v4632
        %v4648 = vadd.f32 %v4573, %v4637
        %4649 = vmatprep.subr.bf16.mxu0 0
        %4650 = vmatpush1.bf16.msra.mxu0 %v4343
        %4651 = vmatprep.subr.bf16.mxu0 0
        %4652 = vmatpush1.bf16.msra.mxu0 %v4344
        %4653 = vmatprep.subr.bf16.mxu0 0
        %4654 = vmatpush1.bf16.msra.mxu0 %v4345
        %4655 = vmatprep.subr.bf16.mxu0 0
        %4656 = vmatpush1.bf16.msra.mxu0 %v4346
        %4657 = vmatprep.subr.bf16.mxu0 0
        %4658 = vmatpush1.bf16.msra.mxu0 %v4347
        %4659 = vmatprep.subr.bf16.mxu0 0
        %4660 = vmatpush1.bf16.msra.mxu0 %v4348
        %4661 = vmatprep.subr.bf16.mxu0 0
        %4662 = vmatpush1.bf16.msra.mxu0 %v4349
        %4663 = vmatprep.subr.bf16.mxu0 0
        %4664 = vmatpush1.bf16.msra.mxu0 %v4350
        %4665 = vmatprep.subr.bf16.mxu0 0
        %4666 = vmatpush1.bf16.msra.mxu0 0
        %4667 = vmatprep.subr.bf16.mxu0 0
        %4668 = vmatpush1.bf16.msra.mxu0 0
        %4669 = vmatprep.subr.bf16.mxu0 0
        %4670 = vmatpush1.bf16.msra.mxu0 0
        %4671 = vmatprep.subr.bf16.mxu0 0
        %4672 = vmatpush1.bf16.msra.mxu0 0
        %4673 = vmatprep.subr.bf16.mxu0 0
        %4674 = vmatpush1.bf16.msra.mxu0 0
        %4675 = vmatprep.subr.bf16.mxu0 0
        %4676 = vmatpush1.bf16.msra.mxu0 0
        %4677 = vmatprep.subr.bf16.mxu0 0
        %4678 = vmatpush1.bf16.msra.mxu0 0
        %4679 = vmatprep.subr.bf16.mxu0 0
        %4680 = vmatpush1.bf16.msra.mxu0 0
        %4681 = vmatprep.mubr.bf16.mxu0 0
        %4682 = vmatmul.mubr.bf16.gmra.mrb[0].mxu0 %v3884
        %v4683 = vpop.f32.mrb[0].mxu0
        %v4684 = vadd.f32 0.0, %v4683
        %v4685 = vpop.f32.mrb[0].mxu0
        %v4686 = vpop.f32.mrb[0].mxu0
        %v4687 = vadd.f32 0.0, %v4686
        %v4688 = vpop.f32.mrb[0].mxu0
        %4689 = vmatprep.mubr.bf16.mxu0 0
        %4690 = vmatmul.mubr.bf16.gmra.mrb[0].mxu0 %v3885
        %v4691 = vpop.f32.mrb[0].mxu0
        %v4692 = vadd.f32 0.0, %v4691
        %v4693 = vpop.f32.mrb[0].mxu0
        %v4694 = vpop.f32.mrb[0].mxu0
        %v4695 = vadd.f32 0.0, %v4694
        %v4696 = vpop.f32.mrb[0].mxu0
        %4697 = vmatprep.mubr.bf16.mxu0 0
        %4698 = vmatmul.mubr.bf16.gmra.mrb[0].mxu0 %v3886
        %v4699 = vpop.f32.mrb[0].mxu0
        %v4700 = vadd.f32 0.0, %v4699
        %v4701 = vpop.f32.mrb[0].mxu0
        %v4702 = vpop.f32.mrb[0].mxu0
        %v4703 = vadd.f32 0.0, %v4702
        %v4704 = vpop.f32.mrb[0].mxu0
        %4705 = vmatprep.mubr.bf16.mxu0 0
        %4706 = vmatmul.mubr.bf16.gmra.mrb[0].mxu0 %v3887
        %v4707 = vpop.f32.mrb[0].mxu0
        %v4708 = vadd.f32 0.0, %v4707
        %v4709 = vpop.f32.mrb[0].mxu0
        %v4710 = vpop.f32.mrb[0].mxu0
        %v4711 = vpop.f32.mrb[0].mxu0
        %4712 = vdwg.mxu0
        %v4713 = vadd.f32 %v4642, %v4684
        %v4714 = vadd.f32 %v4643, %v4687
        %v4715 = vadd.f32 %v4644, %v4692
        %v4716 = vadd.f32 %v4645, %v4695
        %v4717 = vadd.f32 %v4646, %v4700
        %v4718 = vadd.f32 %v4647, %v4703
        %v4719 = vadd.f32 %v4648, %v4708
        %v4720 = vadd.f32 %v4713, %v4434
        %v4721 = vadd.f32 %v4714, %v4434
        %v4722 = vadd.f32 %v4715, %v4434
        %v4723 = vadd.f32 %v4716, %v4434
        %v4724 = vadd.f32 %v4717, %v4434
        %v4725 = vadd.f32 %v4718, %v4434
        %v4726 = vadd.f32 %v4719, %v4434
        %v4727 = vmax.f32 %v4720, 0.0
        %v4728 = vmax.f32 %v4721, 0.0
        %v4729 = vmax.f32 %v4722, 0.0
        %v4730 = vmax.f32 %v4723, 0.0
        %v4731 = vmax.f32 %v4724, 0.0
        %v4732 = vmax.f32 %v4725, 0.0
        %v4733 = vmax.f32 %v4726, 0.0
        %4734 = vmatprep.subr.bf16.mxu0 0
        %4735 = vmatpush1.bf16.msra.mxu0 %v4000
        %4736 = vmatprep.subr.bf16.mxu0 0
        %4737 = vmatpush1.bf16.msra.mxu0 %v4001
        %4738 = vmatprep.subr.bf16.mxu0 0
        %4739 = vmatpush1.bf16.msra.mxu0 %v4002
        %4740 = vmatprep.subr.bf16.mxu0 0
        %4741 = vmatpush1.bf16.msra.mxu0 %v4003
        %4742 = vmatprep.subr.bf16.mxu0 0
        %4743 = vmatpush1.bf16.msra.mxu0 %v4004
        %4744 = vmatprep.subr.bf16.mxu0 0
        %4745 = vmatpush1.bf16.msra.mxu0 %v4005
        %4746 = vmatprep.subr.bf16.mxu0 0
        %4747 = vmatpush1.bf16.msra.mxu0 %v4006
        %4748 = vmatprep.subr.bf16.mxu0 0
        %4749 = vmatpush1.bf16.msra.mxu0 %v4007
        %4750 = vmatprep.subr.bf16.mxu0 0
        %4751 = vmatpush1.bf16.msra.mxu0 0
        %4752 = vmatprep.subr.bf16.mxu0 0
        %4753 = vmatpush1.bf16.msra.mxu0 0
        %4754 = vmatprep.subr.bf16.mxu0 0
        %4755 = vmatpush1.bf16.msra.mxu0 0
        %4756 = vmatprep.subr.bf16.mxu0 0
        %4757 = vmatpush1.bf16.msra.mxu0 0
        %4758 = vmatprep.subr.bf16.mxu0 0
        %4759 = vmatpush1.bf16.msra.mxu0 0
        %4760 = vmatprep.subr.bf16.mxu0 0
        %4761 = vmatpush1.bf16.msra.mxu0 0
        %4762 = vmatprep.subr.bf16.mxu0 0
        %4763 = vmatpush1.bf16.msra.mxu0 0
        %4764 = vmatprep.subr.bf16.mxu0 0
        %4765 = vmatpush1.bf16.msra.mxu0 0
        %4766 = vmatprep.mubr.bf16.mxu0 0
        %4767 = vmatmul.mubr.bf16.gmra.mrb[0].mxu0 %v3878
        %v4768 = vpop.f32.mrb[0].mxu0
        %v4769 = vadd.f32 0.0, %v4768
        %v4770 = vpop.f32.mrb[0].mxu0
        %v4771 = vpop.f32.mrb[0].mxu0
        %v4772 = vadd.f32 0.0, %v4771
        %v4773 = vpop.f32.mrb[0].mxu0
        %4774 = vmatprep.mubr.bf16.mxu0 0
        %4775 = vmatmul.mubr.bf16.gmra.mrb[0].mxu0 %v3879
        %v4776 = vpop.f32.mrb[0].mxu0
        %v4777 = vadd.f32 0.0, %v4776
        %v4778 = vpop.f32.mrb[0].mxu0
        %v4779 = vpop.f32.mrb[0].mxu0
        %v4780 = vadd.f32 0.0, %v4779
        %v4781 = vpop.f32.mrb[0].mxu0
        %4782 = vmatprep.mubr.bf16.mxu0 0
        %4783 = vmatmul.mubr.bf16.gmra.mrb[0].mxu0 %v3880
        %v4784 = vpop.f32.mrb[0].mxu0
        %v4785 = vadd.f32 0.0, %v4784
        %v4786 = vpop.f32.mrb[0].mxu0
        %v4787 = vpop.f32.mrb[0].mxu0
        %v4788 = vadd.f32 0.0, %v4787
        %v4789 = vpop.f32.mrb[0].mxu0
        %4790 = vmatprep.mubr.bf16.mxu0 0
        %4791 = vmatmul.mubr.bf16.gmra.mrb[0].mxu0 %v3881
        %v4792 = vpop.f32.mrb[0].mxu0
        %v4793 = vadd.f32 0.0, %v4792
        %v4794 = vpop.f32.mrb[0].mxu0
        %v4795 = vpop.f32.mrb[0].mxu0
        %v4796 = vpop.f32.mrb[0].mxu0
        %4797 = vdwg.mxu0
        %4798 = vmatprep.subr.bf16.mxu0 0
        %4799 = vmatpush1.bf16.msra.mxu0 %v4112
        %4800 = vmatprep.subr.bf16.mxu0 0
        %4801 = vmatpush1.bf16.msra.mxu0 %v4113
        %4802 = vmatprep.subr.bf16.mxu0 0
        %4803 = vmatpush1.bf16.msra.mxu0 %v4114
        %4804 = vmatprep.subr.bf16.mxu0 0
        %4805 = vmatpush1.bf16.msra.mxu0 %v4115
        %4806 = vmatprep.subr.bf16.mxu0 0
        %4807 = vmatpush1.bf16.msra.mxu0 %v4116
        %4808 = vmatprep.subr.bf16.mxu0 0
        %4809 = vmatpush1.bf16.msra.mxu0 %v4117
        %4810 = vmatprep.subr.bf16.mxu0 0
        %4811 = vmatpush1.bf16.msra.mxu0 %v4118
        %4812 = vmatprep.subr.bf16.mxu0 0
        %4813 = vmatpush1.bf16.msra.mxu0 %v4119
        %4814 = vmatprep.subr.bf16.mxu0 0
        %4815 = vmatpush1.bf16.msra.mxu0 0
        %4816 = vmatprep.subr.bf16.mxu0 0
        %4817 = vmatpush1.bf16.msra.mxu0 0
        %4818 = vmatprep.subr.bf16.mxu0 0
        %4819 = vmatpush1.bf16.msra.mxu0 0
        %4820 = vmatprep.subr.bf16.mxu0 0
        %4821 = vmatpush1.bf16.msra.mxu0 0
        %4822 = vmatprep.subr.bf16.mxu0 0
        %4823 = vmatpush1.bf16.msra.mxu0 0
        %4824 = vmatprep.subr.bf16.mxu0 0
        %4825 = vmatpush1.bf16.msra.mxu0 0
        %4826 = vmatprep.subr.bf16.mxu0 0
        %4827 = vmatpush1.bf16.msra.mxu0 0
        %4828 = vmatprep.subr.bf16.mxu0 0
        %4829 = vmatpush1.bf16.msra.mxu0 0
        %4830 = vmatprep.mubr.bf16.mxu0 0
        %4831 = vmatmul.mubr.bf16.gmra.mrb[0].mxu0 %v3872
        %v4832 = vpop.f32.mrb[0].mxu0
        %v4833 = vadd.f32 %v4769, %v4832
        %v4834 = vpop.f32.mrb[0].mxu0
        %v4835 = vpop.f32.mrb[0].mxu0
        %v4836 = vadd.f32 %v4772, %v4835
        %v4837 = vpop.f32.mrb[0].mxu0
        %4838 = vmatprep.mubr.bf16.mxu0 0
        %4839 = vmatmul.mubr.bf16.gmra.mrb[0].mxu0 %v3873
        %v4840 = vpop.f32.mrb[0].mxu0
        %v4841 = vadd.f32 %v4777, %v4840
        %v4842 = vpop.f32.mrb[0].mxu0
        %v4843 = vpop.f32.mrb[0].mxu0
        %v4844 = vadd.f32 %v4780, %v4843
        %v4845 = vpop.f32.mrb[0].mxu0
        %4846 = vmatprep.mubr.bf16.mxu0 0
        %4847 = vmatmul.mubr.bf16.gmra.mrb[0].mxu0 %v3874
        %v4848 = vpop.f32.mrb[0].mxu0
        %v4849 = vadd.f32 %v4785, %v4848
        %v4850 = vpop.f32.mrb[0].mxu0
        %v4851 = vpop.f32.mrb[0].mxu0
        %v4852 = vadd.f32 %v4788, %v4851
        %v4853 = vpop.f32.mrb[0].mxu0
        %4854 = vmatprep.mubr.bf16.mxu0 0
        %4855 = vmatmul.mubr.bf16.gmra.mrb[0].mxu0 %v3875
        %v4856 = vpop.f32.mrb[0].mxu0
        %v4857 = vadd.f32 %v4793, %v4856
        %v4858 = vpop.f32.mrb[0].mxu0
        %v4859 = vpop.f32.mrb[0].mxu0
        %v4860 = vpop.f32.mrb[0].mxu0
        %4861 = vdwg.mxu0
        %4862 = vmatprep.subr.bf16.mxu0 0
        %4863 = vmatpush1.bf16.msra.mxu0 %v4224
        %4864 = vmatprep.subr.bf16.mxu0 0
        %4865 = vmatpush1.bf16.msra.mxu0 %v4225
        %4866 = vmatprep.subr.bf16.mxu0 0
        %4867 = vmatpush1.bf16.msra.mxu0 %v4226
        %4868 = vmatprep.subr.bf16.mxu0 0
        %4869 = vmatpush1.bf16.msra.mxu0 %v4227
        %4870 = vmatprep.subr.bf16.mxu0 0
        %4871 = vmatpush1.bf16.msra.mxu0 %v4228
        %4872 = vmatprep.subr.bf16.mxu0 0
        %4873 = vmatpush1.bf16.msra.mxu0 %v4229
        %4874 = vmatprep.subr.bf16.mxu0 0
        %4875 = vmatpush1.bf16.msra.mxu0 %v4230
        %4876 = vmatprep.subr.bf16.mxu0 0
        %4877 = vmatpush1.bf16.msra.mxu0 %v4231
        %4878 = vmatprep.subr.bf16.mxu0 0
        %4879 = vmatpush1.bf16.msra.mxu0 0
        %4880 = vmatprep.subr.bf16.mxu0 0
        %4881 = vmatpush1.bf16.msra.mxu0 0
        %4882 = vmatprep.subr.bf16.mxu0 0
        %4883 = vmatpush1.bf16.msra.mxu0 0
        %4884 = vmatprep.subr.bf16.mxu0 0
        %4885 = vmatpush1.bf16.msra.mxu0 0
        %4886 = vmatprep.subr.bf16.mxu0 0
        %4887 = vmatpush1.bf16.msra.mxu0 0
        %4888 = vmatprep.subr.bf16.mxu0 0
        %4889 = vmatpush1.bf16.msra.mxu0 0
        %4890 = vmatprep.subr.bf16.mxu0 0
        %4891 = vmatpush1.bf16.msra.mxu0 0
        %4892 = vmatprep.subr.bf16.mxu0 0
        %4893 = vmatpush1.bf16.msra.mxu0 0
        %4894 = vmatprep.mubr.bf16.mxu0 0
        %4895 = vmatmul.mubr.bf16.gmra.mrb[0].mxu0 %v3831
        %v4896 = vpop.f32.mrb[0].mxu0
        %v4897 = vadd.f32 0.0, %v4896
        %v4898 = vpop.f32.mrb[0].mxu0
        %v4899 = vpop.f32.mrb[0].mxu0
        %v4900 = vadd.f32 0.0, %v4899
        %v4901 = vpop.f32.mrb[0].mxu0
        %4902 = vmatprep.mubr.bf16.mxu0 0
        %4903 = vmatmul.mubr.bf16.gmra.mrb[0].mxu0 %v3832
        %v4904 = vpop.f32.mrb[0].mxu0
        %v4905 = vadd.f32 0.0, %v4904
        %v4906 = vpop.f32.mrb[0].mxu0
        %v4907 = vpop.f32.mrb[0].mxu0
        %v4908 = vadd.f32 0.0, %v4907
        %v4909 = vpop.f32.mrb[0].mxu0
        %4910 = vmatprep.mubr.bf16.mxu0 0
        %4911 = vmatmul.mubr.bf16.gmra.mrb[0].mxu0 %v3890
        %v4912 = vpop.f32.mrb[0].mxu0
        %v4913 = vadd.f32 0.0, %v4912
        %v4914 = vpop.f32.mrb[0].mxu0
        %v4915 = vpop.f32.mrb[0].mxu0
        %v4916 = vadd.f32 0.0, %v4915
        %v4917 = vpop.f32.mrb[0].mxu0
        %4918 = vmatprep.mubr.bf16.mxu0 0
        %4919 = vmatmul.mubr.bf16.gmra.mrb[0].mxu0 %v3891
        %v4920 = vpop.f32.mrb[0].mxu0
        %v4921 = vadd.f32 0.0, %v4920
        %v4922 = vpop.f32.mrb[0].mxu0
        %v4923 = vpop.f32.mrb[0].mxu0
        %v4924 = vpop.f32.mrb[0].mxu0
        %4925 = vdwg.mxu0
        %v4926 = vadd.f32 %v4833, %v4897
        %v4927 = vadd.f32 %v4836, %v4900
        %v4928 = vadd.f32 %v4841, %v4905
        %v4929 = vadd.f32 %v4844, %v4908
        %v4930 = vadd.f32 %v4849, %v4913
        %v4931 = vadd.f32 %v4852, %v4916
        %v4932 = vadd.f32 %v4857, %v4921
        %4933 = vmatprep.subr.bf16.mxu0 0
        %4934 = vmatpush1.bf16.msra.mxu0 %v4343
        %4935 = vmatprep.subr.bf16.mxu0 0
        %4936 = vmatpush1.bf16.msra.mxu0 %v4344
        %4937 = vmatprep.subr.bf16.mxu0 0
        %4938 = vmatpush1.bf16.msra.mxu0 %v4345
        %4939 = vmatprep.subr.bf16.mxu0 0
        %4940 = vmatpush1.bf16.msra.mxu0 %v4346
        %4941 = vmatprep.subr.bf16.mxu0 0
        %4942 = vmatpush1.bf16.msra.mxu0 %v4347
        %4943 = vmatprep.subr.bf16.mxu0 0
        %4944 = vmatpush1.bf16.msra.mxu0 %v4348
        %4945 = vmatprep.subr.bf16.mxu0 0
        %4946 = vmatpush1.bf16.msra.mxu0 %v4349
        %4947 = vmatprep.subr.bf16.mxu0 0
        %4948 = vmatpush1.bf16.msra.mxu0 %v4350
        %4949 = vmatprep.subr.bf16.mxu0 0
        %4950 = vmatpush1.bf16.msra.mxu0 0
        %4951 = vmatprep.subr.bf16.mxu0 0
        %4952 = vmatpush1.bf16.msra.mxu0 0
        %4953 = vmatprep.subr.bf16.mxu0 0
        %4954 = vmatpush1.bf16.msra.mxu0 0
        %4955 = vmatprep.subr.bf16.mxu0 0
        %4956 = vmatpush1.bf16.msra.mxu0 0
        %4957 = vmatprep.subr.bf16.mxu0 0
        %4958 = vmatpush1.bf16.msra.mxu0 0
        %4959 = vmatprep.subr.bf16.mxu0 0
        %4960 = vmatpush1.bf16.msra.mxu0 0
        %4961 = vmatprep.subr.bf16.mxu0 0
        %4962 = vmatpush1.bf16.msra.mxu0 0
        %4963 = vmatprep.subr.bf16.mxu0 0
        %4964 = vmatpush1.bf16.msra.mxu0 0
        %4965 = vmatprep.mubr.bf16.mxu0 0
        %4966 = vmatmul.mubr.bf16.gmra.mrb[0].mxu0 %v3849
        %v4967 = vpop.f32.mrb[0].mxu0
        %v4968 = vadd.f32 0.0, %v4967
        %v4969 = vpop.f32.mrb[0].mxu0
        %v4970 = vpop.f32.mrb[0].mxu0
        %v4971 = vadd.f32 0.0, %v4970
        %v4972 = vpop.f32.mrb[0].mxu0
        %4973 = vmatprep.mubr.bf16.mxu0 0
        %4974 = vmatmul.mubr.bf16.gmra.mrb[0].mxu0 %v3850
        %v4975 = vpop.f32.mrb[0].mxu0
        %v4976 = vadd.f32 0.0, %v4975
        %v4977 = vpop.f32.mrb[0].mxu0
        %v4978 = vpop.f32.mrb[0].mxu0
        %v4979 = vadd.f32 0.0, %v4978
        %v4980 = vpop.f32.mrb[0].mxu0
        %4981 = vmatprep.mubr.bf16.mxu0 0
        %4982 = vmatmul.mubr.bf16.gmra.mrb[0].mxu0 %v3894
        %v4983 = vpop.f32.mrb[0].mxu0
        %v4984 = vadd.f32 0.0, %v4983
        %v4985 = vpop.f32.mrb[0].mxu0
        %v4986 = vpop.f32.mrb[0].mxu0
        %v4987 = vadd.f32 0.0, %v4986
        %v4988 = vpop.f32.mrb[0].mxu0
        %4989 = vmatprep.mubr.bf16.mxu0 0
        %4990 = vmatmul.mubr.bf16.gmra.mrb[0].mxu0 %v3895
        %v4991 = vpop.f32.mrb[0].mxu0
        %v4992 = vadd.f32 0.0, %v4991
        %v4993 = vpop.f32.mrb[0].mxu0
        %v4994 = vpop.f32.mrb[0].mxu0
        %v4995 = vpop.f32.mrb[0].mxu0
        %4996 = vdwg.mxu0
        %v4997 = vadd.f32 %v4926, %v4968
        %v4998 = vadd.f32 %v4927, %v4971
        %v4999 = vadd.f32 %v4928, %v4976
        %v5000 = vadd.f32 %v4929, %v4979
        %v5001 = vadd.f32 %v4930, %v4984
        %v5002 = vadd.f32 %v4931, %v4987
        %v5003 = vadd.f32 %v4932, %v4992
        %v5004 = vadd.f32 %v4997, %v4434
        %v5005 = vadd.f32 %v4998, %v4434
        %v5006 = vadd.f32 %v4999, %v4434
        %v5007 = vadd.f32 %v5000, %v4434
        %v5008 = vadd.f32 %v5001, %v4434
        %v5009 = vadd.f32 %v5002, %v4434
        %v5010 = vadd.f32 %v5003, %v4434
        %v5011 = vmax.f32 %v5004, 0.0
        %v5012 = vmax.f32 %v5005, 0.0
        %v5013 = vmax.f32 %v5006, 0.0
        %v5014 = vmax.f32 %v5007, 0.0
        %v5015 = vmax.f32 %v5008, 0.0
        %v5016 = vmax.f32 %v5009, 0.0
        %v5017 = vmax.f32 %v5010, 0.0
        %5018 = vmatprep.subr.bf16.mxu0 0
        %5019 = vmatpush1.bf16.msra.mxu0 %v4000
        %5020 = vmatprep.subr.bf16.mxu0 0
        %5021 = vmatpush1.bf16.msra.mxu0 %v4001
        %5022 = vmatprep.subr.bf16.mxu0 0
        %5023 = vmatpush1.bf16.msra.mxu0 %v4002
        %5024 = vmatprep.subr.bf16.mxu0 0
        %5025 = vmatpush1.bf16.msra.mxu0 %v4003
        %5026 = vmatprep.subr.bf16.mxu0 0
        %5027 = vmatpush1.bf16.msra.mxu0 %v4004
        %5028 = vmatprep.subr.bf16.mxu0 0
        %5029 = vmatpush1.bf16.msra.mxu0 %v4005
        %5030 = vmatprep.subr.bf16.mxu0 0
        %5031 = vmatpush1.bf16.msra.mxu0 %v4006
        %5032 = vmatprep.subr.bf16.mxu0 0
        %5033 = vmatpush1.bf16.msra.mxu0 %v4007
        %5034 = vmatprep.subr.bf16.mxu0 0
        %5035 = vmatpush1.bf16.msra.mxu0 0
        %5036 = vmatprep.subr.bf16.mxu0 0
        %5037 = vmatpush1.bf16.msra.mxu0 0
        %5038 = vmatprep.subr.bf16.mxu0 0
        %5039 = vmatpush1.bf16.msra.mxu0 0
        %5040 = vmatprep.subr.bf16.mxu0 0
        %5041 = vmatpush1.bf16.msra.mxu0 0
        %5042 = vmatprep.subr.bf16.mxu0 0
        %5043 = vmatpush1.bf16.msra.mxu0 0
        %5044 = vmatprep.subr.bf16.mxu0 0
        %5045 = vmatpush1.bf16.msra.mxu0 0
        %5046 = vmatprep.subr.bf16.mxu0 0
        %5047 = vmatpush1.bf16.msra.mxu0 0
        %5048 = vmatprep.subr.bf16.mxu0 0
        %5049 = vmatpush1.bf16.msra.mxu0 0
        %5050 = vmatprep.mubr.bf16.mxu0 0
        %5051 = vmatmul.mubr.bf16.gmra.mrb[0].mxu0 %v3884
        %v5052 = vpop.f32.mrb[0].mxu0
        %v5053 = vadd.f32 0.0, %v5052
        %v5054 = vpop.f32.mrb[0].mxu0
        %v5055 = vpop.f32.mrb[0].mxu0
        %v5056 = vadd.f32 0.0, %v5055
        %v5057 = vpop.f32.mrb[0].mxu0
        %5058 = vmatprep.mubr.bf16.mxu0 0
        %5059 = vmatmul.mubr.bf16.gmra.mrb[0].mxu0 %v3885
        %v5060 = vpop.f32.mrb[0].mxu0
        %v5061 = vadd.f32 0.0, %v5060
        %v5062 = vpop.f32.mrb[0].mxu0
        %v5063 = vpop.f32.mrb[0].mxu0
        %v5064 = vadd.f32 0.0, %v5063
        %v5065 = vpop.f32.mrb[0].mxu0
        %5066 = vmatprep.mubr.bf16.mxu0 0
        %5067 = vmatmul.mubr.bf16.gmra.mrb[0].mxu0 %v3886
        %v5068 = vpop.f32.mrb[0].mxu0
        %v5069 = vadd.f32 0.0, %v5068
        %v5070 = vpop.f32.mrb[0].mxu0
        %v5071 = vpop.f32.mrb[0].mxu0
        %v5072 = vadd.f32 0.0, %v5071
        %v5073 = vpop.f32.mrb[0].mxu0
        %5074 = vmatprep.mubr.bf16.mxu0 0
        %5075 = vmatmul.mubr.bf16.gmra.mrb[0].mxu0 %v3887
        %v5076 = vpop.f32.mrb[0].mxu0
        %v5077 = vadd.f32 0.0, %v5076
        %v5078 = vpop.f32.mrb[0].mxu0
        %v5079 = vpop.f32.mrb[0].mxu0
        %v5080 = vpop.f32.mrb[0].mxu0
        %5081 = vdwg.mxu0
        %5082 = vmatprep.subr.bf16.mxu0 0
        %5083 = vmatpush1.bf16.msra.mxu0 %v4112
        %5084 = vmatprep.subr.bf16.mxu0 0
        %5085 = vmatpush1.bf16.msra.mxu0 %v4113
        %5086 = vmatprep.subr.bf16.mxu0 0
        %5087 = vmatpush1.bf16.msra.mxu0 %v4114
        %5088 = vmatprep.subr.bf16.mxu0 0
        %5089 = vmatpush1.bf16.msra.mxu0 %v4115
        %5090 = vmatprep.subr.bf16.mxu0 0
        %5091 = vmatpush1.bf16.msra.mxu0 %v4116
        %5092 = vmatprep.subr.bf16.mxu0 0
        %5093 = vmatpush1.bf16.msra.mxu0 %v4117
        %5094 = vmatprep.subr.bf16.mxu0 0
        %5095 = vmatpush1.bf16.msra.mxu0 %v4118
        %5096 = vmatprep.subr.bf16.mxu0 0
        %5097 = vmatpush1.bf16.msra.mxu0 %v4119
        %5098 = vmatprep.subr.bf16.mxu0 0
        %5099 = vmatpush1.bf16.msra.mxu0 0
        %5100 = vmatprep.subr.bf16.mxu0 0
        %5101 = vmatpush1.bf16.msra.mxu0 0
        %5102 = vmatprep.subr.bf16.mxu0 0
        %5103 = vmatpush1.bf16.msra.mxu0 0
        %5104 = vmatprep.subr.bf16.mxu0 0
        %5105 = vmatpush1.bf16.msra.mxu0 0
        %5106 = vmatprep.subr.bf16.mxu0 0
        %5107 = vmatpush1.bf16.msra.mxu0 0
        %5108 = vmatprep.subr.bf16.mxu0 0
        %5109 = vmatpush1.bf16.msra.mxu0 0
        %5110 = vmatprep.subr.bf16.mxu0 0
        %5111 = vmatpush1.bf16.msra.mxu0 0
        %5112 = vmatprep.subr.bf16.mxu0 0
        %5113 = vmatpush1.bf16.msra.mxu0 0
        %5114 = vmatprep.mubr.bf16.mxu0 0
        %5115 = vmatmul.mubr.bf16.gmra.mrb[0].mxu0 %v3878
        %v5116 = vpop.f32.mrb[0].mxu0
        %v5117 = vadd.f32 %v5053, %v5116
        %v5118 = vpop.f32.mrb[0].mxu0
        %v5119 = vpop.f32.mrb[0].mxu0
        %v5120 = vadd.f32 %v5056, %v5119
        %v5121 = vpop.f32.mrb[0].mxu0
        %5122 = vmatprep.mubr.bf16.mxu0 0
        %5123 = vmatmul.mubr.bf16.gmra.mrb[0].mxu0 %v3879
        %v5124 = vpop.f32.mrb[0].mxu0
        %v5125 = vadd.f32 %v5061, %v5124
        %v5126 = vpop.f32.mrb[0].mxu0
        %v5127 = vpop.f32.mrb[0].mxu0
        %v5128 = vadd.f32 %v5064, %v5127
        %v5129 = vpop.f32.mrb[0].mxu0
        %5130 = vmatprep.mubr.bf16.mxu0 0
        %5131 = vmatmul.mubr.bf16.gmra.mrb[0].mxu0 %v3880
        %v5132 = vpop.f32.mrb[0].mxu0
        %v5133 = vadd.f32 %v5069, %v5132
        %v5134 = vpop.f32.mrb[0].mxu0
        %v5135 = vpop.f32.mrb[0].mxu0
        %v5136 = vadd.f32 %v5072, %v5135
        %v5137 = vpop.f32.mrb[0].mxu0
        %5138 = vmatprep.mubr.bf16.mxu0 0
        %5139 = vmatmul.mubr.bf16.gmra.mrb[0].mxu0 %v3881
        %v5140 = vpop.f32.mrb[0].mxu0
        %v5141 = vadd.f32 %v5077, %v5140
        %v5142 = vpop.f32.mrb[0].mxu0
        %v5143 = vpop.f32.mrb[0].mxu0
        %v5144 = vpop.f32.mrb[0].mxu0
        %5145 = vdwg.mxu0
        %5146 = vmatprep.subr.bf16.mxu0 0
        %5147 = vmatpush1.bf16.msra.mxu0 %v4224
        %5148 = vmatprep.subr.bf16.mxu0 0
        %5149 = vmatpush1.bf16.msra.mxu0 %v4225
        %5150 = vmatprep.subr.bf16.mxu0 0
        %5151 = vmatpush1.bf16.msra.mxu0 %v4226
        %5152 = vmatprep.subr.bf16.mxu0 0
        %5153 = vmatpush1.bf16.msra.mxu0 %v4227
        %5154 = vmatprep.subr.bf16.mxu0 0
        %5155 = vmatpush1.bf16.msra.mxu0 %v4228
        %5156 = vmatprep.subr.bf16.mxu0 0
        %5157 = vmatpush1.bf16.msra.mxu0 %v4229
        %5158 = vmatprep.subr.bf16.mxu0 0
        %5159 = vmatpush1.bf16.msra.mxu0 %v4230
        %5160 = vmatprep.subr.bf16.mxu0 0
        %5161 = vmatpush1.bf16.msra.mxu0 %v4231
        %5162 = vmatprep.subr.bf16.mxu0 0
        %5163 = vmatpush1.bf16.msra.mxu0 0
        %5164 = vmatprep.subr.bf16.mxu0 0
        %5165 = vmatpush1.bf16.msra.mxu0 0
        %5166 = vmatprep.subr.bf16.mxu0 0
        %5167 = vmatpush1.bf16.msra.mxu0 0
        %5168 = vmatprep.subr.bf16.mxu0 0
        %5169 = vmatpush1.bf16.msra.mxu0 0
        %5170 = vmatprep.subr.bf16.mxu0 0
        %5171 = vmatpush1.bf16.msra.mxu0 0
        %5172 = vmatprep.subr.bf16.mxu0 0
        %5173 = vmatpush1.bf16.msra.mxu0 0
        %5174 = vmatprep.subr.bf16.mxu0 0
        %5175 = vmatpush1.bf16.msra.mxu0 0
        %5176 = vmatprep.subr.bf16.mxu0 0
        %5177 = vmatpush1.bf16.msra.mxu0 0
        %5178 = vmatprep.mubr.bf16.mxu0 0
        %5179 = vmatmul.mubr.bf16.gmra.mrb[0].mxu0 %v3849
        %v5180 = vpop.f32.mrb[0].mxu0
        %v5181 = vadd.f32 0.0, %v5180
        %v5182 = vpop.f32.mrb[0].mxu0
        %v5183 = vpop.f32.mrb[0].mxu0
        %v5184 = vadd.f32 0.0, %v5183
        %v5185 = vpop.f32.mrb[0].mxu0
        %5186 = vmatprep.mubr.bf16.mxu0 0
        %5187 = vmatmul.mubr.bf16.gmra.mrb[0].mxu0 %v3850
        %v5188 = vpop.f32.mrb[0].mxu0
        %v5189 = vadd.f32 0.0, %v5188
        %v5190 = vpop.f32.mrb[0].mxu0
        %v5191 = vpop.f32.mrb[0].mxu0
        %v5192 = vadd.f32 0.0, %v5191
        %v5193 = vpop.f32.mrb[0].mxu0
        %5194 = vmatprep.mubr.bf16.mxu0 0
        %5195 = vmatmul.mubr.bf16.gmra.mrb[0].mxu0 %v3894
        %v5196 = vpop.f32.mrb[0].mxu0
        %v5197 = vadd.f32 0.0, %v5196
        %v5198 = vpop.f32.mrb[0].mxu0
        %v5199 = vpop.f32.mrb[0].mxu0
        %v5200 = vadd.f32 0.0, %v5199
        %v5201 = vpop.f32.mrb[0].mxu0
        %5202 = vmatprep.mubr.bf16.mxu0 0
        %5203 = vmatmul.mubr.bf16.gmra.mrb[0].mxu0 %v3895
        %v5204 = vpop.f32.mrb[0].mxu0
        %v5205 = vadd.f32 0.0, %v5204
        %v5206 = vpop.f32.mrb[0].mxu0
        %v5207 = vpop.f32.mrb[0].mxu0
        %v5208 = vpop.f32.mrb[0].mxu0
        %5209 = vdwg.mxu0
        %v5210 = vadd.f32 %v5117, %v5181
        %v5211 = vadd.f32 %v5120, %v5184
        %v5212 = vadd.f32 %v5125, %v5189
        %v5213 = vadd.f32 %v5128, %v5192
        %v5214 = vadd.f32 %v5133, %v5197
        %v5215 = vadd.f32 %v5136, %v5200
        %v5216 = vadd.f32 %v5141, %v5205
        %5217 = vmatprep.subr.bf16.mxu0 0
        %5218 = vmatpush1.bf16.msra.mxu0 %v4343
        %5219 = vmatprep.subr.bf16.mxu0 0
        %5220 = vmatpush1.bf16.msra.mxu0 %v4344
        %5221 = vmatprep.subr.bf16.mxu0 0
        %5222 = vmatpush1.bf16.msra.mxu0 %v4345
        %5223 = vmatprep.subr.bf16.mxu0 0
        %5224 = vmatpush1.bf16.msra.mxu0 %v4346
        %5225 = vmatprep.subr.bf16.mxu0 0
        %5226 = vmatpush1.bf16.msra.mxu0 %v4347
        %5227 = vmatprep.subr.bf16.mxu0 0
        %5228 = vmatpush1.bf16.msra.mxu0 %v4348
        %5229 = vmatprep.subr.bf16.mxu0 0
        %5230 = vmatpush1.bf16.msra.mxu0 %v4349
        %5231 = vmatprep.subr.bf16.mxu0 0
        %5232 = vmatpush1.bf16.msra.mxu0 %v4350
        %5233 = vmatprep.subr.bf16.mxu0 0
        %5234 = vmatpush1.bf16.msra.mxu0 0
        %5235 = vmatprep.subr.bf16.mxu0 0
        %5236 = vmatpush1.bf16.msra.mxu0 0
        %5237 = vmatprep.subr.bf16.mxu0 0
        %5238 = vmatpush1.bf16.msra.mxu0 0
        %5239 = vmatprep.subr.bf16.mxu0 0
        %5240 = vmatpush1.bf16.msra.mxu0 0
        %5241 = vmatprep.subr.bf16.mxu0 0
        %5242 = vmatpush1.bf16.msra.mxu0 0
        %5243 = vmatprep.subr.bf16.mxu0 0
        %5244 = vmatpush1.bf16.msra.mxu0 0
        %5245 = vmatprep.subr.bf16.mxu0 0
        %5246 = vmatpush1.bf16.msra.mxu0 0
        %5247 = vmatprep.subr.bf16.mxu0 0
        %5248 = vmatpush1.bf16.msra.mxu0 0
        %5249 = vmatprep.mubr.bf16.mxu0 0
        %5250 = vmatmul.mubr.bf16.gmra.mrb[0].mxu0 %v3867
        %v5251 = vpop.f32.mrb[0].mxu0
        %v5252 = vadd.f32 0.0, %v5251
        %v5253 = vpop.f32.mrb[0].mxu0
        %v5254 = vpop.f32.mrb[0].mxu0
        %v5255 = vadd.f32 0.0, %v5254
        %v5256 = vpop.f32.mrb[0].mxu0
        %5257 = vmatprep.mubr.bf16.mxu0 0
        %5258 = vmatmul.mubr.bf16.gmra.mrb[0].mxu0 %v3868
        %v5259 = vpop.f32.mrb[0].mxu0
        %v5260 = vadd.f32 0.0, %v5259
        %v5261 = vpop.f32.mrb[0].mxu0
        %v5262 = vpop.f32.mrb[0].mxu0
        %v5263 = vadd.f32 0.0, %v5262
        %v5264 = vpop.f32.mrb[0].mxu0
        %5265 = vmatprep.mubr.bf16.mxu0 0
        %5266 = vmatmul.mubr.bf16.gmra.mrb[0].mxu0 %v3898
        %v5267 = vpop.f32.mrb[0].mxu0
        %v5268 = vadd.f32 0.0, %v5267
        %v5269 = vpop.f32.mrb[0].mxu0
        %v5270 = vpop.f32.mrb[0].mxu0
        %v5271 = vadd.f32 0.0, %v5270
        %v5272 = vpop.f32.mrb[0].mxu0
        %5273 = vmatprep.mubr.bf16.mxu0 0
        %5274 = vmatmul.mubr.bf16.gmra.mrb[0].mxu0 %v3899
        %v5275 = vpop.f32.mrb[0].mxu0
        %v5276 = vadd.f32 0.0, %v5275
        %v5277 = vpop.f32.mrb[0].mxu0
        %v5278 = vpop.f32.mrb[0].mxu0
        %v5279 = vpop.f32.mrb[0].mxu0
        %5280 = vdwg.mxu0
        %v5281 = vadd.f32 %v5210, %v5252
        %v5282 = vadd.f32 %v5211, %v5255
        %v5283 = vadd.f32 %v5212, %v5260
        %v5284 = vadd.f32 %v5213, %v5263
        %v5285 = vadd.f32 %v5214, %v5268
        %v5286 = vadd.f32 %v5215, %v5271
        %v5287 = vadd.f32 %v5216, %v5276
        %v5288 = vadd.f32 %v5281, %v4434
        %v5289 = vadd.f32 %v5282, %v4434
        %v5290 = vadd.f32 %v5283, %v4434
        %v5291 = vadd.f32 %v5284, %v4434
        %v5292 = vadd.f32 %v5285, %v4434
        %v5293 = vadd.f32 %v5286, %v4434
        %v5294 = vadd.f32 %v5287, %v4434
        %v5295 = vmax.f32 %v5288, 0.0
        %v5296 = vmax.f32 %v5289, 0.0
        %v5297 = vmax.f32 %v5290, 0.0
        %v5298 = vmax.f32 %v5291, 0.0
        %v5299 = vmax.f32 %v5292, 0.0
        %v5300 = vmax.f32 %v5293, 0.0
        %v5301 = vmax.f32 %v5294, 0.0
        %v5302 = vmax.f32 %v4443, %v4727
        %v5303 = vmax.f32 %v4444, %v4728
        %v5304 = vmax.f32 %v4445, %v4729
        %v5305 = vmax.f32 %v4446, %v4730
        %v5306 = vmax.f32 %v4447, %v4731
        %v5307 = vmax.f32 %v4448, %v4732
        %v5308 = vmax.f32 %v4449, %v4733
        %v5309 = vmax.f32 %v5011, %v5295
        %v5310 = vmax.f32 %v5012, %v5296
        %v5311 = vmax.f32 %v5013, %v5297
        %v5312 = vmax.f32 %v5014, %v5298
        %v5313 = vmax.f32 %v5015, %v5299
        %v5314 = vmax.f32 %v5016, %v5300
        %v5315 = vmax.f32 %v5017, %v5301
        %v5316 = vmax.f32 %v5302, %v5309
        %v5317 = vmax.f32 %v5303, %v5310
        %v5318 = vmax.f32 %v5304, %v5311
        %v5319 = vmax.f32 %v5305, %v5312
        %v5320 = vmax.f32 %v5306, %v5313
        %v5321 = vmax.f32 %v5307, %v5314
        %v5322 = vmax.f32 %v5308, %v5315
        %5323 = vst [vmem:[#allocation3] sm:$0xff] %v5316
        %5324 = vst [vmem:[#allocation3 + $0x8] sm:$0xff] %v5317
        %5325 = vst [vmem:[#allocation3 + $0x10] sm:$0xff] %v5318
        %5326 = vst [vmem:[#allocation3 + $0x18] sm:$0xff] %v5319
        %5327 = vst [vmem:[#allocation3 + $0x20] sm:$0xff] %v5320
        %5328 = vst [vmem:[#allocation3 + $0x28] sm:$0xff] %v5321
        %5329 = vst [vmem:[#allocation3 + $0x30] sm:$0xff] %v5322
        %v5330 = vld [vmem:[#allocation3] ss:$2 sm:$0xff]
        %s5331 = scalar_lea.vmem [#allocation3], 16
        %v5332 = vld [vmem:[%s5331] ss:$2 sm:$0xf]
        %v5333 = vpack.c.bf16 %v5332, %v5330
        %s5334 = scalar_lea.vmem [#allocation3], 1
        %v5335 = vld [vmem:[%s5334] ss:$2 sm:$0xff]
        %s5336 = scalar_lea.vmem [#allocation3], 17
        %v5337 = vld [vmem:[%s5336] ss:$2 sm:$0xf]
        %v5338 = vpack.c.bf16 %v5337, %v5335
        %s5339 = scalar_lea.vmem [#allocation3], 2
        %v5340 = vld [vmem:[%s5339] ss:$2 sm:$0xff]
        %s5341 = scalar_lea.vmem [#allocation3], 18
        %v5342 = vld [vmem:[%s5341] ss:$2 sm:$0xf]
        %v5343 = vpack.c.bf16 %v5342, %v5340
        %s5344 = scalar_lea.vmem [#allocation3], 8
        %v5345 = vld [vmem:[%s5344] ss:$2 sm:$0xff]
        %s5346 = scalar_lea.vmem [#allocation3], 24
        %v5347 = vld [vmem:[%s5346] ss:$2 sm:$0xf]
        %v5348 = vpack.c.bf16 %v5347, %v5345
        %s5349 = scalar_lea.vmem [#allocation3], 9
        %v5350 = vld [vmem:[%s5349] ss:$2 sm:$0xff]
        %s5351 = scalar_lea.vmem [#allocation3], 25
        %v5352 = vld [vmem:[%s5351] ss:$2 sm:$0xf]
        %v5353 = vpack.c.bf16 %v5352, %v5350
        %s5354 = scalar_lea.vmem [#allocation3], 10
        %v5355 = vld [vmem:[%s5354] ss:$2 sm:$0xff]
        %s5356 = scalar_lea.vmem [#allocation3], 26
        %v5357 = vld [vmem:[%s5356] ss:$2 sm:$0xf]
        %v5358 = vpack.c.bf16 %v5357, %v5355
        %v5359 = vld [vmem:[%s5331] ss:$2 sm:$0xff]
        %s5360 = scalar_lea.vmem [#allocation3], 32
        %v5361 = vld [vmem:[%s5360] ss:$2 sm:$0xf]
        %v5362 = vpack.c.bf16 %v5361, %v5359
        %v5363 = vld [vmem:[%s5336] ss:$2 sm:$0xff]
        %s5364 = scalar_lea.vmem [#allocation3], 33
        %v5365 = vld [vmem:[%s5364] ss:$2 sm:$0xf]
        %v5366 = vpack.c.bf16 %v5365, %v5363
        %v5367 = vld [vmem:[%s5341] ss:$2 sm:$0xff]
        %s5368 = scalar_lea.vmem [#allocation3], 34
        %v5369 = vld [vmem:[%s5368] ss:$2 sm:$0xf]
        %v5370 = vpack.c.bf16 %v5369, %v5367
        %v5371 = vld [vmem:[%s5] sm:$0xf]
        %v5372 = vld [vmem:[%s5 + $0x4] sm:$0xf]
        %v5373 = vld [vmem:[%s5 + $0x8] sm:$0xf]
        %v5374 = vld [vmem:[%s5 + $0xc] sm:$0xf]
        %v5375 = vld [vmem:[%s5 + $0x10] sm:$0xf]
        %v5376 = vld [vmem:[%s5 + $0x14] sm:$0xf]
        %v5377 = vld [vmem:[%s5 + $0x18] sm:$0xf]
        %v5378 = vld [vmem:[%s5 + $0x1c] sm:$0xf]
        %v5379 = vld [vmem:[%s5 + $0x20] sm:$0xf]
        %v5380 = vld [vmem:[%s5 + $0x24] sm:$0xf]
        %v5381 = vld [vmem:[%s5 + $0x28] sm:$0xf]
        %v5382 = vld [vmem:[%s5 + $0x2c] sm:$0xf]
        %v5383 = vld [vmem:[%s5 + $0x30] sm:$0xf]
        %v5384 = vld [vmem:[%s5 + $0x34] sm:$0xf]
        %v5385 = vld [vmem:[%s5 + $0x38] sm:$0xf]
        %v5386 = vld [vmem:[%s5 + $0x3c] sm:$0xf]
        %s5387 = scalar_lea.vmem %s5, 64
        %v5388 = vld [vmem:[%s5387] sm:$0xf]
        %v5389 = vld [vmem:[%s5387 + $0x4] sm:$0xf]
        %v5390 = vld [vmem:[%s5387 + $0x8] sm:$0xf]
        %v5391 = vld [vmem:[%s5387 + $0xc] sm:$0xf]
        %v5392 = vld [vmem:[%s5387 + $0x10] sm:$0xf]
        %v5393 = vld [vmem:[%s5387 + $0x14] sm:$0xf]
        %v5394 = vld [vmem:[%s5387 + $0x18] sm:$0xf]
        %v5395 = vld [vmem:[%s5387 + $0x1c] sm:$0xf]
        %v5396 = vld [vmem:[%s5387 + $0x20] sm:$0xf]
        %v5397 = vld [vmem:[%s5387 + $0x24] sm:$0xf]
        %v5398 = vld [vmem:[%s5387 + $0x28] sm:$0xf]
        %v5399 = vld [vmem:[%s5387 + $0x2c] sm:$0xf]
        %v5400 = vld [vmem:[%s5387 + $0x30] sm:$0xf]
        %v5401 = vld [vmem:[%s5387 + $0x34] sm:$0xf]
        %v5402 = vld [vmem:[%s5387 + $0x38] sm:$0xf]
        %v5403 = vld [vmem:[%s5387 + $0x3c] sm:$0xf]
        %s5404 = scalar_lea.vmem %s5, 128
        %v5405 = vld [vmem:[%s5404] sm:$0xf]
        %v5406 = vld [vmem:[%s5404 + $0x4] sm:$0xf]
        %v5407 = vld [vmem:[%s5404 + $0x8] sm:$0xf]
        %v5408 = vld [vmem:[%s5404 + $0xc] sm:$0xf]
        %v5409 = vld [vmem:[%s5404 + $0x10] sm:$0xf]
        %v5410 = vld [vmem:[%s5404 + $0x14] sm:$0xf]
        %v5411 = vld [vmem:[%s5404 + $0x18] sm:$0xf]
        %v5412 = vld [vmem:[%s5404 + $0x1c] sm:$0xf]
        %v5413 = vld [vmem:[%s5404 + $0x20] sm:$0xf]
        %v5414 = vld [vmem:[%s5404 + $0x24] sm:$0xf]
        %v5415 = vld [vmem:[%s5404 + $0x28] sm:$0xf]
        %v5416 = vld [vmem:[%s5404 + $0x2c] sm:$0xf]
        %v5417 = vld [vmem:[%s5404 + $0x30] sm:$0xf]
        %v5418 = vld [vmem:[%s5404 + $0x34] sm:$0xf]
        %v5419 = vld [vmem:[%s5404 + $0x38] sm:$0xf]
        %v5420 = vld [vmem:[%s5404 + $0x3c] sm:$0xf]
        %s5421 = scalar_lea.vmem %s5, 192
        %v5422 = vld [vmem:[%s5421] sm:$0xf]
        %v5423 = vld [vmem:[%s5421 + $0x4] sm:$0xf]
        %v5424 = vld [vmem:[%s5421 + $0x8] sm:$0xf]
        %v5425 = vld [vmem:[%s5421 + $0xc] sm:$0xf]
        %v5426 = vld [vmem:[%s5421 + $0x10] sm:$0xf]
        %v5427 = vld [vmem:[%s5421 + $0x14] sm:$0xf]
        %v5428 = vld [vmem:[%s5421 + $0x18] sm:$0xf]
        %v5429 = vld [vmem:[%s5421 + $0x1c] sm:$0xf]
        %v5430 = vld [vmem:[%s5421 + $0x20] sm:$0xf]
        %v5431 = vld [vmem:[%s5421 + $0x24] sm:$0xf]
        %v5432 = vld [vmem:[%s5421 + $0x28] sm:$0xf]
        %v5433 = vld [vmem:[%s5421 + $0x2c] sm:$0xf]
        %v5434 = vld [vmem:[%s5421 + $0x30] sm:$0xf]
        %v5435 = vld [vmem:[%s5421 + $0x34] sm:$0xf]
        %v5436 = vld [vmem:[%s5421 + $0x38] sm:$0xf]
        %v5437 = vld [vmem:[%s5421 + $0x3c] sm:$0xf]
        %v5438 = vld [vmem:[%s6] sm:$0x1]
        %v5455 = vunpack.c.l.b16 %v5388
        %v5456 = vunpack.c.l.b16 %v5389
        %v5457 = vunpack.c.l.b16 %v5390
        %v5458 = vunpack.c.l.b16 %v5391
        %v5459 = vunpack.c.l.b16 %v5392
        %v5460 = vunpack.c.l.b16 %v5393
        %v5461 = vunpack.c.l.b16 %v5394
        %v5462 = vunpack.c.l.b16 %v5395
        %v5463 = vunpack.c.l.b16 %v5396
        %v5464 = vunpack.c.l.b16 %v5397
        %v5465 = vunpack.c.l.b16 %v5398
        %v5466 = vunpack.c.l.b16 %v5399
        %v5467 = vunpack.c.l.b16 %v5400
        %v5468 = vunpack.c.l.b16 %v5401
        %v5469 = vunpack.c.l.b16 %v5402
        %v5470 = vunpack.c.l.b16 %v5403
        %v5471 = vpack.c.b16 %v5456, %v5455
        %v5472 = vpack.c.b16 %v5458, %v5457
        %v5473 = vpack.c.b16 %v5460, %v5459
        %v5474 = vpack.c.b16 %v5462, %v5461
        %v5475 = vpack.c.b16 %v5464, %v5463
        %v5476 = vpack.c.b16 %v5466, %v5465
        %v5477 = vpack.c.b16 %v5468, %v5467
        %v5478 = vpack.c.b16 %v5470, %v5469
        %5487 = vmatprep.subr.bf16.mxu0 0
        %5488 = vmatpush1.bf16.msra.mxu0 %v5471
        %5489 = vmatprep.subr.bf16.mxu0 0
        %5490 = vmatpush1.bf16.msra.mxu0 %v5472
        %5491 = vmatprep.subr.bf16.mxu0 0
        %5492 = vmatpush1.bf16.msra.mxu0 %v5473
        %5493 = vmatprep.subr.bf16.mxu0 0
        %5494 = vmatpush1.bf16.msra.mxu0 %v5474
        %5495 = vmatprep.subr.bf16.mxu0 0
        %5496 = vmatpush1.bf16.msra.mxu0 %v5475
        %5497 = vmatprep.subr.bf16.mxu0 0
        %5498 = vmatpush1.bf16.msra.mxu0 %v5476
        %5499 = vmatprep.subr.bf16.mxu0 0
        %5500 = vmatpush1.bf16.msra.mxu0 %v5477
        %5501 = vmatprep.subr.bf16.mxu0 0
        %5502 = vmatpush1.bf16.msra.mxu0 %v5478
        %5503 = vmatprep.subr.bf16.mxu0 0
        %5504 = vmatpush1.bf16.msra.mxu0 0
        %5505 = vmatprep.subr.bf16.mxu0 0
        %5506 = vmatpush1.bf16.msra.mxu0 0
        %5507 = vmatprep.subr.bf16.mxu0 0
        %5508 = vmatpush1.bf16.msra.mxu0 0
        %5509 = vmatprep.subr.bf16.mxu0 0
        %5510 = vmatpush1.bf16.msra.mxu0 0
        %5511 = vmatprep.subr.bf16.mxu0 0
        %5512 = vmatpush1.bf16.msra.mxu0 0
        %5513 = vmatprep.subr.bf16.mxu0 0
        %5514 = vmatpush1.bf16.msra.mxu0 0
        %5515 = vmatprep.subr.bf16.mxu0 0
        %5516 = vmatpush1.bf16.msra.mxu0 0
        %5517 = vmatprep.subr.bf16.mxu0 0
        %5518 = vmatpush1.bf16.msra.mxu0 0
        %5519 = vmatprep.mubr.bf16.mxu0 0
        %5520 = vmatmul.mubr.bf16.gmra.mrb[0].mxu0 %v5338
        %v5521 = vpop.f32.mrb[0].mxu0
        %v5522 = vadd.f32 0.0, %v5521
        %v5523 = vpop.f32.mrb[0].mxu0
        %v5524 = vpop.f32.mrb[0].mxu0
        %v5525 = vadd.f32 0.0, %v5524
        %v5526 = vpop.f32.mrb[0].mxu0
        %5527 = vdwg.mxu0
        %v5544 = vunpack.c.l.b16 %v5371
        %v5545 = vunpack.c.l.b16 %v5372
        %v5546 = vunpack.c.l.b16 %v5373
        %v5547 = vunpack.c.l.b16 %v5374
        %v5548 = vunpack.c.l.b16 %v5375
        %v5549 = vunpack.c.l.b16 %v5376
        %v5550 = vunpack.c.l.b16 %v5377
        %v5551 = vunpack.c.l.b16 %v5378
        %v5552 = vunpack.c.l.b16 %v5379
        %v5553 = vunpack.c.l.b16 %v5380
        %v5554 = vunpack.c.l.b16 %v5381
        %v5555 = vunpack.c.l.b16 %v5382
        %v5556 = vunpack.c.l.b16 %v5383
        %v5557 = vunpack.c.l.b16 %v5384
        %v5558 = vunpack.c.l.b16 %v5385
        %v5559 = vunpack.c.l.b16 %v5386
        %v5560 = vpack.c.b16 %v5545, %v5544
        %v5561 = vpack.c.b16 %v5547, %v5546
        %v5562 = vpack.c.b16 %v5549, %v5548
        %v5563 = vpack.c.b16 %v5551, %v5550
        %v5564 = vpack.c.b16 %v5553, %v5552
        %v5565 = vpack.c.b16 %v5555, %v5554
        %v5566 = vpack.c.b16 %v5557, %v5556
        %v5567 = vpack.c.b16 %v5559, %v5558
        %5576 = vmatprep.subr.bf16.mxu0 0
        %5577 = vmatpush1.bf16.msra.mxu0 %v5560
        %5578 = vmatprep.subr.bf16.mxu0 0
        %5579 = vmatpush1.bf16.msra.mxu0 %v5561
        %5580 = vmatprep.subr.bf16.mxu0 0
        %5581 = vmatpush1.bf16.msra.mxu0 %v5562
        %5582 = vmatprep.subr.bf16.mxu0 0
        %5583 = vmatpush1.bf16.msra.mxu0 %v5563
        %5584 = vmatprep.subr.bf16.mxu0 0
        %5585 = vmatpush1.bf16.msra.mxu0 %v5564
        %5586 = vmatprep.subr.bf16.mxu0 0
        %5587 = vmatpush1.bf16.msra.mxu0 %v5565
        %5588 = vmatprep.subr.bf16.mxu0 0
        %5589 = vmatpush1.bf16.msra.mxu0 %v5566
        %5590 = vmatprep.subr.bf16.mxu0 0
        %5591 = vmatpush1.bf16.msra.mxu0 %v5567
        %5592 = vmatprep.subr.bf16.mxu0 0
        %5593 = vmatpush1.bf16.msra.mxu0 0
        %5594 = vmatprep.subr.bf16.mxu0 0
        %5595 = vmatpush1.bf16.msra.mxu0 0
        %5596 = vmatprep.subr.bf16.mxu0 0
        %5597 = vmatpush1.bf16.msra.mxu0 0
        %5598 = vmatprep.subr.bf16.mxu0 0
        %5599 = vmatpush1.bf16.msra.mxu0 0
        %5600 = vmatprep.subr.bf16.mxu0 0
        %5601 = vmatpush1.bf16.msra.mxu0 0
        %5602 = vmatprep.subr.bf16.mxu0 0
        %5603 = vmatpush1.bf16.msra.mxu0 0
        %5604 = vmatprep.subr.bf16.mxu0 0
        %5605 = vmatpush1.bf16.msra.mxu0 0
        %5606 = vmatprep.subr.bf16.mxu0 0
        %5607 = vmatpush1.bf16.msra.mxu0 0
        %5608 = vmatprep.mubr.bf16.mxu0 0
        %5609 = vmatmul.mubr.bf16.gmra.mrb[0].mxu0 %v5333
        %v5610 = vpop.f32.mrb[0].mxu0
        %v5611 = vadd.f32 %v5522, %v5610
        %v5612 = vpop.f32.mrb[0].mxu0
        %v5613 = vpop.f32.mrb[0].mxu0
        %v5614 = vadd.f32 %v5525, %v5613
        %v5615 = vpop.f32.mrb[0].mxu0
        %5616 = vdwg.mxu0
        %v5633 = vunpack.c.l.b16 %v5405
        %v5634 = vunpack.c.l.b16 %v5406
        %v5635 = vunpack.c.l.b16 %v5407
        %v5636 = vunpack.c.l.b16 %v5408
        %v5637 = vunpack.c.l.b16 %v5409
        %v5638 = vunpack.c.l.b16 %v5410
        %v5639 = vunpack.c.l.b16 %v5411
        %v5640 = vunpack.c.l.b16 %v5412
        %v5641 = vunpack.c.l.b16 %v5413
        %v5642 = vunpack.c.l.b16 %v5414
        %v5643 = vunpack.c.l.b16 %v5415
        %v5644 = vunpack.c.l.b16 %v5416
        %v5645 = vunpack.c.l.b16 %v5417
        %v5646 = vunpack.c.l.b16 %v5418
        %v5647 = vunpack.c.l.b16 %v5419
        %v5648 = vunpack.c.l.b16 %v5420
        %v5649 = vpack.c.b16 %v5634, %v5633
        %v5650 = vpack.c.b16 %v5636, %v5635
        %v5651 = vpack.c.b16 %v5638, %v5637
        %v5652 = vpack.c.b16 %v5640, %v5639
        %v5653 = vpack.c.b16 %v5642, %v5641
        %v5654 = vpack.c.b16 %v5644, %v5643
        %v5655 = vpack.c.b16 %v5646, %v5645
        %v5656 = vpack.c.b16 %v5648, %v5647
        %5665 = vmatprep.subr.bf16.mxu0 0
        %5666 = vmatpush1.bf16.msra.mxu0 %v5649
        %5667 = vmatprep.subr.bf16.mxu0 0
        %5668 = vmatpush1.bf16.msra.mxu0 %v5650
        %5669 = vmatprep.subr.bf16.mxu0 0
        %5670 = vmatpush1.bf16.msra.mxu0 %v5651
        %5671 = vmatprep.subr.bf16.mxu0 0
        %5672 = vmatpush1.bf16.msra.mxu0 %v5652
        %5673 = vmatprep.subr.bf16.mxu0 0
        %5674 = vmatpush1.bf16.msra.mxu0 %v5653
        %5675 = vmatprep.subr.bf16.mxu0 0
        %5676 = vmatpush1.bf16.msra.mxu0 %v5654
        %5677 = vmatprep.subr.bf16.mxu0 0
        %5678 = vmatpush1.bf16.msra.mxu0 %v5655
        %5679 = vmatprep.subr.bf16.mxu0 0
        %5680 = vmatpush1.bf16.msra.mxu0 %v5656
        %5681 = vmatprep.subr.bf16.mxu0 0
        %5682 = vmatpush1.bf16.msra.mxu0 0
        %5683 = vmatprep.subr.bf16.mxu0 0
        %5684 = vmatpush1.bf16.msra.mxu0 0
        %5685 = vmatprep.subr.bf16.mxu0 0
        %5686 = vmatpush1.bf16.msra.mxu0 0
        %5687 = vmatprep.subr.bf16.mxu0 0
        %5688 = vmatpush1.bf16.msra.mxu0 0
        %5689 = vmatprep.subr.bf16.mxu0 0
        %5690 = vmatpush1.bf16.msra.mxu0 0
        %5691 = vmatprep.subr.bf16.mxu0 0
        %5692 = vmatpush1.bf16.msra.mxu0 0
        %5693 = vmatprep.subr.bf16.mxu0 0
        %5694 = vmatpush1.bf16.msra.mxu0 0
        %5695 = vmatprep.subr.bf16.mxu0 0
        %5696 = vmatpush1.bf16.msra.mxu0 0
        %5697 = vmatprep.mubr.bf16.mxu0 0
        %5698 = vmatmul.mubr.bf16.gmra.mrb[0].mxu0 %v5348
        %v5699 = vpop.f32.mrb[0].mxu0
        %v5700 = vadd.f32 0.0, %v5699
        %v5701 = vpop.f32.mrb[0].mxu0
        %v5702 = vpop.f32.mrb[0].mxu0
        %v5703 = vadd.f32 0.0, %v5702
        %v5704 = vpop.f32.mrb[0].mxu0
        %5705 = vdwg.mxu0
        %v5706 = vadd.f32 %v5611, %v5700
        %v5707 = vadd.f32 %v5614, %v5703
        %v5724 = vunpack.c.l.b16 %v5422
        %v5725 = vunpack.c.l.b16 %v5423
        %v5726 = vunpack.c.l.b16 %v5424
        %v5727 = vunpack.c.l.b16 %v5425
        %v5728 = vunpack.c.l.b16 %v5426
        %v5729 = vunpack.c.l.b16 %v5427
        %v5730 = vunpack.c.l.b16 %v5428
        %v5731 = vunpack.c.l.b16 %v5429
        %v5732 = vunpack.c.l.b16 %v5430
        %v5733 = vunpack.c.l.b16 %v5431
        %v5734 = vunpack.c.l.b16 %v5432
        %v5735 = vunpack.c.l.b16 %v5433
        %v5736 = vunpack.c.l.b16 %v5434
        %v5737 = vunpack.c.l.b16 %v5435
        %v5738 = vunpack.c.l.b16 %v5436
        %v5739 = vunpack.c.l.b16 %v5437
        %v5740 = vpack.c.b16 %v5725, %v5724
        %v5741 = vpack.c.b16 %v5727, %v5726
        %v5742 = vpack.c.b16 %v5729, %v5728
        %v5743 = vpack.c.b16 %v5731, %v5730
        %v5744 = vpack.c.b16 %v5733, %v5732
        %v5745 = vpack.c.b16 %v5735, %v5734
        %v5746 = vpack.c.b16 %v5737, %v5736
        %v5747 = vpack.c.b16 %v5739, %v5738
        %5756 = vmatprep.subr.bf16.mxu0 0
        %5757 = vmatpush1.bf16.msra.mxu0 %v5740
        %5758 = vmatprep.subr.bf16.mxu0 0
        %5759 = vmatpush1.bf16.msra.mxu0 %v5741
        %5760 = vmatprep.subr.bf16.mxu0 0
        %5761 = vmatpush1.bf16.msra.mxu0 %v5742
        %5762 = vmatprep.subr.bf16.mxu0 0
        %5763 = vmatpush1.bf16.msra.mxu0 %v5743
        %5764 = vmatprep.subr.bf16.mxu0 0
        %5765 = vmatpush1.bf16.msra.mxu0 %v5744
        %5766 = vmatprep.subr.bf16.mxu0 0
        %5767 = vmatpush1.bf16.msra.mxu0 %v5745
        %5768 = vmatprep.subr.bf16.mxu0 0
        %5769 = vmatpush1.bf16.msra.mxu0 %v5746
        %5770 = vmatprep.subr.bf16.mxu0 0
        %5771 = vmatpush1.bf16.msra.mxu0 %v5747
        %5772 = vmatprep.subr.bf16.mxu0 0
        %5773 = vmatpush1.bf16.msra.mxu0 0
        %5774 = vmatprep.subr.bf16.mxu0 0
        %5775 = vmatpush1.bf16.msra.mxu0 0
        %5776 = vmatprep.subr.bf16.mxu0 0
        %5777 = vmatpush1.bf16.msra.mxu0 0
        %5778 = vmatprep.subr.bf16.mxu0 0
        %5779 = vmatpush1.bf16.msra.mxu0 0
        %5780 = vmatprep.subr.bf16.mxu0 0
        %5781 = vmatpush1.bf16.msra.mxu0 0
        %5782 = vmatprep.subr.bf16.mxu0 0
        %5783 = vmatpush1.bf16.msra.mxu0 0
        %5784 = vmatprep.subr.bf16.mxu0 0
        %5785 = vmatpush1.bf16.msra.mxu0 0
        %5786 = vmatprep.subr.bf16.mxu0 0
        %5787 = vmatpush1.bf16.msra.mxu0 0
        %5788 = vmatprep.mubr.bf16.mxu0 0
        %5789 = vmatmul.mubr.bf16.gmra.mrb[0].mxu0 %v5353
        %v5790 = vpop.f32.mrb[0].mxu0
        %v5791 = vadd.f32 0.0, %v5790
        %v5792 = vpop.f32.mrb[0].mxu0
        %v5793 = vpop.f32.mrb[0].mxu0
        %v5794 = vadd.f32 0.0, %v5793
        %v5795 = vpop.f32.mrb[0].mxu0
        %5796 = vdwg.mxu0
        %v5797 = vadd.f32 %v5706, %v5791
        %v5798 = vadd.f32 %v5707, %v5794
        %v5800 = vlaneseq
        %v5801 = vshrl.u32 %v5800, 7
        %v5802 = vsub.s32 0, %v5801
        %v5803 = vrot.slane %v5438, %v5802
        %v5805 = vadd.f32 %v5797, %v5803
        %v5806 = vadd.f32 %v5798, %v5803
        %v5807 = vmax.f32 %v5805, 0.0
        %v5808 = vmax.f32 %v5806, 0.0
        %5809 = vmatprep.subr.bf16.mxu0 0
        %5810 = vmatpush1.bf16.msra.mxu0 %v5471
        %5811 = vmatprep.subr.bf16.mxu0 0
        %5812 = vmatpush1.bf16.msra.mxu0 %v5472
        %5813 = vmatprep.subr.bf16.mxu0 0
        %5814 = vmatpush1.bf16.msra.mxu0 %v5473
        %5815 = vmatprep.subr.bf16.mxu0 0
        %5816 = vmatpush1.bf16.msra.mxu0 %v5474
        %5817 = vmatprep.subr.bf16.mxu0 0
        %5818 = vmatpush1.bf16.msra.mxu0 %v5475
        %5819 = vmatprep.subr.bf16.mxu0 0
        %5820 = vmatpush1.bf16.msra.mxu0 %v5476
        %5821 = vmatprep.subr.bf16.mxu0 0
        %5822 = vmatpush1.bf16.msra.mxu0 %v5477
        %5823 = vmatprep.subr.bf16.mxu0 0
        %5824 = vmatpush1.bf16.msra.mxu0 %v5478
        %5825 = vmatprep.subr.bf16.mxu0 0
        %5826 = vmatpush1.bf16.msra.mxu0 0
        %5827 = vmatprep.subr.bf16.mxu0 0
        %5828 = vmatpush1.bf16.msra.mxu0 0
        %5829 = vmatprep.subr.bf16.mxu0 0
        %5830 = vmatpush1.bf16.msra.mxu0 0
        %5831 = vmatprep.subr.bf16.mxu0 0
        %5832 = vmatpush1.bf16.msra.mxu0 0
        %5833 = vmatprep.subr.bf16.mxu0 0
        %5834 = vmatpush1.bf16.msra.mxu0 0
        %5835 = vmatprep.subr.bf16.mxu0 0
        %5836 = vmatpush1.bf16.msra.mxu0 0
        %5837 = vmatprep.subr.bf16.mxu0 0
        %5838 = vmatpush1.bf16.msra.mxu0 0
        %5839 = vmatprep.subr.bf16.mxu0 0
        %5840 = vmatpush1.bf16.msra.mxu0 0
        %5841 = vmatprep.mubr.bf16.mxu0 0
        %5842 = vmatmul.mubr.bf16.gmra.mrb[0].mxu0 %v5343
        %v5843 = vpop.f32.mrb[0].mxu0
        %v5844 = vadd.f32 0.0, %v5843
        %v5845 = vpop.f32.mrb[0].mxu0
        %v5846 = vpop.f32.mrb[0].mxu0
        %v5847 = vadd.f32 0.0, %v5846
        %v5848 = vpop.f32.mrb[0].mxu0
        %5849 = vdwg.mxu0
        %5850 = vmatprep.subr.bf16.mxu0 0
        %5851 = vmatpush1.bf16.msra.mxu0 %v5560
        %5852 = vmatprep.subr.bf16.mxu0 0
        %5853 = vmatpush1.bf16.msra.mxu0 %v5561
        %5854 = vmatprep.subr.bf16.mxu0 0
        %5855 = vmatpush1.bf16.msra.mxu0 %v5562
        %5856 = vmatprep.subr.bf16.mxu0 0
        %5857 = vmatpush1.bf16.msra.mxu0 %v5563
        %5858 = vmatprep.subr.bf16.mxu0 0
        %5859 = vmatpush1.bf16.msra.mxu0 %v5564
        %5860 = vmatprep.subr.bf16.mxu0 0
        %5861 = vmatpush1.bf16.msra.mxu0 %v5565
        %5862 = vmatprep.subr.bf16.mxu0 0
        %5863 = vmatpush1.bf16.msra.mxu0 %v5566
        %5864 = vmatprep.subr.bf16.mxu0 0
        %5865 = vmatpush1.bf16.msra.mxu0 %v5567
        %5866 = vmatprep.subr.bf16.mxu0 0
        %5867 = vmatpush1.bf16.msra.mxu0 0
        %5868 = vmatprep.subr.bf16.mxu0 0
        %5869 = vmatpush1.bf16.msra.mxu0 0
        %5870 = vmatprep.subr.bf16.mxu0 0
        %5871 = vmatpush1.bf16.msra.mxu0 0
        %5872 = vmatprep.subr.bf16.mxu0 0
        %5873 = vmatpush1.bf16.msra.mxu0 0
        %5874 = vmatprep.subr.bf16.mxu0 0
        %5875 = vmatpush1.bf16.msra.mxu0 0
        %5876 = vmatprep.subr.bf16.mxu0 0
        %5877 = vmatpush1.bf16.msra.mxu0 0
        %5878 = vmatprep.subr.bf16.mxu0 0
        %5879 = vmatpush1.bf16.msra.mxu0 0
        %5880 = vmatprep.subr.bf16.mxu0 0
        %5881 = vmatpush1.bf16.msra.mxu0 0
        %5882 = vmatprep.mubr.bf16.mxu0 0
        %5883 = vmatmul.mubr.bf16.gmra.mrb[0].mxu0 %v5338
        %v5884 = vpop.f32.mrb[0].mxu0
        %v5885 = vadd.f32 %v5844, %v5884
        %v5886 = vpop.f32.mrb[0].mxu0
        %v5887 = vpop.f32.mrb[0].mxu0
        %v5888 = vadd.f32 %v5847, %v5887
        %v5889 = vpop.f32.mrb[0].mxu0
        %5890 = vdwg.mxu0
        %5891 = vmatprep.subr.bf16.mxu0 0
        %5892 = vmatpush1.bf16.msra.mxu0 %v5649
        %5893 = vmatprep.subr.bf16.mxu0 0
        %5894 = vmatpush1.bf16.msra.mxu0 %v5650
        %5895 = vmatprep.subr.bf16.mxu0 0
        %5896 = vmatpush1.bf16.msra.mxu0 %v5651
        %5897 = vmatprep.subr.bf16.mxu0 0
        %5898 = vmatpush1.bf16.msra.mxu0 %v5652
        %5899 = vmatprep.subr.bf16.mxu0 0
        %5900 = vmatpush1.bf16.msra.mxu0 %v5653
        %5901 = vmatprep.subr.bf16.mxu0 0
        %5902 = vmatpush1.bf16.msra.mxu0 %v5654
        %5903 = vmatprep.subr.bf16.mxu0 0
        %5904 = vmatpush1.bf16.msra.mxu0 %v5655
        %5905 = vmatprep.subr.bf16.mxu0 0
        %5906 = vmatpush1.bf16.msra.mxu0 %v5656
        %5907 = vmatprep.subr.bf16.mxu0 0
        %5908 = vmatpush1.bf16.msra.mxu0 0
        %5909 = vmatprep.subr.bf16.mxu0 0
        %5910 = vmatpush1.bf16.msra.mxu0 0
        %5911 = vmatprep.subr.bf16.mxu0 0
        %5912 = vmatpush1.bf16.msra.mxu0 0
        %5913 = vmatprep.subr.bf16.mxu0 0
        %5914 = vmatpush1.bf16.msra.mxu0 0
        %5915 = vmatprep.subr.bf16.mxu0 0
        %5916 = vmatpush1.bf16.msra.mxu0 0
        %5917 = vmatprep.subr.bf16.mxu0 0
        %5918 = vmatpush1.bf16.msra.mxu0 0
        %5919 = vmatprep.subr.bf16.mxu0 0
        %5920 = vmatpush1.bf16.msra.mxu0 0
        %5921 = vmatprep.subr.bf16.mxu0 0
        %5922 = vmatpush1.bf16.msra.mxu0 0
        %5923 = vmatprep.mubr.bf16.mxu0 0
        %5924 = vmatmul.mubr.bf16.gmra.mrb[0].mxu0 %v5353
        %v5925 = vpop.f32.mrb[0].mxu0
        %v5926 = vadd.f32 0.0, %v5925
        %v5927 = vpop.f32.mrb[0].mxu0
        %v5928 = vpop.f32.mrb[0].mxu0
        %v5929 = vadd.f32 0.0, %v5928
        %v5930 = vpop.f32.mrb[0].mxu0
        %5931 = vdwg.mxu0
        %v5932 = vadd.f32 %v5885, %v5926
        %v5933 = vadd.f32 %v5888, %v5929
        %5934 = vmatprep.subr.bf16.mxu0 0
        %5935 = vmatpush1.bf16.msra.mxu0 %v5740
        %5936 = vmatprep.subr.bf16.mxu0 0
        %5937 = vmatpush1.bf16.msra.mxu0 %v5741
        %5938 = vmatprep.subr.bf16.mxu0 0
        %5939 = vmatpush1.bf16.msra.mxu0 %v5742
        %5940 = vmatprep.subr.bf16.mxu0 0
        %5941 = vmatpush1.bf16.msra.mxu0 %v5743
        %5942 = vmatprep.subr.bf16.mxu0 0
        %5943 = vmatpush1.bf16.msra.mxu0 %v5744
        %5944 = vmatprep.subr.bf16.mxu0 0
        %5945 = vmatpush1.bf16.msra.mxu0 %v5745
        %5946 = vmatprep.subr.bf16.mxu0 0
        %5947 = vmatpush1.bf16.msra.mxu0 %v5746
        %5948 = vmatprep.subr.bf16.mxu0 0
        %5949 = vmatpush1.bf16.msra.mxu0 %v5747
        %5950 = vmatprep.subr.bf16.mxu0 0
        %5951 = vmatpush1.bf16.msra.mxu0 0
        %5952 = vmatprep.subr.bf16.mxu0 0
        %5953 = vmatpush1.bf16.msra.mxu0 0
        %5954 = vmatprep.subr.bf16.mxu0 0
        %5955 = vmatpush1.bf16.msra.mxu0 0
        %5956 = vmatprep.subr.bf16.mxu0 0
        %5957 = vmatpush1.bf16.msra.mxu0 0
        %5958 = vmatprep.subr.bf16.mxu0 0
        %5959 = vmatpush1.bf16.msra.mxu0 0
        %5960 = vmatprep.subr.bf16.mxu0 0
        %5961 = vmatpush1.bf16.msra.mxu0 0
        %5962 = vmatprep.subr.bf16.mxu0 0
        %5963 = vmatpush1.bf16.msra.mxu0 0
        %5964 = vmatprep.subr.bf16.mxu0 0
        %5965 = vmatpush1.bf16.msra.mxu0 0
        %5966 = vmatprep.mubr.bf16.mxu0 0
        %5967 = vmatmul.mubr.bf16.gmra.mrb[0].mxu0 %v5358
        %v5968 = vpop.f32.mrb[0].mxu0
        %v5969 = vadd.f32 0.0, %v5968
        %v5970 = vpop.f32.mrb[0].mxu0
        %v5971 = vpop.f32.mrb[0].mxu0
        %v5972 = vadd.f32 0.0, %v5971
        %v5973 = vpop.f32.mrb[0].mxu0
        %5974 = vdwg.mxu0
        %v5975 = vadd.f32 %v5932, %v5969
        %v5976 = vadd.f32 %v5933, %v5972
        %v5977 = vadd.f32 %v5975, %v5803
        %v5978 = vadd.f32 %v5976, %v5803
        %v5979 = vmax.f32 %v5977, 0.0
        %v5980 = vmax.f32 %v5978, 0.0
        %5981 = vmatprep.subr.bf16.mxu0 0
        %5982 = vmatpush1.bf16.msra.mxu0 %v5471
        %5983 = vmatprep.subr.bf16.mxu0 0
        %5984 = vmatpush1.bf16.msra.mxu0 %v5472
        %5985 = vmatprep.subr.bf16.mxu0 0
        %5986 = vmatpush1.bf16.msra.mxu0 %v5473
        %5987 = vmatprep.subr.bf16.mxu0 0
        %5988 = vmatpush1.bf16.msra.mxu0 %v5474
        %5989 = vmatprep.subr.bf16.mxu0 0
        %5990 = vmatpush1.bf16.msra.mxu0 %v5475
        %5991 = vmatprep.subr.bf16.mxu0 0
        %5992 = vmatpush1.bf16.msra.mxu0 %v5476
        %5993 = vmatprep.subr.bf16.mxu0 0
        %5994 = vmatpush1.bf16.msra.mxu0 %v5477
        %5995 = vmatprep.subr.bf16.mxu0 0
        %5996 = vmatpush1.bf16.msra.mxu0 %v5478
        %5997 = vmatprep.subr.bf16.mxu0 0
        %5998 = vmatpush1.bf16.msra.mxu0 0
        %5999 = vmatprep.subr.bf16.mxu0 0
        %6000 = vmatpush1.bf16.msra.mxu0 0
        %6001 = vmatprep.subr.bf16.mxu0 0
        %6002 = vmatpush1.bf16.msra.mxu0 0
        %6003 = vmatprep.subr.bf16.mxu0 0
        %6004 = vmatpush1.bf16.msra.mxu0 0
        %6005 = vmatprep.subr.bf16.mxu0 0
        %6006 = vmatpush1.bf16.msra.mxu0 0
        %6007 = vmatprep.subr.bf16.mxu0 0
        %6008 = vmatpush1.bf16.msra.mxu0 0
        %6009 = vmatprep.subr.bf16.mxu0 0
        %6010 = vmatpush1.bf16.msra.mxu0 0
        %6011 = vmatprep.subr.bf16.mxu0 0
        %6012 = vmatpush1.bf16.msra.mxu0 0
        %6013 = vmatprep.mubr.bf16.mxu0 0
        %6014 = vmatmul.mubr.bf16.gmra.mrb[0].mxu0 %v5353
        %v6015 = vpop.f32.mrb[0].mxu0
        %v6016 = vadd.f32 0.0, %v6015
        %v6017 = vpop.f32.mrb[0].mxu0
        %v6018 = vpop.f32.mrb[0].mxu0
        %v6019 = vadd.f32 0.0, %v6018
        %v6020 = vpop.f32.mrb[0].mxu0
        %6021 = vdwg.mxu0
        %6022 = vmatprep.subr.bf16.mxu0 0
        %6023 = vmatpush1.bf16.msra.mxu0 %v5560
        %6024 = vmatprep.subr.bf16.mxu0 0
        %6025 = vmatpush1.bf16.msra.mxu0 %v5561
        %6026 = vmatprep.subr.bf16.mxu0 0
        %6027 = vmatpush1.bf16.msra.mxu0 %v5562
        %6028 = vmatprep.subr.bf16.mxu0 0
        %6029 = vmatpush1.bf16.msra.mxu0 %v5563
        %6030 = vmatprep.subr.bf16.mxu0 0
        %6031 = vmatpush1.bf16.msra.mxu0 %v5564
        %6032 = vmatprep.subr.bf16.mxu0 0
        %6033 = vmatpush1.bf16.msra.mxu0 %v5565
        %6034 = vmatprep.subr.bf16.mxu0 0
        %6035 = vmatpush1.bf16.msra.mxu0 %v5566
        %6036 = vmatprep.subr.bf16.mxu0 0
        %6037 = vmatpush1.bf16.msra.mxu0 %v5567
        %6038 = vmatprep.subr.bf16.mxu0 0
        %6039 = vmatpush1.bf16.msra.mxu0 0
        %6040 = vmatprep.subr.bf16.mxu0 0
        %6041 = vmatpush1.bf16.msra.mxu0 0
        %6042 = vmatprep.subr.bf16.mxu0 0
        %6043 = vmatpush1.bf16.msra.mxu0 0
        %6044 = vmatprep.subr.bf16.mxu0 0
        %6045 = vmatpush1.bf16.msra.mxu0 0
        %6046 = vmatprep.subr.bf16.mxu0 0
        %6047 = vmatpush1.bf16.msra.mxu0 0
        %6048 = vmatprep.subr.bf16.mxu0 0
        %6049 = vmatpush1.bf16.msra.mxu0 0
        %6050 = vmatprep.subr.bf16.mxu0 0
        %6051 = vmatpush1.bf16.msra.mxu0 0
        %6052 = vmatprep.subr.bf16.mxu0 0
        %6053 = vmatpush1.bf16.msra.mxu0 0
        %6054 = vmatprep.mubr.bf16.mxu0 0
        %6055 = vmatmul.mubr.bf16.gmra.mrb[0].mxu0 %v5348
        %v6056 = vpop.f32.mrb[0].mxu0
        %v6057 = vadd.f32 %v6016, %v6056
        %v6058 = vpop.f32.mrb[0].mxu0
        %v6059 = vpop.f32.mrb[0].mxu0
        %v6060 = vadd.f32 %v6019, %v6059
        %v6061 = vpop.f32.mrb[0].mxu0
        %6062 = vdwg.mxu0
        %6063 = vmatprep.subr.bf16.mxu0 0
        %6064 = vmatpush1.bf16.msra.mxu0 %v5649
        %6065 = vmatprep.subr.bf16.mxu0 0
        %6066 = vmatpush1.bf16.msra.mxu0 %v5650
        %6067 = vmatprep.subr.bf16.mxu0 0
        %6068 = vmatpush1.bf16.msra.mxu0 %v5651
        %6069 = vmatprep.subr.bf16.mxu0 0
        %6070 = vmatpush1.bf16.msra.mxu0 %v5652
        %6071 = vmatprep.subr.bf16.mxu0 0
        %6072 = vmatpush1.bf16.msra.mxu0 %v5653
        %6073 = vmatprep.subr.bf16.mxu0 0
        %6074 = vmatpush1.bf16.msra.mxu0 %v5654
        %6075 = vmatprep.subr.bf16.mxu0 0
        %6076 = vmatpush1.bf16.msra.mxu0 %v5655
        %6077 = vmatprep.subr.bf16.mxu0 0
        %6078 = vmatpush1.bf16.msra.mxu0 %v5656
        %6079 = vmatprep.subr.bf16.mxu0 0
        %6080 = vmatpush1.bf16.msra.mxu0 0
        %6081 = vmatprep.subr.bf16.mxu0 0
        %6082 = vmatpush1.bf16.msra.mxu0 0
        %6083 = vmatprep.subr.bf16.mxu0 0
        %6084 = vmatpush1.bf16.msra.mxu0 0
        %6085 = vmatprep.subr.bf16.mxu0 0
        %6086 = vmatpush1.bf16.msra.mxu0 0
        %6087 = vmatprep.subr.bf16.mxu0 0
        %6088 = vmatpush1.bf16.msra.mxu0 0
        %6089 = vmatprep.subr.bf16.mxu0 0
        %6090 = vmatpush1.bf16.msra.mxu0 0
        %6091 = vmatprep.subr.bf16.mxu0 0
        %6092 = vmatpush1.bf16.msra.mxu0 0
        %6093 = vmatprep.subr.bf16.mxu0 0
        %6094 = vmatpush1.bf16.msra.mxu0 0
        %6095 = vmatprep.mubr.bf16.mxu0 0
        %6096 = vmatmul.mubr.bf16.gmra.mrb[0].mxu0 %v5362
        %v6097 = vpop.f32.mrb[0].mxu0
        %v6098 = vadd.f32 0.0, %v6097
        %v6099 = vpop.f32.mrb[0].mxu0
        %v6100 = vpop.f32.mrb[0].mxu0
        %v6101 = vadd.f32 0.0, %v6100
        %v6102 = vpop.f32.mrb[0].mxu0
        %6103 = vdwg.mxu0
        %v6104 = vadd.f32 %v6057, %v6098
        %v6105 = vadd.f32 %v6060, %v6101
        %6106 = vmatprep.subr.bf16.mxu0 0
        %6107 = vmatpush1.bf16.msra.mxu0 %v5740
        %6108 = vmatprep.subr.bf16.mxu0 0
        %6109 = vmatpush1.bf16.msra.mxu0 %v5741
        %6110 = vmatprep.subr.bf16.mxu0 0
        %6111 = vmatpush1.bf16.msra.mxu0 %v5742
        %6112 = vmatprep.subr.bf16.mxu0 0
        %6113 = vmatpush1.bf16.msra.mxu0 %v5743
        %6114 = vmatprep.subr.bf16.mxu0 0
        %6115 = vmatpush1.bf16.msra.mxu0 %v5744
        %6116 = vmatprep.subr.bf16.mxu0 0
        %6117 = vmatpush1.bf16.msra.mxu0 %v5745
        %6118 = vmatprep.subr.bf16.mxu0 0
        %6119 = vmatpush1.bf16.msra.mxu0 %v5746
        %6120 = vmatprep.subr.bf16.mxu0 0
        %6121 = vmatpush1.bf16.msra.mxu0 %v5747
        %6122 = vmatprep.subr.bf16.mxu0 0
        %6123 = vmatpush1.bf16.msra.mxu0 0
        %6124 = vmatprep.subr.bf16.mxu0 0
        %6125 = vmatpush1.bf16.msra.mxu0 0
        %6126 = vmatprep.subr.bf16.mxu0 0
        %6127 = vmatpush1.bf16.msra.mxu0 0
        %6128 = vmatprep.subr.bf16.mxu0 0
        %6129 = vmatpush1.bf16.msra.mxu0 0
        %6130 = vmatprep.subr.bf16.mxu0 0
        %6131 = vmatpush1.bf16.msra.mxu0 0
        %6132 = vmatprep.subr.bf16.mxu0 0
        %6133 = vmatpush1.bf16.msra.mxu0 0
        %6134 = vmatprep.subr.bf16.mxu0 0
        %6135 = vmatpush1.bf16.msra.mxu0 0
        %6136 = vmatprep.subr.bf16.mxu0 0
        %6137 = vmatpush1.bf16.msra.mxu0 0
        %6138 = vmatprep.mubr.bf16.mxu0 0
        %6139 = vmatmul.mubr.bf16.gmra.mrb[0].mxu0 %v5366
        %v6140 = vpop.f32.mrb[0].mxu0
        %v6141 = vadd.f32 0.0, %v6140
        %v6142 = vpop.f32.mrb[0].mxu0
        %v6143 = vpop.f32.mrb[0].mxu0
        %v6144 = vadd.f32 0.0, %v6143
        %v6145 = vpop.f32.mrb[0].mxu0
        %6146 = vdwg.mxu0
        %v6147 = vadd.f32 %v6104, %v6141
        %v6148 = vadd.f32 %v6105, %v6144
        %v6149 = vadd.f32 %v6147, %v5803
        %v6150 = vadd.f32 %v6148, %v5803
        %v6151 = vmax.f32 %v6149, 0.0
        %v6152 = vmax.f32 %v6150, 0.0
        %6153 = vmatprep.subr.bf16.mxu0 0
        %6154 = vmatpush1.bf16.msra.mxu0 %v5471
        %6155 = vmatprep.subr.bf16.mxu0 0
        %6156 = vmatpush1.bf16.msra.mxu0 %v5472
        %6157 = vmatprep.subr.bf16.mxu0 0
        %6158 = vmatpush1.bf16.msra.mxu0 %v5473
        %6159 = vmatprep.subr.bf16.mxu0 0
        %6160 = vmatpush1.bf16.msra.mxu0 %v5474
        %6161 = vmatprep.subr.bf16.mxu0 0
        %6162 = vmatpush1.bf16.msra.mxu0 %v5475
        %6163 = vmatprep.subr.bf16.mxu0 0
        %6164 = vmatpush1.bf16.msra.mxu0 %v5476
        %6165 = vmatprep.subr.bf16.mxu0 0
        %6166 = vmatpush1.bf16.msra.mxu0 %v5477
        %6167 = vmatprep.subr.bf16.mxu0 0
        %6168 = vmatpush1.bf16.msra.mxu0 %v5478
        %6169 = vmatprep.subr.bf16.mxu0 0
        %6170 = vmatpush1.bf16.msra.mxu0 0
        %6171 = vmatprep.subr.bf16.mxu0 0
        %6172 = vmatpush1.bf16.msra.mxu0 0
        %6173 = vmatprep.subr.bf16.mxu0 0
        %6174 = vmatpush1.bf16.msra.mxu0 0
        %6175 = vmatprep.subr.bf16.mxu0 0
        %6176 = vmatpush1.bf16.msra.mxu0 0
        %6177 = vmatprep.subr.bf16.mxu0 0
        %6178 = vmatpush1.bf16.msra.mxu0 0
        %6179 = vmatprep.subr.bf16.mxu0 0
        %6180 = vmatpush1.bf16.msra.mxu0 0
        %6181 = vmatprep.subr.bf16.mxu0 0
        %6182 = vmatpush1.bf16.msra.mxu0 0
        %6183 = vmatprep.subr.bf16.mxu0 0
        %6184 = vmatpush1.bf16.msra.mxu0 0
        %6185 = vmatprep.mubr.bf16.mxu0 0
        %6186 = vmatmul.mubr.bf16.gmra.mrb[0].mxu0 %v5358
        %v6187 = vpop.f32.mrb[0].mxu0
        %v6188 = vadd.f32 0.0, %v6187
        %v6189 = vpop.f32.mrb[0].mxu0
        %v6190 = vpop.f32.mrb[0].mxu0
        %v6191 = vadd.f32 0.0, %v6190
        %v6192 = vpop.f32.mrb[0].mxu0
        %6193 = vdwg.mxu0
        %6194 = vmatprep.subr.bf16.mxu0 0
        %6195 = vmatpush1.bf16.msra.mxu0 %v5560
        %6196 = vmatprep.subr.bf16.mxu0 0
        %6197 = vmatpush1.bf16.msra.mxu0 %v5561
        %6198 = vmatprep.subr.bf16.mxu0 0
        %6199 = vmatpush1.bf16.msra.mxu0 %v5562
        %6200 = vmatprep.subr.bf16.mxu0 0
        %6201 = vmatpush1.bf16.msra.mxu0 %v5563
        %6202 = vmatprep.subr.bf16.mxu0 0
        %6203 = vmatpush1.bf16.msra.mxu0 %v5564
        %6204 = vmatprep.subr.bf16.mxu0 0
        %6205 = vmatpush1.bf16.msra.mxu0 %v5565
        %6206 = vmatprep.subr.bf16.mxu0 0
        %6207 = vmatpush1.bf16.msra.mxu0 %v5566
        %6208 = vmatprep.subr.bf16.mxu0 0
        %6209 = vmatpush1.bf16.msra.mxu0 %v5567
        %6210 = vmatprep.subr.bf16.mxu0 0
        %6211 = vmatpush1.bf16.msra.mxu0 0
        %6212 = vmatprep.subr.bf16.mxu0 0
        %6213 = vmatpush1.bf16.msra.mxu0 0
        %6214 = vmatprep.subr.bf16.mxu0 0
        %6215 = vmatpush1.bf16.msra.mxu0 0
        %6216 = vmatprep.subr.bf16.mxu0 0
        %6217 = vmatpush1.bf16.msra.mxu0 0
        %6218 = vmatprep.subr.bf16.mxu0 0
        %6219 = vmatpush1.bf16.msra.mxu0 0
        %6220 = vmatprep.subr.bf16.mxu0 0
        %6221 = vmatpush1.bf16.msra.mxu0 0
        %6222 = vmatprep.subr.bf16.mxu0 0
        %6223 = vmatpush1.bf16.msra.mxu0 0
        %6224 = vmatprep.subr.bf16.mxu0 0
        %6225 = vmatpush1.bf16.msra.mxu0 0
        %6226 = vmatprep.mubr.bf16.mxu0 0
        %6227 = vmatmul.mubr.bf16.gmra.mrb[0].mxu0 %v5353
        %v6228 = vpop.f32.mrb[0].mxu0
        %v6229 = vadd.f32 %v6188, %v6228
        %v6230 = vpop.f32.mrb[0].mxu0
        %v6231 = vpop.f32.mrb[0].mxu0
        %v6232 = vadd.f32 %v6191, %v6231
        %v6233 = vpop.f32.mrb[0].mxu0
        %6234 = vdwg.mxu0
        %6235 = vmatprep.subr.bf16.mxu0 0
        %6236 = vmatpush1.bf16.msra.mxu0 %v5649
        %6237 = vmatprep.subr.bf16.mxu0 0
        %6238 = vmatpush1.bf16.msra.mxu0 %v5650
        %6239 = vmatprep.subr.bf16.mxu0 0
        %6240 = vmatpush1.bf16.msra.mxu0 %v5651
        %6241 = vmatprep.subr.bf16.mxu0 0
        %6242 = vmatpush1.bf16.msra.mxu0 %v5652
        %6243 = vmatprep.subr.bf16.mxu0 0
        %6244 = vmatpush1.bf16.msra.mxu0 %v5653
        %6245 = vmatprep.subr.bf16.mxu0 0
        %6246 = vmatpush1.bf16.msra.mxu0 %v5654
        %6247 = vmatprep.subr.bf16.mxu0 0
        %6248 = vmatpush1.bf16.msra.mxu0 %v5655
        %6249 = vmatprep.subr.bf16.mxu0 0
        %6250 = vmatpush1.bf16.msra.mxu0 %v5656
        %6251 = vmatprep.subr.bf16.mxu0 0
        %6252 = vmatpush1.bf16.msra.mxu0 0
        %6253 = vmatprep.subr.bf16.mxu0 0
        %6254 = vmatpush1.bf16.msra.mxu0 0
        %6255 = vmatprep.subr.bf16.mxu0 0
        %6256 = vmatpush1.bf16.msra.mxu0 0
        %6257 = vmatprep.subr.bf16.mxu0 0
        %6258 = vmatpush1.bf16.msra.mxu0 0
        %6259 = vmatprep.subr.bf16.mxu0 0
        %6260 = vmatpush1.bf16.msra.mxu0 0
        %6261 = vmatprep.subr.bf16.mxu0 0
        %6262 = vmatpush1.bf16.msra.mxu0 0
        %6263 = vmatprep.subr.bf16.mxu0 0
        %6264 = vmatpush1.bf16.msra.mxu0 0
        %6265 = vmatprep.subr.bf16.mxu0 0
        %6266 = vmatpush1.bf16.msra.mxu0 0
        %6267 = vmatprep.mubr.bf16.mxu0 0
        %6268 = vmatmul.mubr.bf16.gmra.mrb[0].mxu0 %v5366
        %v6269 = vpop.f32.mrb[0].mxu0
        %v6270 = vadd.f32 0.0, %v6269
        %v6271 = vpop.f32.mrb[0].mxu0
        %v6272 = vpop.f32.mrb[0].mxu0
        %v6273 = vadd.f32 0.0, %v6272
        %v6274 = vpop.f32.mrb[0].mxu0
        %6275 = vdwg.mxu0
        %v6276 = vadd.f32 %v6229, %v6270
        %v6277 = vadd.f32 %v6232, %v6273
        %6278 = vmatprep.subr.bf16.mxu0 0
        %6279 = vmatpush1.bf16.msra.mxu0 %v5740
        %6280 = vmatprep.subr.bf16.mxu0 0
        %6281 = vmatpush1.bf16.msra.mxu0 %v5741
        %6282 = vmatprep.subr.bf16.mxu0 0
        %6283 = vmatpush1.bf16.msra.mxu0 %v5742
        %6284 = vmatprep.subr.bf16.mxu0 0
        %6285 = vmatpush1.bf16.msra.mxu0 %v5743
        %6286 = vmatprep.subr.bf16.mxu0 0
        %6287 = vmatpush1.bf16.msra.mxu0 %v5744
        %6288 = vmatprep.subr.bf16.mxu0 0
        %6289 = vmatpush1.bf16.msra.mxu0 %v5745
        %6290 = vmatprep.subr.bf16.mxu0 0
        %6291 = vmatpush1.bf16.msra.mxu0 %v5746
        %6292 = vmatprep.subr.bf16.mxu0 0
        %6293 = vmatpush1.bf16.msra.mxu0 %v5747
        %6294 = vmatprep.subr.bf16.mxu0 0
        %6295 = vmatpush1.bf16.msra.mxu0 0
        %6296 = vmatprep.subr.bf16.mxu0 0
        %6297 = vmatpush1.bf16.msra.mxu0 0
        %6298 = vmatprep.subr.bf16.mxu0 0
        %6299 = vmatpush1.bf16.msra.mxu0 0
        %6300 = vmatprep.subr.bf16.mxu0 0
        %6301 = vmatpush1.bf16.msra.mxu0 0
        %6302 = vmatprep.subr.bf16.mxu0 0
        %6303 = vmatpush1.bf16.msra.mxu0 0
        %6304 = vmatprep.subr.bf16.mxu0 0
        %6305 = vmatpush1.bf16.msra.mxu0 0
        %6306 = vmatprep.subr.bf16.mxu0 0
        %6307 = vmatpush1.bf16.msra.mxu0 0
        %6308 = vmatprep.subr.bf16.mxu0 0
        %6309 = vmatpush1.bf16.msra.mxu0 0
        %6310 = vmatprep.mubr.bf16.mxu0 0
        %6311 = vmatmul.mubr.bf16.gmra.mrb[0].mxu0 %v5370
        %v6312 = vpop.f32.mrb[0].mxu0
        %v6313 = vadd.f32 0.0, %v6312
        %v6314 = vpop.f32.mrb[0].mxu0
        %v6315 = vpop.f32.mrb[0].mxu0
        %v6316 = vadd.f32 0.0, %v6315
        %v6317 = vpop.f32.mrb[0].mxu0
        %6318 = vdwg.mxu0
        %v6319 = vadd.f32 %v6276, %v6313
        %v6320 = vadd.f32 %v6277, %v6316
        %v6321 = vadd.f32 %v6319, %v5803
        %v6322 = vadd.f32 %v6320, %v5803
        %v6323 = vmax.f32 %v6321, 0.0
        %v6324 = vmax.f32 %v6322, 0.0
        %v6325 = vmax.f32 %v5807, %v5979
        %v6326 = vmax.f32 %v5808, %v5980
        %v6327 = vmax.f32 %v6151, %v6323
        %v6328 = vmax.f32 %v6152, %v6324
        %v6329 = vmax.f32 %v6325, %v6327
        %v6330 = vmax.f32 %v6326, %v6328
        %v6331 = vpack.c.bf16 %v6329, %v6329
        %v6332 = vld [vmem:[%s7] sm:$0xf]
        %v6333 = vld [vmem:[%s7 + $0x4] sm:$0xf]
        %v6334 = vld [vmem:[%s7 + $0x8] sm:$0xf]
        %v6335 = vld [vmem:[%s7 + $0xc] sm:$0xf]
        %v6336 = vld [vmem:[%s7 + $0x10] sm:$0xf]
        %v6337 = vld [vmem:[%s7 + $0x14] sm:$0xf]
        %v6338 = vld [vmem:[%s7 + $0x18] sm:$0xf]
        %v6339 = vld [vmem:[%s7 + $0x1c] sm:$0xf]
        %v6340 = vld [vmem:[%s7 + $0x20] sm:$0xf]
        %v6341 = vld [vmem:[%s7 + $0x24] sm:$0xf]
        %v6342 = vld [vmem:[%s7 + $0x28] sm:$0xf]
        %v6343 = vld [vmem:[%s7 + $0x2c] sm:$0xf]
        %v6344 = vld [vmem:[%s7 + $0x30] sm:$0xf]
        %v6345 = vld [vmem:[%s7 + $0x34] sm:$0xf]
        %v6346 = vld [vmem:[%s7 + $0x38] sm:$0xf]
        %v6347 = vld [vmem:[%s7 + $0x3c] sm:$0xf]
        %s6348 = scalar_lea.vmem %s7, 64
        %v6349 = vld [vmem:[%s6348] sm:$0xf]
        %v6350 = vld [vmem:[%s6348 + $0x4] sm:$0xf]
        %v6351 = vld [vmem:[%s6348 + $0x8] sm:$0xf]
        %v6352 = vld [vmem:[%s6348 + $0xc] sm:$0xf]
        %v6353 = vld [vmem:[%s6348 + $0x10] sm:$0xf]
        %v6354 = vld [vmem:[%s6348 + $0x14] sm:$0xf]
        %v6355 = vld [vmem:[%s6348 + $0x18] sm:$0xf]
        %v6356 = vld [vmem:[%s6348 + $0x1c] sm:$0xf]
        %v6357 = vld [vmem:[%s6348 + $0x20] sm:$0xf]
        %v6358 = vld [vmem:[%s6348 + $0x24] sm:$0xf]
        %v6359 = vld [vmem:[%s6348 + $0x28] sm:$0xf]
        %v6360 = vld [vmem:[%s6348 + $0x2c] sm:$0xf]
        %v6361 = vld [vmem:[%s6348 + $0x30] sm:$0xf]
        %v6362 = vld [vmem:[%s6348 + $0x34] sm:$0xf]
        %v6363 = vld [vmem:[%s6348 + $0x38] sm:$0xf]
        %v6364 = vld [vmem:[%s6348 + $0x3c] sm:$0xf]
        %v6366 = vshrl.u32 %v6331, 16
        %v6385 = vunpack.c.l.b16 %v6349
        %v6386 = vunpack.c.l.b16 %v6350
        %v6387 = vunpack.c.l.b16 %v6351
        %v6388 = vunpack.c.l.b16 %v6352
        %v6389 = vunpack.c.l.b16 %v6353
        %v6390 = vunpack.c.l.b16 %v6354
        %v6391 = vunpack.c.l.b16 %v6355
        %v6392 = vunpack.c.l.b16 %v6356
        %v6393 = vunpack.c.l.b16 %v6357
        %v6394 = vunpack.c.l.b16 %v6358
        %v6395 = vunpack.c.l.b16 %v6359
        %v6396 = vunpack.c.l.b16 %v6360
        %v6397 = vunpack.c.l.b16 %v6361
        %v6398 = vunpack.c.l.b16 %v6362
        %v6399 = vunpack.c.l.b16 %v6363
        %v6400 = vunpack.c.l.b16 %v6364
        %v6401 = vpack.c.b16 %v6386, %v6385
        %v6402 = vpack.c.b16 %v6388, %v6387
        %v6403 = vpack.c.b16 %v6390, %v6389
        %v6404 = vpack.c.b16 %v6392, %v6391
        %v6405 = vpack.c.b16 %v6394, %v6393
        %v6406 = vpack.c.b16 %v6396, %v6395
        %v6407 = vpack.c.b16 %v6398, %v6397
        %v6408 = vpack.c.b16 %v6400, %v6399
        %6417 = vmatprep.subr.bf16.mxu0 0
        %6418 = vmatpush1.bf16.msra.mxu0 %v6401
        %6419 = vmatprep.subr.bf16.mxu0 0
        %6420 = vmatpush1.bf16.msra.mxu0 %v6402
        %6421 = vmatprep.subr.bf16.mxu0 0
        %6422 = vmatpush1.bf16.msra.mxu0 %v6403
        %6423 = vmatprep.subr.bf16.mxu0 0
        %6424 = vmatpush1.bf16.msra.mxu0 %v6404
        %6425 = vmatprep.subr.bf16.mxu0 0
        %6426 = vmatpush1.bf16.msra.mxu0 %v6405
        %6427 = vmatprep.subr.bf16.mxu0 0
        %6428 = vmatpush1.bf16.msra.mxu0 %v6406
        %6429 = vmatprep.subr.bf16.mxu0 0
        %6430 = vmatpush1.bf16.msra.mxu0 %v6407
        %6431 = vmatprep.subr.bf16.mxu0 0
        %6432 = vmatpush1.bf16.msra.mxu0 %v6408
        %6433 = vmatprep.subr.bf16.mxu0 0
        %6434 = vmatpush1.bf16.msra.mxu0 0
        %6435 = vmatprep.subr.bf16.mxu0 0
        %6436 = vmatpush1.bf16.msra.mxu0 0
        %6437 = vmatprep.subr.bf16.mxu0 0
        %6438 = vmatpush1.bf16.msra.mxu0 0
        %6439 = vmatprep.subr.bf16.mxu0 0
        %6440 = vmatpush1.bf16.msra.mxu0 0
        %6441 = vmatprep.subr.bf16.mxu0 0
        %6442 = vmatpush1.bf16.msra.mxu0 0
        %6443 = vmatprep.subr.bf16.mxu0 0
        %6444 = vmatpush1.bf16.msra.mxu0 0
        %6445 = vmatprep.subr.bf16.mxu0 0
        %6446 = vmatpush1.bf16.msra.mxu0 0
        %6447 = vmatprep.subr.bf16.mxu0 0
        %6448 = vmatpush1.bf16.msra.mxu0 0
        %6449 = vmatprep.mubr.bf16.mxu0 0
        %6450 = vmatmul.mubr.bf16.gmra.mrb[0].mxu0 %v6366
        %v6451 = vpop.f32.mrb[0].mxu0
        %v6452 = vadd.f32 0.0, %v6451
        %v6453 = vpop.f32.mrb[0].mxu0
        %v6454 = vpop.f32.mrb[0].mxu0
        %v6455 = vpop.f32.mrb[0].mxu0
        %6456 = vdwg.mxu0
        %v6473 = vunpack.c.l.b16 %v6332
        %v6474 = vunpack.c.l.b16 %v6333
        %v6475 = vunpack.c.l.b16 %v6334
        %v6476 = vunpack.c.l.b16 %v6335
        %v6477 = vunpack.c.l.b16 %v6336
        %v6478 = vunpack.c.l.b16 %v6337
        %v6479 = vunpack.c.l.b16 %v6338
        %v6480 = vunpack.c.l.b16 %v6339
        %v6481 = vunpack.c.l.b16 %v6340
        %v6482 = vunpack.c.l.b16 %v6341
        %v6483 = vunpack.c.l.b16 %v6342
        %v6484 = vunpack.c.l.b16 %v6343
        %v6485 = vunpack.c.l.b16 %v6344
        %v6486 = vunpack.c.l.b16 %v6345
        %v6487 = vunpack.c.l.b16 %v6346
        %v6488 = vunpack.c.l.b16 %v6347
        %v6489 = vpack.c.b16 %v6474, %v6473
        %v6490 = vpack.c.b16 %v6476, %v6475
        %v6491 = vpack.c.b16 %v6478, %v6477
        %v6492 = vpack.c.b16 %v6480, %v6479
        %v6493 = vpack.c.b16 %v6482, %v6481
        %v6494 = vpack.c.b16 %v6484, %v6483
        %v6495 = vpack.c.b16 %v6486, %v6485
        %v6496 = vpack.c.b16 %v6488, %v6487
        %6505 = vmatprep.subr.bf16.mxu0 0
        %6506 = vmatpush1.bf16.msra.mxu0 %v6489
        %6507 = vmatprep.subr.bf16.mxu0 0
        %6508 = vmatpush1.bf16.msra.mxu0 %v6490
        %6509 = vmatprep.subr.bf16.mxu0 0
        %6510 = vmatpush1.bf16.msra.mxu0 %v6491
        %6511 = vmatprep.subr.bf16.mxu0 0
        %6512 = vmatpush1.bf16.msra.mxu0 %v6492
        %6513 = vmatprep.subr.bf16.mxu0 0
        %6514 = vmatpush1.bf16.msra.mxu0 %v6493
        %6515 = vmatprep.subr.bf16.mxu0 0
        %6516 = vmatpush1.bf16.msra.mxu0 %v6494
        %6517 = vmatprep.subr.bf16.mxu0 0
        %6518 = vmatpush1.bf16.msra.mxu0 %v6495
        %6519 = vmatprep.subr.bf16.mxu0 0
        %6520 = vmatpush1.bf16.msra.mxu0 %v6496
        %6521 = vmatprep.subr.bf16.mxu0 0
        %6522 = vmatpush1.bf16.msra.mxu0 0
        %6523 = vmatprep.subr.bf16.mxu0 0
        %6524 = vmatpush1.bf16.msra.mxu0 0
        %6525 = vmatprep.subr.bf16.mxu0 0
        %6526 = vmatpush1.bf16.msra.mxu0 0
        %6527 = vmatprep.subr.bf16.mxu0 0
        %6528 = vmatpush1.bf16.msra.mxu0 0
        %6529 = vmatprep.subr.bf16.mxu0 0
        %6530 = vmatpush1.bf16.msra.mxu0 0
        %6531 = vmatprep.subr.bf16.mxu0 0
        %6532 = vmatpush1.bf16.msra.mxu0 0
        %6533 = vmatprep.subr.bf16.mxu0 0
        %6534 = vmatpush1.bf16.msra.mxu0 0
        %6535 = vmatprep.subr.bf16.mxu0 0
        %6536 = vmatpush1.bf16.msra.mxu0 0
        %6537 = vmatprep.mubr.bf16.mxu0 0
        %6538 = vmatmul.mubr.bf16.gmra.mrb[0].mxu0 %v6331
        %v6539 = vpop.f32.mrb[0].mxu0
        %v6540 = vadd.f32 %v6452, %v6539
        %v6541 = vpop.f32.mrb[0].mxu0
        %v6542 = vpop.f32.mrb[0].mxu0
        %v6543 = vpop.f32.mrb[0].mxu0
        %6544 = vdwg.mxu0
        %s6545 = scalar_lea.vmem %s7, 128
        %v6546 = vld [vmem:[%s6545] sm:$0xf]
        %v6547 = vld [vmem:[%s6545 + $0x4] sm:$0xf]
        %v6548 = vld [vmem:[%s6545 + $0x8] sm:$0xf]
        %v6549 = vld [vmem:[%s6545 + $0xc] sm:$0xf]
        %v6550 = vld [vmem:[%s6545 + $0x10] sm:$0xf]
        %v6551 = vld [vmem:[%s6545 + $0x14] sm:$0xf]
        %v6552 = vld [vmem:[%s6545 + $0x18] sm:$0xf]
        %v6553 = vld [vmem:[%s6545 + $0x1c] sm:$0xf]
        %v6554 = vld [vmem:[%s6545 + $0x20] sm:$0xf]
        %v6555 = vld [vmem:[%s6545 + $0x24] sm:$0xf]
        %v6556 = vld [vmem:[%s6545 + $0x28] sm:$0xf]
        %v6557 = vld [vmem:[%s6545 + $0x2c] sm:$0xf]
        %v6558 = vld [vmem:[%s6545 + $0x30] sm:$0xf]
        %v6559 = vld [vmem:[%s6545 + $0x34] sm:$0xf]
        %v6560 = vld [vmem:[%s6545 + $0x38] sm:$0xf]
        %v6561 = vld [vmem:[%s6545 + $0x3c] sm:$0xf]
        %v6563 = vrot.slane %v6331, 1
        %v6581 = vunpack.c.l.b16 %v6546
        %v6582 = vunpack.c.l.b16 %v6547
        %v6583 = vunpack.c.l.b16 %v6548
        %v6584 = vunpack.c.l.b16 %v6549
        %v6585 = vunpack.c.l.b16 %v6550
        %v6586 = vunpack.c.l.b16 %v6551
        %v6587 = vunpack.c.l.b16 %v6552
        %v6588 = vunpack.c.l.b16 %v6553
        %v6589 = vunpack.c.l.b16 %v6554
        %v6590 = vunpack.c.l.b16 %v6555
        %v6591 = vunpack.c.l.b16 %v6556
        %v6592 = vunpack.c.l.b16 %v6557
        %v6593 = vunpack.c.l.b16 %v6558
        %v6594 = vunpack.c.l.b16 %v6559
        %v6595 = vunpack.c.l.b16 %v6560
        %v6596 = vunpack.c.l.b16 %v6561
        %v6597 = vpack.c.b16 %v6582, %v6581
        %v6598 = vpack.c.b16 %v6584, %v6583
        %v6599 = vpack.c.b16 %v6586, %v6585
        %v6600 = vpack.c.b16 %v6588, %v6587
        %v6601 = vpack.c.b16 %v6590, %v6589
        %v6602 = vpack.c.b16 %v6592, %v6591
        %v6603 = vpack.c.b16 %v6594, %v6593
        %v6604 = vpack.c.b16 %v6596, %v6595
        %6613 = vmatprep.subr.bf16.mxu0 0
        %6614 = vmatpush1.bf16.msra.mxu0 %v6597
        %6615 = vmatprep.subr.bf16.mxu0 0
        %6616 = vmatpush1.bf16.msra.mxu0 %v6598
        %6617 = vmatprep.subr.bf16.mxu0 0
        %6618 = vmatpush1.bf16.msra.mxu0 %v6599
        %6619 = vmatprep.subr.bf16.mxu0 0
        %6620 = vmatpush1.bf16.msra.mxu0 %v6600
        %6621 = vmatprep.subr.bf16.mxu0 0
        %6622 = vmatpush1.bf16.msra.mxu0 %v6601
        %6623 = vmatprep.subr.bf16.mxu0 0
        %6624 = vmatpush1.bf16.msra.mxu0 %v6602
        %6625 = vmatprep.subr.bf16.mxu0 0
        %6626 = vmatpush1.bf16.msra.mxu0 %v6603
        %6627 = vmatprep.subr.bf16.mxu0 0
        %6628 = vmatpush1.bf16.msra.mxu0 %v6604
        %6629 = vmatprep.subr.bf16.mxu0 0
        %6630 = vmatpush1.bf16.msra.mxu0 0
        %6631 = vmatprep.subr.bf16.mxu0 0
        %6632 = vmatpush1.bf16.msra.mxu0 0
        %6633 = vmatprep.subr.bf16.mxu0 0
        %6634 = vmatpush1.bf16.msra.mxu0 0
        %6635 = vmatprep.subr.bf16.mxu0 0
        %6636 = vmatpush1.bf16.msra.mxu0 0
        %6637 = vmatprep.subr.bf16.mxu0 0
        %6638 = vmatpush1.bf16.msra.mxu0 0
        %6639 = vmatprep.subr.bf16.mxu0 0
        %6640 = vmatpush1.bf16.msra.mxu0 0
        %6641 = vmatprep.subr.bf16.mxu0 0
        %6642 = vmatpush1.bf16.msra.mxu0 0
        %6643 = vmatprep.subr.bf16.mxu0 0
        %6644 = vmatpush1.bf16.msra.mxu0 0
        %6645 = vmatprep.mubr.bf16.mxu0 0
        %6646 = vmatmul.mubr.bf16.gmra.mrb[0].mxu0 %v6563
        %v6647 = vpop.f32.mrb[0].mxu0
        %v6648 = vadd.f32 0.0, %v6647
        %v6649 = vpop.f32.mrb[0].mxu0
        %v6650 = vpop.f32.mrb[0].mxu0
        %v6651 = vpop.f32.mrb[0].mxu0
        %6652 = vdwg.mxu0
        %v6653 = vadd.f32 %v6540, %v6648
        %s6654 = scalar_lea.vmem %s7, 192
        %v6655 = vld [vmem:[%s6654] sm:$0xf]
        %v6656 = vld [vmem:[%s6654 + $0x4] sm:$0xf]
        %v6657 = vld [vmem:[%s6654 + $0x8] sm:$0xf]
        %v6658 = vld [vmem:[%s6654 + $0xc] sm:$0xf]
        %v6659 = vld [vmem:[%s6654 + $0x10] sm:$0xf]
        %v6660 = vld [vmem:[%s6654 + $0x14] sm:$0xf]
        %v6661 = vld [vmem:[%s6654 + $0x18] sm:$0xf]
        %v6662 = vld [vmem:[%s6654 + $0x1c] sm:$0xf]
        %v6663 = vld [vmem:[%s6654 + $0x20] sm:$0xf]
        %v6664 = vld [vmem:[%s6654 + $0x24] sm:$0xf]
        %v6665 = vld [vmem:[%s6654 + $0x28] sm:$0xf]
        %v6666 = vld [vmem:[%s6654 + $0x2c] sm:$0xf]
        %v6667 = vld [vmem:[%s6654 + $0x30] sm:$0xf]
        %v6668 = vld [vmem:[%s6654 + $0x34] sm:$0xf]
        %v6669 = vld [vmem:[%s6654 + $0x38] sm:$0xf]
        %v6670 = vld [vmem:[%s6654 + $0x3c] sm:$0xf]
        %v6671 = vrot.slane %v6331, 2
        %v6689 = vunpack.c.l.b16 %v6655
        %v6690 = vunpack.c.l.b16 %v6656
        %v6691 = vunpack.c.l.b16 %v6657
        %v6692 = vunpack.c.l.b16 %v6658
        %v6693 = vunpack.c.l.b16 %v6659
        %v6694 = vunpack.c.l.b16 %v6660
        %v6695 = vunpack.c.l.b16 %v6661
        %v6696 = vunpack.c.l.b16 %v6662
        %v6697 = vunpack.c.l.b16 %v6663
        %v6698 = vunpack.c.l.b16 %v6664
        %v6699 = vunpack.c.l.b16 %v6665
        %v6700 = vunpack.c.l.b16 %v6666
        %v6701 = vunpack.c.l.b16 %v6667
        %v6702 = vunpack.c.l.b16 %v6668
        %v6703 = vunpack.c.l.b16 %v6669
        %v6704 = vunpack.c.l.b16 %v6670
        %v6705 = vpack.c.b16 %v6690, %v6689
        %v6706 = vpack.c.b16 %v6692, %v6691
        %v6707 = vpack.c.b16 %v6694, %v6693
        %v6708 = vpack.c.b16 %v6696, %v6695
        %v6709 = vpack.c.b16 %v6698, %v6697
        %v6710 = vpack.c.b16 %v6700, %v6699
        %v6711 = vpack.c.b16 %v6702, %v6701
        %v6712 = vpack.c.b16 %v6704, %v6703
        %6721 = vmatprep.subr.bf16.mxu0 0
        %6722 = vmatpush1.bf16.msra.mxu0 %v6705
        %6723 = vmatprep.subr.bf16.mxu0 0
        %6724 = vmatpush1.bf16.msra.mxu0 %v6706
        %6725 = vmatprep.subr.bf16.mxu0 0
        %6726 = vmatpush1.bf16.msra.mxu0 %v6707
        %6727 = vmatprep.subr.bf16.mxu0 0
        %6728 = vmatpush1.bf16.msra.mxu0 %v6708
        %6729 = vmatprep.subr.bf16.mxu0 0
        %6730 = vmatpush1.bf16.msra.mxu0 %v6709
        %6731 = vmatprep.subr.bf16.mxu0 0
        %6732 = vmatpush1.bf16.msra.mxu0 %v6710
        %6733 = vmatprep.subr.bf16.mxu0 0
        %6734 = vmatpush1.bf16.msra.mxu0 %v6711
        %6735 = vmatprep.subr.bf16.mxu0 0
        %6736 = vmatpush1.bf16.msra.mxu0 %v6712
        %6737 = vmatprep.subr.bf16.mxu0 0
        %6738 = vmatpush1.bf16.msra.mxu0 0
        %6739 = vmatprep.subr.bf16.mxu0 0
        %6740 = vmatpush1.bf16.msra.mxu0 0
        %6741 = vmatprep.subr.bf16.mxu0 0
        %6742 = vmatpush1.bf16.msra.mxu0 0
        %6743 = vmatprep.subr.bf16.mxu0 0
        %6744 = vmatpush1.bf16.msra.mxu0 0
        %6745 = vmatprep.subr.bf16.mxu0 0
        %6746 = vmatpush1.bf16.msra.mxu0 0
        %6747 = vmatprep.subr.bf16.mxu0 0
        %6748 = vmatpush1.bf16.msra.mxu0 0
        %6749 = vmatprep.subr.bf16.mxu0 0
        %6750 = vmatpush1.bf16.msra.mxu0 0
        %6751 = vmatprep.subr.bf16.mxu0 0
        %6752 = vmatpush1.bf16.msra.mxu0 0
        %6753 = vmatprep.mubr.bf16.mxu0 0
        %6754 = vmatmul.mubr.bf16.gmra.mrb[0].mxu0 %v6671
        %v6755 = vpop.f32.mrb[0].mxu0
        %v6756 = vadd.f32 0.0, %v6755
        %v6757 = vpop.f32.mrb[0].mxu0
        %v6758 = vpop.f32.mrb[0].mxu0
        %v6759 = vpop.f32.mrb[0].mxu0
        %6760 = vdwg.mxu0
        %v6761 = vadd.f32 %v6653, %v6756
        %s6762 = scalar_lea.vmem %s7, 256
        %v6763 = vld [vmem:[%s6762] sm:$0xf]
        %v6764 = vld [vmem:[%s6762 + $0x4] sm:$0xf]
        %v6765 = vld [vmem:[%s6762 + $0x8] sm:$0xf]
        %v6766 = vld [vmem:[%s6762 + $0xc] sm:$0xf]
        %v6767 = vld [vmem:[%s6762 + $0x10] sm:$0xf]
        %v6768 = vld [vmem:[%s6762 + $0x14] sm:$0xf]
        %v6769 = vld [vmem:[%s6762 + $0x18] sm:$0xf]
        %v6770 = vld [vmem:[%s6762 + $0x1c] sm:$0xf]
        %v6771 = vld [vmem:[%s6762 + $0x20] sm:$0xf]
        %v6772 = vld [vmem:[%s6762 + $0x24] sm:$0xf]
        %v6773 = vld [vmem:[%s6762 + $0x28] sm:$0xf]
        %v6774 = vld [vmem:[%s6762 + $0x2c] sm:$0xf]
        %v6775 = vld [vmem:[%s6762 + $0x30] sm:$0xf]
        %v6776 = vld [vmem:[%s6762 + $0x34] sm:$0xf]
        %v6777 = vld [vmem:[%s6762 + $0x38] sm:$0xf]
        %v6778 = vld [vmem:[%s6762 + $0x3c] sm:$0xf]
        %v6779 = vrot.slane %v6366, 2
        %v6797 = vunpack.c.l.b16 %v6763
        %v6798 = vunpack.c.l.b16 %v6764
        %v6799 = vunpack.c.l.b16 %v6765
        %v6800 = vunpack.c.l.b16 %v6766
        %v6801 = vunpack.c.l.b16 %v6767
        %v6802 = vunpack.c.l.b16 %v6768
        %v6803 = vunpack.c.l.b16 %v6769
        %v6804 = vunpack.c.l.b16 %v6770
        %v6805 = vunpack.c.l.b16 %v6771
        %v6806 = vunpack.c.l.b16 %v6772
        %v6807 = vunpack.c.l.b16 %v6773
        %v6808 = vunpack.c.l.b16 %v6774
        %v6809 = vunpack.c.l.b16 %v6775
        %v6810 = vunpack.c.l.b16 %v6776
        %v6811 = vunpack.c.l.b16 %v6777
        %v6812 = vunpack.c.l.b16 %v6778
        %v6813 = vpack.c.b16 %v6798, %v6797
        %v6814 = vpack.c.b16 %v6800, %v6799
        %v6815 = vpack.c.b16 %v6802, %v6801
        %v6816 = vpack.c.b16 %v6804, %v6803
        %v6817 = vpack.c.b16 %v6806, %v6805
        %v6818 = vpack.c.b16 %v6808, %v6807
        %v6819 = vpack.c.b16 %v6810, %v6809
        %v6820 = vpack.c.b16 %v6812, %v6811
        %6829 = vmatprep.subr.bf16.mxu0 0
        %6830 = vmatpush1.bf16.msra.mxu0 %v6813
        %6831 = vmatprep.subr.bf16.mxu0 0
        %6832 = vmatpush1.bf16.msra.mxu0 %v6814
        %6833 = vmatprep.subr.bf16.mxu0 0
        %6834 = vmatpush1.bf16.msra.mxu0 %v6815
        %6835 = vmatprep.subr.bf16.mxu0 0
        %6836 = vmatpush1.bf16.msra.mxu0 %v6816
        %6837 = vmatprep.subr.bf16.mxu0 0
        %6838 = vmatpush1.bf16.msra.mxu0 %v6817
        %6839 = vmatprep.subr.bf16.mxu0 0
        %6840 = vmatpush1.bf16.msra.mxu0 %v6818
        %6841 = vmatprep.subr.bf16.mxu0 0
        %6842 = vmatpush1.bf16.msra.mxu0 %v6819
        %6843 = vmatprep.subr.bf16.mxu0 0
        %6844 = vmatpush1.bf16.msra.mxu0 %v6820
        %6845 = vmatprep.subr.bf16.mxu0 0
        %6846 = vmatpush1.bf16.msra.mxu0 0
        %6847 = vmatprep.subr.bf16.mxu0 0
        %6848 = vmatpush1.bf16.msra.mxu0 0
        %6849 = vmatprep.subr.bf16.mxu0 0
        %6850 = vmatpush1.bf16.msra.mxu0 0
        %6851 = vmatprep.subr.bf16.mxu0 0
        %6852 = vmatpush1.bf16.msra.mxu0 0
        %6853 = vmatprep.subr.bf16.mxu0 0
        %6854 = vmatpush1.bf16.msra.mxu0 0
        %6855 = vmatprep.subr.bf16.mxu0 0
        %6856 = vmatpush1.bf16.msra.mxu0 0
        %6857 = vmatprep.subr.bf16.mxu0 0
        %6858 = vmatpush1.bf16.msra.mxu0 0
        %6859 = vmatprep.subr.bf16.mxu0 0
        %6860 = vmatpush1.bf16.msra.mxu0 0
        %6861 = vmatprep.mubr.bf16.mxu0 0
        %6862 = vmatmul.mubr.bf16.gmra.mrb[0].mxu0 %v6779
        %v6863 = vpop.f32.mrb[0].mxu0
        %v6864 = vadd.f32 0.0, %v6863
        %v6865 = vpop.f32.mrb[0].mxu0
        %v6866 = vpop.f32.mrb[0].mxu0
        %v6867 = vpop.f32.mrb[0].mxu0
        %6868 = vdwg.mxu0
        %v6869 = vadd.f32 %v6761, %v6864
        %s6870 = scalar_lea.vmem %s7, 320
        %v6871 = vld [vmem:[%s6870] sm:$0xf]
        %v6872 = vld [vmem:[%s6870 + $0x4] sm:$0xf]
        %v6873 = vld [vmem:[%s6870 + $0x8] sm:$0xf]
        %v6874 = vld [vmem:[%s6870 + $0xc] sm:$0xf]
        %v6875 = vld [vmem:[%s6870 + $0x10] sm:$0xf]
        %v6876 = vld [vmem:[%s6870 + $0x14] sm:$0xf]
        %v6877 = vld [vmem:[%s6870 + $0x18] sm:$0xf]
        %v6878 = vld [vmem:[%s6870 + $0x1c] sm:$0xf]
        %v6879 = vld [vmem:[%s6870 + $0x20] sm:$0xf]
        %v6880 = vld [vmem:[%s6870 + $0x24] sm:$0xf]
        %v6881 = vld [vmem:[%s6870 + $0x28] sm:$0xf]
        %v6882 = vld [vmem:[%s6870 + $0x2c] sm:$0xf]
        %v6883 = vld [vmem:[%s6870 + $0x30] sm:$0xf]
        %v6884 = vld [vmem:[%s6870 + $0x34] sm:$0xf]
        %v6885 = vld [vmem:[%s6870 + $0x38] sm:$0xf]
        %v6886 = vld [vmem:[%s6870 + $0x3c] sm:$0xf]
        %v6887 = vrot.slane %v6331, 3
        %v6905 = vunpack.c.l.b16 %v6871
        %v6906 = vunpack.c.l.b16 %v6872
        %v6907 = vunpack.c.l.b16 %v6873
        %v6908 = vunpack.c.l.b16 %v6874
        %v6909 = vunpack.c.l.b16 %v6875
        %v6910 = vunpack.c.l.b16 %v6876
        %v6911 = vunpack.c.l.b16 %v6877
        %v6912 = vunpack.c.l.b16 %v6878
        %v6913 = vunpack.c.l.b16 %v6879
        %v6914 = vunpack.c.l.b16 %v6880
        %v6915 = vunpack.c.l.b16 %v6881
        %v6916 = vunpack.c.l.b16 %v6882
        %v6917 = vunpack.c.l.b16 %v6883
        %v6918 = vunpack.c.l.b16 %v6884
        %v6919 = vunpack.c.l.b16 %v6885
        %v6920 = vunpack.c.l.b16 %v6886
        %v6921 = vpack.c.b16 %v6906, %v6905
        %v6922 = vpack.c.b16 %v6908, %v6907
        %v6923 = vpack.c.b16 %v6910, %v6909
        %v6924 = vpack.c.b16 %v6912, %v6911
        %v6925 = vpack.c.b16 %v6914, %v6913
        %v6926 = vpack.c.b16 %v6916, %v6915
        %v6927 = vpack.c.b16 %v6918, %v6917
        %v6928 = vpack.c.b16 %v6920, %v6919
        %6937 = vmatprep.subr.bf16.mxu0 0
        %6938 = vmatpush1.bf16.msra.mxu0 %v6921
        %6939 = vmatprep.subr.bf16.mxu0 0
        %6940 = vmatpush1.bf16.msra.mxu0 %v6922
        %6941 = vmatprep.subr.bf16.mxu0 0
        %6942 = vmatpush1.bf16.msra.mxu0 %v6923
        %6943 = vmatprep.subr.bf16.mxu0 0
        %6944 = vmatpush1.bf16.msra.mxu0 %v6924
        %6945 = vmatprep.subr.bf16.mxu0 0
        %6946 = vmatpush1.bf16.msra.mxu0 %v6925
        %6947 = vmatprep.subr.bf16.mxu0 0
        %6948 = vmatpush1.bf16.msra.mxu0 %v6926
        %6949 = vmatprep.subr.bf16.mxu0 0
        %6950 = vmatpush1.bf16.msra.mxu0 %v6927
        %6951 = vmatprep.subr.bf16.mxu0 0
        %6952 = vmatpush1.bf16.msra.mxu0 %v6928
        %6953 = vmatprep.subr.bf16.mxu0 0
        %6954 = vmatpush1.bf16.msra.mxu0 0
        %6955 = vmatprep.subr.bf16.mxu0 0
        %6956 = vmatpush1.bf16.msra.mxu0 0
        %6957 = vmatprep.subr.bf16.mxu0 0
        %6958 = vmatpush1.bf16.msra.mxu0 0
        %6959 = vmatprep.subr.bf16.mxu0 0
        %6960 = vmatpush1.bf16.msra.mxu0 0
        %6961 = vmatprep.subr.bf16.mxu0 0
        %6962 = vmatpush1.bf16.msra.mxu0 0
        %6963 = vmatprep.subr.bf16.mxu0 0
        %6964 = vmatpush1.bf16.msra.mxu0 0
        %6965 = vmatprep.subr.bf16.mxu0 0
        %6966 = vmatpush1.bf16.msra.mxu0 0
        %6967 = vmatprep.subr.bf16.mxu0 0
        %6968 = vmatpush1.bf16.msra.mxu0 0
        %6969 = vmatprep.mubr.bf16.mxu0 0
        %6970 = vmatmul.mubr.bf16.gmra.mrb[0].mxu0 %v6887
        %v6971 = vpop.f32.mrb[0].mxu0
        %v6972 = vadd.f32 0.0, %v6971
        %v6973 = vpop.f32.mrb[0].mxu0
        %v6974 = vpop.f32.mrb[0].mxu0
        %v6975 = vpop.f32.mrb[0].mxu0
        %6976 = vdwg.mxu0
        %v6977 = vadd.f32 %v6869, %v6972
        %v6978 = vpack.c.bf16 %v6330, %v6330
        %s6979 = scalar_lea.vmem %s7, 384
        %v6980 = vld [vmem:[%s6979] sm:$0xf]
        %v6981 = vld [vmem:[%s6979 + $0x4] sm:$0xf]
        %v6982 = vld [vmem:[%s6979 + $0x8] sm:$0xf]
        %v6983 = vld [vmem:[%s6979 + $0xc] sm:$0xf]
        %v6984 = vld [vmem:[%s6979 + $0x10] sm:$0xf]
        %v6985 = vld [vmem:[%s6979 + $0x14] sm:$0xf]
        %v6986 = vld [vmem:[%s6979 + $0x18] sm:$0xf]
        %v6987 = vld [vmem:[%s6979 + $0x1c] sm:$0xf]
        %v6988 = vld [vmem:[%s6979 + $0x20] sm:$0xf]
        %v6989 = vld [vmem:[%s6979 + $0x24] sm:$0xf]
        %v6990 = vld [vmem:[%s6979 + $0x28] sm:$0xf]
        %v6991 = vld [vmem:[%s6979 + $0x2c] sm:$0xf]
        %v6992 = vld [vmem:[%s6979 + $0x30] sm:$0xf]
        %v6993 = vld [vmem:[%s6979 + $0x34] sm:$0xf]
        %v6994 = vld [vmem:[%s6979 + $0x38] sm:$0xf]
        %v6995 = vld [vmem:[%s6979 + $0x3c] sm:$0xf]
        %v7012 = vunpack.c.l.b16 %v6980
        %v7013 = vunpack.c.l.b16 %v6981
        %v7014 = vunpack.c.l.b16 %v6982
        %v7015 = vunpack.c.l.b16 %v6983
        %v7016 = vunpack.c.l.b16 %v6984
        %v7017 = vunpack.c.l.b16 %v6985
        %v7018 = vunpack.c.l.b16 %v6986
        %v7019 = vunpack.c.l.b16 %v6987
        %v7020 = vunpack.c.l.b16 %v6988
        %v7021 = vunpack.c.l.b16 %v6989
        %v7022 = vunpack.c.l.b16 %v6990
        %v7023 = vunpack.c.l.b16 %v6991
        %v7024 = vunpack.c.l.b16 %v6992
        %v7025 = vunpack.c.l.b16 %v6993
        %v7026 = vunpack.c.l.b16 %v6994
        %v7027 = vunpack.c.l.b16 %v6995
        %v7028 = vpack.c.b16 %v7013, %v7012
        %v7029 = vpack.c.b16 %v7015, %v7014
        %v7030 = vpack.c.b16 %v7017, %v7016
        %v7031 = vpack.c.b16 %v7019, %v7018
        %v7032 = vpack.c.b16 %v7021, %v7020
        %v7033 = vpack.c.b16 %v7023, %v7022
        %v7034 = vpack.c.b16 %v7025, %v7024
        %v7035 = vpack.c.b16 %v7027, %v7026
        %7044 = vmatprep.subr.bf16.mxu0 0
        %7045 = vmatpush1.bf16.msra.mxu0 %v7028
        %7046 = vmatprep.subr.bf16.mxu0 0
        %7047 = vmatpush1.bf16.msra.mxu0 %v7029
        %7048 = vmatprep.subr.bf16.mxu0 0
        %7049 = vmatpush1.bf16.msra.mxu0 %v7030
        %7050 = vmatprep.subr.bf16.mxu0 0
        %7051 = vmatpush1.bf16.msra.mxu0 %v7031
        %7052 = vmatprep.subr.bf16.mxu0 0
        %7053 = vmatpush1.bf16.msra.mxu0 %v7032
        %7054 = vmatprep.subr.bf16.mxu0 0
        %7055 = vmatpush1.bf16.msra.mxu0 %v7033
        %7056 = vmatprep.subr.bf16.mxu0 0
        %7057 = vmatpush1.bf16.msra.mxu0 %v7034
        %7058 = vmatprep.subr.bf16.mxu0 0
        %7059 = vmatpush1.bf16.msra.mxu0 %v7035
        %7060 = vmatprep.subr.bf16.mxu0 0
        %7061 = vmatpush1.bf16.msra.mxu0 0
        %7062 = vmatprep.subr.bf16.mxu0 0
        %7063 = vmatpush1.bf16.msra.mxu0 0
        %7064 = vmatprep.subr.bf16.mxu0 0
        %7065 = vmatpush1.bf16.msra.mxu0 0
        %7066 = vmatprep.subr.bf16.mxu0 0
        %7067 = vmatpush1.bf16.msra.mxu0 0
        %7068 = vmatprep.subr.bf16.mxu0 0
        %7069 = vmatpush1.bf16.msra.mxu0 0
        %7070 = vmatprep.subr.bf16.mxu0 0
        %7071 = vmatpush1.bf16.msra.mxu0 0
        %7072 = vmatprep.subr.bf16.mxu0 0
        %7073 = vmatpush1.bf16.msra.mxu0 0
        %7074 = vmatprep.subr.bf16.mxu0 0
        %7075 = vmatpush1.bf16.msra.mxu0 0
        %7076 = vmatprep.mubr.bf16.mxu0 0
        %7077 = vmatmul.mubr.bf16.gmra.mrb[0].mxu0 %v6978
        %v7078 = vpop.f32.mrb[0].mxu0
        %v7079 = vadd.f32 0.0, %v7078
        %v7080 = vpop.f32.mrb[0].mxu0
        %v7081 = vpop.f32.mrb[0].mxu0
        %v7082 = vpop.f32.mrb[0].mxu0
        %7083 = vdwg.mxu0
        %v7084 = vadd.f32 %v6977, %v7079
        %s7085 = scalar_lea.vmem %s7, 448
        %v7086 = vld [vmem:[%s7085] sm:$0xf]
        %v7087 = vld [vmem:[%s7085 + $0x4] sm:$0xf]
        %v7088 = vld [vmem:[%s7085 + $0x8] sm:$0xf]
        %v7089 = vld [vmem:[%s7085 + $0xc] sm:$0xf]
        %v7090 = vld [vmem:[%s7085 + $0x10] sm:$0xf]
        %v7091 = vld [vmem:[%s7085 + $0x14] sm:$0xf]
        %v7092 = vld [vmem:[%s7085 + $0x18] sm:$0xf]
        %v7093 = vld [vmem:[%s7085 + $0x1c] sm:$0xf]
        %v7094 = vld [vmem:[%s7085 + $0x20] sm:$0xf]
        %v7095 = vld [vmem:[%s7085 + $0x24] sm:$0xf]
        %v7096 = vld [vmem:[%s7085 + $0x28] sm:$0xf]
        %v7097 = vld [vmem:[%s7085 + $0x2c] sm:$0xf]
        %v7098 = vld [vmem:[%s7085 + $0x30] sm:$0xf]
        %v7099 = vld [vmem:[%s7085 + $0x34] sm:$0xf]
        %v7100 = vld [vmem:[%s7085 + $0x38] sm:$0xf]
        %v7101 = vld [vmem:[%s7085 + $0x3c] sm:$0xf]
        %v7103 = vshrl.u32 %v6978, 16
        %v7122 = vunpack.c.l.b16 %v7086
        %v7123 = vunpack.c.l.b16 %v7087
        %v7124 = vunpack.c.l.b16 %v7088
        %v7125 = vunpack.c.l.b16 %v7089
        %v7126 = vunpack.c.l.b16 %v7090
        %v7127 = vunpack.c.l.b16 %v7091
        %v7128 = vunpack.c.l.b16 %v7092
        %v7129 = vunpack.c.l.b16 %v7093
        %v7130 = vunpack.c.l.b16 %v7094
        %v7131 = vunpack.c.l.b16 %v7095
        %v7132 = vunpack.c.l.b16 %v7096
        %v7133 = vunpack.c.l.b16 %v7097
        %v7134 = vunpack.c.l.b16 %v7098
        %v7135 = vunpack.c.l.b16 %v7099
        %v7136 = vunpack.c.l.b16 %v7100
        %v7137 = vunpack.c.l.b16 %v7101
        %v7138 = vpack.c.b16 %v7123, %v7122
        %v7139 = vpack.c.b16 %v7125, %v7124
        %v7140 = vpack.c.b16 %v7127, %v7126
        %v7141 = vpack.c.b16 %v7129, %v7128
        %v7142 = vpack.c.b16 %v7131, %v7130
        %v7143 = vpack.c.b16 %v7133, %v7132
        %v7144 = vpack.c.b16 %v7135, %v7134
        %v7145 = vpack.c.b16 %v7137, %v7136
        %7154 = vmatprep.subr.bf16.mxu0 0
        %7155 = vmatpush1.bf16.msra.mxu0 %v7138
        %7156 = vmatprep.subr.bf16.mxu0 0
        %7157 = vmatpush1.bf16.msra.mxu0 %v7139
        %7158 = vmatprep.subr.bf16.mxu0 0
        %7159 = vmatpush1.bf16.msra.mxu0 %v7140
        %7160 = vmatprep.subr.bf16.mxu0 0
        %7161 = vmatpush1.bf16.msra.mxu0 %v7141
        %7162 = vmatprep.subr.bf16.mxu0 0
        %7163 = vmatpush1.bf16.msra.mxu0 %v7142
        %7164 = vmatprep.subr.bf16.mxu0 0
        %7165 = vmatpush1.bf16.msra.mxu0 %v7143
        %7166 = vmatprep.subr.bf16.mxu0 0
        %7167 = vmatpush1.bf16.msra.mxu0 %v7144
        %7168 = vmatprep.subr.bf16.mxu0 0
        %7169 = vmatpush1.bf16.msra.mxu0 %v7145
        %7170 = vmatprep.subr.bf16.mxu0 0
        %7171 = vmatpush1.bf16.msra.mxu0 0
        %7172 = vmatprep.subr.bf16.mxu0 0
        %7173 = vmatpush1.bf16.msra.mxu0 0
        %7174 = vmatprep.subr.bf16.mxu0 0
        %7175 = vmatpush1.bf16.msra.mxu0 0
        %7176 = vmatprep.subr.bf16.mxu0 0
        %7177 = vmatpush1.bf16.msra.mxu0 0
        %7178 = vmatprep.subr.bf16.mxu0 0
        %7179 = vmatpush1.bf16.msra.mxu0 0
        %7180 = vmatprep.subr.bf16.mxu0 0
        %7181 = vmatpush1.bf16.msra.mxu0 0
        %7182 = vmatprep.subr.bf16.mxu0 0
        %7183 = vmatpush1.bf16.msra.mxu0 0
        %7184 = vmatprep.subr.bf16.mxu0 0
        %7185 = vmatpush1.bf16.msra.mxu0 0
        %7186 = vmatprep.mubr.bf16.mxu0 0
        %7187 = vmatmul.mubr.bf16.gmra.mrb[0].mxu0 %v7103
        %v7188 = vpop.f32.mrb[0].mxu0
        %v7189 = vadd.f32 0.0, %v7188
        %v7190 = vpop.f32.mrb[0].mxu0
        %v7191 = vpop.f32.mrb[0].mxu0
        %v7192 = vpop.f32.mrb[0].mxu0
        %7193 = vdwg.mxu0
        %v7194 = vadd.f32 %v7084, %v7189
        %s7195 = scalar_lea.vmem %s7, 512
        %v7196 = vld [vmem:[%s7195] sm:$0xf]
        %v7197 = vld [vmem:[%s7195 + $0x4] sm:$0xf]
        %v7198 = vld [vmem:[%s7195 + $0x8] sm:$0xf]
        %v7199 = vld [vmem:[%s7195 + $0xc] sm:$0xf]
        %v7200 = vld [vmem:[%s7195 + $0x10] sm:$0xf]
        %v7201 = vld [vmem:[%s7195 + $0x14] sm:$0xf]
        %v7202 = vld [vmem:[%s7195 + $0x18] sm:$0xf]
        %v7203 = vld [vmem:[%s7195 + $0x1c] sm:$0xf]
        %v7204 = vld [vmem:[%s7195 + $0x20] sm:$0xf]
        %v7205 = vld [vmem:[%s7195 + $0x24] sm:$0xf]
        %v7206 = vld [vmem:[%s7195 + $0x28] sm:$0xf]
        %v7207 = vld [vmem:[%s7195 + $0x2c] sm:$0xf]
        %v7208 = vld [vmem:[%s7195 + $0x30] sm:$0xf]
        %v7209 = vld [vmem:[%s7195 + $0x34] sm:$0xf]
        %v7210 = vld [vmem:[%s7195 + $0x38] sm:$0xf]
        %v7211 = vld [vmem:[%s7195 + $0x3c] sm:$0xf]
        %v7213 = vrot.slane %v6978, 1
        %v7231 = vunpack.c.l.b16 %v7196
        %v7232 = vunpack.c.l.b16 %v7197
        %v7233 = vunpack.c.l.b16 %v7198
        %v7234 = vunpack.c.l.b16 %v7199
        %v7235 = vunpack.c.l.b16 %v7200
        %v7236 = vunpack.c.l.b16 %v7201
        %v7237 = vunpack.c.l.b16 %v7202
        %v7238 = vunpack.c.l.b16 %v7203
        %v7239 = vunpack.c.l.b16 %v7204
        %v7240 = vunpack.c.l.b16 %v7205
        %v7241 = vunpack.c.l.b16 %v7206
        %v7242 = vunpack.c.l.b16 %v7207
        %v7243 = vunpack.c.l.b16 %v7208
        %v7244 = vunpack.c.l.b16 %v7209
        %v7245 = vunpack.c.l.b16 %v7210
        %v7246 = vunpack.c.l.b16 %v7211
        %v7247 = vpack.c.b16 %v7232, %v7231
        %v7248 = vpack.c.b16 %v7234, %v7233
        %v7249 = vpack.c.b16 %v7236, %v7235
        %v7250 = vpack.c.b16 %v7238, %v7237
        %v7251 = vpack.c.b16 %v7240, %v7239
        %v7252 = vpack.c.b16 %v7242, %v7241
        %v7253 = vpack.c.b16 %v7244, %v7243
        %v7254 = vpack.c.b16 %v7246, %v7245
        %7263 = vmatprep.subr.bf16.mxu0 0
        %7264 = vmatpush1.bf16.msra.mxu0 %v7247
        %7265 = vmatprep.subr.bf16.mxu0 0
        %7266 = vmatpush1.bf16.msra.mxu0 %v7248
        %7267 = vmatprep.subr.bf16.mxu0 0
        %7268 = vmatpush1.bf16.msra.mxu0 %v7249
        %7269 = vmatprep.subr.bf16.mxu0 0
        %7270 = vmatpush1.bf16.msra.mxu0 %v7250
        %7271 = vmatprep.subr.bf16.mxu0 0
        %7272 = vmatpush1.bf16.msra.mxu0 %v7251
        %7273 = vmatprep.subr.bf16.mxu0 0
        %7274 = vmatpush1.bf16.msra.mxu0 %v7252
        %7275 = vmatprep.subr.bf16.mxu0 0
        %7276 = vmatpush1.bf16.msra.mxu0 %v7253
        %7277 = vmatprep.subr.bf16.mxu0 0
        %7278 = vmatpush1.bf16.msra.mxu0 %v7254
        %7279 = vmatprep.subr.bf16.mxu0 0
        %7280 = vmatpush1.bf16.msra.mxu0 0
        %7281 = vmatprep.subr.bf16.mxu0 0
        %7282 = vmatpush1.bf16.msra.mxu0 0
        %7283 = vmatprep.subr.bf16.mxu0 0
        %7284 = vmatpush1.bf16.msra.mxu0 0
        %7285 = vmatprep.subr.bf16.mxu0 0
        %7286 = vmatpush1.bf16.msra.mxu0 0
        %7287 = vmatprep.subr.bf16.mxu0 0
        %7288 = vmatpush1.bf16.msra.mxu0 0
        %7289 = vmatprep.subr.bf16.mxu0 0
        %7290 = vmatpush1.bf16.msra.mxu0 0
        %7291 = vmatprep.subr.bf16.mxu0 0
        %7292 = vmatpush1.bf16.msra.mxu0 0
        %7293 = vmatprep.subr.bf16.mxu0 0
        %7294 = vmatpush1.bf16.msra.mxu0 0
        %7295 = vmatprep.mubr.bf16.mxu0 0
        %7296 = vmatmul.mubr.bf16.gmra.mrb[0].mxu0 %v7213
        %v7297 = vpop.f32.mrb[0].mxu0
        %v7298 = vadd.f32 0.0, %v7297
        %v7299 = vpop.f32.mrb[0].mxu0
        %v7300 = vpop.f32.mrb[0].mxu0
        %v7301 = vpop.f32.mrb[0].mxu0
        %7302 = vdwg.mxu0
        %v7303 = vadd.f32 %v7194, %v7298
        %v7304 = vld [vmem:[%s8] sm:$0x1]
        %v7305 = vadd.f32 %v7303, %v7304
        %vm7306 = vcmask 73728
        %v7307 = vsel %vm7306, %v7305, -inf
        %7308 = vmax.xlane.f32.xlu0 %v7307
        %v7309 = vpop.xlane.xlu0 %7308
        %v7310 = vsub.f32 %v7305, %v7309
        %v7311 = vmul.f32 %v7310, 1.442695
        %v7312 = vpow.pop %v7311
        %v7313 = vsel %vm7306, %v7312, 0.0
        %7314 = vadd.xlane.f32.xlu0 %v7313
        %v7315 = vpop.xlane.xlu0 %7314
        %v7316 = vrcp.pop %v7315
        %v7317 = vmul.f32 %v7312, %v7316
        %7318 = vst.msk [vmem:[%s324] sm:$0x1] %vm7306, %v7317
        %s7319 = sand.u32 %s225, 1
        %s7320 = scalar_lea.sflag [#allocation5], %s7319
        %s7321 = sand.u32 %s225, 1
        %s7322 = scalar_lea.vmem [#allocation4], %s7321
        // Predicated region
        $region57: #{cnn_forward.1} parent=55 // pred_check
          %p7323 = pneg %p235
        $region58: #{cnn_forward.1} parent=55 // pred_check_branch
          %7325 = sbr.rel (%p7323) target = $region60
        $region59: #{cnn_forward.1} parent=55 // pred_region
          %s7327 = ssub.s32 16, 16
          %7328 = vsyncadd %s7320, %s7327
          %s7329 = smul.addr %s23, 16
          %s7330 = scalar_lea.hbm %s9, %s7329
          %s7332 = sshll.u32 %s7322, 4
          %s7333 = int_to_ptr.vmem [resolvable:$true] %s7332
          %7335 = dma.vmem_to_hbm [thread:$0]  %s7333, 16, %s7330, %s7320
        $region60: #{cnn_forward.1} parent=55 // pred_fallthru
          _
      $region56: #{cnn_forward.1} parent=5 // pred_fallthru
        _
      %p7336 = scmp.le.s32.totalorder 2, %s18
      // Predicated region
      $region61: #{cnn_forward.1} parent=5 // pred_check
        %p7337 = pneg %p7336
      $region62: #{cnn_forward.1} parent=5 // pred_check_branch
        %7339 = sbr.rel (%p7337) target = $region64
      $region63: #{cnn_forward.1} parent=5 // pred_region
        %s7340 = ssub.s32 %s18, 2
        // Predicated region
        $region65: #{cnn_forward.1} parent=63 // pred_check
          %p7341 = pneg %p241
        $region66: #{cnn_forward.1} parent=63 // pred_check_branch
          %7343 = sbr.rel (%p7341) target = $region68
        $region67: #{cnn_forward.1} parent=63 // pred_region
          %s7344 = sand.u32 %s226, 1
          %s7345 = scalar_lea.sflag [#allocation5], %s7344
          %s7346 = sand.u32 %s226, 1
          %s7347 = scalar_lea.vmem [#allocation4], %s7346
          %7348 = dma.done %s7345, 16
        $region68: #{cnn_forward.1} parent=63 // pred_fallthru
          _
      $region64: #{cnn_forward.1} parent=5 // pred_fallthru
        _
    $region6: #{cnn_forward.1} parent=1 // loop_footer
      %s22 = sadd.s32 1, %s18
    $region7: #{cnn_forward.1} parent=1 // loop_footer_branch
      %17 = sbr.rel target = $region3
    $region8: #{cnn_forward.1} parent=1 // loop_exit
      _
    %7349 = vsyncpa [#allocation5], 1
    %s7350 = scalar_lea.sflag [#allocation5], 1
    %7351 = vsyncpa %s7350, 1

</llo_original>
